<compile_context>
chip_gen: v5e
topology: v5e:2x2
jax: 0.10.0
libtpu: 0.0.40
codegen_flags: <defaults>
</compile_context>

<pallas_src>
import jax
import jax.numpy as jnp
import numpy as np
from jax.experimental import pallas as pl
from jax.experimental.pallas import tpu as pltpu

# Set to jnp.bfloat16 on v6e/v7x (bf16 EUP ~2x sigmoid throughput); keep float32 on v5e
# (no bf16 EUP/VPU).  float32 is the safe universal default.
GATE_SIGMOID_DTYPE = jnp.float32


def _layernorm(x, gamma, beta, eps=1e-5):
    # gamma/beta shaped (1, C); biased variance + eps=1e-5 matches torch.nn.LayerNorm
    mu = jnp.mean(x, axis=-1, keepdims=True)
    var = jnp.mean(jnp.square(x - mu), axis=-1, keepdims=True)
    return (x - mu) * jax.lax.rsqrt(var + eps) * gamma + beta


def triangle_mult_kernel(
        xl_ref, xr_ref, xg_ref,            # x blocks: (1,tk,N,D), (1,tk,ti,D), (1,ti,N,D)
        sk_ref, sj_ref, si_ref,            # src slices: (1,tk,1,1), (1,1,N,1), (1,1,ti,1)
        ln1g_ref, ln1b_ref,                # (1, D)
        wl_ref, bl_ref, wr_ref, br_ref,    # (D,H) bf16 / (1,H) f32
        wlg_ref, blg_ref, wrg_ref, brg_ref,
        wog_ref, bog_ref,
        ln2g_ref, ln2b_ref,                # (H, 1) — applied per-d in the d-major epilogue
        wot_ref, bo_ref,                   # wo^T (D,H) bf16, bo (D,1)
        out_ref,                           # (1, D, ti*N) — lane-dense d-major slab
        acc_ref):                          # VMEM scratch (H, ti, N) f32
    k = pl.program_id(2)
    nk = pl.num_programs(2)

    H, ti, N = acc_ref.shape
    tk = xl_ref.shape[1]
    D = xl_ref.shape[3]

    @pl.when(k == 0)
    def _():
        acc_ref[...] = jnp.zeros_like(acc_ref)

    ln1_g = ln1g_ref[...]
    ln1_b = ln1b_ref[...]

    sk = sk_ref[0]        # (tk, 1, 1)
    sj = sj_ref[0]        # (1,  N, 1)
    si = si_ref[0]        # (1, ti, 1)

    # ---- left operand: rows k_tile x all j -------------------------------------------
    xl = xl_ref[0].reshape(tk * N, D)                       # f32
    xln = _layernorm(xl, ln1_g, ln1_b).astype(jnp.bfloat16)
    lproj = jnp.dot(xln, wl_ref[...], preferred_element_type=jnp.float32) + bl_ref[...]
    lgate = jax.nn.sigmoid(
        (jnp.dot(xln, wlg_ref[...], preferred_element_type=jnp.float32) + blg_ref[...]
         ).astype(GATE_SIGMOID_DTYPE))
    left3 = lproj.reshape(tk, N, H) * (sk * sj) * lgate.reshape(tk, N, H)
    # cast to bf16 BEFORE the transpose (review: halves XLU transpose bytes)
    left_c = jnp.transpose(left3.astype(jnp.bfloat16), (2, 0, 1))      # (H, tk, N)

    # ---- right operand: rows k_tile x cols i_tile -------------------------------------
    xr = xr_ref[0].reshape(tk * ti, D)
    xrn = _layernorm(xr, ln1_g, ln1_b).astype(jnp.bfloat16)
    rproj = jnp.dot(xrn, wr_ref[...], preferred_element_type=jnp.float32) + br_ref[...]
    rgate = jax.nn.sigmoid(
        (jnp.dot(xrn, wrg_ref[...], preferred_element_type=jnp.float32) + brg_ref[...]
         ).astype(GATE_SIGMOID_DTYPE))
    right3 = rproj.reshape(tk, ti, H) * (sk * si) * rgate.reshape(tk, ti, H)
    right_c = jnp.transpose(right3.astype(jnp.bfloat16), (2, 1, 0))    # (H, ti, tk)

    # ---- triangle mix on the MXU: H-batched (ti,tk)x(tk,N), accumulated over k tiles ---
    # out[i,j,d] = sum_k right[k,i,d] * left[k,j,d]      (mix='ingoing')
    acc_ref[...] += jnp.einsum("dik,dkj->dij", right_c, left_c,
                               preferred_element_type=jnp.float32)     # (H, ti, N) f32

    # ---- epilogue (d-major), only once per (b, i) tile ---------------------------------
    @pl.when(k == nk - 1)
    def _():
        acc = acc_ref[...]                                             # (H, ti, N) f32
        # LayerNorm over H = reduction over the LEADING axis: pure VPU adds, no lane reduce
        mu = jnp.mean(acc, axis=0, keepdims=True)
        var = jnp.mean(jnp.square(acc - mu), axis=0, keepdims=True)
        normed = (acc - mu) * jax.lax.rsqrt(var + 1e-5)
        normed = (normed * ln2g_ref[...].reshape(H, 1, 1)
                  + ln2b_ref[...].reshape(H, 1, 1))

        # out-gate from the k-resident (ti, N, D) x block
        xg = xg_ref[0].reshape(ti * N, D)
        xgn = _layernorm(xg, ln1_g, ln1_b).astype(jnp.bfloat16)
        og_logits = (jnp.dot(xgn, wog_ref[...], preferred_element_type=jnp.float32)
                     + bog_ref[...])
        og = jax.nn.sigmoid(og_logits.astype(GATE_SIGMOID_DTYPE)).astype(jnp.bfloat16)
        og_d = jnp.transpose(og.reshape(ti, N, H), (2, 0, 1))          # (H, ti, N) bf16

        gated = (normed * og_d).astype(jnp.bfloat16).reshape(H, ti * N)
        # final projection kept d-major: wo^T (D,H) @ (H, ti*N) -> lane-dense (D, ti*N)
        y = jnp.dot(wot_ref[...], gated, preferred_element_type=jnp.float32) + bo_ref[...]
        out_ref[0] = y.astype(out_ref.dtype)


def triangle_multiplicative(x, src_mask, p, *, ti=8, tk=8):
    B, N, N2, D = x.shape
    assert N == N2, "feature map must be symmetrical"
    H = p["wl"].shape[1]

    ti = min(ti, N)
    tk = min(tk, N)
    assert N % ti == 0 and N % tk == 0
    assert ti == N or ti % 8 == 0                 # (ti, D) / (ti, 1) sublane constraint
    assert ti == N or (ti * N) % 128 == 0         # lane-dense (D, ti*N) output block

    grid = (B, N // ti, N // tk)

    # layout plumbing (wrapper side)
    src = src_mask.astype(jnp.float32)
    src_k = src.reshape(B, N, 1, 1)
    src_j = src.reshape(B, 1, N, 1)

    wl = p["wl"].astype(jnp.bfloat16)
    wr = p["wr"].astype(jnp.bfloat16)
    wlg = p["wlg"].astype(jnp.bfloat16)
    wrg = p["wrg"].astype(jnp.bfloat16)
    wog = p["wog"].astype(jnp.bfloat16)
    wo_t = p["wo"].T.astype(jnp.bfloat16)         # (D, H) for the d-major final matmul
    ln2_g = p["ln2_g"].reshape(H, 1)
    ln2_b = p["ln2_b"].reshape(H, 1)
    bo_col = p["bo"].reshape(D, 1)

    def wspec(shape):
        return pl.BlockSpec(shape, lambda b, i, k: (0,) * len(shape))

    in_specs = [
        pl.BlockSpec((1, tk, N, D), lambda b, i, k: (b, k, 0, 0)),    # x — left rows
        pl.BlockSpec((1, tk, ti, D), lambda b, i, k: (b, k, i, 0)),   # x — right rows
        pl.BlockSpec((1, ti, N, D), lambda b, i, k: (b, i, 0, 0)),    # x — out-gate rows
        pl.BlockSpec((1, tk, 1, 1), lambda b, i, k: (b, k, 0, 0)),    # src[k_tile]
        pl.BlockSpec((1, 1, N, 1), lambda b, i, k: (b, 0, 0, 0)),     # src[all j]
        pl.BlockSpec((1, 1, ti, 1), lambda b, i, k: (b, 0, i, 0)),    # src[i_tile]
        wspec((1, D)), wspec((1, D)),                                 # ln1 gamma / beta
        wspec((D, H)), wspec((1, H)),                                 # wl / bl
        wspec((D, H)), wspec((1, H)),                                 # wr / br
        wspec((D, H)), wspec((1, H)),                                 # wlg / blg
        wspec((D, H)), wspec((1, H)),                                 # wrg / brg
        wspec((D, H)), wspec((1, H)),                                 # wog / bog
        wspec((H, 1)), wspec((H, 1)),                                 # ln2 gamma / beta
        wspec((D, H)), wspec((D, 1)),                                 # wo^T / bo
    ]
    out_spec = pl.BlockSpec((1, D, ti * N), lambda b, i, k: (b, 0, i))

    out_t = pl.pallas_call(
        triangle_mult_kernel,
        out_shape=jax.ShapeDtypeStruct((B, D, N * N), jnp.float32),
        grid_spec=pltpu.PrefetchScalarGridSpec(
            num_scalar_prefetch=0,
            grid=grid,
            in_specs=in_specs,
            out_specs=out_spec,
            scratch_shapes=[pltpu.VMEM((H, ti, N), jnp.float32)],
        ),
        compiler_params=pltpu.CompilerParams(
            # batch and i-tile shard across TensorCores; k is the reduction (accumulator)
            dimension_semantics=("parallel", "parallel", "arbitrary"),
            # 48 MiB: headroom under v7x's 64 MiB physical VMEM; raise on v5e/v6e (128 MiB)
            vmem_limit_bytes=48 * 1024 * 1024,
        ),
    )(x, x, x, src_k, src_j, src_j,
      p["ln1_g"], p["ln1_b"],
      wl, p["bl"], wr, p["br"],
      wlg, p["blg"], wrg, p["brg"],
      wog, p["bog"],
      ln2_g, ln2_b, wo_t, bo_col)

    # wrapper-side transpose of the d-major output back to channels-last
    return jnp.transpose(out_t.reshape(B, D, N, N), (0, 2, 3, 1))


def reference(x, src_mask, p):
    # pure-JAX f32 reference mirroring the PyTorch forward (mix='ingoing')
    src = src_mask.astype(jnp.float32)
    mask = (src[:, :, None] * src[:, None, :])[..., None]        # (B,N,N,1)
    xn = _layernorm(x, p["ln1_g"], p["ln1_b"])
    left = (xn @ p["wl"] + p["bl"]) * mask
    right = (xn @ p["wr"] + p["br"]) * mask
    lg = jax.nn.sigmoid(xn @ p["wlg"] + p["blg"])
    rg = jax.nn.sigmoid(xn @ p["wrg"] + p["brg"])
    og = jax.nn.sigmoid(xn @ p["wog"] + p["bog"])
    left = left * lg
    right = right * rg
    out = jnp.einsum("bkjd,bkid->bijd", left, right)
    out = _layernorm(out, p["ln2_g"], p["ln2_b"]) * og
    return out @ p["wo"] + p["bo"]


def make_params(key, dim, hidden_dim):
    ks = jax.random.split(key, 8)
    scale = 1.0 / np.sqrt(dim)

    def lin(k, din, dout, w_scale, b_scale=0.01, b_mean=0.0):
        kw, kb = jax.random.split(k)
        w = jax.random.normal(kw, (din, dout), jnp.float32) * w_scale
        b = b_mean + jax.random.normal(kb, (1, dout), jnp.float32) * b_scale
        return w, b

    wl, bl = lin(ks[0], dim, hidden_dim, scale)
    wr, br = lin(ks[1], dim, hidden_dim, scale)
    wo, bo = lin(ks[2], hidden_dim, dim, 1.0 / np.sqrt(hidden_dim))
    # gates: small random weights / bias near 1 so the sigmoid paths are exercised
    # (module init is W=0, b=1).
    wlg, blg = lin(ks[3], dim, hidden_dim, 0.1 * scale, 0.05, 1.0)
    wrg, brg = lin(ks[4], dim, hidden_dim, 0.1 * scale, 0.05, 1.0)
    wog, bog = lin(ks[5], dim, hidden_dim, 0.1 * scale, 0.05, 1.0)
    return {
        "ln1_g": jnp.ones((1, dim), jnp.float32),
        "ln1_b": jnp.zeros((1, dim), jnp.float32),
        "wl": wl, "bl": bl, "wr": wr, "br": br,
        "wlg": wlg, "blg": blg, "wrg": wrg, "brg": brg,
        "wog": wog, "bog": bog,
        "ln2_g": jnp.ones((1, hidden_dim), jnp.float32),
        "ln2_b": jnp.zeros((1, hidden_dim), jnp.float32),
        "wo": wo, "bo": bo,
    }


if __name__ == "__main__":
    B, N, D = 2, 16, 32        # batch, seq (symmetric feature map), dim
    H = D                      # hidden_dim defaults to dim

    key = jax.random.PRNGKey(0)
    kx, kp = jax.random.split(key)
    x = jax.random.normal(kx, (B, N, N, D), jnp.float32)
    # symmetrize so the "feature map must be symmetrical" assertion semantics hold
    x = 0.5 * (x + jnp.transpose(x, (0, 2, 1, 3)))
    # deterministic src_mask: batch 0 fully valid, batch 1 has 11 valid tokens
    lengths = jnp.array([N, 11], dtype=jnp.int32)
    src_mask = (jnp.arange(N)[None, :] < lengths[:, None]).astype(jnp.float32)

    params = make_params(kp, D, H)

    # ti=8, tk=8 so the i-tile axis (2 tiles) and the k accumulation (2 tiles) are both
    # actually exercised at this toy shape (do NOT tune performance on this config).
    out = jax.block_until_ready(triangle_multiplicative(x, src_mask, params, ti=8, tk=8))
    ref = reference(x, src_mask, params)

    # bf16 MXU operands (f32 accumulation) shift results vs. the pure-f32 reference.
    np.testing.assert_allclose(np.asarray(out), np.asarray(ref), rtol=4e-2, atol=4e-2)
    print("KERNEL_OK")
</pallas_src>

<mosaic_0001>
module attributes {stable_mosaic.version = 11 : i64} {
  func.func @triangle_mult_kernel(%arg0: i32, %arg1: i32, %arg2: i32, %arg3: memref<1x8x16x32xf32, #tpu.memory_space<vmem>>, %arg4: memref<1x8x8x32xf32, #tpu.memory_space<vmem>>, %arg5: memref<1x8x16x32xf32, #tpu.memory_space<vmem>>, %arg6: memref<1x8x1x1xf32, #tpu.memory_space<vmem>>, %arg7: memref<1x1x16x1xf32, #tpu.memory_space<vmem>>, %arg8: memref<1x1x8x1xf32, #tpu.memory_space<vmem>>, %arg9: memref<1x32xf32, #tpu.memory_space<vmem>>, %arg10: memref<1x32xf32, #tpu.memory_space<vmem>>, %arg11: memref<32x32xbf16, #tpu.memory_space<vmem>>, %arg12: memref<1x32xf32, #tpu.memory_space<vmem>>, %arg13: memref<32x32xbf16, #tpu.memory_space<vmem>>, %arg14: memref<1x32xf32, #tpu.memory_space<vmem>>, %arg15: memref<32x32xbf16, #tpu.memory_space<vmem>>, %arg16: memref<1x32xf32, #tpu.memory_space<vmem>>, %arg17: memref<32x32xbf16, #tpu.memory_space<vmem>>, %arg18: memref<1x32xf32, #tpu.memory_space<vmem>>, %arg19: memref<32x32xbf16, #tpu.memory_space<vmem>>, %arg20: memref<1x32xf32, #tpu.memory_space<vmem>>, %arg21: memref<32x1xf32, #tpu.memory_space<vmem>>, %arg22: memref<32x1xf32, #tpu.memory_space<vmem>>, %arg23: memref<32x32xbf16, #tpu.memory_space<vmem>>, %arg24: memref<32x1xf32, #tpu.memory_space<vmem>>, %arg25: memref<1x32x128xf32, #tpu.memory_space<vmem>>, %arg26: memref<32x8x16xf32, #tpu.memory_space<vmem>>) attributes {dimension_semantics = [#tpu.dimension_semantics<parallel>, #tpu.dimension_semantics<parallel>, #tpu.dimension_semantics<arbitrary>], iteration_bounds = array<i64: 2, 2, 2>, scalar_prefetch = 0 : i64, scratch_operands = 1 : i64, tpu.core_type = #tpu.core_type<tc>, window_params = [{transform_indices = @transform_0, window_bounds = array<i64: 1, 8, 16, 32>}, {transform_indices = @transform_1, window_bounds = array<i64: 1, 8, 8, 32>}, {transform_indices = @transform_2, window_bounds = array<i64: 1, 8, 16, 32>}, {transform_indices = @transform_3, window_bounds = array<i64: 1, 8, 1, 1>}, {transform_indices = @transform_4, window_bounds = array<i64: 1, 1, 16, 1>}, {transform_indices = @transform_5, window_bounds = array<i64: 1, 1, 8, 1>}, {pipeline_mode = #tpu.pipeline_mode<synchronous>, transform_indices = @transform_6, window_bounds = array<i64: 1, 32>}, {pipeline_mode = #tpu.pipeline_mode<synchronous>, transform_indices = @transform_7, window_bounds = array<i64: 1, 32>}, {pipeline_mode = #tpu.pipeline_mode<synchronous>, transform_indices = @transform_8, window_bounds = array<i64: 32, 32>}, {pipeline_mode = #tpu.pipeline_mode<synchronous>, transform_indices = @transform_9, window_bounds = array<i64: 1, 32>}, {pipeline_mode = #tpu.pipeline_mode<synchronous>, transform_indices = @transform_10, window_bounds = array<i64: 32, 32>}, {pipeline_mode = #tpu.pipeline_mode<synchronous>, transform_indices = @transform_11, window_bounds = array<i64: 1, 32>}, {pipeline_mode = #tpu.pipeline_mode<synchronous>, transform_indices = @transform_12, window_bounds = array<i64: 32, 32>}, {pipeline_mode = #tpu.pipeline_mode<synchronous>, transform_indices = @transform_13, window_bounds = array<i64: 1, 32>}, {pipeline_mode = #tpu.pipeline_mode<synchronous>, transform_indices = @transform_14, window_bounds = array<i64: 32, 32>}, {pipeline_mode = #tpu.pipeline_mode<synchronous>, transform_indices = @transform_15, window_bounds = array<i64: 1, 32>}, {pipeline_mode = #tpu.pipeline_mode<synchronous>, transform_indices = @transform_16, window_bounds = array<i64: 32, 32>}, {pipeline_mode = #tpu.pipeline_mode<synchronous>, transform_indices = @transform_17, window_bounds = array<i64: 1, 32>}, {pipeline_mode = #tpu.pipeline_mode<synchronous>, transform_indices = @transform_18, window_bounds = array<i64: 32, 1>}, {pipeline_mode = #tpu.pipeline_mode<synchronous>, transform_indices = @transform_19, window_bounds = array<i64: 32, 1>}, {pipeline_mode = #tpu.pipeline_mode<synchronous>, transform_indices = @transform_20, window_bounds = array<i64: 32, 32>}, {pipeline_mode = #tpu.pipeline_mode<synchronous>, transform_indices = @transform_21, window_bounds = array<i64: 32, 1>}, {transform_indices = @transform_22, window_bounds = array<i64: 1, 32, 128>}]} {
    %c0_i32 = arith.constant 0 : i32
    %0 = arith.cmpi eq, %arg2, %c0_i32 : i32
    %1 = arith.extui %0 : i1 to i32
    %c0_i32_0 = arith.constant 0 : i32
    %2 = arith.cmpi ne, %1, %c0_i32_0 : i32
    scf.if %2 {
      %cst_63 = arith.constant 0.000000e+00 : f32
      %120 = vector.broadcast %cst_63 : f32 to vector<32x8x16xf32>
      %c0_64 = arith.constant 0 : index
      %c0_65 = arith.constant 0 : index
      %c0_66 = arith.constant 0 : index
      %121 = vector.load %arg26[%c0_64, %c0_65, %c0_66] : memref<32x8x16xf32, #tpu.memory_space<vmem>>, vector<32x8x16xf32>
      tpu.vector_store %arg26[%c0_64, %c0_65, %c0_66], %120 {strides = array<i32>} : memref<32x8x16xf32, #tpu.memory_space<vmem>>, vector<32x8x16xf32>,
    } else {
    }
    %c0 = arith.constant 0 : index
    %c0_1 = arith.constant 0 : index
    %3 = vector.load %arg9[%c0, %c0_1] : memref<1x32xf32, #tpu.memory_space<vmem>>, vector<1x32xf32>
    %c0_2 = arith.constant 0 : index
    %c0_3 = arith.constant 0 : index
    %4 = vector.load %arg10[%c0_2, %c0_3] : memref<1x32xf32, #tpu.memory_space<vmem>>, vector<1x32xf32>
    %c0_4 = arith.constant 0 : index
    %c0_5 = arith.constant 0 : index
    %c0_6 = arith.constant 0 : index
    %c0_7 = arith.constant 0 : index
    %5 = vector.load %arg6[%c0_4, %c0_5, %c0_6, %c0_7] : memref<1x8x1x1xf32, #tpu.memory_space<vmem>>, vector<1x8x1x1xf32>
    %6 = vector.shape_cast %5 : vector<1x8x1x1xf32> to vector<8x1x1xf32>
    %c0_8 = arith.constant 0 : index
    %c0_9 = arith.constant 0 : index
    %c0_10 = arith.constant 0 : index
    %c0_11 = arith.constant 0 : index
    %7 = vector.load %arg7[%c0_8, %c0_9, %c0_10, %c0_11] : memref<1x1x16x1xf32, #tpu.memory_space<vmem>>, vector<1x1x16x1xf32>
    %8 = vector.shape_cast %7 : vector<1x1x16x1xf32> to vector<1x16x1xf32>
    %c0_12 = arith.constant 0 : index
    %c0_13 = arith.constant 0 : index
    %c0_14 = arith.constant 0 : index
    %c0_15 = arith.constant 0 : index
    %9 = vector.load %arg8[%c0_12, %c0_13, %c0_14, %c0_15] : memref<1x1x8x1xf32, #tpu.memory_space<vmem>>, vector<1x1x8x1xf32>
    %10 = vector.shape_cast %9 : vector<1x1x8x1xf32> to vector<1x8x1xf32>
    %c0_16 = arith.constant 0 : index
    %c0_17 = arith.constant 0 : index
    %c0_18 = arith.constant 0 : index
    %c0_19 = arith.constant 0 : index
    %11 = vector.load %arg3[%c0_16, %c0_17, %c0_18, %c0_19] : memref<1x8x16x32xf32, #tpu.memory_space<vmem>>, vector<1x8x16x32xf32>
    %12 = vector.shape_cast %11 : vector<1x8x16x32xf32> to vector<8x16x32xf32>
    %13 = vector.shape_cast %12 : vector<8x16x32xf32> to vector<128x32xf32>
    %cst = arith.constant dense<0.000000e+00> : vector<128xf32>
    %14 = vector.multi_reduction <add>, %13, %cst [1] : vector<128x32xf32> to vector<128xf32>
    %15 = vector.shape_cast %14 : vector<128xf32> to vector<128x1xf32>
    %cst_20 = arith.constant 3.200000e+01 : f32
    %16 = vector.broadcast %cst_20 : f32 to vector<128x1xf32>
    %17 = arith.divf %15, %16 : vector<128x1xf32>
    %18 = vector.broadcast %17 : vector<128x1xf32> to vector<128x32xf32>
    %19 = arith.subf %13, %18 : vector<128x32xf32>
    %20 = arith.mulf %19, %19 : vector<128x32xf32>
    %cst_21 = arith.constant dense<0.000000e+00> : vector<128xf32>
    %21 = vector.multi_reduction <add>, %20, %cst_21 [1] : vector<128x32xf32> to vector<128xf32>
    %22 = vector.shape_cast %21 : vector<128xf32> to vector<128x1xf32>
    %cst_22 = arith.constant 3.200000e+01 : f32
    %23 = vector.broadcast %cst_22 : f32 to vector<128x1xf32>
    %24 = arith.divf %22, %23 : vector<128x1xf32>
    %25 = vector.broadcast %17 : vector<128x1xf32> to vector<128x32xf32>
    %26 = arith.subf %13, %25 : vector<128x32xf32>
    %cst_23 = arith.constant 9.99999974E-6 : f32
    %27 = vector.broadcast %cst_23 : f32 to vector<128x1xf32>
    %28 = arith.addf %24, %27 : vector<128x1xf32>
    %29 = math.rsqrt %28 : vector<128x1xf32>
    %30 = vector.broadcast %29 : vector<128x1xf32> to vector<128x32xf32>
    %31 = arith.mulf %26, %30 : vector<128x32xf32>
    %32 = vector.broadcast %3 : vector<1x32xf32> to vector<128x32xf32>
    %33 = arith.mulf %31, %32 : vector<128x32xf32>
    %34 = vector.broadcast %4 : vector<1x32xf32> to vector<128x32xf32>
    %35 = arith.addf %33, %34 : vector<128x32xf32>
    %36 = arith.truncf %35 : vector<128x32xf32> to vector<128x32xbf16>
    %c0_24 = arith.constant 0 : index
    %c0_25 = arith.constant 0 : index
    %37 = vector.load %arg11[%c0_24, %c0_25] : memref<32x32xbf16, #tpu.memory_space<vmem>>, vector<32x32xbf16>
    %cst_26 = arith.constant dense<0.000000e+00> : vector<128x32xf32>
    %38 = tpu.matmul %36, %37, %cst_26 {dimension_numbers = #tpu.dot_dimension_numbers<[1], [0], [0], [1], [0, 0, 1, 1], [], []>} : vector<128x32xbf16>, vector<32x32xbf16>, vector<128x32xf32> -> vector<128x32xf32>
    %c0_27 = arith.constant 0 : index
    %c0_28 = arith.constant 0 : index
    %39 = vector.load %arg12[%c0_27, %c0_28] : memref<1x32xf32, #tpu.memory_space<vmem>>, vector<1x32xf32>
    %40 = vector.broadcast %39 : vector<1x32xf32> to vector<128x32xf32>
    %41 = arith.addf %38, %40 : vector<128x32xf32>
    %c0_29 = arith.constant 0 : index
    %c0_30 = arith.constant 0 : index
    %42 = vector.load %arg15[%c0_29, %c0_30] : memref<32x32xbf16, #tpu.memory_space<vmem>>, vector<32x32xbf16>
    %cst_31 = arith.constant dense<0.000000e+00> : vector<128x32xf32>
    %43 = tpu.matmul %36, %42, %cst_31 {dimension_numbers = #tpu.dot_dimension_numbers<[1], [0], [0], [1], [0, 0, 1, 1], [], []>} : vector<128x32xbf16>, vector<32x32xbf16>, vector<128x32xf32> -> vector<128x32xf32>
    %c0_32 = arith.constant 0 : index
    %c0_33 = arith.constant 0 : index
    %44 = vector.load %arg16[%c0_32, %c0_33] : memref<1x32xf32, #tpu.memory_space<vmem>>, vector<1x32xf32>
    %45 = vector.broadcast %44 : vector<1x32xf32> to vector<128x32xf32>
    %46 = arith.addf %43, %45 : vector<128x32xf32>
    %47 = arith.negf %46 : vector<128x32xf32>
    %48 = math.exp %47 : vector<128x32xf32>
    %cst_34 = arith.constant 1.000000e+00 : f32
    %49 = vector.broadcast %cst_34 : f32 to vector<128x32xf32>
    %50 = arith.addf %49, %48 : vector<128x32xf32>
    %51 = arith.divf %49, %50 : vector<128x32xf32>
    %52 = vector.shape_cast %41 : vector<128x32xf32> to vector<8x16x32xf32>
    %53 = vector.broadcast %6 : vector<8x1x1xf32> to vector<8x16x1xf32>
    %54 = vector.broadcast %8 : vector<1x16x1xf32> to vector<8x16x1xf32>
    %55 = arith.mulf %53, %54 : vector<8x16x1xf32>
    %56 = vector.broadcast %55 : vector<8x16x1xf32> to vector<8x16x32xf32>
    %57 = arith.mulf %52, %56 : vector<8x16x32xf32>
    %58 = vector.shape_cast %51 : vector<128x32xf32> to vector<8x16x32xf32>
    %59 = arith.mulf %57, %58 : vector<8x16x32xf32>
    %60 = arith.truncf %59 : vector<8x16x32xf32> to vector<8x16x32xbf16>
    %61 = tpu.transpose %60, [2, 0, 1] : vector<8x16x32xbf16> -> vector<32x8x16xbf16>
    %c0_35 = arith.constant 0 : index
    %c0_36 = arith.constant 0 : index
    %c0_37 = arith.constant 0 : index
    %c0_38 = arith.constant 0 : index
    %62 = vector.load %arg4[%c0_35, %c0_36, %c0_37, %c0_38] : memref<1x8x8x32xf32, #tpu.memory_space<vmem>>, vector<1x8x8x32xf32>
    %63 = vector.shape_cast %62 : vector<1x8x8x32xf32> to vector<8x8x32xf32>
    %64 = vector.shape_cast %63 : vector<8x8x32xf32> to vector<64x32xf32>
    %cst_39 = arith.constant dense<0.000000e+00> : vector<64xf32>
    %65 = vector.multi_reduction <add>, %64, %cst_39 [1] : vector<64x32xf32> to vector<64xf32>
    %66 = vector.shape_cast %65 : vector<64xf32> to vector<64x1xf32>
    %cst_40 = arith.constant 3.200000e+01 : f32
    %67 = vector.broadcast %cst_40 : f32 to vector<64x1xf32>
    %68 = arith.divf %66, %67 : vector<64x1xf32>
    %69 = vector.broadcast %68 : vector<64x1xf32> to vector<64x32xf32>
    %70 = arith.subf %64, %69 : vector<64x32xf32>
    %71 = arith.mulf %70, %70 : vector<64x32xf32>
    %cst_41 = arith.constant dense<0.000000e+00> : vector<64xf32>
    %72 = vector.multi_reduction <add>, %71, %cst_41 [1] : vector<64x32xf32> to vector<64xf32>
    %73 = vector.shape_cast %72 : vector<64xf32> to vector<64x1xf32>
    %cst_42 = arith.constant 3.200000e+01 : f32
    %74 = vector.broadcast %cst_42 : f32 to vector<64x1xf32>
    %75 = arith.divf %73, %74 : vector<64x1xf32>
    %76 = vector.broadcast %68 : vector<64x1xf32> to vector<64x32xf32>
    %77 = arith.subf %64, %76 : vector<64x32xf32>
    %cst_43 = arith.constant 9.99999974E-6 : f32
    %78 = vector.broadcast %cst_43 : f32 to vector<64x1xf32>
    %79 = arith.addf %75, %78 : vector<64x1xf32>
    %80 = math.rsqrt %79 : vector<64x1xf32>
    %81 = vector.broadcast %80 : vector<64x1xf32> to vector<64x32xf32>
    %82 = arith.mulf %77, %81 : vector<64x32xf32>
    %83 = vector.broadcast %3 : vector<1x32xf32> to vector<64x32xf32>
    %84 = arith.mulf %82, %83 : vector<64x32xf32>
    %85 = vector.broadcast %4 : vector<1x32xf32> to vector<64x32xf32>
    %86 = arith.addf %84, %85 : vector<64x32xf32>
    %87 = arith.truncf %86 : vector<64x32xf32> to vector<64x32xbf16>
    %c0_44 = arith.constant 0 : index
    %c0_45 = arith.constant 0 : index
    %88 = vector.load %arg13[%c0_44, %c0_45] : memref<32x32xbf16, #tpu.memory_space<vmem>>, vector<32x32xbf16>
    %cst_46 = arith.constant dense<0.000000e+00> : vector<64x32xf32>
    %89 = tpu.matmul %87, %88, %cst_46 {dimension_numbers = #tpu.dot_dimension_numbers<[1], [0], [0], [1], [0, 0, 1, 1], [], []>} : vector<64x32xbf16>, vector<32x32xbf16>, vector<64x32xf32> -> vector<64x32xf32>
    %c0_47 = arith.constant 0 : index
    %c0_48 = arith.constant 0 : index
    %90 = vector.load %arg14[%c0_47, %c0_48] : memref<1x32xf32, #tpu.memory_space<vmem>>, vector<1x32xf32>
    %91 = vector.broadcast %90 : vector<1x32xf32> to vector<64x32xf32>
    %92 = arith.addf %89, %91 : vector<64x32xf32>
    %c0_49 = arith.constant 0 : index
    %c0_50 = arith.constant 0 : index
    %93 = vector.load %arg17[%c0_49, %c0_50] : memref<32x32xbf16, #tpu.memory_space<vmem>>, vector<32x32xbf16>
    %cst_51 = arith.constant dense<0.000000e+00> : vector<64x32xf32>
    %94 = tpu.matmul %87, %93, %cst_51 {dimension_numbers = #tpu.dot_dimension_numbers<[1], [0], [0], [1], [0, 0, 1, 1], [], []>} : vector<64x32xbf16>, vector<32x32xbf16>, vector<64x32xf32> -> vector<64x32xf32>
    %c0_52 = arith.constant 0 : index
    %c0_53 = arith.constant 0 : index
    %95 = vector.load %arg18[%c0_52, %c0_53] : memref<1x32xf32, #tpu.memory_space<vmem>>, vector<1x32xf32>
    %96 = vector.broadcast %95 : vector<1x32xf32> to vector<64x32xf32>
    %97 = arith.addf %94, %96 : vector<64x32xf32>
    %98 = arith.negf %97 : vector<64x32xf32>
    %99 = math.exp %98 : vector<64x32xf32>
    %cst_54 = arith.constant 1.000000e+00 : f32
    %100 = vector.broadcast %cst_54 : f32 to vector<64x32xf32>
    %101 = arith.addf %100, %99 : vector<64x32xf32>
    %102 = arith.divf %100, %101 : vector<64x32xf32>
    %103 = vector.shape_cast %92 : vector<64x32xf32> to vector<8x8x32xf32>
    %104 = vector.broadcast %6 : vector<8x1x1xf32> to vector<8x8x1xf32>
    %105 = vector.broadcast %10 : vector<1x8x1xf32> to vector<8x8x1xf32>
    %106 = arith.mulf %104, %105 : vector<8x8x1xf32>
    %107 = vector.broadcast %106 : vector<8x8x1xf32> to vector<8x8x32xf32>
    %108 = arith.mulf %103, %107 : vector<8x8x32xf32>
    %109 = vector.shape_cast %102 : vector<64x32xf32> to vector<8x8x32xf32>
    %110 = arith.mulf %108, %109 : vector<8x8x32xf32>
    %111 = arith.truncf %110 : vector<8x8x32xf32> to vector<8x8x32xbf16>
    %112 = tpu.transpose %111, [2, 1, 0] : vector<8x8x32xbf16> -> vector<32x8x8xbf16>
    %c0_55 = arith.constant 0 : index
    %c0_56 = arith.constant 0 : index
    %c0_57 = arith.constant 0 : index
    %113 = vector.load %arg26[%c0_55, %c0_56, %c0_57] : memref<32x8x16xf32, #tpu.memory_space<vmem>>, vector<32x8x16xf32>
    "tpu.trace_start"() <{level = 10 : i32, message = "dik,dkj->dij"}> : () -> ()
    %cst_58 = arith.constant dense<0.000000e+00> : vector<32x8x16xf32>
    %114 = tpu.matmul %112, %61, %cst_58 {dimension_numbers = #tpu.dot_dimension_numbers<[2], [1], [1], [2], [0, 0, 0, 1, 1, 2], [0], [0]>} : vector<32x8x8xbf16>, vector<32x8x16xbf16>, vector<32x8x16xf32> -> vector<32x8x16xf32>
    "tpu.trace_stop"() : () -> ()
    %115 = arith.addf %113, %114 : vector<32x8x16xf32>
    %c0_59 = arith.constant 0 : index
    %c0_60 = arith.constant 0 : index
    %c0_61 = arith.constant 0 : index
    %116 = vector.load %arg26[%c0_59, %c0_60, %c0_61] : memref<32x8x16xf32, #tpu.memory_space<vmem>>, vector<32x8x16xf32>
    tpu.vector_store %arg26[%c0_59, %c0_60, %c0_61], %115 {strides = array<i32>} : memref<32x8x16xf32, #tpu.memory_space<vmem>>, vector<32x8x16xf32>,
    %c1_i32 = arith.constant 1 : i32
    %117 = arith.cmpi eq, %arg2, %c1_i32 : i32
    %118 = arith.extui %117 : i1 to i32
    %c0_i32_62 = arith.constant 0 : i32
    %119 = arith.cmpi ne, %118, %c0_i32_62 : i32
    scf.if %119 {
      %c0_63 = arith.constant 0 : index
      %c0_64 = arith.constant 0 : index
      %c0_65 = arith.constant 0 : index
      %120 = vector.load %arg26[%c0_63, %c0_64, %c0_65] : memref<32x8x16xf32, #tpu.memory_space<vmem>>, vector<32x8x16xf32>
      %cst_66 = arith.constant dense<0.000000e+00> : vector<8x16xf32>
      %121 = vector.multi_reduction <add>, %120, %cst_66 [0] : vector<32x8x16xf32> to vector<8x16xf32>
      %122 = vector.shape_cast %121 : vector<8x16xf32> to vector<1x8x16xf32>
      %cst_67 = arith.constant 3.200000e+01 : f32
      %123 = vector.broadcast %cst_67 : f32 to vector<1x8x16xf32>
      %124 = arith.divf %122, %123 : vector<1x8x16xf32>
      %125 = vector.broadcast %124 : vector<1x8x16xf32> to vector<32x8x16xf32>
      %126 = arith.subf %120, %125 : vector<32x8x16xf32>
      %127 = arith.mulf %126, %126 : vector<32x8x16xf32>
      %cst_68 = arith.constant dense<0.000000e+00> : vector<8x16xf32>
      %128 = vector.multi_reduction <add>, %127, %cst_68 [0] : vector<32x8x16xf32> to vector<8x16xf32>
      %129 = vector.shape_cast %128 : vector<8x16xf32> to vector<1x8x16xf32>
      %cst_69 = arith.constant 3.200000e+01 : f32
      %130 = vector.broadcast %cst_69 : f32 to vector<1x8x16xf32>
      %131 = arith.divf %129, %130 : vector<1x8x16xf32>
      %132 = vector.broadcast %124 : vector<1x8x16xf32> to vector<32x8x16xf32>
      %133 = arith.subf %120, %132 : vector<32x8x16xf32>
      %cst_70 = arith.constant 9.99999974E-6 : f32
      %134 = vector.broadcast %cst_70 : f32 to vector<1x8x16xf32>
      %135 = arith.addf %131, %134 : vector<1x8x16xf32>
      %136 = math.rsqrt %135 : vector<1x8x16xf32>
      %137 = vector.broadcast %136 : vector<1x8x16xf32> to vector<32x8x16xf32>
      %138 = arith.mulf %133, %137 : vector<32x8x16xf32>
      %c0_71 = arith.constant 0 : index
      %c0_72 = arith.constant 0 : index
      %139 = vector.load %arg21[%c0_71, %c0_72] : memref<32x1xf32, #tpu.memory_space<vmem>>, vector<32x1xf32>
      %140 = vector.shape_cast %139 : vector<32x1xf32> to vector<32x1x1xf32>
      %141 = vector.broadcast %140 : vector<32x1x1xf32> to vector<32x8x16xf32>
      %142 = arith.mulf %138, %141 : vector<32x8x16xf32>
      %c0_73 = arith.constant 0 : index
      %c0_74 = arith.constant 0 : index
      %143 = vector.load %arg22[%c0_73, %c0_74] : memref<32x1xf32, #tpu.memory_space<vmem>>, vector<32x1xf32>
      %144 = vector.shape_cast %143 : vector<32x1xf32> to vector<32x1x1xf32>
      %145 = vector.broadcast %144 : vector<32x1x1xf32> to vector<32x8x16xf32>
      %146 = arith.addf %142, %145 : vector<32x8x16xf32>
      %c0_75 = arith.constant 0 : index
      %c0_76 = arith.constant 0 : index
      %c0_77 = arith.constant 0 : index
      %c0_78 = arith.constant 0 : index
      %147 = vector.load %arg5[%c0_75, %c0_76, %c0_77, %c0_78] : memref<1x8x16x32xf32, #tpu.memory_space<vmem>>, vector<1x8x16x32xf32>
      %148 = vector.shape_cast %147 : vector<1x8x16x32xf32> to vector<8x16x32xf32>
      %149 = vector.shape_cast %148 : vector<8x16x32xf32> to vector<128x32xf32>
      %cst_79 = arith.constant dense<0.000000e+00> : vector<128xf32>
      %150 = vector.multi_reduction <add>, %149, %cst_79 [1] : vector<128x32xf32> to vector<128xf32>
      %151 = vector.shape_cast %150 : vector<128xf32> to vector<128x1xf32>
      %cst_80 = arith.constant 3.200000e+01 : f32
      %152 = vector.broadcast %cst_80 : f32 to vector<128x1xf32>
      %153 = arith.divf %151, %152 : vector<128x1xf32>
      %154 = vector.broadcast %153 : vector<128x1xf32> to vector<128x32xf32>
      %155 = arith.subf %149, %154 : vector<128x32xf32>
      %156 = arith.mulf %155, %155 : vector<128x32xf32>
      %cst_81 = arith.constant dense<0.000000e+00> : vector<128xf32>
      %157 = vector.multi_reduction <add>, %156, %cst_81 [1] : vector<128x32xf32> to vector<128xf32>
      %158 = vector.shape_cast %157 : vector<128xf32> to vector<128x1xf32>
      %cst_82 = arith.constant 3.200000e+01 : f32
      %159 = vector.broadcast %cst_82 : f32 to vector<128x1xf32>
      %160 = arith.divf %158, %159 : vector<128x1xf32>
      %161 = vector.broadcast %153 : vector<128x1xf32> to vector<128x32xf32>
      %162 = arith.subf %149, %161 : vector<128x32xf32>
      %cst_83 = arith.constant 9.99999974E-6 : f32
      %163 = vector.broadcast %cst_83 : f32 to vector<128x1xf32>
      %164 = arith.addf %160, %163 : vector<128x1xf32>
      %165 = math.rsqrt %164 : vector<128x1xf32>
      %166 = vector.broadcast %165 : vector<128x1xf32> to vector<128x32xf32>
      %167 = arith.mulf %162, %166 : vector<128x32xf32>
      %168 = vector.broadcast %3 : vector<1x32xf32> to vector<128x32xf32>
      %169 = arith.mulf %167, %168 : vector<128x32xf32>
      %170 = vector.broadcast %4 : vector<1x32xf32> to vector<128x32xf32>
      %171 = arith.addf %169, %170 : vector<128x32xf32>
      %172 = arith.truncf %171 : vector<128x32xf32> to vector<128x32xbf16>
      %c0_84 = arith.constant 0 : index
      %c0_85 = arith.constant 0 : index
      %173 = vector.load %arg19[%c0_84, %c0_85] : memref<32x32xbf16, #tpu.memory_space<vmem>>, vector<32x32xbf16>
      %cst_86 = arith.constant dense<0.000000e+00> : vector<128x32xf32>
      %174 = tpu.matmul %172, %173, %cst_86 {dimension_numbers = #tpu.dot_dimension_numbers<[1], [0], [0], [1], [0, 0, 1, 1], [], []>} : vector<128x32xbf16>, vector<32x32xbf16>, vector<128x32xf32> -> vector<128x32xf32>
      %c0_87 = arith.constant 0 : index
      %c0_88 = arith.constant 0 : index
      %175 = vector.load %arg20[%c0_87, %c0_88] : memref<1x32xf32, #tpu.memory_space<vmem>>, vector<1x32xf32>
      %176 = vector.broadcast %175 : vector<1x32xf32> to vector<128x32xf32>
      %177 = arith.addf %174, %176 : vector<128x32xf32>
      %178 = arith.negf %177 : vector<128x32xf32>
      %179 = math.exp %178 : vector<128x32xf32>
      %cst_89 = arith.constant 1.000000e+00 : f32
      %180 = vector.broadcast %cst_89 : f32 to vector<128x32xf32>
      %181 = arith.addf %180, %179 : vector<128x32xf32>
      %182 = arith.divf %180, %181 : vector<128x32xf32>
      %183 = arith.truncf %182 : vector<128x32xf32> to vector<128x32xbf16>
      %184 = vector.shape_cast %183 : vector<128x32xbf16> to vector<8x16x32xbf16>
      %185 = tpu.transpose %184, [2, 0, 1] : vector<8x16x32xbf16> -> vector<32x8x16xbf16>
      %186 = arith.extf %185 : vector<32x8x16xbf16> to vector<32x8x16xf32>
      %187 = arith.mulf %146, %186 : vector<32x8x16xf32>
      %188 = arith.truncf %187 : vector<32x8x16xf32> to vector<32x8x16xbf16>
      %189 = vector.shape_cast %188 : vector<32x8x16xbf16> to vector<32x128xbf16>
      %c0_90 = arith.constant 0 : index
      %c0_91 = arith.constant 0 : index
      %190 = vector.load %arg23[%c0_90, %c0_91] : memref<32x32xbf16, #tpu.memory_space<vmem>>, vector<32x32xbf16>
      %cst_92 = arith.constant dense<0.000000e+00> : vector<32x128xf32>
      %191 = tpu.matmul %190, %189, %cst_92 {dimension_numbers = #tpu.dot_dimension_numbers<[1], [0], [0], [1], [0, 0, 1, 1], [], []>} : vector<32x32xbf16>, vector<32x128xbf16>, vector<32x128xf32> -> vector<32x128xf32>
      %c0_93 = arith.constant 0 : index
      %c0_94 = arith.constant 0 : index
      %192 = vector.load %arg24[%c0_93, %c0_94] : memref<32x1xf32, #tpu.memory_space<vmem>>, vector<32x1xf32>
      %193 = vector.broadcast %192 : vector<32x1xf32> to vector<32x128xf32>
      %194 = arith.addf %191, %193 : vector<32x128xf32>
      %c0_95 = arith.constant 0 : index
      %c0_96 = arith.constant 0 : index
      %c0_97 = arith.constant 0 : index
      %195 = vector.load %arg25[%c0_95, %c0_96, %c0_97] : memref<1x32x128xf32, #tpu.memory_space<vmem>>, vector<1x32x128xf32>
      %196 = vector.shape_cast %195 : vector<1x32x128xf32> to vector<32x128xf32>
      %197 = vector.shape_cast %194 : vector<32x128xf32> to vector<1x32x128xf32>
      tpu.vector_store %arg25[%c0_95, %c0_96, %c0_97], %197 {strides = array<i32>} : memref<1x32x128xf32, #tpu.memory_space<vmem>>, vector<1x32x128xf32>,
    } else {
    }
    return
  }
  func.func @transform_0(%arg0: i32, %arg1: i32, %arg2: i32) -> (i32, i32, i32, i32) {
    %c0_i32 = arith.constant 0 : i32
    %c0_i32_0 = arith.constant 0 : i32
    %c0_i32_1 = arith.constant 0 : i32
    return %arg0, %arg2, %c0_i32, %c0_i32_0 : i32, i32, i32, i32
  }
  func.func @transform_1(%arg0: i32, %arg1: i32, %arg2: i32) -> (i32, i32, i32, i32) {
    %c0_i32 = arith.constant 0 : i32
    %c0_i32_0 = arith.constant 0 : i32
    return %arg0, %arg2, %arg1, %c0_i32 : i32, i32, i32, i32
  }
  func.func @transform_2(%arg0: i32, %arg1: i32, %arg2: i32) -> (i32, i32, i32, i32) {
    %c0_i32 = arith.constant 0 : i32
    %c0_i32_0 = arith.constant 0 : i32
    %c0_i32_1 = arith.constant 0 : i32
    return %arg0, %arg1, %c0_i32, %c0_i32_0 : i32, i32, i32, i32
  }
  func.func @transform_3(%arg0: i32, %arg1: i32, %arg2: i32) -> (i32, i32, i32, i32) {
    %c0_i32 = arith.constant 0 : i32
    %c0_i32_0 = arith.constant 0 : i32
    %c0_i32_1 = arith.constant 0 : i32
    return %arg0, %arg2, %c0_i32, %c0_i32_0 : i32, i32, i32, i32
  }
  func.func @transform_4(%arg0: i32, %arg1: i32, %arg2: i32) -> (i32, i32, i32, i32) {
    %c0_i32 = arith.constant 0 : i32
    %c0_i32_0 = arith.constant 0 : i32
    %c0_i32_1 = arith.constant 0 : i32
    %c0_i32_2 = arith.constant 0 : i32
    return %arg0, %c0_i32, %c0_i32_0, %c0_i32_1 : i32, i32, i32, i32
  }
  func.func @transform_5(%arg0: i32, %arg1: i32, %arg2: i32) -> (i32, i32, i32, i32) {
    %c0_i32 = arith.constant 0 : i32
    %c0_i32_0 = arith.constant 0 : i32
    %c0_i32_1 = arith.constant 0 : i32
    return %arg0, %c0_i32, %arg1, %c0_i32_0 : i32, i32, i32, i32
  }
  func.func @transform_6(%arg0: i32, %arg1: i32, %arg2: i32) -> (i32, i32) {
    %c0_i32 = arith.constant 0 : i32
    %c0_i32_0 = arith.constant 0 : i32
    %c0_i32_1 = arith.constant 0 : i32
    return %c0_i32, %c0_i32_0 : i32, i32
  }
  func.func @transform_7(%arg0: i32, %arg1: i32, %arg2: i32) -> (i32, i32) {
    %c0_i32 = arith.constant 0 : i32
    %c0_i32_0 = arith.constant 0 : i32
    %c0_i32_1 = arith.constant 0 : i32
    return %c0_i32, %c0_i32_0 : i32, i32
  }
  func.func @transform_8(%arg0: i32, %arg1: i32, %arg2: i32) -> (i32, i32) {
    %c0_i32 = arith.constant 0 : i32
    %c0_i32_0 = arith.constant 0 : i32
    %c0_i32_1 = arith.constant 0 : i32
    return %c0_i32, %c0_i32_0 : i32, i32
  }
  func.func @transform_9(%arg0: i32, %arg1: i32, %arg2: i32) -> (i32, i32) {
    %c0_i32 = arith.constant 0 : i32
    %c0_i32_0 = arith.constant 0 : i32
    %c0_i32_1 = arith.constant 0 : i32
    return %c0_i32, %c0_i32_0 : i32, i32
  }
  func.func @transform_10(%arg0: i32, %arg1: i32, %arg2: i32) -> (i32, i32) {
    %c0_i32 = arith.constant 0 : i32
    %c0_i32_0 = arith.constant 0 : i32
    %c0_i32_1 = arith.constant 0 : i32
    return %c0_i32, %c0_i32_0 : i32, i32
  }
  func.func @transform_11(%arg0: i32, %arg1: i32, %arg2: i32) -> (i32, i32) {
    %c0_i32 = arith.constant 0 : i32
    %c0_i32_0 = arith.constant 0 : i32
    %c0_i32_1 = arith.constant 0 : i32
    return %c0_i32, %c0_i32_0 : i32, i32
  }
  func.func @transform_12(%arg0: i32, %arg1: i32, %arg2: i32) -> (i32, i32) {
    %c0_i32 = arith.constant 0 : i32
    %c0_i32_0 = arith.constant 0 : i32
    %c0_i32_1 = arith.constant 0 : i32
    return %c0_i32, %c0_i32_0 : i32, i32
  }
  func.func @transform_13(%arg0: i32, %arg1: i32, %arg2: i32) -> (i32, i32) {
    %c0_i32 = arith.constant 0 : i32
    %c0_i32_0 = arith.constant 0 : i32
    %c0_i32_1 = arith.constant 0 : i32
    return %c0_i32, %c0_i32_0 : i32, i32
  }
  func.func @transform_14(%arg0: i32, %arg1: i32, %arg2: i32) -> (i32, i32) {
    %c0_i32 = arith.constant 0 : i32
    %c0_i32_0 = arith.constant 0 : i32
    %c0_i32_1 = arith.constant 0 : i32
    return %c0_i32, %c0_i32_0 : i32, i32
  }
  func.func @transform_15(%arg0: i32, %arg1: i32, %arg2: i32) -> (i32, i32) {
    %c0_i32 = arith.constant 0 : i32
    %c0_i32_0 = arith.constant 0 : i32
    %c0_i32_1 = arith.constant 0 : i32
    return %c0_i32, %c0_i32_0 : i32, i32
  }
  func.func @transform_16(%arg0: i32, %arg1: i32, %arg2: i32) -> (i32, i32) {
    %c0_i32 = arith.constant 0 : i32
    %c0_i32_0 = arith.constant 0 : i32
    %c0_i32_1 = arith.constant 0 : i32
    return %c0_i32, %c0_i32_0 : i32, i32
  }
  func.func @transform_17(%arg0: i32, %arg1: i32, %arg2: i32) -> (i32, i32) {
    %c0_i32 = arith.constant 0 : i32
    %c0_i32_0 = arith.constant 0 : i32
    %c0_i32_1 = arith.constant 0 : i32
    return %c0_i32, %c0_i32_0 : i32, i32
  }
  func.func @transform_18(%arg0: i32, %arg1: i32, %arg2: i32) -> (i32, i32) {
    %c0_i32 = arith.constant 0 : i32
    %c0_i32_0 = arith.constant 0 : i32
    %c0_i32_1 = arith.constant 0 : i32
    return %c0_i32, %c0_i32_0 : i32, i32
  }
  func.func @transform_19(%arg0: i32, %arg1: i32, %arg2: i32) -> (i32, i32) {
    %c0_i32 = arith.constant 0 : i32
    %c0_i32_0 = arith.constant 0 : i32
    %c0_i32_1 = arith.constant 0 : i32
    return %c0_i32, %c0_i32_0 : i32, i32
  }
  func.func @transform_20(%arg0: i32, %arg1: i32, %arg2: i32) -> (i32, i32) {
    %c0_i32 = arith.constant 0 : i32
    %c0_i32_0 = arith.constant 0 : i32
    %c0_i32_1 = arith.constant 0 : i32
    return %c0_i32, %c0_i32_0 : i32, i32
  }
  func.func @transform_21(%arg0: i32, %arg1: i32, %arg2: i32) -> (i32, i32) {
    %c0_i32 = arith.constant 0 : i32
    %c0_i32_0 = arith.constant 0 : i32
    %c0_i32_1 = arith.constant 0 : i32
    return %c0_i32, %c0_i32_0 : i32, i32
  }
  func.func @transform_22(%arg0: i32, %arg1: i32, %arg2: i32) -> (i32, i32, i32) {
    %c0_i32 = arith.constant 0 : i32
    %c0_i32_0 = arith.constant 0 : i32
    return %arg0, %c0_i32, %arg1 : i32, i32, i32
  }
}

</mosaic_0001>

<llo_original>
// kernel: tpu_custom_call.1
$region0: #{tpu_custom_call.1}
  #allocation0 [shape = 'u32[]', space=smem, size = 0x4, offset = 0x4, fixed_abs, tag = 'smem constant byte address 0x4 - core index']
  #allocation1 [shape = 'u32[72,128]{1,0:T(1,128)}', space=vmem, size = 0x9000, scoped, tag = 'internal scratch']
  #allocation2 [shape = 'f32[32,8,16]{2,1,0:T(8,128)}', space=vmem, size = 0x20000, scoped, tag = 'scratch operand']
  %s0 = inlined_call_operand.hbm [shape: f32[2,16,16,32], index: 0, kind: input, shape index: {}]
  %s1 = inlined_call_operand.hbm [shape: f32[2,16,16,32], index: 1, kind: input, shape index: {}]
  %s2 = inlined_call_operand.hbm [shape: f32[2,16,16,32], index: 2, kind: input, shape index: {}]
  %s3 = inlined_call_operand.vmem [shape: f32[2,16,1,1], index: 3, kind: input, shape index: {}]
  %s4 = inlined_call_operand.vmem [shape: f32[2,1,16,1], index: 4, kind: input, shape index: {}]
  %s5 = inlined_call_operand.vmem [shape: f32[2,1,16,1], index: 5, kind: input, shape index: {}]
  %s6 = inlined_call_operand.vmem [shape: f32[1,32], index: 6, kind: input, shape index: {}]
  %s7 = inlined_call_operand.vmem [shape: f32[1,32], index: 7, kind: input, shape index: {}]
  %s8 = inlined_call_operand.vmem [shape: bf16[32,32], index: 8, kind: input, shape index: {}]
  %s9 = inlined_call_operand.vmem [shape: f32[1,32], index: 9, kind: input, shape index: {}]
  %s10 = inlined_call_operand.vmem [shape: bf16[32,32], index: 10, kind: input, shape index: {}]
  %s11 = inlined_call_operand.vmem [shape: f32[1,32], index: 11, kind: input, shape index: {}]
  %s12 = inlined_call_operand.vmem [shape: bf16[32,32], index: 12, kind: input, shape index: {}]
  %s13 = inlined_call_operand.vmem [shape: f32[1,32], index: 13, kind: input, shape index: {}]
  %s14 = inlined_call_operand.vmem [shape: bf16[32,32], index: 14, kind: input, shape index: {}]
  %s15 = inlined_call_operand.vmem [shape: f32[1,32], index: 15, kind: input, shape index: {}]
  %s16 = inlined_call_operand.vmem [shape: bf16[32,32], index: 16, kind: input, shape index: {}]
  %s17 = inlined_call_operand.vmem [shape: f32[1,32], index: 17, kind: input, shape index: {}]
  %s18 = inlined_call_operand.vmem [shape: f32[32,1], index: 18, kind: input, shape index: {}]
  %s19 = inlined_call_operand.vmem [shape: f32[32,1], index: 19, kind: input, shape index: {}]
  %s20 = inlined_call_operand.vmem [shape: bf16[32,32], index: 20, kind: input, shape index: {}]
  %s21 = inlined_call_operand.vmem [shape: f32[32,1], index: 21, kind: input, shape index: {}]
  %s22 = inlined_call_operand.hbm [shape: f32[2,32,256], index: 22, kind: output, shape index: {}]
  %s23 = sld [smem:[#allocation0]]
  $region141: #{tpu_custom_call.1} parent=0
    _
  %s25 = ssub.s32 1, %s23
  %s26 = scalar_select 0, %s25, %s23
  $region1: #{tpu_custom_call.1} parent=0
    #allocation3 [shape = 'u8[131072]{0}', space=vmem, size = 0x20000, scoped, tag = 'input window, operand 0']
    #allocation4 [shape = 's32[2]{0}', space=sflag, size = 0x8, scoped, tag = 'scoped memory for tpu_custom_call.1']
    #allocation5 [shape = 's32[2]{0}', space=sflag, size = 0x8, scoped, tag = 'scoped memory for tpu_custom_call.1']
    #allocation6 [shape = 'u8[65536]{0}', space=vmem, size = 0x10000, scoped, tag = 'input window, operand 1']
    #allocation7 [shape = 's32[2]{0}', space=sflag, size = 0x8, scoped, tag = 'scoped memory for tpu_custom_call.1']
    #allocation8 [shape = 'u8[131072]{0}', space=vmem, size = 0x20000, scoped, tag = 'input window, operand 2']
    #allocation9 [shape = 'u8[32768]{0}', space=vmem, size = 0x8000, scoped, tag = 'output window, operand 0']
    %27 = vsyncpa [#allocation4], 0
    %s28 = scalar_lea.sflag [#allocation4], 1
    %29 = vsyncpa %s28, 0
    %30 = vsyncpa [#allocation7], 0
    %s31 = scalar_lea.sflag [#allocation7], 1
    %32 = vsyncpa %s31, 0
    %33 = vsyncpa [#allocation5], 0
    %s34 = scalar_lea.sflag [#allocation5], 1
    %35 = vsyncpa %s34, 0
    loop: start=0, step=1, limit=10
    $region2: #{tpu_custom_call.1} parent=1 // loop_pre_header
      _
    $region3: #{tpu_custom_call.1} parent=1 // loop_header
      %s37 = sphi 0, %s41
      %p38 = scmp.ge.s32.totalorder %s37, 10
      %s44 = sphi 0, %s63
      %s45 = sphi 0, %s59
      %s46 = sphi 0, %s55
      %s47 = sphi 0, %s44
      %s48 = sphi 0, %s45
      %s49 = sphi 0, %s46
      %s50 = sphi 0, %s47
      %s51 = sphi 0, %s48
      %s52 = sphi 0, %s49
      %s68 = sphi 0, %s70
      %s71 = sphi 0, %s68
      %s72 = sphi 0, %s71
      %s88 = sphi 0, %s72
      %s98 = sphi 0, %s100
      %s101 = sphi 0, %s98
      %s102 = sphi 0, %s101
      %s118 = sphi 0, %s102
      %s126 = sphi 0, %s128
      %s129 = sphi 0, %s126
      %s130 = sphi 0, %s129
      %s146 = sphi 0, %s130
      %s154 = sphi 0, %s156
      %s157 = sphi 0, %s154
      %s158 = sphi 0, %s157
      %s174 = sphi 0, %s158
      %s180 = sphi 0, %s182
      %s183 = sphi 0, %s180
      %s184 = sphi 0, %s183
      %s200 = sphi 0, %s184
      %s208 = sphi 0, %s210
      %s211 = sphi 0, %s208
      %s212 = sphi 0, %s211
      %s228 = sphi 0, %s212
      %s232 = sphi 0, %s232
      %s234 = sphi 0, %s232
      %s235 = sphi 0, %s234
      %s249 = sphi 0, %s235
      %s253 = sphi 0, %s253
      %s255 = sphi 0, %s253
      %s256 = sphi 0, %s255
      %s270 = sphi 0, %s256
      %s274 = sphi 0, %s274
      %s276 = sphi 0, %s274
      %s277 = sphi 0, %s276
      %s291 = sphi 0, %s277
      %s295 = sphi 0, %s295
      %s297 = sphi 0, %s295
      %s298 = sphi 0, %s297
      %s312 = sphi 0, %s298
      %s316 = sphi 0, %s316
      %s318 = sphi 0, %s316
      %s319 = sphi 0, %s318
      %s333 = sphi 0, %s319
      %s337 = sphi 0, %s337
      %s339 = sphi 0, %s337
      %s340 = sphi 0, %s339
      %s354 = sphi 0, %s340
      %s358 = sphi 0, %s358
      %s360 = sphi 0, %s358
      %s361 = sphi 0, %s360
      %s375 = sphi 0, %s361
      %s379 = sphi 0, %s379
      %s381 = sphi 0, %s379
      %s382 = sphi 0, %s381
      %s396 = sphi 0, %s382
      %s400 = sphi 0, %s400
      %s402 = sphi 0, %s400
      %s403 = sphi 0, %s402
      %s417 = sphi 0, %s403
      %s421 = sphi 0, %s421
      %s423 = sphi 0, %s421
      %s424 = sphi 0, %s423
      %s438 = sphi 0, %s424
      %s442 = sphi 0, %s442
      %s444 = sphi 0, %s442
      %s445 = sphi 0, %s444
      %s459 = sphi 0, %s445
      %s463 = sphi 0, %s463
      %s465 = sphi 0, %s463
      %s466 = sphi 0, %s465
      %s480 = sphi 0, %s466
      %s484 = sphi 0, %s484
      %s486 = sphi 0, %s484
      %s487 = sphi 0, %s486
      %s501 = sphi 0, %s487
      %s505 = sphi 0, %s505
      %s507 = sphi 0, %s505
      %s508 = sphi 0, %s507
      %s522 = sphi 0, %s508
      %s526 = sphi 0, %s526
      %s528 = sphi 0, %s526
      %s529 = sphi 0, %s528
      %s543 = sphi 0, %s529
      %s547 = sphi 0, %s547
      %s549 = sphi 0, %s547
      %s550 = sphi 0, %s549
      %s564 = sphi 0, %s550
      %s572 = sphi 0, %s574
      %s575 = sphi 0, %s572
      %s576 = sphi 0, %s575
      %s592 = sphi 0, %s576
    $region4: #{tpu_custom_call.1} parent=1 // loop_header_branch
      %40 = sbr.rel (%p38) target = $region8
    $region5: #{tpu_custom_call.1} parent=1 // loop_body
      %s42 = ssub.s32 %s37, 1
      %s43 = ssub.s32 %s37, 2
      %s53 = sadd.s32 1, %s46
      %p54 = scmp.ge.s32.totalorder %s53, 2
      %s55 = scalar_select %p54, 0, %s53
      %s56 = sadd.s32 1, %s45
      %s57 = scalar_select %p54, %s56, %s45
      %p58 = scmp.ge.s32.totalorder %s57, 2
      %s59 = scalar_select %p58, 0, %s57
      %s60 = sadd.s32 1, %s44
      %s61 = scalar_select %p58, %s60, %s44
      %p62 = scmp.ge.s32.totalorder %s61, 2
      %s63 = scalar_select %p62, 0, %s61
      %s64 = ssub.s32 %s44, %s63
      %s65 = ssub.s32 %s46, %s55
      %s66 = sor.u32 %s64, %s65
      %p67 = scmp.eq.s32.totalorder %s66, 0
      %s69 = sadd.s32 %s68, 1
      %s70 = scalar_select %p67, %s68, %s69
      %p73 = pneg %p67
      %p74 = scmp.eq.s32.totalorder %s37, 7
      %p75 = por %p73, %p74
      %p76 = scmp.ne.s32.totalorder %s68, %s71
      %p77 = scmp.eq.s32.totalorder %s37, 0
      %p78 = por %p76, %p77
      %p79 = scmp.ne.s32.totalorder %s68, %s71
      %p80 = scmp.eq.s32.totalorder %s42, 7
      %p81 = por %p79, %p80
      %p82 = scmp.ne.s32.totalorder %s71, %s72
      %p83 = scmp.eq.s32.totalorder %s42, 0
      %p84 = por %p82, %p83
      %p85 = scmp.ne.s32.totalorder %s71, %s72
      %p86 = scmp.eq.s32.totalorder %s43, 7
      %p87 = por %p85, %p86
      %p89 = scmp.ne.s32.totalorder %s72, %s88
      %p90 = scmp.eq.s32.totalorder %s43, 0
      %p91 = por %p89, %p90
      %s92 = ssub.s32 %s44, %s63
      %s93 = ssub.s32 %s46, %s55
      %s94 = sor.u32 %s92, %s93
      %s95 = ssub.s32 %s45, %s59
      %s96 = sor.u32 %s94, %s95
      %p97 = scmp.eq.s32.totalorder %s96, 0
      %s99 = sadd.s32 %s98, 1
      %s100 = scalar_select %p97, %s98, %s99
      %p103 = pneg %p97
      %p104 = scmp.eq.s32.totalorder %s37, 7
      %p105 = por %p103, %p104
      %p106 = scmp.ne.s32.totalorder %s98, %s101
      %p107 = scmp.eq.s32.totalorder %s37, 0
      %p108 = por %p106, %p107
      %p109 = scmp.ne.s32.totalorder %s98, %s101
      %p110 = scmp.eq.s32.totalorder %s42, 7
      %p111 = por %p109, %p110
      %p112 = scmp.ne.s32.totalorder %s101, %s102
      %p113 = scmp.eq.s32.totalorder %s42, 0
      %p114 = por %p112, %p113
      %p115 = scmp.ne.s32.totalorder %s101, %s102
      %p116 = scmp.eq.s32.totalorder %s43, 7
      %p117 = por %p115, %p116
      %p119 = scmp.ne.s32.totalorder %s102, %s118
      %p120 = scmp.eq.s32.totalorder %s43, 0
      %p121 = por %p119, %p120
      %s122 = ssub.s32 %s44, %s63
      %s123 = ssub.s32 %s45, %s59
      %s124 = sor.u32 %s122, %s123
      %p125 = scmp.eq.s32.totalorder %s124, 0
      %s127 = sadd.s32 %s126, 1
      %s128 = scalar_select %p125, %s126, %s127
      %p131 = pneg %p125
      %p132 = scmp.eq.s32.totalorder %s37, 7
      %p133 = por %p131, %p132
      %p134 = scmp.ne.s32.totalorder %s126, %s129
      %p135 = scmp.eq.s32.totalorder %s37, 0
      %p136 = por %p134, %p135
      %p137 = scmp.ne.s32.totalorder %s126, %s129
      %p138 = scmp.eq.s32.totalorder %s42, 7
      %p139 = por %p137, %p138
      %p140 = scmp.ne.s32.totalorder %s129, %s130
      %p141 = scmp.eq.s32.totalorder %s42, 0
      %p142 = por %p140, %p141
      %p143 = scmp.ne.s32.totalorder %s129, %s130
      %p144 = scmp.eq.s32.totalorder %s43, 7
      %p145 = por %p143, %p144
      %p147 = scmp.ne.s32.totalorder %s130, %s146
      %p148 = scmp.eq.s32.totalorder %s43, 0
      %p149 = por %p147, %p148
      %s150 = ssub.s32 %s44, %s63
      %s151 = ssub.s32 %s46, %s55
      %s152 = sor.u32 %s150, %s151
      %p153 = scmp.eq.s32.totalorder %s152, 0
      %s155 = sadd.s32 %s154, 1
      %s156 = scalar_select %p153, %s154, %s155
      %p159 = pneg %p153
      %p160 = scmp.eq.s32.totalorder %s37, 7
      %p161 = por %p159, %p160
      %p162 = scmp.ne.s32.totalorder %s154, %s157
      %p163 = scmp.eq.s32.totalorder %s37, 0
      %p164 = por %p162, %p163
      %p165 = scmp.ne.s32.totalorder %s154, %s157
      %p166 = scmp.eq.s32.totalorder %s42, 7
      %p167 = por %p165, %p166
      %p168 = scmp.ne.s32.totalorder %s157, %s158
      %p169 = scmp.eq.s32.totalorder %s42, 0
      %p170 = por %p168, %p169
      %p171 = scmp.ne.s32.totalorder %s157, %s158
      %p172 = scmp.eq.s32.totalorder %s43, 7
      %p173 = por %p171, %p172
      %p175 = scmp.ne.s32.totalorder %s158, %s174
      %p176 = scmp.eq.s32.totalorder %s43, 0
      %p177 = por %p175, %p176
      %s178 = ssub.s32 %s44, %s63
      %p179 = scmp.eq.s32.totalorder %s178, 0
      %s181 = sadd.s32 %s180, 1
      %s182 = scalar_select %p179, %s180, %s181
      %p185 = pneg %p179
      %p186 = scmp.eq.s32.totalorder %s37, 7
      %p187 = por %p185, %p186
      %p188 = scmp.ne.s32.totalorder %s180, %s183
      %p189 = scmp.eq.s32.totalorder %s37, 0
      %p190 = por %p188, %p189
      %p191 = scmp.ne.s32.totalorder %s180, %s183
      %p192 = scmp.eq.s32.totalorder %s42, 7
      %p193 = por %p191, %p192
      %p194 = scmp.ne.s32.totalorder %s183, %s184
      %p195 = scmp.eq.s32.totalorder %s42, 0
      %p196 = por %p194, %p195
      %p197 = scmp.ne.s32.totalorder %s183, %s184
      %p198 = scmp.eq.s32.totalorder %s43, 7
      %p199 = por %p197, %p198
      %p201 = scmp.ne.s32.totalorder %s184, %s200
      %p202 = scmp.eq.s32.totalorder %s43, 0
      %p203 = por %p201, %p202
      %s204 = ssub.s32 %s44, %s63
      %s205 = ssub.s32 %s45, %s59
      %s206 = sor.u32 %s204, %s205
      %p207 = scmp.eq.s32.totalorder %s206, 0
      %s209 = sadd.s32 %s208, 1
      %s210 = scalar_select %p207, %s208, %s209
      %p213 = pneg %p207
      %p214 = scmp.eq.s32.totalorder %s37, 7
      %p215 = por %p213, %p214
      %p216 = scmp.ne.s32.totalorder %s208, %s211
      %p217 = scmp.eq.s32.totalorder %s37, 0
      %p218 = por %p216, %p217
      %p219 = scmp.ne.s32.totalorder %s208, %s211
      %p220 = scmp.eq.s32.totalorder %s42, 7
      %p221 = por %p219, %p220
      %p222 = scmp.ne.s32.totalorder %s211, %s212
      %p223 = scmp.eq.s32.totalorder %s42, 0
      %p224 = por %p222, %p223
      %p225 = scmp.ne.s32.totalorder %s211, %s212
      %p226 = scmp.eq.s32.totalorder %s43, 7
      %p227 = por %p225, %p226
      %p229 = scmp.ne.s32.totalorder %s212, %s228
      %p230 = scmp.eq.s32.totalorder %s43, 0
      %p231 = por %p229, %p230
      %s233 = sadd.s32 %s232, 1
      %p236 = scmp.eq.s32.totalorder %s37, 7
      %p237 = scmp.ne.s32.totalorder %s232, %s234
      %p238 = scmp.eq.s32.totalorder %s37, 0
      %p239 = por %p237, %p238
      %p240 = scmp.ne.s32.totalorder %s232, %s234
      %p241 = scmp.eq.s32.totalorder %s42, 7
      %p242 = por %p240, %p241
      %p243 = scmp.ne.s32.totalorder %s234, %s235
      %p244 = scmp.eq.s32.totalorder %s42, 0
      %p245 = por %p243, %p244
      %p246 = scmp.ne.s32.totalorder %s234, %s235
      %p247 = scmp.eq.s32.totalorder %s43, 7
      %p248 = por %p246, %p247
      %p250 = scmp.ne.s32.totalorder %s235, %s249
      %p251 = scmp.eq.s32.totalorder %s43, 0
      %p252 = por %p250, %p251
      %s254 = sadd.s32 %s253, 1
      %p257 = scmp.eq.s32.totalorder %s37, 7
      %p258 = scmp.ne.s32.totalorder %s253, %s255
      %p259 = scmp.eq.s32.totalorder %s37, 0
      %p260 = por %p258, %p259
      %p261 = scmp.ne.s32.totalorder %s253, %s255
      %p262 = scmp.eq.s32.totalorder %s42, 7
      %p263 = por %p261, %p262
      %p264 = scmp.ne.s32.totalorder %s255, %s256
      %p265 = scmp.eq.s32.totalorder %s42, 0
      %p266 = por %p264, %p265
      %p267 = scmp.ne.s32.totalorder %s255, %s256
      %p268 = scmp.eq.s32.totalorder %s43, 7
      %p269 = por %p267, %p268
      %p271 = scmp.ne.s32.totalorder %s256, %s270
      %p272 = scmp.eq.s32.totalorder %s43, 0
      %p273 = por %p271, %p272
      %s275 = sadd.s32 %s274, 1
      %p278 = scmp.eq.s32.totalorder %s37, 7
      %p279 = scmp.ne.s32.totalorder %s274, %s276
      %p280 = scmp.eq.s32.totalorder %s37, 0
      %p281 = por %p279, %p280
      %p282 = scmp.ne.s32.totalorder %s274, %s276
      %p283 = scmp.eq.s32.totalorder %s42, 7
      %p284 = por %p282, %p283
      %p285 = scmp.ne.s32.totalorder %s276, %s277
      %p286 = scmp.eq.s32.totalorder %s42, 0
      %p287 = por %p285, %p286
      %p288 = scmp.ne.s32.totalorder %s276, %s277
      %p289 = scmp.eq.s32.totalorder %s43, 7
      %p290 = por %p288, %p289
      %p292 = scmp.ne.s32.totalorder %s277, %s291
      %p293 = scmp.eq.s32.totalorder %s43, 0
      %p294 = por %p292, %p293
      %s296 = sadd.s32 %s295, 1
      %p299 = scmp.eq.s32.totalorder %s37, 7
      %p300 = scmp.ne.s32.totalorder %s295, %s297
      %p301 = scmp.eq.s32.totalorder %s37, 0
      %p302 = por %p300, %p301
      %p303 = scmp.ne.s32.totalorder %s295, %s297
      %p304 = scmp.eq.s32.totalorder %s42, 7
      %p305 = por %p303, %p304
      %p306 = scmp.ne.s32.totalorder %s297, %s298
      %p307 = scmp.eq.s32.totalorder %s42, 0
      %p308 = por %p306, %p307
      %p309 = scmp.ne.s32.totalorder %s297, %s298
      %p310 = scmp.eq.s32.totalorder %s43, 7
      %p311 = por %p309, %p310
      %p313 = scmp.ne.s32.totalorder %s298, %s312
      %p314 = scmp.eq.s32.totalorder %s43, 0
      %p315 = por %p313, %p314
      %s317 = sadd.s32 %s316, 1
      %p320 = scmp.eq.s32.totalorder %s37, 7
      %p321 = scmp.ne.s32.totalorder %s316, %s318
      %p322 = scmp.eq.s32.totalorder %s37, 0
      %p323 = por %p321, %p322
      %p324 = scmp.ne.s32.totalorder %s316, %s318
      %p325 = scmp.eq.s32.totalorder %s42, 7
      %p326 = por %p324, %p325
      %p327 = scmp.ne.s32.totalorder %s318, %s319
      %p328 = scmp.eq.s32.totalorder %s42, 0
      %p329 = por %p327, %p328
      %p330 = scmp.ne.s32.totalorder %s318, %s319
      %p331 = scmp.eq.s32.totalorder %s43, 7
      %p332 = por %p330, %p331
      %p334 = scmp.ne.s32.totalorder %s319, %s333
      %p335 = scmp.eq.s32.totalorder %s43, 0
      %p336 = por %p334, %p335
      %s338 = sadd.s32 %s337, 1
      %p341 = scmp.eq.s32.totalorder %s37, 7
      %p342 = scmp.ne.s32.totalorder %s337, %s339
      %p343 = scmp.eq.s32.totalorder %s37, 0
      %p344 = por %p342, %p343
      %p345 = scmp.ne.s32.totalorder %s337, %s339
      %p346 = scmp.eq.s32.totalorder %s42, 7
      %p347 = por %p345, %p346
      %p348 = scmp.ne.s32.totalorder %s339, %s340
      %p349 = scmp.eq.s32.totalorder %s42, 0
      %p350 = por %p348, %p349
      %p351 = scmp.ne.s32.totalorder %s339, %s340
      %p352 = scmp.eq.s32.totalorder %s43, 7
      %p353 = por %p351, %p352
      %p355 = scmp.ne.s32.totalorder %s340, %s354
      %p356 = scmp.eq.s32.totalorder %s43, 0
      %p357 = por %p355, %p356
      %s359 = sadd.s32 %s358, 1
      %p362 = scmp.eq.s32.totalorder %s37, 7
      %p363 = scmp.ne.s32.totalorder %s358, %s360
      %p364 = scmp.eq.s32.totalorder %s37, 0
      %p365 = por %p363, %p364
      %p366 = scmp.ne.s32.totalorder %s358, %s360
      %p367 = scmp.eq.s32.totalorder %s42, 7
      %p368 = por %p366, %p367
      %p369 = scmp.ne.s32.totalorder %s360, %s361
      %p370 = scmp.eq.s32.totalorder %s42, 0
      %p371 = por %p369, %p370
      %p372 = scmp.ne.s32.totalorder %s360, %s361
      %p373 = scmp.eq.s32.totalorder %s43, 7
      %p374 = por %p372, %p373
      %p376 = scmp.ne.s32.totalorder %s361, %s375
      %p377 = scmp.eq.s32.totalorder %s43, 0
      %p378 = por %p376, %p377
      %s380 = sadd.s32 %s379, 1
      %p383 = scmp.eq.s32.totalorder %s37, 7
      %p384 = scmp.ne.s32.totalorder %s379, %s381
      %p385 = scmp.eq.s32.totalorder %s37, 0
      %p386 = por %p384, %p385
      %p387 = scmp.ne.s32.totalorder %s379, %s381
      %p388 = scmp.eq.s32.totalorder %s42, 7
      %p389 = por %p387, %p388
      %p390 = scmp.ne.s32.totalorder %s381, %s382
      %p391 = scmp.eq.s32.totalorder %s42, 0
      %p392 = por %p390, %p391
      %p393 = scmp.ne.s32.totalorder %s381, %s382
      %p394 = scmp.eq.s32.totalorder %s43, 7
      %p395 = por %p393, %p394
      %p397 = scmp.ne.s32.totalorder %s382, %s396
      %p398 = scmp.eq.s32.totalorder %s43, 0
      %p399 = por %p397, %p398
      %s401 = sadd.s32 %s400, 1
      %p404 = scmp.eq.s32.totalorder %s37, 7
      %p405 = scmp.ne.s32.totalorder %s400, %s402
      %p406 = scmp.eq.s32.totalorder %s37, 0
      %p407 = por %p405, %p406
      %p408 = scmp.ne.s32.totalorder %s400, %s402
      %p409 = scmp.eq.s32.totalorder %s42, 7
      %p410 = por %p408, %p409
      %p411 = scmp.ne.s32.totalorder %s402, %s403
      %p412 = scmp.eq.s32.totalorder %s42, 0
      %p413 = por %p411, %p412
      %p414 = scmp.ne.s32.totalorder %s402, %s403
      %p415 = scmp.eq.s32.totalorder %s43, 7
      %p416 = por %p414, %p415
      %p418 = scmp.ne.s32.totalorder %s403, %s417
      %p419 = scmp.eq.s32.totalorder %s43, 0
      %p420 = por %p418, %p419
      %s422 = sadd.s32 %s421, 1
      %p425 = scmp.eq.s32.totalorder %s37, 7
      %p426 = scmp.ne.s32.totalorder %s421, %s423
      %p427 = scmp.eq.s32.totalorder %s37, 0
      %p428 = por %p426, %p427
      %p429 = scmp.ne.s32.totalorder %s421, %s423
      %p430 = scmp.eq.s32.totalorder %s42, 7
      %p431 = por %p429, %p430
      %p432 = scmp.ne.s32.totalorder %s423, %s424
      %p433 = scmp.eq.s32.totalorder %s42, 0
      %p434 = por %p432, %p433
      %p435 = scmp.ne.s32.totalorder %s423, %s424
      %p436 = scmp.eq.s32.totalorder %s43, 7
      %p437 = por %p435, %p436
      %p439 = scmp.ne.s32.totalorder %s424, %s438
      %p440 = scmp.eq.s32.totalorder %s43, 0
      %p441 = por %p439, %p440
      %s443 = sadd.s32 %s442, 1
      %p446 = scmp.eq.s32.totalorder %s37, 7
      %p447 = scmp.ne.s32.totalorder %s442, %s444
      %p448 = scmp.eq.s32.totalorder %s37, 0
      %p449 = por %p447, %p448
      %p450 = scmp.ne.s32.totalorder %s442, %s444
      %p451 = scmp.eq.s32.totalorder %s42, 7
      %p452 = por %p450, %p451
      %p453 = scmp.ne.s32.totalorder %s444, %s445
      %p454 = scmp.eq.s32.totalorder %s42, 0
      %p455 = por %p453, %p454
      %p456 = scmp.ne.s32.totalorder %s444, %s445
      %p457 = scmp.eq.s32.totalorder %s43, 7
      %p458 = por %p456, %p457
      %p460 = scmp.ne.s32.totalorder %s445, %s459
      %p461 = scmp.eq.s32.totalorder %s43, 0
      %p462 = por %p460, %p461
      %s464 = sadd.s32 %s463, 1
      %p467 = scmp.eq.s32.totalorder %s37, 7
      %p468 = scmp.ne.s32.totalorder %s463, %s465
      %p469 = scmp.eq.s32.totalorder %s37, 0
      %p470 = por %p468, %p469
      %p471 = scmp.ne.s32.totalorder %s463, %s465
      %p472 = scmp.eq.s32.totalorder %s42, 7
      %p473 = por %p471, %p472
      %p474 = scmp.ne.s32.totalorder %s465, %s466
      %p475 = scmp.eq.s32.totalorder %s42, 0
      %p476 = por %p474, %p475
      %p477 = scmp.ne.s32.totalorder %s465, %s466
      %p478 = scmp.eq.s32.totalorder %s43, 7
      %p479 = por %p477, %p478
      %p481 = scmp.ne.s32.totalorder %s466, %s480
      %p482 = scmp.eq.s32.totalorder %s43, 0
      %p483 = por %p481, %p482
      %s485 = sadd.s32 %s484, 1
      %p488 = scmp.eq.s32.totalorder %s37, 7
      %p489 = scmp.ne.s32.totalorder %s484, %s486
      %p490 = scmp.eq.s32.totalorder %s37, 0
      %p491 = por %p489, %p490
      %p492 = scmp.ne.s32.totalorder %s484, %s486
      %p493 = scmp.eq.s32.totalorder %s42, 7
      %p494 = por %p492, %p493
      %p495 = scmp.ne.s32.totalorder %s486, %s487
      %p496 = scmp.eq.s32.totalorder %s42, 0
      %p497 = por %p495, %p496
      %p498 = scmp.ne.s32.totalorder %s486, %s487
      %p499 = scmp.eq.s32.totalorder %s43, 7
      %p500 = por %p498, %p499
      %p502 = scmp.ne.s32.totalorder %s487, %s501
      %p503 = scmp.eq.s32.totalorder %s43, 0
      %p504 = por %p502, %p503
      %s506 = sadd.s32 %s505, 1
      %p509 = scmp.eq.s32.totalorder %s37, 7
      %p510 = scmp.ne.s32.totalorder %s505, %s507
      %p511 = scmp.eq.s32.totalorder %s37, 0
      %p512 = por %p510, %p511
      %p513 = scmp.ne.s32.totalorder %s505, %s507
      %p514 = scmp.eq.s32.totalorder %s42, 7
      %p515 = por %p513, %p514
      %p516 = scmp.ne.s32.totalorder %s507, %s508
      %p517 = scmp.eq.s32.totalorder %s42, 0
      %p518 = por %p516, %p517
      %p519 = scmp.ne.s32.totalorder %s507, %s508
      %p520 = scmp.eq.s32.totalorder %s43, 7
      %p521 = por %p519, %p520
      %p523 = scmp.ne.s32.totalorder %s508, %s522
      %p524 = scmp.eq.s32.totalorder %s43, 0
      %p525 = por %p523, %p524
      %s527 = sadd.s32 %s526, 1
      %p530 = scmp.eq.s32.totalorder %s37, 7
      %p531 = scmp.ne.s32.totalorder %s526, %s528
      %p532 = scmp.eq.s32.totalorder %s37, 0
      %p533 = por %p531, %p532
      %p534 = scmp.ne.s32.totalorder %s526, %s528
      %p535 = scmp.eq.s32.totalorder %s42, 7
      %p536 = por %p534, %p535
      %p537 = scmp.ne.s32.totalorder %s528, %s529
      %p538 = scmp.eq.s32.totalorder %s42, 0
      %p539 = por %p537, %p538
      %p540 = scmp.ne.s32.totalorder %s528, %s529
      %p541 = scmp.eq.s32.totalorder %s43, 7
      %p542 = por %p540, %p541
      %p544 = scmp.ne.s32.totalorder %s529, %s543
      %p545 = scmp.eq.s32.totalorder %s43, 0
      %p546 = por %p544, %p545
      %s548 = sadd.s32 %s547, 1
      %p551 = scmp.eq.s32.totalorder %s37, 7
      %p552 = scmp.ne.s32.totalorder %s547, %s549
      %p553 = scmp.eq.s32.totalorder %s37, 0
      %p554 = por %p552, %p553
      %p555 = scmp.ne.s32.totalorder %s547, %s549
      %p556 = scmp.eq.s32.totalorder %s42, 7
      %p557 = por %p555, %p556
      %p558 = scmp.ne.s32.totalorder %s549, %s550
      %p559 = scmp.eq.s32.totalorder %s42, 0
      %p560 = por %p558, %p559
      %p561 = scmp.ne.s32.totalorder %s549, %s550
      %p562 = scmp.eq.s32.totalorder %s43, 7
      %p563 = por %p561, %p562
      %p565 = scmp.ne.s32.totalorder %s550, %s564
      %p566 = scmp.eq.s32.totalorder %s43, 0
      %p567 = por %p565, %p566
      %s568 = ssub.s32 %s44, %s63
      %s569 = ssub.s32 %s45, %s59
      %s570 = sor.u32 %s568, %s569
      %p571 = scmp.eq.s32.totalorder %s570, 0
      %s573 = sadd.s32 %s572, 1
      %s574 = scalar_select %p571, %s572, %s573
      %p577 = pneg %p571
      %p578 = scmp.eq.s32.totalorder %s37, 7
      %p579 = por %p577, %p578
      %p580 = scmp.ne.s32.totalorder %s572, %s575
      %p581 = scmp.eq.s32.totalorder %s37, 0
      %p582 = por %p580, %p581
      %p583 = scmp.ne.s32.totalorder %s572, %s575
      %p584 = scmp.eq.s32.totalorder %s42, 7
      %p585 = por %p583, %p584
      %p586 = scmp.ne.s32.totalorder %s575, %s576
      %p587 = scmp.eq.s32.totalorder %s42, 0
      %p588 = por %p586, %p587
      %p589 = scmp.ne.s32.totalorder %s575, %s576
      %p590 = scmp.eq.s32.totalorder %s43, 7
      %p591 = por %p589, %p590
      %p593 = scmp.ne.s32.totalorder %s576, %s592
      %p594 = scmp.eq.s32.totalorder %s43, 0
      %p595 = por %p593, %p594
      %p596 = scmp.le.s32.totalorder 1, %s37
      %p597 = scmp.lt.s32.totalorder %s37, 9
      %p598 = pnand %p596, %p597
      %p599 = pneg %p598
      // Predicated region
      $region9: #{tpu_custom_call.1} parent=5 // pred_check
        _
      $region10: #{tpu_custom_call.1} parent=5 // pred_check_branch
        %601 = sbr.rel (%p598) target = $region12
      $region11: #{tpu_custom_call.1} parent=5 // pred_region
        %s602 = ssub.s32 %s37, 1
        // Predicated region
        $region13: #{tpu_custom_call.1} parent=11 // pred_check
          %p603 = pneg %p245
        $region14: #{tpu_custom_call.1} parent=11 // pred_check_branch
          %605 = sbr.rel (%p603) target = $region16
        $region15: #{tpu_custom_call.1} parent=11 // pred_region
          _
        $region16: #{tpu_custom_call.1} parent=11 // pred_fallthru
          _
        // Predicated region
        $region17: #{tpu_custom_call.1} parent=11 // pred_check
          %p606 = pneg %p266
        $region18: #{tpu_custom_call.1} parent=11 // pred_check_branch
          %608 = sbr.rel (%p606) target = $region20
        $region19: #{tpu_custom_call.1} parent=11 // pred_region
          _
        $region20: #{tpu_custom_call.1} parent=11 // pred_fallthru
          _
        // Predicated region
        $region21: #{tpu_custom_call.1} parent=11 // pred_check
          %p609 = pneg %p287
        $region22: #{tpu_custom_call.1} parent=11 // pred_check_branch
          %611 = sbr.rel (%p609) target = $region24
        $region23: #{tpu_custom_call.1} parent=11 // pred_region
          _
        $region24: #{tpu_custom_call.1} parent=11 // pred_fallthru
          _
        // Predicated region
        $region25: #{tpu_custom_call.1} parent=11 // pred_check
          %p612 = pneg %p308
        $region26: #{tpu_custom_call.1} parent=11 // pred_check_branch
          %614 = sbr.rel (%p612) target = $region28
        $region27: #{tpu_custom_call.1} parent=11 // pred_region
          _
        $region28: #{tpu_custom_call.1} parent=11 // pred_fallthru
          _
        // Predicated region
        $region29: #{tpu_custom_call.1} parent=11 // pred_check
          %p615 = pneg %p329
        $region30: #{tpu_custom_call.1} parent=11 // pred_check_branch
          %617 = sbr.rel (%p615) target = $region32
        $region31: #{tpu_custom_call.1} parent=11 // pred_region
          _
        $region32: #{tpu_custom_call.1} parent=11 // pred_fallthru
          _
        // Predicated region
        $region33: #{tpu_custom_call.1} parent=11 // pred_check
          %p618 = pneg %p350
        $region34: #{tpu_custom_call.1} parent=11 // pred_check_branch
          %620 = sbr.rel (%p618) target = $region36
        $region35: #{tpu_custom_call.1} parent=11 // pred_region
          _
        $region36: #{tpu_custom_call.1} parent=11 // pred_fallthru
          _
        // Predicated region
        $region37: #{tpu_custom_call.1} parent=11 // pred_check
          %p621 = pneg %p371
        $region38: #{tpu_custom_call.1} parent=11 // pred_check_branch
          %623 = sbr.rel (%p621) target = $region40
        $region39: #{tpu_custom_call.1} parent=11 // pred_region
          _
        $region40: #{tpu_custom_call.1} parent=11 // pred_fallthru
          _
        // Predicated region
        $region41: #{tpu_custom_call.1} parent=11 // pred_check
          %p624 = pneg %p392
        $region42: #{tpu_custom_call.1} parent=11 // pred_check_branch
          %626 = sbr.rel (%p624) target = $region44
        $region43: #{tpu_custom_call.1} parent=11 // pred_region
          _
        $region44: #{tpu_custom_call.1} parent=11 // pred_fallthru
          _
        // Predicated region
        $region45: #{tpu_custom_call.1} parent=11 // pred_check
          %p627 = pneg %p413
        $region46: #{tpu_custom_call.1} parent=11 // pred_check_branch
          %629 = sbr.rel (%p627) target = $region48
        $region47: #{tpu_custom_call.1} parent=11 // pred_region
          _
        $region48: #{tpu_custom_call.1} parent=11 // pred_fallthru
          _
        // Predicated region
        $region49: #{tpu_custom_call.1} parent=11 // pred_check
          %p630 = pneg %p434
        $region50: #{tpu_custom_call.1} parent=11 // pred_check_branch
          %632 = sbr.rel (%p630) target = $region52
        $region51: #{tpu_custom_call.1} parent=11 // pred_region
          _
        $region52: #{tpu_custom_call.1} parent=11 // pred_fallthru
          _
        // Predicated region
        $region53: #{tpu_custom_call.1} parent=11 // pred_check
          %p633 = pneg %p455
        $region54: #{tpu_custom_call.1} parent=11 // pred_check_branch
          %635 = sbr.rel (%p633) target = $region56
        $region55: #{tpu_custom_call.1} parent=11 // pred_region
          _
        $region56: #{tpu_custom_call.1} parent=11 // pred_fallthru
          _
        // Predicated region
        $region57: #{tpu_custom_call.1} parent=11 // pred_check
          %p636 = pneg %p476
        $region58: #{tpu_custom_call.1} parent=11 // pred_check_branch
          %638 = sbr.rel (%p636) target = $region60
        $region59: #{tpu_custom_call.1} parent=11 // pred_region
          _
        $region60: #{tpu_custom_call.1} parent=11 // pred_fallthru
          _
        // Predicated region
        $region61: #{tpu_custom_call.1} parent=11 // pred_check
          %p639 = pneg %p497
        $region62: #{tpu_custom_call.1} parent=11 // pred_check_branch
          %641 = sbr.rel (%p639) target = $region64
        $region63: #{tpu_custom_call.1} parent=11 // pred_region
          _
        $region64: #{tpu_custom_call.1} parent=11 // pred_fallthru
          _
        // Predicated region
        $region65: #{tpu_custom_call.1} parent=11 // pred_check
          %p642 = pneg %p518
        $region66: #{tpu_custom_call.1} parent=11 // pred_check_branch
          %644 = sbr.rel (%p642) target = $region68
        $region67: #{tpu_custom_call.1} parent=11 // pred_region
          _
        $region68: #{tpu_custom_call.1} parent=11 // pred_fallthru
          _
        // Predicated region
        $region69: #{tpu_custom_call.1} parent=11 // pred_check
          %p645 = pneg %p539
        $region70: #{tpu_custom_call.1} parent=11 // pred_check_branch
          %647 = sbr.rel (%p645) target = $region72
        $region71: #{tpu_custom_call.1} parent=11 // pred_region
          _
        $region72: #{tpu_custom_call.1} parent=11 // pred_fallthru
          _
        // Predicated region
        $region73: #{tpu_custom_call.1} parent=11 // pred_check
          %p648 = pneg %p560
        $region74: #{tpu_custom_call.1} parent=11 // pred_check_branch
          %650 = sbr.rel (%p648) target = $region76
        $region75: #{tpu_custom_call.1} parent=11 // pred_region
          _
        $region76: #{tpu_custom_call.1} parent=11 // pred_fallthru
          _
      $region12: #{tpu_custom_call.1} parent=5 // pred_fallthru
        _
      %p651 = scmp.lt.s32.totalorder %s37, 8
      // Predicated region
      $region77: #{tpu_custom_call.1} parent=5 // pred_check
        %p652 = pneg %p651
      $region78: #{tpu_custom_call.1} parent=5 // pred_check_branch
        %654 = sbr.rel (%p652) target = $region80
      $region79: #{tpu_custom_call.1} parent=5 // pred_region
        // Predicated region
        $region81: #{tpu_custom_call.1} parent=79 // pred_check
          %p655 = pneg %p78
        $region82: #{tpu_custom_call.1} parent=79 // pred_check_branch
          %657 = sbr.rel (%p655) target = $region84
        $region83: #{tpu_custom_call.1} parent=79 // pred_region
          %s658 = sand.u32 %s68, 1
          %s659 = scalar_lea.sflag [#allocation4], %s658
          %s660 = sand.u32 %s68, 1
          %s661 = smul.addr %s660, 128
          %s662 = scalar_lea.vmem [#allocation3], %s661
          %s663 = smul.u32 8, %s46
          %665 = vsyncadd %s659, 0
          %s666 = smul.addr %s663, 2
          %s667 = smul.addr %s44, 32
          %s668 = sadd.s32 %s666, %s667
          %s669 = smul.addr %s668, 8
          %s670 = scalar_lea.hbm %s0, %s669
          %s671 = sshll.u32 %s670, 4
          %s672 = int_to_ptr.hbm [resolvable:$true] %s671
          %s673 = sshll.u32 %s662, 4
          %s674 = int_to_ptr.vmem [resolvable:$true] %s673
          %679 = dma.hbm_to_vmem [thread:$0]  %s672, 2048, %s674, %s659, 128, 128, 8
        $region84: #{tpu_custom_call.1} parent=79 // pred_fallthru
          _
        // Predicated region
        $region85: #{tpu_custom_call.1} parent=79 // pred_check
          %p680 = pneg %p108
        $region86: #{tpu_custom_call.1} parent=79 // pred_check_branch
          %682 = sbr.rel (%p680) target = $region88
        $region87: #{tpu_custom_call.1} parent=79 // pred_region
          %s683 = sand.u32 %s37, 1
          %s684 = scalar_lea.sflag [#allocation7], %s683
          %s685 = sand.u32 %s98, 1
          %s686 = smul.addr %s685, 64
          %s687 = scalar_lea.vmem [#allocation6], %s686
          %s688 = smul.u32 8, %s46
          %690 = vsyncadd %s684, 0
          %s691 = smul.addr %s688, 2
          %s692 = sadd.s32 %s45, %s691
          %s693 = smul.addr %s44, 32
          %s694 = sadd.s32 %s692, %s693
          %s695 = smul.addr %s694, 8
          %s696 = scalar_lea.hbm %s1, %s695
          %s697 = sshll.u32 %s696, 4
          %s698 = int_to_ptr.hbm [resolvable:$true] %s697
          %s699 = sshll.u32 %s687, 4
          %s700 = int_to_ptr.vmem [resolvable:$true] %s699
          %705 = dma.hbm_to_vmem [thread:$0]  %s698, 1024, %s700, %s684, 256, 128, 8
        $region88: #{tpu_custom_call.1} parent=79 // pred_fallthru
          _
        // Predicated region
        $region89: #{tpu_custom_call.1} parent=79 // pred_check
          %p706 = pneg %p136
        $region90: #{tpu_custom_call.1} parent=79 // pred_check_branch
          %708 = sbr.rel (%p706) target = $region92
        $region91: #{tpu_custom_call.1} parent=79 // pred_region
          %s709 = sand.u32 %s37, 1
          %s710 = scalar_lea.sflag [#allocation7], %s709
          %s711 = sand.u32 %s126, 1
          %s712 = smul.addr %s711, 128
          %s713 = scalar_lea.vmem [#allocation8], %s712
          %s714 = smul.u32 8, %s45
          %716 = vsyncadd %s710, 0
          %s717 = smul.addr %s714, 2
          %s718 = smul.addr %s44, 32
          %s719 = sadd.s32 %s717, %s718
          %s720 = smul.addr %s719, 8
          %s721 = scalar_lea.hbm %s2, %s720
          %s722 = sshll.u32 %s721, 4
          %s723 = int_to_ptr.hbm [resolvable:$true] %s722
          %s724 = sshll.u32 %s713, 4
          %s725 = int_to_ptr.vmem [resolvable:$true] %s724
          %730 = dma.hbm_to_vmem [thread:$0]  %s723, 2048, %s725, %s710, 128, 128, 8
        $region92: #{tpu_custom_call.1} parent=79 // pred_fallthru
          _
        // Predicated region
        $region93: #{tpu_custom_call.1} parent=79 // pred_check
          %p731 = pneg %p164
        $region94: #{tpu_custom_call.1} parent=79 // pred_check_branch
          %733 = sbr.rel (%p731) target = $region96
        $region95: #{tpu_custom_call.1} parent=79 // pred_region
          %s734 = smul.u32 8, %s46
          %p735 = scmp.lt.s32.totalorder %s44, 1
          %s736 = scalar_select %p735, %s44, 1
          %p737 = scmp.lt.s32.totalorder %s734, 15
          %s738 = scalar_select %p737, %s734, 15
          %s739 = smul.addr %s736, 16
          %s740 = sadd.s32 %s738, %s739
          %s741 = scalar_lea.vmem %s3, %s740
          %s742 = smul.u32 8, %s46
        $region96: #{tpu_custom_call.1} parent=79 // pred_fallthru
          _
        // Predicated region
        $region97: #{tpu_custom_call.1} parent=79 // pred_check
          %p743 = pneg %p190
        $region98: #{tpu_custom_call.1} parent=79 // pred_check_branch
          %745 = sbr.rel (%p743) target = $region100
        $region99: #{tpu_custom_call.1} parent=79 // pred_region
          %p746 = scmp.lt.s32.totalorder %s44, 1
          %s747 = scalar_select %p746, %s44, 1
          %s748 = smul.addr %s747, 2
          %s749 = smul.addr %s748, 8
          %s750 = scalar_lea.vmem %s4, %s749
        $region100: #{tpu_custom_call.1} parent=79 // pred_fallthru
          _
        // Predicated region
        $region101: #{tpu_custom_call.1} parent=79 // pred_check
          %p751 = pneg %p218
        $region102: #{tpu_custom_call.1} parent=79 // pred_check_branch
          %753 = sbr.rel (%p751) target = $region104
        $region103: #{tpu_custom_call.1} parent=79 // pred_region
          %p754 = scmp.lt.s32.totalorder %s44, 1
          %s755 = scalar_select %p754, %s44, 1
          %p756 = scmp.lt.s32.totalorder %s45, 1
          %s757 = scalar_select %p756, %s45, 1
          %s758 = smul.addr %s755, 2
          %s759 = sadd.s32 %s757, %s758
          %s760 = smul.addr %s759, 8
          %s761 = scalar_lea.vmem %s5, %s760
        $region104: #{tpu_custom_call.1} parent=79 // pred_fallthru
          _
      $region80: #{tpu_custom_call.1} parent=5 // pred_fallthru
        _
      %p762 = scmp.le.s32.totalorder 1, %s37
      %p763 = scmp.lt.s32.totalorder %s37, 9
      %p764 = pnand %p762, %p763
      %p765 = pneg %p764
      // Predicated region
      $region105: #{tpu_custom_call.1} parent=5 // pred_check
        _
      $region106: #{tpu_custom_call.1} parent=5 // pred_check_branch
        %767 = sbr.rel (%p764) target = $region108
      $region107: #{tpu_custom_call.1} parent=5 // pred_region
        %s768 = ssub.s32 %s37, 1
        %s769 = sand.u32 %s71, 1
        %s770 = scalar_lea.sflag [#allocation4], %s769
        %s771 = sand.u32 %s71, 1
        %s772 = smul.addr %s771, 128
        %s773 = scalar_lea.vmem [#allocation3], %s772
        // Predicated region
        $region109: #{tpu_custom_call.1} parent=107 // pred_check
          %p774 = pneg %p84
        $region110: #{tpu_custom_call.1} parent=107 // pred_check_branch
          %776 = sbr.rel (%p774) target = $region112
        $region111: #{tpu_custom_call.1} parent=107 // pred_region
          %778 = dma.done %s770, 2048
        $region112: #{tpu_custom_call.1} parent=107 // pred_fallthru
          _
        %s779 = sand.u32 %s42, 1
        %s780 = scalar_lea.sflag [#allocation7], %s779
        %s781 = sand.u32 %s101, 1
        %s782 = smul.addr %s781, 64
        %s783 = scalar_lea.vmem [#allocation6], %s782
        // Predicated region
        $region113: #{tpu_custom_call.1} parent=107 // pred_check
          %p784 = pneg %p114
        $region114: #{tpu_custom_call.1} parent=107 // pred_check_branch
          %786 = sbr.rel (%p784) target = $region116
        $region115: #{tpu_custom_call.1} parent=107 // pred_region
          %788 = dma.done %s780, 1024
        $region116: #{tpu_custom_call.1} parent=107 // pred_fallthru
          _
        %s789 = sand.u32 %s42, 1
        %s790 = scalar_lea.sflag [#allocation7], %s789
        %s791 = sand.u32 %s129, 1
        %s792 = smul.addr %s791, 128
        %s793 = scalar_lea.vmem [#allocation8], %s792
        // Predicated region
        $region117: #{tpu_custom_call.1} parent=107 // pred_check
          %p794 = pneg %p142
        $region118: #{tpu_custom_call.1} parent=107 // pred_check_branch
          %796 = sbr.rel (%p794) target = $region120
        $region119: #{tpu_custom_call.1} parent=107 // pred_region
          %798 = dma.done %s790, 2048
        $region120: #{tpu_custom_call.1} parent=107 // pred_fallthru
          _
        %s799 = sand.u32 %s71, 1
        %s800 = scalar_lea.sflag [#allocation4], %s799
        %s801 = sand.u32 %s71, 1
        %s802 = smul.addr %s801, 128
        %s803 = scalar_lea.vmem [#allocation3], %s802
        %p804 = pneg %p84
        %p805 = pneg %p81
        %s806 = sand.u32 %s42, 1
        %s807 = scalar_lea.sflag [#allocation7], %s806
        %s808 = sand.u32 %s101, 1
        %s809 = smul.addr %s808, 64
        %s810 = scalar_lea.vmem [#allocation6], %s809
        %p811 = pneg %p114
        %p812 = pneg %p111
        %s813 = sand.u32 %s42, 1
        %s814 = scalar_lea.sflag [#allocation7], %s813
        %s815 = sand.u32 %s129, 1
        %s816 = smul.addr %s815, 128
        %s817 = scalar_lea.vmem [#allocation8], %s816
        %p818 = pneg %p142
        %p819 = pneg %p139
        %s820 = smul.u32 8, %s49
        %p821 = scmp.lt.s32.totalorder %s47, 1
        %s822 = scalar_select %p821, %s47, 1
        %p823 = scmp.lt.s32.totalorder %s820, 15
        %s824 = scalar_select %p823, %s820, 15
        %s825 = smul.addr %s822, 16
        %s826 = sadd.s32 %s824, %s825
        %s827 = scalar_lea.vmem %s3, %s826
        %p828 = pneg %p170
        %p829 = pneg %p167
        %p830 = scmp.lt.s32.totalorder %s47, 1
        %s831 = scalar_select %p830, %s47, 1
        %s832 = smul.addr %s831, 2
        %s833 = smul.addr %s832, 8
        %s834 = scalar_lea.vmem %s4, %s833
        %p835 = pneg %p196
        %p836 = pneg %p193
        %p837 = scmp.lt.s32.totalorder %s47, 1
        %s838 = scalar_select %p837, %s47, 1
        %p839 = scmp.lt.s32.totalorder %s48, 1
        %s840 = scalar_select %p839, %s48, 1
        %s841 = smul.addr %s838, 2
        %s842 = sadd.s32 %s840, %s841
        %s843 = smul.addr %s842, 8
        %s844 = scalar_lea.vmem %s5, %s843
        %p845 = pneg %p224
        %p846 = pneg %p221
        %p847 = pneg %p245
        %p848 = pneg %p242
        %p849 = pneg %p266
        %p850 = pneg %p263
        %p851 = pneg %p287
        %p852 = pneg %p284
        %p853 = pneg %p308
        %p854 = pneg %p305
        %p855 = pneg %p329
        %p856 = pneg %p326
        %p857 = pneg %p350
        %p858 = pneg %p347
        %p859 = pneg %p371
        %p860 = pneg %p368
        %p861 = pneg %p392
        %p862 = pneg %p389
        %p863 = pneg %p413
        %p864 = pneg %p410
        %p865 = pneg %p434
        %p866 = pneg %p431
        %p867 = pneg %p455
        %p868 = pneg %p452
        %p869 = pneg %p476
        %p870 = pneg %p473
        %p871 = pneg %p497
        %p872 = pneg %p494
        %p873 = pneg %p518
        %p874 = pneg %p515
        %p875 = pneg %p539
        %p876 = pneg %p536
        %p877 = pneg %p560
        %p878 = pneg %p557
        %p879 = pneg %p588
        %p880 = pneg %p585
        %s881 = sand.u32 %s575, 1
        %s882 = scalar_lea.sflag [#allocation5], %s881
        %s883 = sand.u32 %s575, 1
        %s884 = smul.addr %s883, 32
        %s885 = scalar_lea.vmem [#allocation9], %s884
        %s886 = smul.u32 8, %s49
        %s887 = smul.u32 8, %s49
        %s888 = smul.u32 8, %s48
        %s889 = smul.u32 8, %s49
        %p890 = scmp.lt.s32.totalorder %s47, 1
        %s891 = scalar_select %p890, %s47, 1
        %p892 = scmp.lt.s32.totalorder %s889, 15
        %s893 = scalar_select %p892, %s889, 15
        %s894 = smul.addr %s891, 16
        %s895 = sadd.s32 %s893, %s894
        %s896 = scalar_lea.vmem %s3, %s895
        %s897 = smul.u32 8, %s49
        %p898 = scmp.lt.s32.totalorder %s47, 1
        %s899 = scalar_select %p898, %s47, 1
        %s900 = smul.addr %s899, 2
        %s901 = smul.addr %s900, 8
        %s902 = scalar_lea.vmem %s4, %s901
        %p903 = scmp.lt.s32.totalorder %s47, 1
        %s904 = scalar_select %p903, %s47, 1
        %p905 = scmp.lt.s32.totalorder %s48, 1
        %s906 = scalar_select %p905, %s48, 1
        %s907 = smul.addr %s904, 2
        %s908 = sadd.s32 %s906, %s907
        %s909 = smul.addr %s908, 8
        %s910 = scalar_lea.vmem %s5, %s909
        %p912 = scmp.eq.s32.totalorder %s49, 0
        // Predicated region
        $region121: #{tpu_custom_call.1} parent=107 // pred_check
          %p913 = pneg %p912
        $region122: #{tpu_custom_call.1} parent=107 // pred_check_branch
          %915 = sbr.rel (%p913) target = $region124
        $region123: #{tpu_custom_call.1} parent=107 // pred_region
          %vm916 = vcmask 130048
          %917 = vst.msk [vmem:[#allocation2] sm:$0xff] %vm916, 0.0
          %918 = vst.msk [vmem:[#allocation2 + $0x8] sm:$0xff] %vm916, 0.0
          %919 = vst.msk [vmem:[#allocation2 + $0x10] sm:$0xff] %vm916, 0.0
          %920 = vst.msk [vmem:[#allocation2 + $0x18] sm:$0xff] %vm916, 0.0
          %921 = vst.msk [vmem:[#allocation2 + $0x20] sm:$0xff] %vm916, 0.0
          %922 = vst.msk [vmem:[#allocation2 + $0x28] sm:$0xff] %vm916, 0.0
          %923 = vst.msk [vmem:[#allocation2 + $0x30] sm:$0xff] %vm916, 0.0
          %924 = vst.msk [vmem:[#allocation2 + $0x38] sm:$0xff] %vm916, 0.0
          %925 = vst.msk [vmem:[#allocation2 + $0x40] sm:$0xff] %vm916, 0.0
          %926 = vst.msk [vmem:[#allocation2 + $0x48] sm:$0xff] %vm916, 0.0
          %927 = vst.msk [vmem:[#allocation2 + $0x50] sm:$0xff] %vm916, 0.0
          %928 = vst.msk [vmem:[#allocation2 + $0x58] sm:$0xff] %vm916, 0.0
          %929 = vst.msk [vmem:[#allocation2 + $0x60] sm:$0xff] %vm916, 0.0
          %930 = vst.msk [vmem:[#allocation2 + $0x68] sm:$0xff] %vm916, 0.0
          %931 = vst.msk [vmem:[#allocation2 + $0x70] sm:$0xff] %vm916, 0.0
          %932 = vst.msk [vmem:[#allocation2 + $0x78] sm:$0xff] %vm916, 0.0
          %933 = vst.msk [vmem:[#allocation2 + $0x80] sm:$0xff] %vm916, 0.0
          %934 = vst.msk [vmem:[#allocation2 + $0x88] sm:$0xff] %vm916, 0.0
          %935 = vst.msk [vmem:[#allocation2 + $0x90] sm:$0xff] %vm916, 0.0
          %936 = vst.msk [vmem:[#allocation2 + $0x98] sm:$0xff] %vm916, 0.0
          %937 = vst.msk [vmem:[#allocation2 + $0xa0] sm:$0xff] %vm916, 0.0
          %938 = vst.msk [vmem:[#allocation2 + $0xa8] sm:$0xff] %vm916, 0.0
          %939 = vst.msk [vmem:[#allocation2 + $0xb0] sm:$0xff] %vm916, 0.0
          %940 = vst.msk [vmem:[#allocation2 + $0xb8] sm:$0xff] %vm916, 0.0
          %941 = vst.msk [vmem:[#allocation2 + $0xc0] sm:$0xff] %vm916, 0.0
          %942 = vst.msk [vmem:[#allocation2 + $0xc8] sm:$0xff] %vm916, 0.0
          %943 = vst.msk [vmem:[#allocation2 + $0xd0] sm:$0xff] %vm916, 0.0
          %944 = vst.msk [vmem:[#allocation2 + $0xd8] sm:$0xff] %vm916, 0.0
          %945 = vst.msk [vmem:[#allocation2 + $0xe0] sm:$0xff] %vm916, 0.0
          %946 = vst.msk [vmem:[#allocation2 + $0xe8] sm:$0xff] %vm916, 0.0
          %947 = vst.msk [vmem:[#allocation2 + $0xf0] sm:$0xff] %vm916, 0.0
          %948 = vst.msk [vmem:[#allocation2 + $0xf8] sm:$0xff] %vm916, 0.0
        $region124: #{tpu_custom_call.1} parent=107 // pred_fallthru
          _
        %v949 = vld [vmem:[%s6] sm:$0x1]
        %v950 = vld [vmem:[%s7] sm:$0x1]
        %v951 = vld [vmem:[%s896] sm:$0x1]
        %v952 = vld [vmem:[%s896 + $0x1] sm:$0x1]
        %v953 = vld [vmem:[%s896 + $0x2] sm:$0x1]
        %v954 = vld [vmem:[%s896 + $0x3] sm:$0x1]
        %v955 = vld [vmem:[%s896 + $0x4] sm:$0x1]
        %v956 = vld [vmem:[%s896 + $0x5] sm:$0x1]
        %v957 = vld [vmem:[%s896 + $0x6] sm:$0x1]
        %v958 = vld [vmem:[%s896 + $0x7] sm:$0x1]
        %v959 = vld [vmem:[%s902] sm:$0xff]
        %v960 = vld [vmem:[%s902 + $0x8] sm:$0xff]
        %v961 = vld [vmem:[%s910] sm:$0xff]
        %v962 = vld [vmem:[%s773] sm:$0xff]
        %v963 = vld [vmem:[%s773 + $0x8] sm:$0xff]
        %v964 = vld [vmem:[%s773 + $0x10] sm:$0xff]
        %v965 = vld [vmem:[%s773 + $0x18] sm:$0xff]
        %v966 = vld [vmem:[%s773 + $0x20] sm:$0xff]
        %v967 = vld [vmem:[%s773 + $0x28] sm:$0xff]
        %v968 = vld [vmem:[%s773 + $0x30] sm:$0xff]
        %v969 = vld [vmem:[%s773 + $0x38] sm:$0xff]
        %v970 = vld [vmem:[%s773 + $0x40] sm:$0xff]
        %v971 = vld [vmem:[%s773 + $0x48] sm:$0xff]
        %v972 = vld [vmem:[%s773 + $0x50] sm:$0xff]
        %v973 = vld [vmem:[%s773 + $0x58] sm:$0xff]
        %v974 = vld [vmem:[%s773 + $0x60] sm:$0xff]
        %v975 = vld [vmem:[%s773 + $0x68] sm:$0xff]
        %v976 = vld [vmem:[%s773 + $0x70] sm:$0xff]
        %v977 = vld [vmem:[%s773 + $0x78] sm:$0xff]
        %vm978 = vcmask 261120
        %v979 = vsel %vm978, %v962, 0.0
        %980 = vadd.xlane.f32.xlu0 %v979
        %v981 = vpop.xlane.xlu0 %980
        %v982 = vsel %vm978, %v963, 0.0
        %983 = vadd.xlane.f32.xlu0 %v982
        %v984 = vpop.xlane.xlu0 %983
        %v985 = vsel %vm978, %v964, 0.0
        %986 = vadd.xlane.f32.xlu0 %v985
        %v987 = vpop.xlane.xlu0 %986
        %v988 = vsel %vm978, %v965, 0.0
        %989 = vadd.xlane.f32.xlu0 %v988
        %v990 = vpop.xlane.xlu0 %989
        %v991 = vsel %vm978, %v966, 0.0
        %992 = vadd.xlane.f32.xlu0 %v991
        %v993 = vpop.xlane.xlu0 %992
        %v994 = vsel %vm978, %v967, 0.0
        %995 = vadd.xlane.f32.xlu0 %v994
        %v996 = vpop.xlane.xlu0 %995
        %v997 = vsel %vm978, %v968, 0.0
        %998 = vadd.xlane.f32.xlu0 %v997
        %v999 = vpop.xlane.xlu0 %998
        %v1000 = vsel %vm978, %v969, 0.0
        %1001 = vadd.xlane.f32.xlu0 %v1000
        %v1002 = vpop.xlane.xlu0 %1001
        %v1003 = vsel %vm978, %v970, 0.0
        %1004 = vadd.xlane.f32.xlu0 %v1003
        %v1005 = vpop.xlane.xlu0 %1004
        %v1006 = vsel %vm978, %v971, 0.0
        %1007 = vadd.xlane.f32.xlu0 %v1006
        %v1008 = vpop.xlane.xlu0 %1007
        %v1009 = vsel %vm978, %v972, 0.0
        %1010 = vadd.xlane.f32.xlu0 %v1009
        %v1011 = vpop.xlane.xlu0 %1010
        %v1012 = vsel %vm978, %v973, 0.0
        %1013 = vadd.xlane.f32.xlu0 %v1012
        %v1014 = vpop.xlane.xlu0 %1013
        %v1015 = vsel %vm978, %v974, 0.0
        %1016 = vadd.xlane.f32.xlu0 %v1015
        %v1017 = vpop.xlane.xlu0 %1016
        %v1018 = vsel %vm978, %v975, 0.0
        %1019 = vadd.xlane.f32.xlu0 %v1018
        %v1020 = vpop.xlane.xlu0 %1019
        %v1021 = vsel %vm978, %v976, 0.0
        %1022 = vadd.xlane.f32.xlu0 %v1021
        %v1023 = vpop.xlane.xlu0 %1022
        %v1024 = vsel %vm978, %v977, 0.0
        %1025 = vadd.xlane.f32.xlu0 %v1024
        %v1026 = vpop.xlane.xlu0 %1025
        %v1027 = vrcp.pop 32.0
        %v1028 = vmul.f32 32.0, %v1027
        %v1029 = vsub.f32 1.0, %v1028
        %v1030 = vmul.f32 %v1027, %v1029
        %v1031 = vadd.f32 %v1027, %v1030
        %vm1032 = vweird.f32 %v1027
        %v1033 = vsel %vm1032, %v1027, %v1031
        %v1034 = vmul.f32 %v981, %v1033
        %v1035 = vmul.f32 %v984, %v1033
        %v1036 = vmul.f32 %v987, %v1033
        %v1037 = vmul.f32 %v990, %v1033
        %v1038 = vmul.f32 %v993, %v1033
        %v1039 = vmul.f32 %v996, %v1033
        %v1040 = vmul.f32 %v999, %v1033
        %v1041 = vmul.f32 %v1002, %v1033
        %v1042 = vmul.f32 %v1005, %v1033
        %v1043 = vmul.f32 %v1008, %v1033
        %v1044 = vmul.f32 %v1011, %v1033
        %v1045 = vmul.f32 %v1014, %v1033
        %v1046 = vmul.f32 %v1017, %v1033
        %v1047 = vmul.f32 %v1020, %v1033
        %v1048 = vmul.f32 %v1023, %v1033
        %v1049 = vmul.f32 %v1026, %v1033
        %v1050 = vsub.f32 %v962, %v1034
        %v1051 = vsub.f32 %v963, %v1035
        %v1052 = vsub.f32 %v964, %v1036
        %v1053 = vsub.f32 %v965, %v1037
        %v1054 = vsub.f32 %v966, %v1038
        %v1055 = vsub.f32 %v967, %v1039
        %v1056 = vsub.f32 %v968, %v1040
        %v1057 = vsub.f32 %v969, %v1041
        %v1058 = vsub.f32 %v970, %v1042
        %v1059 = vsub.f32 %v971, %v1043
        %v1060 = vsub.f32 %v972, %v1044
        %v1061 = vsub.f32 %v973, %v1045
        %v1062 = vsub.f32 %v974, %v1046
        %v1063 = vsub.f32 %v975, %v1047
        %v1064 = vsub.f32 %v976, %v1048
        %v1065 = vsub.f32 %v977, %v1049
        %v1066 = vmul.f32 %v1050, %v1050
        %v1067 = vmul.f32 %v1051, %v1051
        %v1068 = vmul.f32 %v1052, %v1052
        %v1069 = vmul.f32 %v1053, %v1053
        %v1070 = vmul.f32 %v1054, %v1054
        %v1071 = vmul.f32 %v1055, %v1055
        %v1072 = vmul.f32 %v1056, %v1056
        %v1073 = vmul.f32 %v1057, %v1057
        %v1074 = vmul.f32 %v1058, %v1058
        %v1075 = vmul.f32 %v1059, %v1059
        %v1076 = vmul.f32 %v1060, %v1060
        %v1077 = vmul.f32 %v1061, %v1061
        %v1078 = vmul.f32 %v1062, %v1062
        %v1079 = vmul.f32 %v1063, %v1063
        %v1080 = vmul.f32 %v1064, %v1064
        %v1081 = vmul.f32 %v1065, %v1065
        %v1082 = vsel %vm978, %v1066, 0.0
        %1083 = vadd.xlane.f32.xlu0 %v1082
        %v1084 = vpop.xlane.xlu0 %1083
        %v1085 = vsel %vm978, %v1067, 0.0
        %1086 = vadd.xlane.f32.xlu0 %v1085
        %v1087 = vpop.xlane.xlu0 %1086
        %v1088 = vsel %vm978, %v1068, 0.0
        %1089 = vadd.xlane.f32.xlu0 %v1088
        %v1090 = vpop.xlane.xlu0 %1089
        %v1091 = vsel %vm978, %v1069, 0.0
        %1092 = vadd.xlane.f32.xlu0 %v1091
        %v1093 = vpop.xlane.xlu0 %1092
        %v1094 = vsel %vm978, %v1070, 0.0
        %1095 = vadd.xlane.f32.xlu0 %v1094
        %v1096 = vpop.xlane.xlu0 %1095
        %v1097 = vsel %vm978, %v1071, 0.0
        %1098 = vadd.xlane.f32.xlu0 %v1097
        %v1099 = vpop.xlane.xlu0 %1098
        %v1100 = vsel %vm978, %v1072, 0.0
        %1101 = vadd.xlane.f32.xlu0 %v1100
        %v1102 = vpop.xlane.xlu0 %1101
        %v1103 = vsel %vm978, %v1073, 0.0
        %1104 = vadd.xlane.f32.xlu0 %v1103
        %v1105 = vpop.xlane.xlu0 %1104
        %v1106 = vsel %vm978, %v1074, 0.0
        %1107 = vadd.xlane.f32.xlu0 %v1106
        %v1108 = vpop.xlane.xlu0 %1107
        %v1109 = vsel %vm978, %v1075, 0.0
        %1110 = vadd.xlane.f32.xlu0 %v1109
        %v1111 = vpop.xlane.xlu0 %1110
        %v1112 = vsel %vm978, %v1076, 0.0
        %1113 = vadd.xlane.f32.xlu0 %v1112
        %v1114 = vpop.xlane.xlu0 %1113
        %v1115 = vsel %vm978, %v1077, 0.0
        %1116 = vadd.xlane.f32.xlu0 %v1115
        %v1117 = vpop.xlane.xlu0 %1116
        %v1118 = vsel %vm978, %v1078, 0.0
        %1119 = vadd.xlane.f32.xlu0 %v1118
        %v1120 = vpop.xlane.xlu0 %1119
        %v1121 = vsel %vm978, %v1079, 0.0
        %1122 = vadd.xlane.f32.xlu0 %v1121
        %v1123 = vpop.xlane.xlu0 %1122
        %v1124 = vsel %vm978, %v1080, 0.0
        %1125 = vadd.xlane.f32.xlu0 %v1124
        %v1126 = vpop.xlane.xlu0 %1125
        %v1127 = vsel %vm978, %v1081, 0.0
        %1128 = vadd.xlane.f32.xlu0 %v1127
        %v1129 = vpop.xlane.xlu0 %1128
        %v1130 = vmul.f32 %v1084, %v1033
        %v1131 = vmul.f32 %v1087, %v1033
        %v1132 = vmul.f32 %v1090, %v1033
        %v1133 = vmul.f32 %v1093, %v1033
        %v1134 = vmul.f32 %v1096, %v1033
        %v1135 = vmul.f32 %v1099, %v1033
        %v1136 = vmul.f32 %v1102, %v1033
        %v1137 = vmul.f32 %v1105, %v1033
        %v1138 = vmul.f32 %v1108, %v1033
        %v1139 = vmul.f32 %v1111, %v1033
        %v1140 = vmul.f32 %v1114, %v1033
        %v1141 = vmul.f32 %v1117, %v1033
        %v1142 = vmul.f32 %v1120, %v1033
        %v1143 = vmul.f32 %v1123, %v1033
        %v1144 = vmul.f32 %v1126, %v1033
        %v1145 = vmul.f32 %v1129, %v1033
        %v1146 = vadd.f32 %v1130, 1e-05
        %v1147 = vadd.f32 %v1131, 1e-05
        %v1148 = vadd.f32 %v1132, 1e-05
        %v1149 = vadd.f32 %v1133, 1e-05
        %v1150 = vadd.f32 %v1134, 1e-05
        %v1151 = vadd.f32 %v1135, 1e-05
        %v1152 = vadd.f32 %v1136, 1e-05
        %v1153 = vadd.f32 %v1137, 1e-05
        %v1154 = vadd.f32 %v1138, 1e-05
        %v1155 = vadd.f32 %v1139, 1e-05
        %v1156 = vadd.f32 %v1140, 1e-05
        %v1157 = vadd.f32 %v1141, 1e-05
        %v1158 = vadd.f32 %v1142, 1e-05
        %v1159 = vadd.f32 %v1143, 1e-05
        %v1160 = vadd.f32 %v1144, 1e-05
        %v1161 = vadd.f32 %v1145, 1e-05
        %v1162 = vrsqrt.pop %v1146
        %v1163 = vmul.f32 %v1162, %v1146
        %v1164 = vmul.f32 %v1163, %v1162
        %v1165 = vmul.f32 0.5, %v1164
        %v1166 = vsub.f32 1.5, %v1165
        %v1167 = vmul.f32 %v1162, %v1166
        %vm1168 = vweird.f32 %v1146
        %vm1169 = vweird.f32 %v1162
        %vm1170 = vmor %vm1168, %vm1169
        %v1171 = vsel %vm1170, %v1162, %v1167
        %v1172 = vrsqrt.pop %v1147
        %v1173 = vmul.f32 %v1172, %v1147
        %v1174 = vmul.f32 %v1173, %v1172
        %v1175 = vmul.f32 0.5, %v1174
        %v1176 = vsub.f32 1.5, %v1175
        %v1177 = vmul.f32 %v1172, %v1176
        %vm1178 = vweird.f32 %v1147
        %vm1179 = vweird.f32 %v1172
        %vm1180 = vmor %vm1178, %vm1179
        %v1181 = vsel %vm1180, %v1172, %v1177
        %v1182 = vrsqrt.pop %v1148
        %v1183 = vmul.f32 %v1182, %v1148
        %v1184 = vmul.f32 %v1183, %v1182
        %v1185 = vmul.f32 0.5, %v1184
        %v1186 = vsub.f32 1.5, %v1185
        %v1187 = vmul.f32 %v1182, %v1186
        %vm1188 = vweird.f32 %v1148
        %vm1189 = vweird.f32 %v1182
        %vm1190 = vmor %vm1188, %vm1189
        %v1191 = vsel %vm1190, %v1182, %v1187
        %v1192 = vrsqrt.pop %v1149
        %v1193 = vmul.f32 %v1192, %v1149
        %v1194 = vmul.f32 %v1193, %v1192
        %v1195 = vmul.f32 0.5, %v1194
        %v1196 = vsub.f32 1.5, %v1195
        %v1197 = vmul.f32 %v1192, %v1196
        %vm1198 = vweird.f32 %v1149
        %vm1199 = vweird.f32 %v1192
        %vm1200 = vmor %vm1198, %vm1199
        %v1201 = vsel %vm1200, %v1192, %v1197
        %v1202 = vrsqrt.pop %v1150
        %v1203 = vmul.f32 %v1202, %v1150
        %v1204 = vmul.f32 %v1203, %v1202
        %v1205 = vmul.f32 0.5, %v1204
        %v1206 = vsub.f32 1.5, %v1205
        %v1207 = vmul.f32 %v1202, %v1206
        %vm1208 = vweird.f32 %v1150
        %vm1209 = vweird.f32 %v1202
        %vm1210 = vmor %vm1208, %vm1209
        %v1211 = vsel %vm1210, %v1202, %v1207
        %v1212 = vrsqrt.pop %v1151
        %v1213 = vmul.f32 %v1212, %v1151
        %v1214 = vmul.f32 %v1213, %v1212
        %v1215 = vmul.f32 0.5, %v1214
        %v1216 = vsub.f32 1.5, %v1215
        %v1217 = vmul.f32 %v1212, %v1216
        %vm1218 = vweird.f32 %v1151
        %vm1219 = vweird.f32 %v1212
        %vm1220 = vmor %vm1218, %vm1219
        %v1221 = vsel %vm1220, %v1212, %v1217
        %v1222 = vrsqrt.pop %v1152
        %v1223 = vmul.f32 %v1222, %v1152
        %v1224 = vmul.f32 %v1223, %v1222
        %v1225 = vmul.f32 0.5, %v1224
        %v1226 = vsub.f32 1.5, %v1225
        %v1227 = vmul.f32 %v1222, %v1226
        %vm1228 = vweird.f32 %v1152
        %vm1229 = vweird.f32 %v1222
        %vm1230 = vmor %vm1228, %vm1229
        %v1231 = vsel %vm1230, %v1222, %v1227
        %v1232 = vrsqrt.pop %v1153
        %v1233 = vmul.f32 %v1232, %v1153
        %v1234 = vmul.f32 %v1233, %v1232
        %v1235 = vmul.f32 0.5, %v1234
        %v1236 = vsub.f32 1.5, %v1235
        %v1237 = vmul.f32 %v1232, %v1236
        %vm1238 = vweird.f32 %v1153
        %vm1239 = vweird.f32 %v1232
        %vm1240 = vmor %vm1238, %vm1239
        %v1241 = vsel %vm1240, %v1232, %v1237
        %v1242 = vrsqrt.pop %v1154
        %v1243 = vmul.f32 %v1242, %v1154
        %v1244 = vmul.f32 %v1243, %v1242
        %v1245 = vmul.f32 0.5, %v1244
        %v1246 = vsub.f32 1.5, %v1245
        %v1247 = vmul.f32 %v1242, %v1246
        %vm1248 = vweird.f32 %v1154
        %vm1249 = vweird.f32 %v1242
        %vm1250 = vmor %vm1248, %vm1249
        %v1251 = vsel %vm1250, %v1242, %v1247
        %v1252 = vrsqrt.pop %v1155
        %v1253 = vmul.f32 %v1252, %v1155
        %v1254 = vmul.f32 %v1253, %v1252
        %v1255 = vmul.f32 0.5, %v1254
        %v1256 = vsub.f32 1.5, %v1255
        %v1257 = vmul.f32 %v1252, %v1256
        %vm1258 = vweird.f32 %v1155
        %vm1259 = vweird.f32 %v1252
        %vm1260 = vmor %vm1258, %vm1259
        %v1261 = vsel %vm1260, %v1252, %v1257
        %v1262 = vrsqrt.pop %v1156
        %v1263 = vmul.f32 %v1262, %v1156
        %v1264 = vmul.f32 %v1263, %v1262
        %v1265 = vmul.f32 0.5, %v1264
        %v1266 = vsub.f32 1.5, %v1265
        %v1267 = vmul.f32 %v1262, %v1266
        %vm1268 = vweird.f32 %v1156
        %vm1269 = vweird.f32 %v1262
        %vm1270 = vmor %vm1268, %vm1269
        %v1271 = vsel %vm1270, %v1262, %v1267
        %v1272 = vrsqrt.pop %v1157
        %v1273 = vmul.f32 %v1272, %v1157
        %v1274 = vmul.f32 %v1273, %v1272
        %v1275 = vmul.f32 0.5, %v1274
        %v1276 = vsub.f32 1.5, %v1275
        %v1277 = vmul.f32 %v1272, %v1276
        %vm1278 = vweird.f32 %v1157
        %vm1279 = vweird.f32 %v1272
        %vm1280 = vmor %vm1278, %vm1279
        %v1281 = vsel %vm1280, %v1272, %v1277
        %v1282 = vrsqrt.pop %v1158
        %v1283 = vmul.f32 %v1282, %v1158
        %v1284 = vmul.f32 %v1283, %v1282
        %v1285 = vmul.f32 0.5, %v1284
        %v1286 = vsub.f32 1.5, %v1285
        %v1287 = vmul.f32 %v1282, %v1286
        %vm1288 = vweird.f32 %v1158
        %vm1289 = vweird.f32 %v1282
        %vm1290 = vmor %vm1288, %vm1289
        %v1291 = vsel %vm1290, %v1282, %v1287
        %v1292 = vrsqrt.pop %v1159
        %v1293 = vmul.f32 %v1292, %v1159
        %v1294 = vmul.f32 %v1293, %v1292
        %v1295 = vmul.f32 0.5, %v1294
        %v1296 = vsub.f32 1.5, %v1295
        %v1297 = vmul.f32 %v1292, %v1296
        %vm1298 = vweird.f32 %v1159
        %vm1299 = vweird.f32 %v1292
        %vm1300 = vmor %vm1298, %vm1299
        %v1301 = vsel %vm1300, %v1292, %v1297
        %v1302 = vrsqrt.pop %v1160
        %v1303 = vmul.f32 %v1302, %v1160
        %v1304 = vmul.f32 %v1303, %v1302
        %v1305 = vmul.f32 0.5, %v1304
        %v1306 = vsub.f32 1.5, %v1305
        %v1307 = vmul.f32 %v1302, %v1306
        %vm1308 = vweird.f32 %v1160
        %vm1309 = vweird.f32 %v1302
        %vm1310 = vmor %vm1308, %vm1309
        %v1311 = vsel %vm1310, %v1302, %v1307
        %v1312 = vrsqrt.pop %v1161
        %v1313 = vmul.f32 %v1312, %v1161
        %v1314 = vmul.f32 %v1313, %v1312
        %v1315 = vmul.f32 0.5, %v1314
        %v1316 = vsub.f32 1.5, %v1315
        %v1317 = vmul.f32 %v1312, %v1316
        %vm1318 = vweird.f32 %v1161
        %vm1319 = vweird.f32 %v1312
        %vm1320 = vmor %vm1318, %vm1319
        %v1321 = vsel %vm1320, %v1312, %v1317
        %v1322 = vmul.f32 %v1050, %v1171
        %v1323 = vmul.f32 %v1051, %v1181
        %v1324 = vmul.f32 %v1052, %v1191
        %v1325 = vmul.f32 %v1053, %v1201
        %v1326 = vmul.f32 %v1054, %v1211
        %v1327 = vmul.f32 %v1055, %v1221
        %v1328 = vmul.f32 %v1056, %v1231
        %v1329 = vmul.f32 %v1057, %v1241
        %v1330 = vmul.f32 %v1058, %v1251
        %v1331 = vmul.f32 %v1059, %v1261
        %v1332 = vmul.f32 %v1060, %v1271
        %v1333 = vmul.f32 %v1061, %v1281
        %v1334 = vmul.f32 %v1062, %v1291
        %v1335 = vmul.f32 %v1063, %v1301
        %v1336 = vmul.f32 %v1064, %v1311
        %v1337 = vmul.f32 %v1065, %v1321
        %v1339 = vperm.slane %v949, 0
        %v1341 = vmul.f32 %v1322, %v1339
        %v1342 = vmul.f32 %v1323, %v1339
        %v1343 = vmul.f32 %v1324, %v1339
        %v1344 = vmul.f32 %v1325, %v1339
        %v1345 = vmul.f32 %v1326, %v1339
        %v1346 = vmul.f32 %v1327, %v1339
        %v1347 = vmul.f32 %v1328, %v1339
        %v1348 = vmul.f32 %v1329, %v1339
        %v1349 = vmul.f32 %v1330, %v1339
        %v1350 = vmul.f32 %v1331, %v1339
        %v1351 = vmul.f32 %v1332, %v1339
        %v1352 = vmul.f32 %v1333, %v1339
        %v1353 = vmul.f32 %v1334, %v1339
        %v1354 = vmul.f32 %v1335, %v1339
        %v1355 = vmul.f32 %v1336, %v1339
        %v1356 = vmul.f32 %v1337, %v1339
        %v1358 = vperm.slane %v950, 0
        %v1360 = vadd.f32 %v1341, %v1358
        %v1361 = vadd.f32 %v1342, %v1358
        %v1362 = vadd.f32 %v1343, %v1358
        %v1363 = vadd.f32 %v1344, %v1358
        %v1364 = vadd.f32 %v1345, %v1358
        %v1365 = vadd.f32 %v1346, %v1358
        %v1366 = vadd.f32 %v1347, %v1358
        %v1367 = vadd.f32 %v1348, %v1358
        %v1368 = vadd.f32 %v1349, %v1358
        %v1369 = vadd.f32 %v1350, %v1358
        %v1370 = vadd.f32 %v1351, %v1358
        %v1371 = vadd.f32 %v1352, %v1358
        %v1372 = vadd.f32 %v1353, %v1358
        %v1373 = vadd.f32 %v1354, %v1358
        %v1374 = vadd.f32 %v1355, %v1358
        %v1375 = vadd.f32 %v1356, %v1358
        %v1376 = vpack.c.bf16 %v1361, %v1360
        %v1377 = vpack.c.bf16 %v1363, %v1362
        %v1378 = vpack.c.bf16 %v1365, %v1364
        %v1379 = vpack.c.bf16 %v1367, %v1366
        %v1380 = vpack.c.bf16 %v1369, %v1368
        %v1381 = vpack.c.bf16 %v1371, %v1370
        %v1382 = vpack.c.bf16 %v1373, %v1372
        %v1383 = vpack.c.bf16 %v1375, %v1374
        %v1384 = vld [vmem:[%s8] sm:$0xf]
        %v1385 = vld [vmem:[%s8 + $0x4] sm:$0xf]
        %v1386 = vld [vmem:[%s8 + $0x8] sm:$0xf]
        %v1387 = vld [vmem:[%s8 + $0xc] sm:$0xf]
        %v1388 = vld [vmem:[%s9] sm:$0x1]
        %v1390 = vperm.slane %v1388, 0
        %v1396 = vunpack.c.l.b16 %v1384
        %v1397 = vunpack.c.l.b16 %v1385
        %v1398 = vunpack.c.l.b16 %v1386
        %v1399 = vunpack.c.l.b16 %v1387
        %v1400 = vpack.c.b16 %v1397, %v1396
        %v1401 = vpack.c.b16 %v1399, %v1398
        %v1405 = vsel %vm978, %v1376, 0
        %v1408 = vsel %vm978, %v1377, 0
        %v1411 = vsel %vm978, %v1378, 0
        %v1414 = vsel %vm978, %v1379, 0
        %v1417 = vsel %vm978, %v1380, 0
        %v1420 = vsel %vm978, %v1381, 0
        %v1423 = vsel %vm978, %v1382, 0
        %v1426 = vsel %vm978, %v1383, 0
        %1428 = vmatpush.bf16.msra.mxu0 0
        %1429 = vmatpush.bf16.msra.mxu0 0
        %1430 = vmatpush.bf16.msra.mxu0 0
        %1431 = vmatpush.bf16.msra.mxu0 0
        %1432 = vmatpush.bf16.msra.mxu0 0
        %1433 = vmatpush.bf16.msra.mxu0 0
        %1434 = vmatpush.bf16.msra.mxu0 %v1401
        %1435 = vmatpush.bf16.msra.mxu0 %v1400
        %1436 = vmatmul.bf16.gmra.mxu0 %v1405
        %v1437 = vpop.f32.mrf.mxu0
        %v1438 = vadd.f32 %v1390, %v1437
        %v1439 = vpop.f32.mrf.mxu0
        %v1440 = vadd.f32 %v1390, %v1439
        %1441 = vmatmul.bf16.gmra.mxu0 %v1408
        %v1442 = vpop.f32.mrf.mxu0
        %v1443 = vadd.f32 %v1390, %v1442
        %v1444 = vpop.f32.mrf.mxu0
        %v1445 = vadd.f32 %v1390, %v1444
        %1446 = vmatmul.bf16.gmra.mxu0 %v1411
        %v1447 = vpop.f32.mrf.mxu0
        %v1448 = vadd.f32 %v1390, %v1447
        %v1449 = vpop.f32.mrf.mxu0
        %v1450 = vadd.f32 %v1390, %v1449
        %1451 = vmatmul.bf16.gmra.mxu0 %v1414
        %v1452 = vpop.f32.mrf.mxu0
        %v1453 = vadd.f32 %v1390, %v1452
        %v1454 = vpop.f32.mrf.mxu0
        %v1455 = vadd.f32 %v1390, %v1454
        %1456 = vmatmul.bf16.gmra.mxu0 %v1417
        %v1457 = vpop.f32.mrf.mxu0
        %v1458 = vadd.f32 %v1390, %v1457
        %v1459 = vpop.f32.mrf.mxu0
        %v1460 = vadd.f32 %v1390, %v1459
        %1461 = vmatmul.bf16.gmra.mxu0 %v1420
        %v1462 = vpop.f32.mrf.mxu0
        %v1463 = vadd.f32 %v1390, %v1462
        %v1464 = vpop.f32.mrf.mxu0
        %v1465 = vadd.f32 %v1390, %v1464
        %1466 = vmatmul.bf16.gmra.mxu0 %v1423
        %v1467 = vpop.f32.mrf.mxu0
        %v1468 = vadd.f32 %v1390, %v1467
        %v1469 = vpop.f32.mrf.mxu0
        %v1470 = vadd.f32 %v1390, %v1469
        %1471 = vmatmul.bf16.gmra.mxu0 %v1426
        %v1472 = vpop.f32.mrf.mxu0
        %v1473 = vadd.f32 %v1390, %v1472
        %v1474 = vpop.f32.mrf.mxu0
        %v1475 = vadd.f32 %v1390, %v1474
        %1476 = vdwg.mxu0
        %v1477 = vld [vmem:[%s12] sm:$0xf]
        %v1478 = vld [vmem:[%s12 + $0x4] sm:$0xf]
        %v1479 = vld [vmem:[%s12 + $0x8] sm:$0xf]
        %v1480 = vld [vmem:[%s12 + $0xc] sm:$0xf]
        %v1481 = vld [vmem:[%s13] sm:$0x1]
        %v1483 = vperm.slane %v1481, 0
        %v1489 = vunpack.c.l.b16 %v1477
        %v1490 = vunpack.c.l.b16 %v1478
        %v1491 = vunpack.c.l.b16 %v1479
        %v1492 = vunpack.c.l.b16 %v1480
        %v1493 = vpack.c.b16 %v1490, %v1489
        %v1494 = vpack.c.b16 %v1492, %v1491
        %1497 = vmatpush.bf16.msra.mxu0 0
        %1498 = vmatpush.bf16.msra.mxu0 0
        %1499 = vmatpush.bf16.msra.mxu0 0
        %1500 = vmatpush.bf16.msra.mxu0 0
        %1501 = vmatpush.bf16.msra.mxu0 0
        %1502 = vmatpush.bf16.msra.mxu0 0
        %1503 = vmatpush.bf16.msra.mxu0 %v1494
        %1504 = vmatpush.bf16.msra.mxu0 %v1493
        %1505 = vmatmul.bf16.gmra.mxu0 %v1405
        %v1506 = vpop.f32.mrf.mxu0
        %v1507 = vadd.f32 %v1483, %v1506
        %v1508 = vpop.f32.mrf.mxu0
        %v1509 = vadd.f32 %v1483, %v1508
        %1510 = vmatmul.bf16.gmra.mxu0 %v1408
        %v1511 = vpop.f32.mrf.mxu0
        %v1512 = vadd.f32 %v1483, %v1511
        %v1513 = vpop.f32.mrf.mxu0
        %v1514 = vadd.f32 %v1483, %v1513
        %1515 = vmatmul.bf16.gmra.mxu0 %v1411
        %v1516 = vpop.f32.mrf.mxu0
        %v1517 = vadd.f32 %v1483, %v1516
        %v1518 = vpop.f32.mrf.mxu0
        %v1519 = vadd.f32 %v1483, %v1518
        %1520 = vmatmul.bf16.gmra.mxu0 %v1414
        %v1521 = vpop.f32.mrf.mxu0
        %v1522 = vadd.f32 %v1483, %v1521
        %v1523 = vpop.f32.mrf.mxu0
        %v1524 = vadd.f32 %v1483, %v1523
        %1525 = vmatmul.bf16.gmra.mxu0 %v1417
        %v1526 = vpop.f32.mrf.mxu0
        %v1527 = vadd.f32 %v1483, %v1526
        %v1528 = vpop.f32.mrf.mxu0
        %v1529 = vadd.f32 %v1483, %v1528
        %1530 = vmatmul.bf16.gmra.mxu0 %v1420
        %v1531 = vpop.f32.mrf.mxu0
        %v1532 = vadd.f32 %v1483, %v1531
        %v1533 = vpop.f32.mrf.mxu0
        %v1534 = vadd.f32 %v1483, %v1533
        %1535 = vmatmul.bf16.gmra.mxu0 %v1423
        %v1536 = vpop.f32.mrf.mxu0
        %v1537 = vadd.f32 %v1483, %v1536
        %v1538 = vpop.f32.mrf.mxu0
        %v1539 = vadd.f32 %v1483, %v1538
        %1540 = vmatmul.bf16.gmra.mxu0 %v1426
        %v1541 = vpop.f32.mrf.mxu0
        %v1542 = vadd.f32 %v1483, %v1541
        %v1543 = vpop.f32.mrf.mxu0
        %v1544 = vadd.f32 %v1483, %v1543
        %1545 = vdwg.mxu0
        %v1546 = vxor.u32 %v1507, 2147483648
        %v1547 = vxor.u32 %v1509, 2147483648
        %v1548 = vxor.u32 %v1512, 2147483648
        %v1549 = vxor.u32 %v1514, 2147483648
        %v1550 = vxor.u32 %v1517, 2147483648
        %v1551 = vxor.u32 %v1519, 2147483648
        %v1552 = vxor.u32 %v1522, 2147483648
        %v1553 = vxor.u32 %v1524, 2147483648
        %v1554 = vxor.u32 %v1527, 2147483648
        %v1555 = vxor.u32 %v1529, 2147483648
        %v1556 = vxor.u32 %v1532, 2147483648
        %v1557 = vxor.u32 %v1534, 2147483648
        %v1558 = vxor.u32 %v1537, 2147483648
        %v1559 = vxor.u32 %v1539, 2147483648
        %v1560 = vxor.u32 %v1542, 2147483648
        %v1561 = vxor.u32 %v1544, 2147483648
        %v1562 = vmul.f32 %v1546, 1.442695
        %v1563 = vpow.pop %v1562
        %v1564 = vmul.f32 %v1547, 1.442695
        %v1565 = vpow.pop %v1564
        %v1566 = vmul.f32 %v1548, 1.442695
        %v1567 = vpow.pop %v1566
        %v1568 = vmul.f32 %v1549, 1.442695
        %v1569 = vpow.pop %v1568
        %v1570 = vmul.f32 %v1550, 1.442695
        %v1571 = vpow.pop %v1570
        %v1572 = vmul.f32 %v1551, 1.442695
        %v1573 = vpow.pop %v1572
        %v1574 = vmul.f32 %v1552, 1.442695
        %v1575 = vpow.pop %v1574
        %v1576 = vmul.f32 %v1553, 1.442695
        %v1577 = vpow.pop %v1576
        %v1578 = vmul.f32 %v1554, 1.442695
        %v1579 = vpow.pop %v1578
        %v1580 = vmul.f32 %v1555, 1.442695
        %v1581 = vpow.pop %v1580
        %v1582 = vmul.f32 %v1556, 1.442695
        %v1583 = vpow.pop %v1582
        %v1584 = vmul.f32 %v1557, 1.442695
        %v1585 = vpow.pop %v1584
        %v1586 = vmul.f32 %v1558, 1.442695
        %v1587 = vpow.pop %v1586
        %v1588 = vmul.f32 %v1559, 1.442695
        %v1589 = vpow.pop %v1588
        %v1590 = vmul.f32 %v1560, 1.442695
        %v1591 = vpow.pop %v1590
        %v1592 = vmul.f32 %v1561, 1.442695
        %v1593 = vpow.pop %v1592
        %v1594 = vadd.f32 %v1563, 1.0
        %v1595 = vadd.f32 %v1565, 1.0
        %v1596 = vadd.f32 %v1567, 1.0
        %v1597 = vadd.f32 %v1569, 1.0
        %v1598 = vadd.f32 %v1571, 1.0
        %v1599 = vadd.f32 %v1573, 1.0
        %v1600 = vadd.f32 %v1575, 1.0
        %v1601 = vadd.f32 %v1577, 1.0
        %v1602 = vadd.f32 %v1579, 1.0
        %v1603 = vadd.f32 %v1581, 1.0
        %v1604 = vadd.f32 %v1583, 1.0
        %v1605 = vadd.f32 %v1585, 1.0
        %v1606 = vadd.f32 %v1587, 1.0
        %v1607 = vadd.f32 %v1589, 1.0
        %v1608 = vadd.f32 %v1591, 1.0
        %v1609 = vadd.f32 %v1593, 1.0
        %v1610 = vrcp.pop %v1594
        %v1611 = vmul.f32 %v1594, %v1610
        %v1612 = vsub.f32 1.0, %v1611
        %v1613 = vmul.f32 %v1610, %v1612
        %v1614 = vadd.f32 %v1610, %v1613
        %vm1615 = vweird.f32 %v1594
        %vm1616 = vweird.f32 %v1610
        %vm1617 = vmor %vm1615, %vm1616
        %v1618 = vsel %vm1617, %v1610, %v1614
        %v1619 = vand.u32 2147483647, %v1594
        %vm1620 = vcmp.eq.f32.partialorder %v1619, 8.507059e+37
        %v1621 = vand.u32 %v1594, 2147483648
        %v1622 = vor.u32 1.1754944e-38, %v1621
        %v1623 = vsel %vm1620, %v1622, %v1618
        %v1624 = vmul.f32 1.0, %v1623
        %v1625 = vrcp.pop %v1595
        %v1626 = vmul.f32 %v1595, %v1625
        %v1627 = vsub.f32 1.0, %v1626
        %v1628 = vmul.f32 %v1625, %v1627
        %v1629 = vadd.f32 %v1625, %v1628
        %vm1630 = vweird.f32 %v1595
        %vm1631 = vweird.f32 %v1625
        %vm1632 = vmor %vm1630, %vm1631
        %v1633 = vsel %vm1632, %v1625, %v1629
        %v1634 = vand.u32 2147483647, %v1595
        %vm1635 = vcmp.eq.f32.partialorder %v1634, 8.507059e+37
        %v1636 = vand.u32 %v1595, 2147483648
        %v1637 = vor.u32 1.1754944e-38, %v1636
        %v1638 = vsel %vm1635, %v1637, %v1633
        %v1639 = vmul.f32 1.0, %v1638
        %v1640 = vrcp.pop %v1596
        %v1641 = vmul.f32 %v1596, %v1640
        %v1642 = vsub.f32 1.0, %v1641
        %v1643 = vmul.f32 %v1640, %v1642
        %v1644 = vadd.f32 %v1640, %v1643
        %vm1645 = vweird.f32 %v1596
        %vm1646 = vweird.f32 %v1640
        %vm1647 = vmor %vm1645, %vm1646
        %v1648 = vsel %vm1647, %v1640, %v1644
        %v1649 = vand.u32 2147483647, %v1596
        %vm1650 = vcmp.eq.f32.partialorder %v1649, 8.507059e+37
        %v1651 = vand.u32 %v1596, 2147483648
        %v1652 = vor.u32 1.1754944e-38, %v1651
        %v1653 = vsel %vm1650, %v1652, %v1648
        %v1654 = vmul.f32 1.0, %v1653
        %v1655 = vrcp.pop %v1597
        %v1656 = vmul.f32 %v1597, %v1655
        %v1657 = vsub.f32 1.0, %v1656
        %v1658 = vmul.f32 %v1655, %v1657
        %v1659 = vadd.f32 %v1655, %v1658
        %vm1660 = vweird.f32 %v1597
        %vm1661 = vweird.f32 %v1655
        %vm1662 = vmor %vm1660, %vm1661
        %v1663 = vsel %vm1662, %v1655, %v1659
        %v1664 = vand.u32 2147483647, %v1597
        %vm1665 = vcmp.eq.f32.partialorder %v1664, 8.507059e+37
        %v1666 = vand.u32 %v1597, 2147483648
        %v1667 = vor.u32 1.1754944e-38, %v1666
        %v1668 = vsel %vm1665, %v1667, %v1663
        %v1669 = vmul.f32 1.0, %v1668
        %v1670 = vrcp.pop %v1598
        %v1671 = vmul.f32 %v1598, %v1670
        %v1672 = vsub.f32 1.0, %v1671
        %v1673 = vmul.f32 %v1670, %v1672
        %v1674 = vadd.f32 %v1670, %v1673
        %vm1675 = vweird.f32 %v1598
        %vm1676 = vweird.f32 %v1670
        %vm1677 = vmor %vm1675, %vm1676
        %v1678 = vsel %vm1677, %v1670, %v1674
        %v1679 = vand.u32 2147483647, %v1598
        %vm1680 = vcmp.eq.f32.partialorder %v1679, 8.507059e+37
        %v1681 = vand.u32 %v1598, 2147483648
        %v1682 = vor.u32 1.1754944e-38, %v1681
        %v1683 = vsel %vm1680, %v1682, %v1678
        %v1684 = vmul.f32 1.0, %v1683
        %v1685 = vrcp.pop %v1599
        %v1686 = vmul.f32 %v1599, %v1685
        %v1687 = vsub.f32 1.0, %v1686
        %v1688 = vmul.f32 %v1685, %v1687
        %v1689 = vadd.f32 %v1685, %v1688
        %vm1690 = vweird.f32 %v1599
        %vm1691 = vweird.f32 %v1685
        %vm1692 = vmor %vm1690, %vm1691
        %v1693 = vsel %vm1692, %v1685, %v1689
        %v1694 = vand.u32 2147483647, %v1599
        %vm1695 = vcmp.eq.f32.partialorder %v1694, 8.507059e+37
        %v1696 = vand.u32 %v1599, 2147483648
        %v1697 = vor.u32 1.1754944e-38, %v1696
        %v1698 = vsel %vm1695, %v1697, %v1693
        %v1699 = vmul.f32 1.0, %v1698
        %v1700 = vrcp.pop %v1600
        %v1701 = vmul.f32 %v1600, %v1700
        %v1702 = vsub.f32 1.0, %v1701
        %v1703 = vmul.f32 %v1700, %v1702
        %v1704 = vadd.f32 %v1700, %v1703
        %vm1705 = vweird.f32 %v1600
        %vm1706 = vweird.f32 %v1700
        %vm1707 = vmor %vm1705, %vm1706
        %v1708 = vsel %vm1707, %v1700, %v1704
        %v1709 = vand.u32 2147483647, %v1600
        %vm1710 = vcmp.eq.f32.partialorder %v1709, 8.507059e+37
        %v1711 = vand.u32 %v1600, 2147483648
        %v1712 = vor.u32 1.1754944e-38, %v1711
        %v1713 = vsel %vm1710, %v1712, %v1708
        %v1714 = vmul.f32 1.0, %v1713
        %v1715 = vrcp.pop %v1601
        %v1716 = vmul.f32 %v1601, %v1715
        %v1717 = vsub.f32 1.0, %v1716
        %v1718 = vmul.f32 %v1715, %v1717
        %v1719 = vadd.f32 %v1715, %v1718
        %vm1720 = vweird.f32 %v1601
        %vm1721 = vweird.f32 %v1715
        %vm1722 = vmor %vm1720, %vm1721
        %v1723 = vsel %vm1722, %v1715, %v1719
        %v1724 = vand.u32 2147483647, %v1601
        %vm1725 = vcmp.eq.f32.partialorder %v1724, 8.507059e+37
        %v1726 = vand.u32 %v1601, 2147483648
        %v1727 = vor.u32 1.1754944e-38, %v1726
        %v1728 = vsel %vm1725, %v1727, %v1723
        %v1729 = vmul.f32 1.0, %v1728
        %v1730 = vrcp.pop %v1602
        %v1731 = vmul.f32 %v1602, %v1730
        %v1732 = vsub.f32 1.0, %v1731
        %v1733 = vmul.f32 %v1730, %v1732
        %v1734 = vadd.f32 %v1730, %v1733
        %vm1735 = vweird.f32 %v1602
        %vm1736 = vweird.f32 %v1730
        %vm1737 = vmor %vm1735, %vm1736
        %v1738 = vsel %vm1737, %v1730, %v1734
        %v1739 = vand.u32 2147483647, %v1602
        %vm1740 = vcmp.eq.f32.partialorder %v1739, 8.507059e+37
        %v1741 = vand.u32 %v1602, 2147483648
        %v1742 = vor.u32 1.1754944e-38, %v1741
        %v1743 = vsel %vm1740, %v1742, %v1738
        %v1744 = vmul.f32 1.0, %v1743
        %v1745 = vrcp.pop %v1603
        %v1746 = vmul.f32 %v1603, %v1745
        %v1747 = vsub.f32 1.0, %v1746
        %v1748 = vmul.f32 %v1745, %v1747
        %v1749 = vadd.f32 %v1745, %v1748
        %vm1750 = vweird.f32 %v1603
        %vm1751 = vweird.f32 %v1745
        %vm1752 = vmor %vm1750, %vm1751
        %v1753 = vsel %vm1752, %v1745, %v1749
        %v1754 = vand.u32 2147483647, %v1603
        %vm1755 = vcmp.eq.f32.partialorder %v1754, 8.507059e+37
        %v1756 = vand.u32 %v1603, 2147483648
        %v1757 = vor.u32 1.1754944e-38, %v1756
        %v1758 = vsel %vm1755, %v1757, %v1753
        %v1759 = vmul.f32 1.0, %v1758
        %v1760 = vrcp.pop %v1604
        %v1761 = vmul.f32 %v1604, %v1760
        %v1762 = vsub.f32 1.0, %v1761
        %v1763 = vmul.f32 %v1760, %v1762
        %v1764 = vadd.f32 %v1760, %v1763
        %vm1765 = vweird.f32 %v1604
        %vm1766 = vweird.f32 %v1760
        %vm1767 = vmor %vm1765, %vm1766
        %v1768 = vsel %vm1767, %v1760, %v1764
        %v1769 = vand.u32 2147483647, %v1604
        %vm1770 = vcmp.eq.f32.partialorder %v1769, 8.507059e+37
        %v1771 = vand.u32 %v1604, 2147483648
        %v1772 = vor.u32 1.1754944e-38, %v1771
        %v1773 = vsel %vm1770, %v1772, %v1768
        %v1774 = vmul.f32 1.0, %v1773
        %v1775 = vrcp.pop %v1605
        %v1776 = vmul.f32 %v1605, %v1775
        %v1777 = vsub.f32 1.0, %v1776
        %v1778 = vmul.f32 %v1775, %v1777
        %v1779 = vadd.f32 %v1775, %v1778
        %vm1780 = vweird.f32 %v1605
        %vm1781 = vweird.f32 %v1775
        %vm1782 = vmor %vm1780, %vm1781
        %v1783 = vsel %vm1782, %v1775, %v1779
        %v1784 = vand.u32 2147483647, %v1605
        %vm1785 = vcmp.eq.f32.partialorder %v1784, 8.507059e+37
        %v1786 = vand.u32 %v1605, 2147483648
        %v1787 = vor.u32 1.1754944e-38, %v1786
        %v1788 = vsel %vm1785, %v1787, %v1783
        %v1789 = vmul.f32 1.0, %v1788
        %v1790 = vrcp.pop %v1606
        %v1791 = vmul.f32 %v1606, %v1790
        %v1792 = vsub.f32 1.0, %v1791
        %v1793 = vmul.f32 %v1790, %v1792
        %v1794 = vadd.f32 %v1790, %v1793
        %vm1795 = vweird.f32 %v1606
        %vm1796 = vweird.f32 %v1790
        %vm1797 = vmor %vm1795, %vm1796
        %v1798 = vsel %vm1797, %v1790, %v1794
        %v1799 = vand.u32 2147483647, %v1606
        %vm1800 = vcmp.eq.f32.partialorder %v1799, 8.507059e+37
        %v1801 = vand.u32 %v1606, 2147483648
        %v1802 = vor.u32 1.1754944e-38, %v1801
        %v1803 = vsel %vm1800, %v1802, %v1798
        %v1804 = vmul.f32 1.0, %v1803
        %v1805 = vrcp.pop %v1607
        %v1806 = vmul.f32 %v1607, %v1805
        %v1807 = vsub.f32 1.0, %v1806
        %v1808 = vmul.f32 %v1805, %v1807
        %v1809 = vadd.f32 %v1805, %v1808
        %vm1810 = vweird.f32 %v1607
        %vm1811 = vweird.f32 %v1805
        %vm1812 = vmor %vm1810, %vm1811
        %v1813 = vsel %vm1812, %v1805, %v1809
        %v1814 = vand.u32 2147483647, %v1607
        %vm1815 = vcmp.eq.f32.partialorder %v1814, 8.507059e+37
        %v1816 = vand.u32 %v1607, 2147483648
        %v1817 = vor.u32 1.1754944e-38, %v1816
        %v1818 = vsel %vm1815, %v1817, %v1813
        %v1819 = vmul.f32 1.0, %v1818
        %v1820 = vrcp.pop %v1608
        %v1821 = vmul.f32 %v1608, %v1820
        %v1822 = vsub.f32 1.0, %v1821
        %v1823 = vmul.f32 %v1820, %v1822
        %v1824 = vadd.f32 %v1820, %v1823
        %vm1825 = vweird.f32 %v1608
        %vm1826 = vweird.f32 %v1820
        %vm1827 = vmor %vm1825, %vm1826
        %v1828 = vsel %vm1827, %v1820, %v1824
        %v1829 = vand.u32 2147483647, %v1608
        %vm1830 = vcmp.eq.f32.partialorder %v1829, 8.507059e+37
        %v1831 = vand.u32 %v1608, 2147483648
        %v1832 = vor.u32 1.1754944e-38, %v1831
        %v1833 = vsel %vm1830, %v1832, %v1828
        %v1834 = vmul.f32 1.0, %v1833
        %v1835 = vrcp.pop %v1609
        %v1836 = vmul.f32 %v1609, %v1835
        %v1837 = vsub.f32 1.0, %v1836
        %v1838 = vmul.f32 %v1835, %v1837
        %v1839 = vadd.f32 %v1835, %v1838
        %vm1840 = vweird.f32 %v1609
        %vm1841 = vweird.f32 %v1835
        %vm1842 = vmor %vm1840, %vm1841
        %v1843 = vsel %vm1842, %v1835, %v1839
        %v1844 = vand.u32 2147483647, %v1609
        %vm1845 = vcmp.eq.f32.partialorder %v1844, 8.507059e+37
        %v1846 = vand.u32 %v1609, 2147483648
        %v1847 = vor.u32 1.1754944e-38, %v1846
        %v1848 = vsel %vm1845, %v1847, %v1843
        %v1849 = vmul.f32 1.0, %v1848
        %v1858 = vperm.slane %v951, 0
        %v1859 = vperm.slane %v952, 0
        %v1860 = vperm.slane %v953, 0
        %v1861 = vperm.slane %v954, 0
        %v1862 = vperm.slane %v955, 0
        %v1863 = vperm.slane %v956, 0
        %v1864 = vperm.slane %v957, 0
        %v1865 = vperm.slane %v958, 0
        %v1874 = vmul.f32 %v1858, %v959
        %v1875 = vmul.f32 %v1858, %v960
        %v1876 = vmul.f32 %v1859, %v959
        %v1877 = vmul.f32 %v1859, %v960
        %v1878 = vmul.f32 %v1860, %v959
        %v1879 = vmul.f32 %v1860, %v960
        %v1880 = vmul.f32 %v1861, %v959
        %v1881 = vmul.f32 %v1861, %v960
        %v1882 = vmul.f32 %v1862, %v959
        %v1883 = vmul.f32 %v1862, %v960
        %v1884 = vmul.f32 %v1863, %v959
        %v1885 = vmul.f32 %v1863, %v960
        %v1886 = vmul.f32 %v1864, %v959
        %v1887 = vmul.f32 %v1864, %v960
        %v1888 = vmul.f32 %v1865, %v959
        %v1889 = vmul.f32 %v1865, %v960
        %1891 = vset.pattern.permute.xlu0 0
        %1892 = vperm.xlu0 %1891, %v1874
        %v1893 = vpop.permute.xlu0 %1892
        %1896 = vset.pattern.permute.xlu0 0
        %1897 = vperm.xlu0 %1896, %v1875
        %v1898 = vpop.permute.xlu0 %1897
        %1901 = vset.pattern.permute.xlu0 0
        %1902 = vperm.xlu0 %1901, %v1876
        %v1903 = vpop.permute.xlu0 %1902
        %1906 = vset.pattern.permute.xlu0 0
        %1907 = vperm.xlu0 %1906, %v1877
        %v1908 = vpop.permute.xlu0 %1907
        %1911 = vset.pattern.permute.xlu0 0
        %1912 = vperm.xlu0 %1911, %v1878
        %v1913 = vpop.permute.xlu0 %1912
        %1916 = vset.pattern.permute.xlu0 0
        %1917 = vperm.xlu0 %1916, %v1879
        %v1918 = vpop.permute.xlu0 %1917
        %1921 = vset.pattern.permute.xlu0 0
        %1922 = vperm.xlu0 %1921, %v1880
        %v1923 = vpop.permute.xlu0 %1922
        %1926 = vset.pattern.permute.xlu0 0
        %1927 = vperm.xlu0 %1926, %v1881
        %v1928 = vpop.permute.xlu0 %1927
        %1931 = vset.pattern.permute.xlu0 0
        %1932 = vperm.xlu0 %1931, %v1882
        %v1933 = vpop.permute.xlu0 %1932
        %1936 = vset.pattern.permute.xlu0 0
        %1937 = vperm.xlu0 %1936, %v1883
        %v1938 = vpop.permute.xlu0 %1937
        %1941 = vset.pattern.permute.xlu0 0
        %1942 = vperm.xlu0 %1941, %v1884
        %v1943 = vpop.permute.xlu0 %1942
        %1946 = vset.pattern.permute.xlu0 0
        %1947 = vperm.xlu0 %1946, %v1885
        %v1948 = vpop.permute.xlu0 %1947
        %1951 = vset.pattern.permute.xlu0 0
        %1952 = vperm.xlu0 %1951, %v1886
        %v1953 = vpop.permute.xlu0 %1952
        %1956 = vset.pattern.permute.xlu0 0
        %1957 = vperm.xlu0 %1956, %v1887
        %v1958 = vpop.permute.xlu0 %1957
        %1961 = vset.pattern.permute.xlu0 0
        %1962 = vperm.xlu0 %1961, %v1888
        %v1963 = vpop.permute.xlu0 %1962
        %1966 = vset.pattern.permute.xlu0 0
        %1967 = vperm.xlu0 %1966, %v1889
        %v1968 = vpop.permute.xlu0 %1967
        %v1970 = vmul.f32 %v1438, %v1893
        %v1971 = vmul.f32 %v1440, %v1898
        %v1972 = vmul.f32 %v1443, %v1903
        %v1973 = vmul.f32 %v1445, %v1908
        %v1974 = vmul.f32 %v1448, %v1913
        %v1975 = vmul.f32 %v1450, %v1918
        %v1976 = vmul.f32 %v1453, %v1923
        %v1977 = vmul.f32 %v1455, %v1928
        %v1978 = vmul.f32 %v1458, %v1933
        %v1979 = vmul.f32 %v1460, %v1938
        %v1980 = vmul.f32 %v1463, %v1943
        %v1981 = vmul.f32 %v1465, %v1948
        %v1982 = vmul.f32 %v1468, %v1953
        %v1983 = vmul.f32 %v1470, %v1958
        %v1984 = vmul.f32 %v1473, %v1963
        %v1985 = vmul.f32 %v1475, %v1968
        %v1986 = vmul.f32 %v1970, %v1624
        %v1987 = vmul.f32 %v1971, %v1639
        %v1988 = vmul.f32 %v1972, %v1654
        %v1989 = vmul.f32 %v1973, %v1669
        %v1990 = vmul.f32 %v1974, %v1684
        %v1991 = vmul.f32 %v1975, %v1699
        %v1992 = vmul.f32 %v1976, %v1714
        %v1993 = vmul.f32 %v1977, %v1729
        %v1994 = vmul.f32 %v1978, %v1744
        %v1995 = vmul.f32 %v1979, %v1759
        %v1996 = vmul.f32 %v1980, %v1774
        %v1997 = vmul.f32 %v1981, %v1789
        %v1998 = vmul.f32 %v1982, %v1804
        %v1999 = vmul.f32 %v1983, %v1819
        %v2000 = vmul.f32 %v1984, %v1834
        %v2001 = vmul.f32 %v1985, %v1849
        %v2002 = vpack.c.bf16 %v1987, %v1986
        %v2003 = vpack.c.bf16 %v1989, %v1988
        %v2004 = vpack.c.bf16 %v1991, %v1990
        %v2005 = vpack.c.bf16 %v1993, %v1992
        %v2006 = vpack.c.bf16 %v1995, %v1994
        %v2007 = vpack.c.bf16 %v1997, %v1996
        %v2008 = vpack.c.bf16 %v1999, %v1998
        %v2009 = vpack.c.bf16 %v2001, %v2000
        %2010 = vxpose.xlu0.c.b16.start [1/8] %v2002, 128
        %2011 = vxpose.xlu0.c.b16.cont [2/8] 0, 128
        %2012 = vxpose.xlu0.c.b16.cont [3/8] 0, 128
        %2013 = vxpose.xlu0.c.b16.cont [4/8] 0, 128
        %2014 = vxpose.xlu0.c.b16.cont [5/8] 0, 128
        %2015 = vxpose.xlu0.c.b16.cont [6/8] 0, 128
        %2016 = vxpose.xlu0.c.b16.cont [7/8] 0, 128
        %2017 = vxpose.xlu0.c.b16.end [8/8] 0, 128
        %v2018 = vpop.trf.xlu0
        %v2019 = vpop.trf.xlu0
        %v2020 = vpop.trf.xlu0
        %v2021 = vpop.trf.xlu0
        %v2022 = vpop.trf.xlu0
        %v2023 = vpop.trf.xlu0
        %v2024 = vpop.trf.xlu0
        %v2025 = vpop.trf.xlu0
        %2026 = vxpose.xlu0.c.b16.start [1/8] %v2003, 128
        %2027 = vxpose.xlu0.c.b16.cont [2/8] 0, 128
        %2028 = vxpose.xlu0.c.b16.cont [3/8] 0, 128
        %2029 = vxpose.xlu0.c.b16.cont [4/8] 0, 128
        %2030 = vxpose.xlu0.c.b16.cont [5/8] 0, 128
        %2031 = vxpose.xlu0.c.b16.cont [6/8] 0, 128
        %2032 = vxpose.xlu0.c.b16.cont [7/8] 0, 128
        %2033 = vxpose.xlu0.c.b16.end [8/8] 0, 128
        %v2034 = vpop.trf.xlu0
        %v2035 = vpop.trf.xlu0
        %v2036 = vpop.trf.xlu0
        %v2037 = vpop.trf.xlu0
        %v2038 = vpop.trf.xlu0
        %v2039 = vpop.trf.xlu0
        %v2040 = vpop.trf.xlu0
        %v2041 = vpop.trf.xlu0
        %2042 = vxpose.xlu0.c.b16.start [1/8] %v2004, 128
        %2043 = vxpose.xlu0.c.b16.cont [2/8] 0, 128
        %2044 = vxpose.xlu0.c.b16.cont [3/8] 0, 128
        %2045 = vxpose.xlu0.c.b16.cont [4/8] 0, 128
        %2046 = vxpose.xlu0.c.b16.cont [5/8] 0, 128
        %2047 = vxpose.xlu0.c.b16.cont [6/8] 0, 128
        %2048 = vxpose.xlu0.c.b16.cont [7/8] 0, 128
        %2049 = vxpose.xlu0.c.b16.end [8/8] 0, 128
        %v2050 = vpop.trf.xlu0
        %v2051 = vpop.trf.xlu0
        %v2052 = vpop.trf.xlu0
        %v2053 = vpop.trf.xlu0
        %v2054 = vpop.trf.xlu0
        %v2055 = vpop.trf.xlu0
        %v2056 = vpop.trf.xlu0
        %v2057 = vpop.trf.xlu0
        %2058 = vxpose.xlu0.c.b16.start [1/8] %v2005, 128
        %2059 = vxpose.xlu0.c.b16.cont [2/8] 0, 128
        %2060 = vxpose.xlu0.c.b16.cont [3/8] 0, 128
        %2061 = vxpose.xlu0.c.b16.cont [4/8] 0, 128
        %2062 = vxpose.xlu0.c.b16.cont [5/8] 0, 128
        %2063 = vxpose.xlu0.c.b16.cont [6/8] 0, 128
        %2064 = vxpose.xlu0.c.b16.cont [7/8] 0, 128
        %2065 = vxpose.xlu0.c.b16.end [8/8] 0, 128
        %v2066 = vpop.trf.xlu0
        %v2067 = vpop.trf.xlu0
        %v2068 = vpop.trf.xlu0
        %v2069 = vpop.trf.xlu0
        %v2070 = vpop.trf.xlu0
        %v2071 = vpop.trf.xlu0
        %v2072 = vpop.trf.xlu0
        %v2073 = vpop.trf.xlu0
        %2074 = vxpose.xlu0.c.b16.start [1/8] %v2006, 128
        %2075 = vxpose.xlu0.c.b16.cont [2/8] 0, 128
        %2076 = vxpose.xlu0.c.b16.cont [3/8] 0, 128
        %2077 = vxpose.xlu0.c.b16.cont [4/8] 0, 128
        %2078 = vxpose.xlu0.c.b16.cont [5/8] 0, 128
        %2079 = vxpose.xlu0.c.b16.cont [6/8] 0, 128
        %2080 = vxpose.xlu0.c.b16.cont [7/8] 0, 128
        %2081 = vxpose.xlu0.c.b16.end [8/8] 0, 128
        %v2082 = vpop.trf.xlu0
        %v2083 = vpop.trf.xlu0
        %v2084 = vpop.trf.xlu0
        %v2085 = vpop.trf.xlu0
        %v2086 = vpop.trf.xlu0
        %v2087 = vpop.trf.xlu0
        %v2088 = vpop.trf.xlu0
        %v2089 = vpop.trf.xlu0
        %2090 = vxpose.xlu0.c.b16.start [1/8] %v2007, 128
        %2091 = vxpose.xlu0.c.b16.cont [2/8] 0, 128
        %2092 = vxpose.xlu0.c.b16.cont [3/8] 0, 128
        %2093 = vxpose.xlu0.c.b16.cont [4/8] 0, 128
        %2094 = vxpose.xlu0.c.b16.cont [5/8] 0, 128
        %2095 = vxpose.xlu0.c.b16.cont [6/8] 0, 128
        %2096 = vxpose.xlu0.c.b16.cont [7/8] 0, 128
        %2097 = vxpose.xlu0.c.b16.end [8/8] 0, 128
        %v2098 = vpop.trf.xlu0
        %v2099 = vpop.trf.xlu0
        %v2100 = vpop.trf.xlu0
        %v2101 = vpop.trf.xlu0
        %v2102 = vpop.trf.xlu0
        %v2103 = vpop.trf.xlu0
        %v2104 = vpop.trf.xlu0
        %v2105 = vpop.trf.xlu0
        %2106 = vxpose.xlu0.c.b16.start [1/8] %v2008, 128
        %2107 = vxpose.xlu0.c.b16.cont [2/8] 0, 128
        %2108 = vxpose.xlu0.c.b16.cont [3/8] 0, 128
        %2109 = vxpose.xlu0.c.b16.cont [4/8] 0, 128
        %2110 = vxpose.xlu0.c.b16.cont [5/8] 0, 128
        %2111 = vxpose.xlu0.c.b16.cont [6/8] 0, 128
        %2112 = vxpose.xlu0.c.b16.cont [7/8] 0, 128
        %2113 = vxpose.xlu0.c.b16.end [8/8] 0, 128
        %v2114 = vpop.trf.xlu0
        %v2115 = vpop.trf.xlu0
        %v2116 = vpop.trf.xlu0
        %v2117 = vpop.trf.xlu0
        %v2118 = vpop.trf.xlu0
        %v2119 = vpop.trf.xlu0
        %v2120 = vpop.trf.xlu0
        %v2121 = vpop.trf.xlu0
        %2122 = vxpose.xlu0.c.b16.start [1/8] %v2009, 128
        %2123 = vxpose.xlu0.c.b16.cont [2/8] 0, 128
        %2124 = vxpose.xlu0.c.b16.cont [3/8] 0, 128
        %2125 = vxpose.xlu0.c.b16.cont [4/8] 0, 128
        %2126 = vxpose.xlu0.c.b16.cont [5/8] 0, 128
        %2127 = vxpose.xlu0.c.b16.cont [6/8] 0, 128
        %2128 = vxpose.xlu0.c.b16.cont [7/8] 0, 128
        %2129 = vxpose.xlu0.c.b16.end [8/8] 0, 128
        %v2130 = vpop.trf.xlu0
        %v2131 = vpop.trf.xlu0
        %v2132 = vpop.trf.xlu0
        %v2133 = vpop.trf.xlu0
        %v2134 = vpop.trf.xlu0
        %v2135 = vpop.trf.xlu0
        %v2136 = vpop.trf.xlu0
        %v2137 = vpop.trf.xlu0
        %v2140 = vpack.i.b16 %v2034, %v2018
        %v2142 = vshrl.u32 %v2018, 16
        %v2143 = vshrl.u32 %v2034, 16
        %v2144 = vpack.i.b16 %v2143, %v2142
        %v2148 = vpack.i.b16 %v2066, %v2050
        %v2150 = vshrl.u32 %v2050, 16
        %v2151 = vshrl.u32 %v2066, 16
        %v2152 = vpack.i.b16 %v2151, %v2150
        %v2156 = vpack.i.b16 %v2098, %v2082
        %v2158 = vshrl.u32 %v2082, 16
        %v2159 = vshrl.u32 %v2098, 16
        %v2160 = vpack.i.b16 %v2159, %v2158
        %v2164 = vpack.i.b16 %v2130, %v2114
        %v2166 = vshrl.u32 %v2114, 16
        %v2167 = vshrl.u32 %v2130, 16
        %v2168 = vpack.i.b16 %v2167, %v2166
        %v2172 = vpack.i.b16 %v2035, %v2019
        %v2174 = vshrl.u32 %v2019, 16
        %v2175 = vshrl.u32 %v2035, 16
        %v2176 = vpack.i.b16 %v2175, %v2174
        %v2180 = vpack.i.b16 %v2067, %v2051
        %v2182 = vshrl.u32 %v2051, 16
        %v2183 = vshrl.u32 %v2067, 16
        %v2184 = vpack.i.b16 %v2183, %v2182
        %v2188 = vpack.i.b16 %v2099, %v2083
        %v2190 = vshrl.u32 %v2083, 16
        %v2191 = vshrl.u32 %v2099, 16
        %v2192 = vpack.i.b16 %v2191, %v2190
        %v2196 = vpack.i.b16 %v2131, %v2115
        %v2198 = vshrl.u32 %v2115, 16
        %v2199 = vshrl.u32 %v2131, 16
        %v2200 = vpack.i.b16 %v2199, %v2198
        %v2202 = vrot.slane %v2156, 4
        %vm2203 = vcmask 1047556
        %v2204 = vsel %vm2203, %v2202, %v2140
        %v2205 = vrot.slane %v2140, 4
        %v2206 = vsel %vm2203, %v2156, %v2205
        %v2208 = vunpack.c.l.s4 1983009808
        %v2209 = vunpack.c.0.s8 %v2208
        %v2210 = vperm.slane %v2204, %v2209
        %v2212 = vunpack.c.l.s4 1983009808
        %v2213 = vunpack.c.0.s8 %v2212
        %v2214 = vperm.slane %v2206, %v2213
        %v2215 = vrot.slane %v2164, 4
        %v2216 = vsel %vm2203, %v2215, %v2148
        %v2217 = vrot.slane %v2148, 4
        %v2218 = vsel %vm2203, %v2164, %v2217
        %v2220 = vunpack.c.l.s4 1983009808
        %v2221 = vunpack.c.0.s8 %v2220
        %v2222 = vperm.slane %v2216, %v2221
        %v2224 = vunpack.c.l.s4 1983009808
        %v2225 = vunpack.c.0.s8 %v2224
        %v2226 = vperm.slane %v2218, %v2225
        %v2227 = vrot.slane %v2222, 4
        %v2228 = vsel %vm2203, %v2227, %v2210
        %v2229 = vrot.slane %v2210, 4
        %v2230 = vsel %vm2203, %v2222, %v2229
        %v2232 = vunpack.c.l.s4 1934713408
        %v2233 = vunpack.c.0.s8 %v2232
        %v2234 = vperm.slane %v2228, %v2233
        %v2236 = vunpack.c.l.s4 1934713408
        %v2237 = vunpack.c.0.s8 %v2236
        %v2238 = vperm.slane %v2230, %v2237
        %v2239 = vrot.slane %v2226, 4
        %v2240 = vsel %vm2203, %v2239, %v2214
        %v2241 = vrot.slane %v2214, 4
        %v2242 = vsel %vm2203, %v2226, %v2241
        %v2244 = vunpack.c.l.s4 1934713408
        %v2245 = vunpack.c.0.s8 %v2244
        %v2246 = vperm.slane %v2240, %v2245
        %v2248 = vunpack.c.l.s4 1934713408
        %v2249 = vunpack.c.0.s8 %v2248
        %v2250 = vperm.slane %v2242, %v2249
        %v2251 = vrot.slane %v2234, 4
        %v2252 = vsel %vm2203, 0, %v2251
        %v2253 = vrot.slane %v2238, 4
        %v2254 = vsel %vm2203, 0, %v2253
        %v2255 = vrot.slane %v2246, 4
        %v2256 = vsel %vm2203, 0, %v2255
        %v2257 = vrot.slane %v2250, 4
        %v2258 = vsel %vm2203, 0, %v2257
        %v2259 = vrot.slane %v2160, 4
        %v2260 = vsel %vm2203, %v2259, %v2144
        %v2261 = vrot.slane %v2144, 4
        %v2262 = vsel %vm2203, %v2160, %v2261
        %v2264 = vunpack.c.l.s4 1983009808
        %v2265 = vunpack.c.0.s8 %v2264
        %v2266 = vperm.slane %v2260, %v2265
        %v2268 = vunpack.c.l.s4 1983009808
        %v2269 = vunpack.c.0.s8 %v2268
        %v2270 = vperm.slane %v2262, %v2269
        %v2271 = vrot.slane %v2168, 4
        %v2272 = vsel %vm2203, %v2271, %v2152
        %v2273 = vrot.slane %v2152, 4
        %v2274 = vsel %vm2203, %v2168, %v2273
        %v2276 = vunpack.c.l.s4 1983009808
        %v2277 = vunpack.c.0.s8 %v2276
        %v2278 = vperm.slane %v2272, %v2277
        %v2280 = vunpack.c.l.s4 1983009808
        %v2281 = vunpack.c.0.s8 %v2280
        %v2282 = vperm.slane %v2274, %v2281
        %v2283 = vrot.slane %v2278, 4
        %v2284 = vsel %vm2203, %v2283, %v2266
        %v2285 = vrot.slane %v2266, 4
        %v2286 = vsel %vm2203, %v2278, %v2285
        %v2288 = vunpack.c.l.s4 1934713408
        %v2289 = vunpack.c.0.s8 %v2288
        %v2290 = vperm.slane %v2284, %v2289
        %v2292 = vunpack.c.l.s4 1934713408
        %v2293 = vunpack.c.0.s8 %v2292
        %v2294 = vperm.slane %v2286, %v2293
        %v2295 = vrot.slane %v2282, 4
        %v2296 = vsel %vm2203, %v2295, %v2270
        %v2297 = vrot.slane %v2270, 4
        %v2298 = vsel %vm2203, %v2282, %v2297
        %v2300 = vunpack.c.l.s4 1934713408
        %v2301 = vunpack.c.0.s8 %v2300
        %v2302 = vperm.slane %v2296, %v2301
        %v2304 = vunpack.c.l.s4 1934713408
        %v2305 = vunpack.c.0.s8 %v2304
        %v2306 = vperm.slane %v2298, %v2305
        %v2307 = vrot.slane %v2290, 4
        %v2308 = vsel %vm2203, 0, %v2307
        %v2309 = vrot.slane %v2294, 4
        %v2310 = vsel %vm2203, 0, %v2309
        %v2311 = vrot.slane %v2302, 4
        %v2312 = vsel %vm2203, 0, %v2311
        %v2313 = vrot.slane %v2306, 4
        %v2314 = vsel %vm2203, 0, %v2313
        %v2315 = vrot.slane %v2188, 4
        %v2316 = vsel %vm2203, %v2315, %v2172
        %v2317 = vrot.slane %v2172, 4
        %v2318 = vsel %vm2203, %v2188, %v2317
        %v2320 = vunpack.c.l.s4 1983009808
        %v2321 = vunpack.c.0.s8 %v2320
        %v2322 = vperm.slane %v2316, %v2321
        %v2324 = vunpack.c.l.s4 1983009808
        %v2325 = vunpack.c.0.s8 %v2324
        %v2326 = vperm.slane %v2318, %v2325
        %v2327 = vrot.slane %v2196, 4
        %v2328 = vsel %vm2203, %v2327, %v2180
        %v2329 = vrot.slane %v2180, 4
        %v2330 = vsel %vm2203, %v2196, %v2329
        %v2332 = vunpack.c.l.s4 1983009808
        %v2333 = vunpack.c.0.s8 %v2332
        %v2334 = vperm.slane %v2328, %v2333
        %v2336 = vunpack.c.l.s4 1983009808
        %v2337 = vunpack.c.0.s8 %v2336
        %v2338 = vperm.slane %v2330, %v2337
        %v2339 = vrot.slane %v2334, 4
        %v2340 = vsel %vm2203, %v2339, %v2322
        %v2341 = vrot.slane %v2322, 4
        %v2342 = vsel %vm2203, %v2334, %v2341
        %v2344 = vunpack.c.l.s4 1934713408
        %v2345 = vunpack.c.0.s8 %v2344
        %v2346 = vperm.slane %v2340, %v2345
        %v2348 = vunpack.c.l.s4 1934713408
        %v2349 = vunpack.c.0.s8 %v2348
        %v2350 = vperm.slane %v2342, %v2349
        %v2351 = vrot.slane %v2338, 4
        %v2352 = vsel %vm2203, %v2351, %v2326
        %v2353 = vrot.slane %v2326, 4
        %v2354 = vsel %vm2203, %v2338, %v2353
        %v2356 = vunpack.c.l.s4 1934713408
        %v2357 = vunpack.c.0.s8 %v2356
        %v2358 = vperm.slane %v2352, %v2357
        %v2360 = vunpack.c.l.s4 1934713408
        %v2361 = vunpack.c.0.s8 %v2360
        %v2362 = vperm.slane %v2354, %v2361
        %v2363 = vrot.slane %v2346, 4
        %v2364 = vsel %vm2203, 0, %v2363
        %v2365 = vrot.slane %v2350, 4
        %v2366 = vsel %vm2203, 0, %v2365
        %v2367 = vrot.slane %v2358, 4
        %v2368 = vsel %vm2203, 0, %v2367
        %v2369 = vrot.slane %v2362, 4
        %v2370 = vsel %vm2203, 0, %v2369
        %v2371 = vrot.slane %v2192, 4
        %v2372 = vsel %vm2203, %v2371, %v2176
        %v2373 = vrot.slane %v2176, 4
        %v2374 = vsel %vm2203, %v2192, %v2373
        %v2376 = vunpack.c.l.s4 1983009808
        %v2377 = vunpack.c.0.s8 %v2376
        %v2378 = vperm.slane %v2372, %v2377
        %v2380 = vunpack.c.l.s4 1983009808
        %v2381 = vunpack.c.0.s8 %v2380
        %v2382 = vperm.slane %v2374, %v2381
        %v2383 = vrot.slane %v2200, 4
        %v2384 = vsel %vm2203, %v2383, %v2184
        %v2385 = vrot.slane %v2184, 4
        %v2386 = vsel %vm2203, %v2200, %v2385
        %v2388 = vunpack.c.l.s4 1983009808
        %v2389 = vunpack.c.0.s8 %v2388
        %v2390 = vperm.slane %v2384, %v2389
        %v2392 = vunpack.c.l.s4 1983009808
        %v2393 = vunpack.c.0.s8 %v2392
        %v2394 = vperm.slane %v2386, %v2393
        %v2395 = vrot.slane %v2390, 4
        %v2396 = vsel %vm2203, %v2395, %v2378
        %v2397 = vrot.slane %v2378, 4
        %v2398 = vsel %vm2203, %v2390, %v2397
        %v2400 = vunpack.c.l.s4 1934713408
        %v2401 = vunpack.c.0.s8 %v2400
        %v2402 = vperm.slane %v2396, %v2401
        %v2404 = vunpack.c.l.s4 1934713408
        %v2405 = vunpack.c.0.s8 %v2404
        %v2406 = vperm.slane %v2398, %v2405
        %v2407 = vrot.slane %v2394, 4
        %v2408 = vsel %vm2203, %v2407, %v2382
        %v2409 = vrot.slane %v2382, 4
        %v2410 = vsel %vm2203, %v2394, %v2409
        %v2412 = vunpack.c.l.s4 1934713408
        %v2413 = vunpack.c.0.s8 %v2412
        %v2414 = vperm.slane %v2408, %v2413
        %v2416 = vunpack.c.l.s4 1934713408
        %v2417 = vunpack.c.0.s8 %v2416
        %v2418 = vperm.slane %v2410, %v2417
        %v2419 = vrot.slane %v2402, 4
        %v2420 = vsel %vm2203, 0, %v2419
        %v2421 = vrot.slane %v2406, 4
        %v2422 = vsel %vm2203, 0, %v2421
        %v2423 = vrot.slane %v2414, 4
        %v2424 = vsel %vm2203, 0, %v2423
        %v2425 = vrot.slane %v2418, 4
        %v2426 = vsel %vm2203, 0, %v2425
        %v2427 = vld [vmem:[%s783] sm:$0xff]
        %v2428 = vld [vmem:[%s783 + $0x8] sm:$0xff]
        %v2429 = vld [vmem:[%s783 + $0x10] sm:$0xff]
        %v2430 = vld [vmem:[%s783 + $0x18] sm:$0xff]
        %v2431 = vld [vmem:[%s783 + $0x20] sm:$0xff]
        %v2432 = vld [vmem:[%s783 + $0x28] sm:$0xff]
        %v2433 = vld [vmem:[%s783 + $0x30] sm:$0xff]
        %v2434 = vld [vmem:[%s783 + $0x38] sm:$0xff]
        %v2435 = vsel %vm978, %v2427, 0.0
        %2436 = vadd.xlane.f32.xlu0 %v2435
        %v2437 = vpop.xlane.xlu0 %2436
        %v2438 = vsel %vm978, %v2428, 0.0
        %2439 = vadd.xlane.f32.xlu0 %v2438
        %v2440 = vpop.xlane.xlu0 %2439
        %v2441 = vsel %vm978, %v2429, 0.0
        %2442 = vadd.xlane.f32.xlu0 %v2441
        %v2443 = vpop.xlane.xlu0 %2442
        %v2444 = vsel %vm978, %v2430, 0.0
        %2445 = vadd.xlane.f32.xlu0 %v2444
        %v2446 = vpop.xlane.xlu0 %2445
        %v2447 = vsel %vm978, %v2431, 0.0
        %2448 = vadd.xlane.f32.xlu0 %v2447
        %v2449 = vpop.xlane.xlu0 %2448
        %v2450 = vsel %vm978, %v2432, 0.0
        %2451 = vadd.xlane.f32.xlu0 %v2450
        %v2452 = vpop.xlane.xlu0 %2451
        %v2453 = vsel %vm978, %v2433, 0.0
        %2454 = vadd.xlane.f32.xlu0 %v2453
        %v2455 = vpop.xlane.xlu0 %2454
        %v2456 = vsel %vm978, %v2434, 0.0
        %2457 = vadd.xlane.f32.xlu0 %v2456
        %v2458 = vpop.xlane.xlu0 %2457
        %v2459 = vmul.f32 %v2437, %v1033
        %v2460 = vmul.f32 %v2440, %v1033
        %v2461 = vmul.f32 %v2443, %v1033
        %v2462 = vmul.f32 %v2446, %v1033
        %v2463 = vmul.f32 %v2449, %v1033
        %v2464 = vmul.f32 %v2452, %v1033
        %v2465 = vmul.f32 %v2455, %v1033
        %v2466 = vmul.f32 %v2458, %v1033
        %v2467 = vsub.f32 %v2427, %v2459
        %v2468 = vsub.f32 %v2428, %v2460
        %v2469 = vsub.f32 %v2429, %v2461
        %v2470 = vsub.f32 %v2430, %v2462
        %v2471 = vsub.f32 %v2431, %v2463
        %v2472 = vsub.f32 %v2432, %v2464
        %v2473 = vsub.f32 %v2433, %v2465
        %v2474 = vsub.f32 %v2434, %v2466
        %v2475 = vmul.f32 %v2467, %v2467
        %v2476 = vmul.f32 %v2468, %v2468
        %v2477 = vmul.f32 %v2469, %v2469
        %v2478 = vmul.f32 %v2470, %v2470
        %v2479 = vmul.f32 %v2471, %v2471
        %v2480 = vmul.f32 %v2472, %v2472
        %v2481 = vmul.f32 %v2473, %v2473
        %v2482 = vmul.f32 %v2474, %v2474
        %v2483 = vsel %vm978, %v2475, 0.0
        %2484 = vadd.xlane.f32.xlu0 %v2483
        %v2485 = vpop.xlane.xlu0 %2484
        %v2486 = vsel %vm978, %v2476, 0.0
        %2487 = vadd.xlane.f32.xlu0 %v2486
        %v2488 = vpop.xlane.xlu0 %2487
        %v2489 = vsel %vm978, %v2477, 0.0
        %2490 = vadd.xlane.f32.xlu0 %v2489
        %v2491 = vpop.xlane.xlu0 %2490
        %v2492 = vsel %vm978, %v2478, 0.0
        %2493 = vadd.xlane.f32.xlu0 %v2492
        %v2494 = vpop.xlane.xlu0 %2493
        %v2495 = vsel %vm978, %v2479, 0.0
        %2496 = vadd.xlane.f32.xlu0 %v2495
        %v2497 = vpop.xlane.xlu0 %2496
        %v2498 = vsel %vm978, %v2480, 0.0
        %2499 = vadd.xlane.f32.xlu0 %v2498
        %v2500 = vpop.xlane.xlu0 %2499
        %v2501 = vsel %vm978, %v2481, 0.0
        %2502 = vadd.xlane.f32.xlu0 %v2501
        %v2503 = vpop.xlane.xlu0 %2502
        %v2504 = vsel %vm978, %v2482, 0.0
        %2505 = vadd.xlane.f32.xlu0 %v2504
        %v2506 = vpop.xlane.xlu0 %2505
        %v2507 = vmul.f32 %v2485, %v1033
        %v2508 = vmul.f32 %v2488, %v1033
        %v2509 = vmul.f32 %v2491, %v1033
        %v2510 = vmul.f32 %v2494, %v1033
        %v2511 = vmul.f32 %v2497, %v1033
        %v2512 = vmul.f32 %v2500, %v1033
        %v2513 = vmul.f32 %v2503, %v1033
        %v2514 = vmul.f32 %v2506, %v1033
        %v2515 = vadd.f32 %v2507, 1e-05
        %v2516 = vadd.f32 %v2508, 1e-05
        %v2517 = vadd.f32 %v2509, 1e-05
        %v2518 = vadd.f32 %v2510, 1e-05
        %v2519 = vadd.f32 %v2511, 1e-05
        %v2520 = vadd.f32 %v2512, 1e-05
        %v2521 = vadd.f32 %v2513, 1e-05
        %v2522 = vadd.f32 %v2514, 1e-05
        %v2523 = vrsqrt.pop %v2515
        %v2524 = vmul.f32 %v2523, %v2515
        %v2525 = vmul.f32 %v2524, %v2523
        %v2526 = vmul.f32 0.5, %v2525
        %v2527 = vsub.f32 1.5, %v2526
        %v2528 = vmul.f32 %v2523, %v2527
        %vm2529 = vweird.f32 %v2515
        %vm2530 = vweird.f32 %v2523
        %vm2531 = vmor %vm2529, %vm2530
        %v2532 = vsel %vm2531, %v2523, %v2528
        %v2533 = vrsqrt.pop %v2516
        %v2534 = vmul.f32 %v2533, %v2516
        %v2535 = vmul.f32 %v2534, %v2533
        %v2536 = vmul.f32 0.5, %v2535
        %v2537 = vsub.f32 1.5, %v2536
        %v2538 = vmul.f32 %v2533, %v2537
        %vm2539 = vweird.f32 %v2516
        %vm2540 = vweird.f32 %v2533
        %vm2541 = vmor %vm2539, %vm2540
        %v2542 = vsel %vm2541, %v2533, %v2538
        %v2543 = vrsqrt.pop %v2517
        %v2544 = vmul.f32 %v2543, %v2517
        %v2545 = vmul.f32 %v2544, %v2543
        %v2546 = vmul.f32 0.5, %v2545
        %v2547 = vsub.f32 1.5, %v2546
        %v2548 = vmul.f32 %v2543, %v2547
        %vm2549 = vweird.f32 %v2517
        %vm2550 = vweird.f32 %v2543
        %vm2551 = vmor %vm2549, %vm2550
        %v2552 = vsel %vm2551, %v2543, %v2548
        %v2553 = vrsqrt.pop %v2518
        %v2554 = vmul.f32 %v2553, %v2518
        %v2555 = vmul.f32 %v2554, %v2553
        %v2556 = vmul.f32 0.5, %v2555
        %v2557 = vsub.f32 1.5, %v2556
        %v2558 = vmul.f32 %v2553, %v2557
        %vm2559 = vweird.f32 %v2518
        %vm2560 = vweird.f32 %v2553
        %vm2561 = vmor %vm2559, %vm2560
        %v2562 = vsel %vm2561, %v2553, %v2558
        %v2563 = vrsqrt.pop %v2519
        %v2564 = vmul.f32 %v2563, %v2519
        %v2565 = vmul.f32 %v2564, %v2563
        %v2566 = vmul.f32 0.5, %v2565
        %v2567 = vsub.f32 1.5, %v2566
        %v2568 = vmul.f32 %v2563, %v2567
        %vm2569 = vweird.f32 %v2519
        %vm2570 = vweird.f32 %v2563
        %vm2571 = vmor %vm2569, %vm2570
        %v2572 = vsel %vm2571, %v2563, %v2568
        %v2573 = vrsqrt.pop %v2520
        %v2574 = vmul.f32 %v2573, %v2520
        %v2575 = vmul.f32 %v2574, %v2573
        %v2576 = vmul.f32 0.5, %v2575
        %v2577 = vsub.f32 1.5, %v2576
        %v2578 = vmul.f32 %v2573, %v2577
        %vm2579 = vweird.f32 %v2520
        %vm2580 = vweird.f32 %v2573
        %vm2581 = vmor %vm2579, %vm2580
        %v2582 = vsel %vm2581, %v2573, %v2578
        %v2583 = vrsqrt.pop %v2521
        %v2584 = vmul.f32 %v2583, %v2521
        %v2585 = vmul.f32 %v2584, %v2583
        %v2586 = vmul.f32 0.5, %v2585
        %v2587 = vsub.f32 1.5, %v2586
        %v2588 = vmul.f32 %v2583, %v2587
        %vm2589 = vweird.f32 %v2521
        %vm2590 = vweird.f32 %v2583
        %vm2591 = vmor %vm2589, %vm2590
        %v2592 = vsel %vm2591, %v2583, %v2588
        %v2593 = vrsqrt.pop %v2522
        %v2594 = vmul.f32 %v2593, %v2522
        %v2595 = vmul.f32 %v2594, %v2593
        %v2596 = vmul.f32 0.5, %v2595
        %v2597 = vsub.f32 1.5, %v2596
        %v2598 = vmul.f32 %v2593, %v2597
        %vm2599 = vweird.f32 %v2522
        %vm2600 = vweird.f32 %v2593
        %vm2601 = vmor %vm2599, %vm2600
        %v2602 = vsel %vm2601, %v2593, %v2598
        %v2603 = vmul.f32 %v2467, %v2532
        %v2604 = vmul.f32 %v2468, %v2542
        %v2605 = vmul.f32 %v2469, %v2552
        %v2606 = vmul.f32 %v2470, %v2562
        %v2607 = vmul.f32 %v2471, %v2572
        %v2608 = vmul.f32 %v2472, %v2582
        %v2609 = vmul.f32 %v2473, %v2592
        %v2610 = vmul.f32 %v2474, %v2602
        %v2611 = vmul.f32 %v2603, %v1339
        %v2612 = vmul.f32 %v2604, %v1339
        %v2613 = vmul.f32 %v2605, %v1339
        %v2614 = vmul.f32 %v2606, %v1339
        %v2615 = vmul.f32 %v2607, %v1339
        %v2616 = vmul.f32 %v2608, %v1339
        %v2617 = vmul.f32 %v2609, %v1339
        %v2618 = vmul.f32 %v2610, %v1339
        %v2619 = vadd.f32 %v2611, %v1358
        %v2620 = vadd.f32 %v2612, %v1358
        %v2621 = vadd.f32 %v2613, %v1358
        %v2622 = vadd.f32 %v2614, %v1358
        %v2623 = vadd.f32 %v2615, %v1358
        %v2624 = vadd.f32 %v2616, %v1358
        %v2625 = vadd.f32 %v2617, %v1358
        %v2626 = vadd.f32 %v2618, %v1358
        %v2627 = vpack.c.bf16 %v2620, %v2619
        %v2628 = vpack.c.bf16 %v2622, %v2621
        %v2629 = vpack.c.bf16 %v2624, %v2623
        %v2630 = vpack.c.bf16 %v2626, %v2625
        %v2631 = vld [vmem:[%s10] sm:$0xf]
        %v2632 = vld [vmem:[%s10 + $0x4] sm:$0xf]
        %v2633 = vld [vmem:[%s10 + $0x8] sm:$0xf]
        %v2634 = vld [vmem:[%s10 + $0xc] sm:$0xf]
        %v2635 = vld [vmem:[%s11] sm:$0x1]
        %v2637 = vperm.slane %v2635, 0
        %v2643 = vunpack.c.l.b16 %v2631
        %v2644 = vunpack.c.l.b16 %v2632
        %v2645 = vunpack.c.l.b16 %v2633
        %v2646 = vunpack.c.l.b16 %v2634
        %v2647 = vpack.c.b16 %v2644, %v2643
        %v2648 = vpack.c.b16 %v2646, %v2645
        %v2652 = vsel %vm978, %v2627, 0
        %v2655 = vsel %vm978, %v2628, 0
        %v2658 = vsel %vm978, %v2629, 0
        %v2661 = vsel %vm978, %v2630, 0
        %2663 = vmatpush.bf16.msra.mxu0 0
        %2664 = vmatpush.bf16.msra.mxu0 0
        %2665 = vmatpush.bf16.msra.mxu0 0
        %2666 = vmatpush.bf16.msra.mxu0 0
        %2667 = vmatpush.bf16.msra.mxu0 0
        %2668 = vmatpush.bf16.msra.mxu0 0
        %2669 = vmatpush.bf16.msra.mxu0 %v2648
        %2670 = vmatpush.bf16.msra.mxu0 %v2647
        %2671 = vmatmul.bf16.gmra.mxu0 %v2652
        %v2672 = vpop.f32.mrf.mxu0
        %v2673 = vadd.f32 %v2637, %v2672
        %v2674 = vpop.f32.mrf.mxu0
        %v2675 = vadd.f32 %v2637, %v2674
        %2676 = vmatmul.bf16.gmra.mxu0 %v2655
        %v2677 = vpop.f32.mrf.mxu0
        %v2678 = vadd.f32 %v2637, %v2677
        %v2679 = vpop.f32.mrf.mxu0
        %v2680 = vadd.f32 %v2637, %v2679
        %2681 = vmatmul.bf16.gmra.mxu0 %v2658
        %v2682 = vpop.f32.mrf.mxu0
        %v2683 = vadd.f32 %v2637, %v2682
        %v2684 = vpop.f32.mrf.mxu0
        %v2685 = vadd.f32 %v2637, %v2684
        %2686 = vmatmul.bf16.gmra.mxu0 %v2661
        %v2687 = vpop.f32.mrf.mxu0
        %v2688 = vadd.f32 %v2637, %v2687
        %v2689 = vpop.f32.mrf.mxu0
        %v2690 = vadd.f32 %v2637, %v2689
        %2691 = vdwg.mxu0
        %v2692 = vld [vmem:[%s14] sm:$0xf]
        %v2693 = vld [vmem:[%s14 + $0x4] sm:$0xf]
        %v2694 = vld [vmem:[%s14 + $0x8] sm:$0xf]
        %v2695 = vld [vmem:[%s14 + $0xc] sm:$0xf]
        %v2696 = vld [vmem:[%s15] sm:$0x1]
        %v2698 = vperm.slane %v2696, 0
        %v2704 = vunpack.c.l.b16 %v2692
        %v2705 = vunpack.c.l.b16 %v2693
        %v2706 = vunpack.c.l.b16 %v2694
        %v2707 = vunpack.c.l.b16 %v2695
        %v2708 = vpack.c.b16 %v2705, %v2704
        %v2709 = vpack.c.b16 %v2707, %v2706
        %2712 = vmatpush.bf16.msra.mxu0 0
        %2713 = vmatpush.bf16.msra.mxu0 0
        %2714 = vmatpush.bf16.msra.mxu0 0
        %2715 = vmatpush.bf16.msra.mxu0 0
        %2716 = vmatpush.bf16.msra.mxu0 0
        %2717 = vmatpush.bf16.msra.mxu0 0
        %2718 = vmatpush.bf16.msra.mxu0 %v2709
        %2719 = vmatpush.bf16.msra.mxu0 %v2708
        %2720 = vmatmul.bf16.gmra.mxu0 %v2652
        %v2721 = vpop.f32.mrf.mxu0
        %v2722 = vadd.f32 %v2698, %v2721
        %v2723 = vpop.f32.mrf.mxu0
        %v2724 = vadd.f32 %v2698, %v2723
        %2725 = vmatmul.bf16.gmra.mxu0 %v2655
        %v2726 = vpop.f32.mrf.mxu0
        %v2727 = vadd.f32 %v2698, %v2726
        %v2728 = vpop.f32.mrf.mxu0
        %v2729 = vadd.f32 %v2698, %v2728
        %2730 = vmatmul.bf16.gmra.mxu0 %v2658
        %v2731 = vpop.f32.mrf.mxu0
        %v2732 = vadd.f32 %v2698, %v2731
        %v2733 = vpop.f32.mrf.mxu0
        %v2734 = vadd.f32 %v2698, %v2733
        %2735 = vmatmul.bf16.gmra.mxu0 %v2661
        %v2736 = vpop.f32.mrf.mxu0
        %v2737 = vadd.f32 %v2698, %v2736
        %v2738 = vpop.f32.mrf.mxu0
        %v2739 = vadd.f32 %v2698, %v2738
        %2740 = vdwg.mxu0
        %v2741 = vxor.u32 %v2722, 2147483648
        %v2742 = vxor.u32 %v2724, 2147483648
        %v2743 = vxor.u32 %v2727, 2147483648
        %v2744 = vxor.u32 %v2729, 2147483648
        %v2745 = vxor.u32 %v2732, 2147483648
        %v2746 = vxor.u32 %v2734, 2147483648
        %v2747 = vxor.u32 %v2737, 2147483648
        %v2748 = vxor.u32 %v2739, 2147483648
        %v2749 = vmul.f32 %v2741, 1.442695
        %v2750 = vpow.pop %v2749
        %v2751 = vmul.f32 %v2742, 1.442695
        %v2752 = vpow.pop %v2751
        %v2753 = vmul.f32 %v2743, 1.442695
        %v2754 = vpow.pop %v2753
        %v2755 = vmul.f32 %v2744, 1.442695
        %v2756 = vpow.pop %v2755
        %v2757 = vmul.f32 %v2745, 1.442695
        %v2758 = vpow.pop %v2757
        %v2759 = vmul.f32 %v2746, 1.442695
        %v2760 = vpow.pop %v2759
        %v2761 = vmul.f32 %v2747, 1.442695
        %v2762 = vpow.pop %v2761
        %v2763 = vmul.f32 %v2748, 1.442695
        %v2764 = vpow.pop %v2763
        %v2765 = vadd.f32 %v2750, 1.0
        %v2766 = vadd.f32 %v2752, 1.0
        %v2767 = vadd.f32 %v2754, 1.0
        %v2768 = vadd.f32 %v2756, 1.0
        %v2769 = vadd.f32 %v2758, 1.0
        %v2770 = vadd.f32 %v2760, 1.0
        %v2771 = vadd.f32 %v2762, 1.0
        %v2772 = vadd.f32 %v2764, 1.0
        %v2773 = vrcp.pop %v2765
        %v2774 = vmul.f32 %v2765, %v2773
        %v2775 = vsub.f32 1.0, %v2774
        %v2776 = vmul.f32 %v2773, %v2775
        %v2777 = vadd.f32 %v2773, %v2776
        %vm2778 = vweird.f32 %v2765
        %vm2779 = vweird.f32 %v2773
        %vm2780 = vmor %vm2778, %vm2779
        %v2781 = vsel %vm2780, %v2773, %v2777
        %v2782 = vand.u32 2147483647, %v2765
        %vm2783 = vcmp.eq.f32.partialorder %v2782, 8.507059e+37
        %v2784 = vand.u32 %v2765, 2147483648
        %v2785 = vor.u32 1.1754944e-38, %v2784
        %v2786 = vsel %vm2783, %v2785, %v2781
        %v2787 = vmul.f32 1.0, %v2786
        %v2788 = vrcp.pop %v2766
        %v2789 = vmul.f32 %v2766, %v2788
        %v2790 = vsub.f32 1.0, %v2789
        %v2791 = vmul.f32 %v2788, %v2790
        %v2792 = vadd.f32 %v2788, %v2791
        %vm2793 = vweird.f32 %v2766
        %vm2794 = vweird.f32 %v2788
        %vm2795 = vmor %vm2793, %vm2794
        %v2796 = vsel %vm2795, %v2788, %v2792
        %v2797 = vand.u32 2147483647, %v2766
        %vm2798 = vcmp.eq.f32.partialorder %v2797, 8.507059e+37
        %v2799 = vand.u32 %v2766, 2147483648
        %v2800 = vor.u32 1.1754944e-38, %v2799
        %v2801 = vsel %vm2798, %v2800, %v2796
        %v2802 = vmul.f32 1.0, %v2801
        %v2803 = vrcp.pop %v2767
        %v2804 = vmul.f32 %v2767, %v2803
        %v2805 = vsub.f32 1.0, %v2804
        %v2806 = vmul.f32 %v2803, %v2805
        %v2807 = vadd.f32 %v2803, %v2806
        %vm2808 = vweird.f32 %v2767
        %vm2809 = vweird.f32 %v2803
        %vm2810 = vmor %vm2808, %vm2809
        %v2811 = vsel %vm2810, %v2803, %v2807
        %v2812 = vand.u32 2147483647, %v2767
        %vm2813 = vcmp.eq.f32.partialorder %v2812, 8.507059e+37
        %v2814 = vand.u32 %v2767, 2147483648
        %v2815 = vor.u32 1.1754944e-38, %v2814
        %v2816 = vsel %vm2813, %v2815, %v2811
        %v2817 = vmul.f32 1.0, %v2816
        %v2818 = vrcp.pop %v2768
        %v2819 = vmul.f32 %v2768, %v2818
        %v2820 = vsub.f32 1.0, %v2819
        %v2821 = vmul.f32 %v2818, %v2820
        %v2822 = vadd.f32 %v2818, %v2821
        %vm2823 = vweird.f32 %v2768
        %vm2824 = vweird.f32 %v2818
        %vm2825 = vmor %vm2823, %vm2824
        %v2826 = vsel %vm2825, %v2818, %v2822
        %v2827 = vand.u32 2147483647, %v2768
        %vm2828 = vcmp.eq.f32.partialorder %v2827, 8.507059e+37
        %v2829 = vand.u32 %v2768, 2147483648
        %v2830 = vor.u32 1.1754944e-38, %v2829
        %v2831 = vsel %vm2828, %v2830, %v2826
        %v2832 = vmul.f32 1.0, %v2831
        %v2833 = vrcp.pop %v2769
        %v2834 = vmul.f32 %v2769, %v2833
        %v2835 = vsub.f32 1.0, %v2834
        %v2836 = vmul.f32 %v2833, %v2835
        %v2837 = vadd.f32 %v2833, %v2836
        %vm2838 = vweird.f32 %v2769
        %vm2839 = vweird.f32 %v2833
        %vm2840 = vmor %vm2838, %vm2839
        %v2841 = vsel %vm2840, %v2833, %v2837
        %v2842 = vand.u32 2147483647, %v2769
        %vm2843 = vcmp.eq.f32.partialorder %v2842, 8.507059e+37
        %v2844 = vand.u32 %v2769, 2147483648
        %v2845 = vor.u32 1.1754944e-38, %v2844
        %v2846 = vsel %vm2843, %v2845, %v2841
        %v2847 = vmul.f32 1.0, %v2846
        %v2848 = vrcp.pop %v2770
        %v2849 = vmul.f32 %v2770, %v2848
        %v2850 = vsub.f32 1.0, %v2849
        %v2851 = vmul.f32 %v2848, %v2850
        %v2852 = vadd.f32 %v2848, %v2851
        %vm2853 = vweird.f32 %v2770
        %vm2854 = vweird.f32 %v2848
        %vm2855 = vmor %vm2853, %vm2854
        %v2856 = vsel %vm2855, %v2848, %v2852
        %v2857 = vand.u32 2147483647, %v2770
        %vm2858 = vcmp.eq.f32.partialorder %v2857, 8.507059e+37
        %v2859 = vand.u32 %v2770, 2147483648
        %v2860 = vor.u32 1.1754944e-38, %v2859
        %v2861 = vsel %vm2858, %v2860, %v2856
        %v2862 = vmul.f32 1.0, %v2861
        %v2863 = vrcp.pop %v2771
        %v2864 = vmul.f32 %v2771, %v2863
        %v2865 = vsub.f32 1.0, %v2864
        %v2866 = vmul.f32 %v2863, %v2865
        %v2867 = vadd.f32 %v2863, %v2866
        %vm2868 = vweird.f32 %v2771
        %vm2869 = vweird.f32 %v2863
        %vm2870 = vmor %vm2868, %vm2869
        %v2871 = vsel %vm2870, %v2863, %v2867
        %v2872 = vand.u32 2147483647, %v2771
        %vm2873 = vcmp.eq.f32.partialorder %v2872, 8.507059e+37
        %v2874 = vand.u32 %v2771, 2147483648
        %v2875 = vor.u32 1.1754944e-38, %v2874
        %v2876 = vsel %vm2873, %v2875, %v2871
        %v2877 = vmul.f32 1.0, %v2876
        %v2878 = vrcp.pop %v2772
        %v2879 = vmul.f32 %v2772, %v2878
        %v2880 = vsub.f32 1.0, %v2879
        %v2881 = vmul.f32 %v2878, %v2880
        %v2882 = vadd.f32 %v2878, %v2881
        %vm2883 = vweird.f32 %v2772
        %vm2884 = vweird.f32 %v2878
        %vm2885 = vmor %vm2883, %vm2884
        %v2886 = vsel %vm2885, %v2878, %v2882
        %v2887 = vand.u32 2147483647, %v2772
        %vm2888 = vcmp.eq.f32.partialorder %v2887, 8.507059e+37
        %v2889 = vand.u32 %v2772, 2147483648
        %v2890 = vor.u32 1.1754944e-38, %v2889
        %v2891 = vsel %vm2888, %v2890, %v2886
        %v2892 = vmul.f32 1.0, %v2891
        %v2893 = vmul.f32 %v1858, %v961
        %v2894 = vmul.f32 %v1859, %v961
        %v2895 = vmul.f32 %v1860, %v961
        %v2896 = vmul.f32 %v1861, %v961
        %v2897 = vmul.f32 %v1862, %v961
        %v2898 = vmul.f32 %v1863, %v961
        %v2899 = vmul.f32 %v1864, %v961
        %v2900 = vmul.f32 %v1865, %v961
        %2902 = vset.pattern.permute.xlu0 0
        %2903 = vperm.xlu0 %2902, %v2893
        %v2904 = vpop.permute.xlu0 %2903
        %2907 = vset.pattern.permute.xlu0 0
        %2908 = vperm.xlu0 %2907, %v2894
        %v2909 = vpop.permute.xlu0 %2908
        %2912 = vset.pattern.permute.xlu0 0
        %2913 = vperm.xlu0 %2912, %v2895
        %v2914 = vpop.permute.xlu0 %2913
        %2917 = vset.pattern.permute.xlu0 0
        %2918 = vperm.xlu0 %2917, %v2896
        %v2919 = vpop.permute.xlu0 %2918
        %2922 = vset.pattern.permute.xlu0 0
        %2923 = vperm.xlu0 %2922, %v2897
        %v2924 = vpop.permute.xlu0 %2923
        %2927 = vset.pattern.permute.xlu0 0
        %2928 = vperm.xlu0 %2927, %v2898
        %v2929 = vpop.permute.xlu0 %2928
        %2932 = vset.pattern.permute.xlu0 0
        %2933 = vperm.xlu0 %2932, %v2899
        %v2934 = vpop.permute.xlu0 %2933
        %2937 = vset.pattern.permute.xlu0 0
        %2938 = vperm.xlu0 %2937, %v2900
        %v2939 = vpop.permute.xlu0 %2938
        %v2941 = vmul.f32 %v2673, %v2904
        %v2942 = vmul.f32 %v2675, %v2909
        %v2943 = vmul.f32 %v2678, %v2914
        %v2944 = vmul.f32 %v2680, %v2919
        %v2945 = vmul.f32 %v2683, %v2924
        %v2946 = vmul.f32 %v2685, %v2929
        %v2947 = vmul.f32 %v2688, %v2934
        %v2948 = vmul.f32 %v2690, %v2939
        %v2949 = vmul.f32 %v2941, %v2787
        %v2950 = vmul.f32 %v2942, %v2802
        %v2951 = vmul.f32 %v2943, %v2817
        %v2952 = vmul.f32 %v2944, %v2832
        %v2953 = vmul.f32 %v2945, %v2847
        %v2954 = vmul.f32 %v2946, %v2862
        %v2955 = vmul.f32 %v2947, %v2877
        %v2956 = vmul.f32 %v2948, %v2892
        %v2957 = vpack.c.bf16 %v2949, %v2949
        %v2958 = vpack.c.bf16 %v2950, %v2950
        %v2959 = vpack.c.bf16 %v2951, %v2951
        %v2960 = vpack.c.bf16 %v2952, %v2952
        %v2961 = vpack.c.bf16 %v2953, %v2953
        %v2962 = vpack.c.bf16 %v2954, %v2954
        %v2963 = vpack.c.bf16 %v2955, %v2955
        %v2964 = vpack.c.bf16 %v2956, %v2956
        %2965 = vxpose.xlu0.c.b16.start [1/8] %v2957, 128
        %2966 = vxpose.xlu0.c.b16.cont [2/8] 0, 128
        %2967 = vxpose.xlu0.c.b16.cont [3/8] 0, 128
        %2968 = vxpose.xlu0.c.b16.cont [4/8] 0, 128
        %2969 = vxpose.xlu0.c.b16.cont [5/8] 0, 128
        %2970 = vxpose.xlu0.c.b16.cont [6/8] 0, 128
        %2971 = vxpose.xlu0.c.b16.cont [7/8] 0, 128
        %2972 = vxpose.xlu0.c.b16.end [8/8] 0, 128
        %v2973 = vpop.trf.xlu0
        %v2974 = vpop.trf.xlu0
        %v2975 = vpop.trf.xlu0
        %v2976 = vpop.trf.xlu0
        %v2977 = vpop.trf.xlu0
        %v2978 = vpop.trf.xlu0
        %v2979 = vpop.trf.xlu0
        %v2980 = vpop.trf.xlu0
        %2981 = vxpose.xlu0.c.b16.start [1/8] %v2958, 128
        %2982 = vxpose.xlu0.c.b16.cont [2/8] 0, 128
        %2983 = vxpose.xlu0.c.b16.cont [3/8] 0, 128
        %2984 = vxpose.xlu0.c.b16.cont [4/8] 0, 128
        %2985 = vxpose.xlu0.c.b16.cont [5/8] 0, 128
        %2986 = vxpose.xlu0.c.b16.cont [6/8] 0, 128
        %2987 = vxpose.xlu0.c.b16.cont [7/8] 0, 128
        %2988 = vxpose.xlu0.c.b16.end [8/8] 0, 128
        %v2989 = vpop.trf.xlu0
        %v2990 = vpop.trf.xlu0
        %v2991 = vpop.trf.xlu0
        %v2992 = vpop.trf.xlu0
        %v2993 = vpop.trf.xlu0
        %v2994 = vpop.trf.xlu0
        %v2995 = vpop.trf.xlu0
        %v2996 = vpop.trf.xlu0
        %2997 = vxpose.xlu0.c.b16.start [1/8] %v2959, 128
        %2998 = vxpose.xlu0.c.b16.cont [2/8] 0, 128
        %2999 = vxpose.xlu0.c.b16.cont [3/8] 0, 128
        %3000 = vxpose.xlu0.c.b16.cont [4/8] 0, 128
        %3001 = vxpose.xlu0.c.b16.cont [5/8] 0, 128
        %3002 = vxpose.xlu0.c.b16.cont [6/8] 0, 128
        %3003 = vxpose.xlu0.c.b16.cont [7/8] 0, 128
        %3004 = vxpose.xlu0.c.b16.end [8/8] 0, 128
        %v3005 = vpop.trf.xlu0
        %v3006 = vpop.trf.xlu0
        %v3007 = vpop.trf.xlu0
        %v3008 = vpop.trf.xlu0
        %v3009 = vpop.trf.xlu0
        %v3010 = vpop.trf.xlu0
        %v3011 = vpop.trf.xlu0
        %v3012 = vpop.trf.xlu0
        %3013 = vxpose.xlu0.c.b16.start [1/8] %v2960, 128
        %3014 = vxpose.xlu0.c.b16.cont [2/8] 0, 128
        %3015 = vxpose.xlu0.c.b16.cont [3/8] 0, 128
        %3016 = vxpose.xlu0.c.b16.cont [4/8] 0, 128
        %3017 = vxpose.xlu0.c.b16.cont [5/8] 0, 128
        %3018 = vxpose.xlu0.c.b16.cont [6/8] 0, 128
        %3019 = vxpose.xlu0.c.b16.cont [7/8] 0, 128
        %3020 = vxpose.xlu0.c.b16.end [8/8] 0, 128
        %v3021 = vpop.trf.xlu0
        %v3022 = vpop.trf.xlu0
        %v3023 = vpop.trf.xlu0
        %v3024 = vpop.trf.xlu0
        %v3025 = vpop.trf.xlu0
        %v3026 = vpop.trf.xlu0
        %v3027 = vpop.trf.xlu0
        %v3028 = vpop.trf.xlu0
        %3029 = vxpose.xlu0.c.b16.start [1/8] %v2961, 128
        %3030 = vxpose.xlu0.c.b16.cont [2/8] 0, 128
        %3031 = vxpose.xlu0.c.b16.cont [3/8] 0, 128
        %3032 = vxpose.xlu0.c.b16.cont [4/8] 0, 128
        %3033 = vxpose.xlu0.c.b16.cont [5/8] 0, 128
        %3034 = vxpose.xlu0.c.b16.cont [6/8] 0, 128
        %3035 = vxpose.xlu0.c.b16.cont [7/8] 0, 128
        %3036 = vxpose.xlu0.c.b16.end [8/8] 0, 128
        %v3037 = vpop.trf.xlu0
        %v3038 = vpop.trf.xlu0
        %v3039 = vpop.trf.xlu0
        %v3040 = vpop.trf.xlu0
        %v3041 = vpop.trf.xlu0
        %v3042 = vpop.trf.xlu0
        %v3043 = vpop.trf.xlu0
        %v3044 = vpop.trf.xlu0
        %3045 = vxpose.xlu0.c.b16.start [1/8] %v2962, 128
        %3046 = vxpose.xlu0.c.b16.cont [2/8] 0, 128
        %3047 = vxpose.xlu0.c.b16.cont [3/8] 0, 128
        %3048 = vxpose.xlu0.c.b16.cont [4/8] 0, 128
        %3049 = vxpose.xlu0.c.b16.cont [5/8] 0, 128
        %3050 = vxpose.xlu0.c.b16.cont [6/8] 0, 128
        %3051 = vxpose.xlu0.c.b16.cont [7/8] 0, 128
        %3052 = vxpose.xlu0.c.b16.end [8/8] 0, 128
        %v3053 = vpop.trf.xlu0
        %v3054 = vpop.trf.xlu0
        %v3055 = vpop.trf.xlu0
        %v3056 = vpop.trf.xlu0
        %v3057 = vpop.trf.xlu0
        %v3058 = vpop.trf.xlu0
        %v3059 = vpop.trf.xlu0
        %v3060 = vpop.trf.xlu0
        %3061 = vxpose.xlu0.c.b16.start [1/8] %v2963, 128
        %3062 = vxpose.xlu0.c.b16.cont [2/8] 0, 128
        %3063 = vxpose.xlu0.c.b16.cont [3/8] 0, 128
        %3064 = vxpose.xlu0.c.b16.cont [4/8] 0, 128
        %3065 = vxpose.xlu0.c.b16.cont [5/8] 0, 128
        %3066 = vxpose.xlu0.c.b16.cont [6/8] 0, 128
        %3067 = vxpose.xlu0.c.b16.cont [7/8] 0, 128
        %3068 = vxpose.xlu0.c.b16.end [8/8] 0, 128
        %v3069 = vpop.trf.xlu0
        %v3070 = vpop.trf.xlu0
        %v3071 = vpop.trf.xlu0
        %v3072 = vpop.trf.xlu0
        %v3073 = vpop.trf.xlu0
        %v3074 = vpop.trf.xlu0
        %v3075 = vpop.trf.xlu0
        %v3076 = vpop.trf.xlu0
        %3077 = vxpose.xlu0.c.b16.start [1/8] %v2964, 128
        %3078 = vxpose.xlu0.c.b16.cont [2/8] 0, 128
        %3079 = vxpose.xlu0.c.b16.cont [3/8] 0, 128
        %3080 = vxpose.xlu0.c.b16.cont [4/8] 0, 128
        %3081 = vxpose.xlu0.c.b16.cont [5/8] 0, 128
        %3082 = vxpose.xlu0.c.b16.cont [6/8] 0, 128
        %3083 = vxpose.xlu0.c.b16.cont [7/8] 0, 128
        %3084 = vxpose.xlu0.c.b16.end [8/8] 0, 128
        %v3085 = vpop.trf.xlu0
        %v3086 = vpop.trf.xlu0
        %v3087 = vpop.trf.xlu0
        %v3088 = vpop.trf.xlu0
        %v3089 = vpop.trf.xlu0
        %v3090 = vpop.trf.xlu0
        %v3091 = vpop.trf.xlu0
        %v3092 = vpop.trf.xlu0
        %v3095 = vpack.i.b16 %v2989, %v2973
        %v3097 = vshrl.u32 %v2973, 16
        %v3098 = vshrl.u32 %v2989, 16
        %v3099 = vpack.i.b16 %v3098, %v3097
        %v3103 = vpack.i.b16 %v3021, %v3005
        %v3105 = vshrl.u32 %v3005, 16
        %v3106 = vshrl.u32 %v3021, 16
        %v3107 = vpack.i.b16 %v3106, %v3105
        %v3111 = vpack.i.b16 %v3053, %v3037
        %v3113 = vshrl.u32 %v3037, 16
        %v3114 = vshrl.u32 %v3053, 16
        %v3115 = vpack.i.b16 %v3114, %v3113
        %v3119 = vpack.i.b16 %v3085, %v3069
        %v3121 = vshrl.u32 %v3069, 16
        %v3122 = vshrl.u32 %v3085, 16
        %v3123 = vpack.i.b16 %v3122, %v3121
        %v3127 = vpack.i.b16 %v2990, %v2974
        %v3129 = vshrl.u32 %v2974, 16
        %v3130 = vshrl.u32 %v2990, 16
        %v3131 = vpack.i.b16 %v3130, %v3129
        %v3135 = vpack.i.b16 %v3022, %v3006
        %v3137 = vshrl.u32 %v3006, 16
        %v3138 = vshrl.u32 %v3022, 16
        %v3139 = vpack.i.b16 %v3138, %v3137
        %v3143 = vpack.i.b16 %v3054, %v3038
        %v3145 = vshrl.u32 %v3038, 16
        %v3146 = vshrl.u32 %v3054, 16
        %v3147 = vpack.i.b16 %v3146, %v3145
        %v3151 = vpack.i.b16 %v3086, %v3070
        %v3153 = vshrl.u32 %v3070, 16
        %v3154 = vshrl.u32 %v3086, 16
        %v3155 = vpack.i.b16 %v3154, %v3153
        %v3157 = vrot.slane %v3111, 4
        %v3158 = vsel %vm2203, %v3157, %v3095
        %v3159 = vrot.slane %v3095, 4
        %v3160 = vsel %vm2203, %v3111, %v3159
        %v3162 = vunpack.c.l.s4 1983009808
        %v3163 = vunpack.c.0.s8 %v3162
        %v3164 = vperm.slane %v3158, %v3163
        %v3166 = vunpack.c.l.s4 1983009808
        %v3167 = vunpack.c.0.s8 %v3166
        %v3168 = vperm.slane %v3160, %v3167
        %v3169 = vrot.slane %v3119, 4
        %v3170 = vsel %vm2203, %v3169, %v3103
        %v3171 = vrot.slane %v3103, 4
        %v3172 = vsel %vm2203, %v3119, %v3171
        %v3174 = vunpack.c.l.s4 1983009808
        %v3175 = vunpack.c.0.s8 %v3174
        %v3176 = vperm.slane %v3170, %v3175
        %v3178 = vunpack.c.l.s4 1983009808
        %v3179 = vunpack.c.0.s8 %v3178
        %v3180 = vperm.slane %v3172, %v3179
        %v3181 = vrot.slane %v3176, 4
        %v3182 = vsel %vm2203, %v3181, %v3164
        %v3183 = vrot.slane %v3164, 4
        %v3184 = vsel %vm2203, %v3176, %v3183
        %v3186 = vunpack.c.l.s4 1934713408
        %v3187 = vunpack.c.0.s8 %v3186
        %v3188 = vperm.slane %v3182, %v3187
        %v3190 = vunpack.c.l.s4 1934713408
        %v3191 = vunpack.c.0.s8 %v3190
        %v3192 = vperm.slane %v3184, %v3191
        %v3193 = vrot.slane %v3180, 4
        %v3194 = vsel %vm2203, %v3193, %v3168
        %v3195 = vrot.slane %v3168, 4
        %v3196 = vsel %vm2203, %v3180, %v3195
        %v3198 = vunpack.c.l.s4 1934713408
        %v3199 = vunpack.c.0.s8 %v3198
        %v3200 = vperm.slane %v3194, %v3199
        %v3202 = vunpack.c.l.s4 1934713408
        %v3203 = vunpack.c.0.s8 %v3202
        %v3204 = vperm.slane %v3196, %v3203
        %v3205 = vrot.slane %v3188, 4
        %v3206 = vsel %vm2203, 0, %v3205
        %v3207 = vrot.slane %v3192, 4
        %v3208 = vsel %vm2203, 0, %v3207
        %v3209 = vrot.slane %v3200, 4
        %v3210 = vsel %vm2203, 0, %v3209
        %v3211 = vrot.slane %v3204, 4
        %v3212 = vsel %vm2203, 0, %v3211
        %v3213 = vrot.slane %v3115, 4
        %v3214 = vsel %vm2203, %v3213, %v3099
        %v3215 = vrot.slane %v3099, 4
        %v3216 = vsel %vm2203, %v3115, %v3215
        %v3218 = vunpack.c.l.s4 1983009808
        %v3219 = vunpack.c.0.s8 %v3218
        %v3220 = vperm.slane %v3214, %v3219
        %v3222 = vunpack.c.l.s4 1983009808
        %v3223 = vunpack.c.0.s8 %v3222
        %v3224 = vperm.slane %v3216, %v3223
        %v3225 = vrot.slane %v3123, 4
        %v3226 = vsel %vm2203, %v3225, %v3107
        %v3227 = vrot.slane %v3107, 4
        %v3228 = vsel %vm2203, %v3123, %v3227
        %v3230 = vunpack.c.l.s4 1983009808
        %v3231 = vunpack.c.0.s8 %v3230
        %v3232 = vperm.slane %v3226, %v3231
        %v3234 = vunpack.c.l.s4 1983009808
        %v3235 = vunpack.c.0.s8 %v3234
        %v3236 = vperm.slane %v3228, %v3235
        %v3237 = vrot.slane %v3232, 4
        %v3238 = vsel %vm2203, %v3237, %v3220
        %v3239 = vrot.slane %v3220, 4
        %v3240 = vsel %vm2203, %v3232, %v3239
        %v3242 = vunpack.c.l.s4 1934713408
        %v3243 = vunpack.c.0.s8 %v3242
        %v3244 = vperm.slane %v3238, %v3243
        %v3246 = vunpack.c.l.s4 1934713408
        %v3247 = vunpack.c.0.s8 %v3246
        %v3248 = vperm.slane %v3240, %v3247
        %v3249 = vrot.slane %v3236, 4
        %v3250 = vsel %vm2203, %v3249, %v3224
        %v3251 = vrot.slane %v3224, 4
        %v3252 = vsel %vm2203, %v3236, %v3251
        %v3254 = vunpack.c.l.s4 1934713408
        %v3255 = vunpack.c.0.s8 %v3254
        %v3256 = vperm.slane %v3250, %v3255
        %v3258 = vunpack.c.l.s4 1934713408
        %v3259 = vunpack.c.0.s8 %v3258
        %v3260 = vperm.slane %v3252, %v3259
        %v3261 = vrot.slane %v3244, 4
        %v3262 = vsel %vm2203, 0, %v3261
        %v3263 = vrot.slane %v3248, 4
        %v3264 = vsel %vm2203, 0, %v3263
        %v3265 = vrot.slane %v3256, 4
        %v3266 = vsel %vm2203, 0, %v3265
        %v3267 = vrot.slane %v3260, 4
        %v3268 = vsel %vm2203, 0, %v3267
        %v3269 = vrot.slane %v3143, 4
        %v3270 = vsel %vm2203, %v3269, %v3127
        %v3271 = vrot.slane %v3127, 4
        %v3272 = vsel %vm2203, %v3143, %v3271
        %v3274 = vunpack.c.l.s4 1983009808
        %v3275 = vunpack.c.0.s8 %v3274
        %v3276 = vperm.slane %v3270, %v3275
        %v3278 = vunpack.c.l.s4 1983009808
        %v3279 = vunpack.c.0.s8 %v3278
        %v3280 = vperm.slane %v3272, %v3279
        %v3281 = vrot.slane %v3151, 4
        %v3282 = vsel %vm2203, %v3281, %v3135
        %v3283 = vrot.slane %v3135, 4
        %v3284 = vsel %vm2203, %v3151, %v3283
        %v3286 = vunpack.c.l.s4 1983009808
        %v3287 = vunpack.c.0.s8 %v3286
        %v3288 = vperm.slane %v3282, %v3287
        %v3290 = vunpack.c.l.s4 1983009808
        %v3291 = vunpack.c.0.s8 %v3290
        %v3292 = vperm.slane %v3284, %v3291
        %v3293 = vrot.slane %v3288, 4
        %v3294 = vsel %vm2203, %v3293, %v3276
        %v3295 = vrot.slane %v3276, 4
        %v3296 = vsel %vm2203, %v3288, %v3295
        %v3298 = vunpack.c.l.s4 1934713408
        %v3299 = vunpack.c.0.s8 %v3298
        %v3300 = vperm.slane %v3294, %v3299
        %v3302 = vunpack.c.l.s4 1934713408
        %v3303 = vunpack.c.0.s8 %v3302
        %v3304 = vperm.slane %v3296, %v3303
        %v3305 = vrot.slane %v3292, 4
        %v3306 = vsel %vm2203, %v3305, %v3280
        %v3307 = vrot.slane %v3280, 4
        %v3308 = vsel %vm2203, %v3292, %v3307
        %v3310 = vunpack.c.l.s4 1934713408
        %v3311 = vunpack.c.0.s8 %v3310
        %v3312 = vperm.slane %v3306, %v3311
        %v3314 = vunpack.c.l.s4 1934713408
        %v3315 = vunpack.c.0.s8 %v3314
        %v3316 = vperm.slane %v3308, %v3315
        %v3317 = vrot.slane %v3300, 4
        %v3318 = vsel %vm2203, 0, %v3317
        %v3319 = vrot.slane %v3304, 4
        %v3320 = vsel %vm2203, 0, %v3319
        %v3321 = vrot.slane %v3312, 4
        %v3322 = vsel %vm2203, 0, %v3321
        %v3323 = vrot.slane %v3316, 4
        %v3324 = vsel %vm2203, 0, %v3323
        %v3325 = vrot.slane %v3147, 4
        %v3326 = vsel %vm2203, %v3325, %v3131
        %v3327 = vrot.slane %v3131, 4
        %v3328 = vsel %vm2203, %v3147, %v3327
        %v3330 = vunpack.c.l.s4 1983009808
        %v3331 = vunpack.c.0.s8 %v3330
        %v3332 = vperm.slane %v3326, %v3331
        %v3334 = vunpack.c.l.s4 1983009808
        %v3335 = vunpack.c.0.s8 %v3334
        %v3336 = vperm.slane %v3328, %v3335
        %v3337 = vrot.slane %v3155, 4
        %v3338 = vsel %vm2203, %v3337, %v3139
        %v3339 = vrot.slane %v3139, 4
        %v3340 = vsel %vm2203, %v3155, %v3339
        %v3342 = vunpack.c.l.s4 1983009808
        %v3343 = vunpack.c.0.s8 %v3342
        %v3344 = vperm.slane %v3338, %v3343
        %v3346 = vunpack.c.l.s4 1983009808
        %v3347 = vunpack.c.0.s8 %v3346
        %v3348 = vperm.slane %v3340, %v3347
        %v3349 = vrot.slane %v3344, 4
        %v3350 = vsel %vm2203, %v3349, %v3332
        %v3351 = vrot.slane %v3332, 4
        %v3352 = vsel %vm2203, %v3344, %v3351
        %v3354 = vunpack.c.l.s4 1934713408
        %v3355 = vunpack.c.0.s8 %v3354
        %v3356 = vperm.slane %v3350, %v3355
        %v3358 = vunpack.c.l.s4 1934713408
        %v3359 = vunpack.c.0.s8 %v3358
        %v3360 = vperm.slane %v3352, %v3359
        %v3361 = vrot.slane %v3348, 4
        %v3362 = vsel %vm2203, %v3361, %v3336
        %v3363 = vrot.slane %v3336, 4
        %v3364 = vsel %vm2203, %v3348, %v3363
        %v3366 = vunpack.c.l.s4 1934713408
        %v3367 = vunpack.c.0.s8 %v3366
        %v3368 = vperm.slane %v3362, %v3367
        %v3370 = vunpack.c.l.s4 1934713408
        %v3371 = vunpack.c.0.s8 %v3370
        %v3372 = vperm.slane %v3364, %v3371
        %v3373 = vrot.slane %v3356, 4
        %v3374 = vsel %vm2203, 0, %v3373
        %v3375 = vrot.slane %v3360, 4
        %v3376 = vsel %vm2203, 0, %v3375
        %v3377 = vrot.slane %v3368, 4
        %v3378 = vsel %vm2203, 0, %v3377
        %v3379 = vrot.slane %v3372, 4
        %v3380 = vsel %vm2203, 0, %v3379
        %3381 = vxpose.xlu0.c.b16.start [1/8] %v3188, 128
        %3382 = vxpose.xlu0.c.b16.cont [2/8] 0, 128
        %3383 = vxpose.xlu0.c.b16.cont [3/8] 0, 128
        %3384 = vxpose.xlu0.c.b16.cont [4/8] 0, 128
        %3385 = vxpose.xlu0.c.b16.cont [5/8] 0, 128
        %3386 = vxpose.xlu0.c.b16.cont [6/8] 0, 128
        %3387 = vxpose.xlu0.c.b16.cont [7/8] 0, 128
        %3388 = vxpose.xlu0.c.b16.end [8/8] 0, 128
        %v3389 = vpop.trf.xlu0
        %v3390 = vpop.trf.xlu0
        %v3391 = vpop.trf.xlu0
        %v3392 = vpop.trf.xlu0
        %v3393 = vpop.trf.xlu0
        %v3394 = vpop.trf.xlu0
        %v3395 = vpop.trf.xlu0
        %v3396 = vpop.trf.xlu0
        %3397 = vxpose.xlu0.c.b16.start [1/8] %v3244, 128
        %3398 = vxpose.xlu0.c.b16.cont [2/8] 0, 128
        %3399 = vxpose.xlu0.c.b16.cont [3/8] 0, 128
        %3400 = vxpose.xlu0.c.b16.cont [4/8] 0, 128
        %3401 = vxpose.xlu0.c.b16.cont [5/8] 0, 128
        %3402 = vxpose.xlu0.c.b16.cont [6/8] 0, 128
        %3403 = vxpose.xlu0.c.b16.cont [7/8] 0, 128
        %3404 = vxpose.xlu0.c.b16.end [8/8] 0, 128
        %v3405 = vpop.trf.xlu0
        %v3406 = vpop.trf.xlu0
        %v3407 = vpop.trf.xlu0
        %v3408 = vpop.trf.xlu0
        %v3409 = vpop.trf.xlu0
        %v3410 = vpop.trf.xlu0
        %v3411 = vpop.trf.xlu0
        %v3412 = vpop.trf.xlu0
        %3413 = vxpose.xlu0.c.b16.start [1/8] %v3206, 128
        %3414 = vxpose.xlu0.c.b16.cont [2/8] 0, 128
        %3415 = vxpose.xlu0.c.b16.cont [3/8] 0, 128
        %3416 = vxpose.xlu0.c.b16.cont [4/8] 0, 128
        %3417 = vxpose.xlu0.c.b16.cont [5/8] 0, 128
        %3418 = vxpose.xlu0.c.b16.cont [6/8] 0, 128
        %3419 = vxpose.xlu0.c.b16.cont [7/8] 0, 128
        %3420 = vxpose.xlu0.c.b16.end [8/8] 0, 128
        %v3421 = vpop.trf.xlu0
        %v3422 = vpop.trf.xlu0
        %v3423 = vpop.trf.xlu0
        %v3424 = vpop.trf.xlu0
        %v3425 = vpop.trf.xlu0
        %v3426 = vpop.trf.xlu0
        %v3427 = vpop.trf.xlu0
        %v3428 = vpop.trf.xlu0
        %3429 = vxpose.xlu0.c.b16.start [1/8] %v3262, 128
        %3430 = vxpose.xlu0.c.b16.cont [2/8] 0, 128
        %3431 = vxpose.xlu0.c.b16.cont [3/8] 0, 128
        %3432 = vxpose.xlu0.c.b16.cont [4/8] 0, 128
        %3433 = vxpose.xlu0.c.b16.cont [5/8] 0, 128
        %3434 = vxpose.xlu0.c.b16.cont [6/8] 0, 128
        %3435 = vxpose.xlu0.c.b16.cont [7/8] 0, 128
        %3436 = vxpose.xlu0.c.b16.end [8/8] 0, 128
        %v3437 = vpop.trf.xlu0
        %v3438 = vpop.trf.xlu0
        %v3439 = vpop.trf.xlu0
        %v3440 = vpop.trf.xlu0
        %v3441 = vpop.trf.xlu0
        %v3442 = vpop.trf.xlu0
        %v3443 = vpop.trf.xlu0
        %v3444 = vpop.trf.xlu0
        %3445 = vxpose.xlu0.c.b16.start [1/8] %v3192, 128
        %3446 = vxpose.xlu0.c.b16.cont [2/8] 0, 128
        %3447 = vxpose.xlu0.c.b16.cont [3/8] 0, 128
        %3448 = vxpose.xlu0.c.b16.cont [4/8] 0, 128
        %3449 = vxpose.xlu0.c.b16.cont [5/8] 0, 128
        %3450 = vxpose.xlu0.c.b16.cont [6/8] 0, 128
        %3451 = vxpose.xlu0.c.b16.cont [7/8] 0, 128
        %3452 = vxpose.xlu0.c.b16.end [8/8] 0, 128
        %v3453 = vpop.trf.xlu0
        %v3454 = vpop.trf.xlu0
        %v3455 = vpop.trf.xlu0
        %v3456 = vpop.trf.xlu0
        %v3457 = vpop.trf.xlu0
        %v3458 = vpop.trf.xlu0
        %v3459 = vpop.trf.xlu0
        %v3460 = vpop.trf.xlu0
        %3461 = vxpose.xlu0.c.b16.start [1/8] %v3248, 128
        %3462 = vxpose.xlu0.c.b16.cont [2/8] 0, 128
        %3463 = vxpose.xlu0.c.b16.cont [3/8] 0, 128
        %3464 = vxpose.xlu0.c.b16.cont [4/8] 0, 128
        %3465 = vxpose.xlu0.c.b16.cont [5/8] 0, 128
        %3466 = vxpose.xlu0.c.b16.cont [6/8] 0, 128
        %3467 = vxpose.xlu0.c.b16.cont [7/8] 0, 128
        %3468 = vxpose.xlu0.c.b16.end [8/8] 0, 128
        %v3469 = vpop.trf.xlu0
        %v3470 = vpop.trf.xlu0
        %v3471 = vpop.trf.xlu0
        %v3472 = vpop.trf.xlu0
        %v3473 = vpop.trf.xlu0
        %v3474 = vpop.trf.xlu0
        %v3475 = vpop.trf.xlu0
        %v3476 = vpop.trf.xlu0
        %3477 = vxpose.xlu0.c.b16.start [1/8] %v3208, 128
        %3478 = vxpose.xlu0.c.b16.cont [2/8] 0, 128
        %3479 = vxpose.xlu0.c.b16.cont [3/8] 0, 128
        %3480 = vxpose.xlu0.c.b16.cont [4/8] 0, 128
        %3481 = vxpose.xlu0.c.b16.cont [5/8] 0, 128
        %3482 = vxpose.xlu0.c.b16.cont [6/8] 0, 128
        %3483 = vxpose.xlu0.c.b16.cont [7/8] 0, 128
        %3484 = vxpose.xlu0.c.b16.end [8/8] 0, 128
        %v3485 = vpop.trf.xlu0
        %v3486 = vpop.trf.xlu0
        %v3487 = vpop.trf.xlu0
        %v3488 = vpop.trf.xlu0
        %v3489 = vpop.trf.xlu0
        %v3490 = vpop.trf.xlu0
        %v3491 = vpop.trf.xlu0
        %v3492 = vpop.trf.xlu0
        %3493 = vxpose.xlu0.c.b16.start [1/8] %v3264, 128
        %3494 = vxpose.xlu0.c.b16.cont [2/8] 0, 128
        %3495 = vxpose.xlu0.c.b16.cont [3/8] 0, 128
        %3496 = vxpose.xlu0.c.b16.cont [4/8] 0, 128
        %3497 = vxpose.xlu0.c.b16.cont [5/8] 0, 128
        %3498 = vxpose.xlu0.c.b16.cont [6/8] 0, 128
        %3499 = vxpose.xlu0.c.b16.cont [7/8] 0, 128
        %3500 = vxpose.xlu0.c.b16.end [8/8] 0, 128
        %v3501 = vpop.trf.xlu0
        %v3502 = vpop.trf.xlu0
        %v3503 = vpop.trf.xlu0
        %v3504 = vpop.trf.xlu0
        %v3505 = vpop.trf.xlu0
        %v3506 = vpop.trf.xlu0
        %v3507 = vpop.trf.xlu0
        %v3508 = vpop.trf.xlu0
        %3509 = vxpose.xlu0.c.b16.start [1/8] %v3200, 128
        %3510 = vxpose.xlu0.c.b16.cont [2/8] 0, 128
        %3511 = vxpose.xlu0.c.b16.cont [3/8] 0, 128
        %3512 = vxpose.xlu0.c.b16.cont [4/8] 0, 128
        %3513 = vxpose.xlu0.c.b16.cont [5/8] 0, 128
        %3514 = vxpose.xlu0.c.b16.cont [6/8] 0, 128
        %3515 = vxpose.xlu0.c.b16.cont [7/8] 0, 128
        %3516 = vxpose.xlu0.c.b16.end [8/8] 0, 128
        %v3517 = vpop.trf.xlu0
        %v3518 = vpop.trf.xlu0
        %v3519 = vpop.trf.xlu0
        %v3520 = vpop.trf.xlu0
        %v3521 = vpop.trf.xlu0
        %v3522 = vpop.trf.xlu0
        %v3523 = vpop.trf.xlu0
        %v3524 = vpop.trf.xlu0
        %3525 = vxpose.xlu0.c.b16.start [1/8] %v3256, 128
        %3526 = vxpose.xlu0.c.b16.cont [2/8] 0, 128
        %3527 = vxpose.xlu0.c.b16.cont [3/8] 0, 128
        %3528 = vxpose.xlu0.c.b16.cont [4/8] 0, 128
        %3529 = vxpose.xlu0.c.b16.cont [5/8] 0, 128
        %3530 = vxpose.xlu0.c.b16.cont [6/8] 0, 128
        %3531 = vxpose.xlu0.c.b16.cont [7/8] 0, 128
        %3532 = vxpose.xlu0.c.b16.end [8/8] 0, 128
        %v3533 = vpop.trf.xlu0
        %v3534 = vpop.trf.xlu0
        %v3535 = vpop.trf.xlu0
        %v3536 = vpop.trf.xlu0
        %v3537 = vpop.trf.xlu0
        %v3538 = vpop.trf.xlu0
        %v3539 = vpop.trf.xlu0
        %v3540 = vpop.trf.xlu0
        %3541 = vxpose.xlu0.c.b16.start [1/8] %v3210, 128
        %3542 = vxpose.xlu0.c.b16.cont [2/8] 0, 128
        %3543 = vxpose.xlu0.c.b16.cont [3/8] 0, 128
        %3544 = vxpose.xlu0.c.b16.cont [4/8] 0, 128
        %3545 = vxpose.xlu0.c.b16.cont [5/8] 0, 128
        %3546 = vxpose.xlu0.c.b16.cont [6/8] 0, 128
        %3547 = vxpose.xlu0.c.b16.cont [7/8] 0, 128
        %3548 = vxpose.xlu0.c.b16.end [8/8] 0, 128
        %v3549 = vpop.trf.xlu0
        %v3550 = vpop.trf.xlu0
        %v3551 = vpop.trf.xlu0
        %v3552 = vpop.trf.xlu0
        %v3553 = vpop.trf.xlu0
        %v3554 = vpop.trf.xlu0
        %v3555 = vpop.trf.xlu0
        %v3556 = vpop.trf.xlu0
        %3557 = vxpose.xlu0.c.b16.start [1/8] %v3266, 128
        %3558 = vxpose.xlu0.c.b16.cont [2/8] 0, 128
        %3559 = vxpose.xlu0.c.b16.cont [3/8] 0, 128
        %3560 = vxpose.xlu0.c.b16.cont [4/8] 0, 128
        %3561 = vxpose.xlu0.c.b16.cont [5/8] 0, 128
        %3562 = vxpose.xlu0.c.b16.cont [6/8] 0, 128
        %3563 = vxpose.xlu0.c.b16.cont [7/8] 0, 128
        %3564 = vxpose.xlu0.c.b16.end [8/8] 0, 128
        %v3565 = vpop.trf.xlu0
        %v3566 = vpop.trf.xlu0
        %v3567 = vpop.trf.xlu0
        %v3568 = vpop.trf.xlu0
        %v3569 = vpop.trf.xlu0
        %v3570 = vpop.trf.xlu0
        %v3571 = vpop.trf.xlu0
        %v3572 = vpop.trf.xlu0
        %3573 = vxpose.xlu0.c.b16.start [1/8] %v3204, 128
        %3574 = vxpose.xlu0.c.b16.cont [2/8] 0, 128
        %3575 = vxpose.xlu0.c.b16.cont [3/8] 0, 128
        %3576 = vxpose.xlu0.c.b16.cont [4/8] 0, 128
        %3577 = vxpose.xlu0.c.b16.cont [5/8] 0, 128
        %3578 = vxpose.xlu0.c.b16.cont [6/8] 0, 128
        %3579 = vxpose.xlu0.c.b16.cont [7/8] 0, 128
        %3580 = vxpose.xlu0.c.b16.end [8/8] 0, 128
        %v3581 = vpop.trf.xlu0
        %v3582 = vpop.trf.xlu0
        %v3583 = vpop.trf.xlu0
        %v3584 = vpop.trf.xlu0
        %v3585 = vpop.trf.xlu0
        %v3586 = vpop.trf.xlu0
        %v3587 = vpop.trf.xlu0
        %v3588 = vpop.trf.xlu0
        %3589 = vxpose.xlu0.c.b16.start [1/8] %v3260, 128
        %3590 = vxpose.xlu0.c.b16.cont [2/8] 0, 128
        %3591 = vxpose.xlu0.c.b16.cont [3/8] 0, 128
        %3592 = vxpose.xlu0.c.b16.cont [4/8] 0, 128
        %3593 = vxpose.xlu0.c.b16.cont [5/8] 0, 128
        %3594 = vxpose.xlu0.c.b16.cont [6/8] 0, 128
        %3595 = vxpose.xlu0.c.b16.cont [7/8] 0, 128
        %3596 = vxpose.xlu0.c.b16.end [8/8] 0, 128
        %v3597 = vpop.trf.xlu0
        %v3598 = vpop.trf.xlu0
        %v3599 = vpop.trf.xlu0
        %v3600 = vpop.trf.xlu0
        %v3601 = vpop.trf.xlu0
        %v3602 = vpop.trf.xlu0
        %v3603 = vpop.trf.xlu0
        %v3604 = vpop.trf.xlu0
        %3605 = vxpose.xlu0.c.b16.start [1/8] %v3212, 128
        %3606 = vxpose.xlu0.c.b16.cont [2/8] 0, 128
        %3607 = vxpose.xlu0.c.b16.cont [3/8] 0, 128
        %3608 = vxpose.xlu0.c.b16.cont [4/8] 0, 128
        %3609 = vxpose.xlu0.c.b16.cont [5/8] 0, 128
        %3610 = vxpose.xlu0.c.b16.cont [6/8] 0, 128
        %3611 = vxpose.xlu0.c.b16.cont [7/8] 0, 128
        %3612 = vxpose.xlu0.c.b16.end [8/8] 0, 128
        %v3613 = vpop.trf.xlu0
        %v3614 = vpop.trf.xlu0
        %v3615 = vpop.trf.xlu0
        %v3616 = vpop.trf.xlu0
        %v3617 = vpop.trf.xlu0
        %v3618 = vpop.trf.xlu0
        %v3619 = vpop.trf.xlu0
        %v3620 = vpop.trf.xlu0
        %3621 = vxpose.xlu0.c.b16.start [1/8] %v3268, 128
        %3622 = vxpose.xlu0.c.b16.cont [2/8] 0, 128
        %3623 = vxpose.xlu0.c.b16.cont [3/8] 0, 128
        %3624 = vxpose.xlu0.c.b16.cont [4/8] 0, 128
        %3625 = vxpose.xlu0.c.b16.cont [5/8] 0, 128
        %3626 = vxpose.xlu0.c.b16.cont [6/8] 0, 128
        %3627 = vxpose.xlu0.c.b16.cont [7/8] 0, 128
        %3628 = vxpose.xlu0.c.b16.end [8/8] 0, 128
        %v3629 = vpop.trf.xlu0
        %v3630 = vpop.trf.xlu0
        %v3631 = vpop.trf.xlu0
        %v3632 = vpop.trf.xlu0
        %v3633 = vpop.trf.xlu0
        %v3634 = vpop.trf.xlu0
        %v3635 = vpop.trf.xlu0
        %v3636 = vpop.trf.xlu0
        %3637 = vxpose.xlu0.c.b16.start [1/8] %v3300, 128
        %3638 = vxpose.xlu0.c.b16.cont [2/8] 0, 128
        %3639 = vxpose.xlu0.c.b16.cont [3/8] 0, 128
        %3640 = vxpose.xlu0.c.b16.cont [4/8] 0, 128
        %3641 = vxpose.xlu0.c.b16.cont [5/8] 0, 128
        %3642 = vxpose.xlu0.c.b16.cont [6/8] 0, 128
        %3643 = vxpose.xlu0.c.b16.cont [7/8] 0, 128
        %3644 = vxpose.xlu0.c.b16.end [8/8] 0, 128
        %v3645 = vpop.trf.xlu0
        %v3646 = vpop.trf.xlu0
        %v3647 = vpop.trf.xlu0
        %v3648 = vpop.trf.xlu0
        %v3649 = vpop.trf.xlu0
        %v3650 = vpop.trf.xlu0
        %v3651 = vpop.trf.xlu0
        %v3652 = vpop.trf.xlu0
        %3653 = vxpose.xlu0.c.b16.start [1/8] %v3356, 128
        %3654 = vxpose.xlu0.c.b16.cont [2/8] 0, 128
        %3655 = vxpose.xlu0.c.b16.cont [3/8] 0, 128
        %3656 = vxpose.xlu0.c.b16.cont [4/8] 0, 128
        %3657 = vxpose.xlu0.c.b16.cont [5/8] 0, 128
        %3658 = vxpose.xlu0.c.b16.cont [6/8] 0, 128
        %3659 = vxpose.xlu0.c.b16.cont [7/8] 0, 128
        %3660 = vxpose.xlu0.c.b16.end [8/8] 0, 128
        %v3661 = vpop.trf.xlu0
        %v3662 = vpop.trf.xlu0
        %v3663 = vpop.trf.xlu0
        %v3664 = vpop.trf.xlu0
        %v3665 = vpop.trf.xlu0
        %v3666 = vpop.trf.xlu0
        %v3667 = vpop.trf.xlu0
        %v3668 = vpop.trf.xlu0
        %3669 = vxpose.xlu0.c.b16.start [1/8] %v3318, 128
        %3670 = vxpose.xlu0.c.b16.cont [2/8] 0, 128
        %3671 = vxpose.xlu0.c.b16.cont [3/8] 0, 128
        %3672 = vxpose.xlu0.c.b16.cont [4/8] 0, 128
        %3673 = vxpose.xlu0.c.b16.cont [5/8] 0, 128
        %3674 = vxpose.xlu0.c.b16.cont [6/8] 0, 128
        %3675 = vxpose.xlu0.c.b16.cont [7/8] 0, 128
        %3676 = vxpose.xlu0.c.b16.end [8/8] 0, 128
        %v3677 = vpop.trf.xlu0
        %v3678 = vpop.trf.xlu0
        %v3679 = vpop.trf.xlu0
        %v3680 = vpop.trf.xlu0
        %v3681 = vpop.trf.xlu0
        %v3682 = vpop.trf.xlu0
        %v3683 = vpop.trf.xlu0
        %v3684 = vpop.trf.xlu0
        %3685 = vxpose.xlu0.c.b16.start [1/8] %v3374, 128
        %3686 = vxpose.xlu0.c.b16.cont [2/8] 0, 128
        %3687 = vxpose.xlu0.c.b16.cont [3/8] 0, 128
        %3688 = vxpose.xlu0.c.b16.cont [4/8] 0, 128
        %3689 = vxpose.xlu0.c.b16.cont [5/8] 0, 128
        %3690 = vxpose.xlu0.c.b16.cont [6/8] 0, 128
        %3691 = vxpose.xlu0.c.b16.cont [7/8] 0, 128
        %3692 = vxpose.xlu0.c.b16.end [8/8] 0, 128
        %v3693 = vpop.trf.xlu0
        %v3694 = vpop.trf.xlu0
        %v3695 = vpop.trf.xlu0
        %v3696 = vpop.trf.xlu0
        %v3697 = vpop.trf.xlu0
        %v3698 = vpop.trf.xlu0
        %v3699 = vpop.trf.xlu0
        %v3700 = vpop.trf.xlu0
        %3701 = vxpose.xlu0.c.b16.start [1/8] %v3304, 128
        %3702 = vxpose.xlu0.c.b16.cont [2/8] 0, 128
        %3703 = vxpose.xlu0.c.b16.cont [3/8] 0, 128
        %3704 = vxpose.xlu0.c.b16.cont [4/8] 0, 128
        %3705 = vxpose.xlu0.c.b16.cont [5/8] 0, 128
        %3706 = vxpose.xlu0.c.b16.cont [6/8] 0, 128
        %3707 = vxpose.xlu0.c.b16.cont [7/8] 0, 128
        %3708 = vxpose.xlu0.c.b16.end [8/8] 0, 128
        %v3709 = vpop.trf.xlu0
        %v3710 = vpop.trf.xlu0
        %v3711 = vpop.trf.xlu0
        %v3712 = vpop.trf.xlu0
        %v3713 = vpop.trf.xlu0
        %v3714 = vpop.trf.xlu0
        %v3715 = vpop.trf.xlu0
        %v3716 = vpop.trf.xlu0
        %3717 = vxpose.xlu0.c.b16.start [1/8] %v3360, 128
        %3718 = vxpose.xlu0.c.b16.cont [2/8] 0, 128
        %3719 = vxpose.xlu0.c.b16.cont [3/8] 0, 128
        %3720 = vxpose.xlu0.c.b16.cont [4/8] 0, 128
        %3721 = vxpose.xlu0.c.b16.cont [5/8] 0, 128
        %3722 = vxpose.xlu0.c.b16.cont [6/8] 0, 128
        %3723 = vxpose.xlu0.c.b16.cont [7/8] 0, 128
        %3724 = vxpose.xlu0.c.b16.end [8/8] 0, 128
        %v3725 = vpop.trf.xlu0
        %v3726 = vpop.trf.xlu0
        %v3727 = vpop.trf.xlu0
        %v3728 = vpop.trf.xlu0
        %v3729 = vpop.trf.xlu0
        %v3730 = vpop.trf.xlu0
        %v3731 = vpop.trf.xlu0
        %v3732 = vpop.trf.xlu0
        %3733 = vxpose.xlu0.c.b16.start [1/8] %v3320, 128
        %3734 = vxpose.xlu0.c.b16.cont [2/8] 0, 128
        %3735 = vxpose.xlu0.c.b16.cont [3/8] 0, 128
        %3736 = vxpose.xlu0.c.b16.cont [4/8] 0, 128
        %3737 = vxpose.xlu0.c.b16.cont [5/8] 0, 128
        %3738 = vxpose.xlu0.c.b16.cont [6/8] 0, 128
        %3739 = vxpose.xlu0.c.b16.cont [7/8] 0, 128
        %3740 = vxpose.xlu0.c.b16.end [8/8] 0, 128
        %v3741 = vpop.trf.xlu0
        %v3742 = vpop.trf.xlu0
        %v3743 = vpop.trf.xlu0
        %v3744 = vpop.trf.xlu0
        %v3745 = vpop.trf.xlu0
        %v3746 = vpop.trf.xlu0
        %v3747 = vpop.trf.xlu0
        %v3748 = vpop.trf.xlu0
        %3749 = vxpose.xlu0.c.b16.start [1/8] %v3376, 128
        %3750 = vxpose.xlu0.c.b16.cont [2/8] 0, 128
        %3751 = vxpose.xlu0.c.b16.cont [3/8] 0, 128
        %3752 = vxpose.xlu0.c.b16.cont [4/8] 0, 128
        %3753 = vxpose.xlu0.c.b16.cont [5/8] 0, 128
        %3754 = vxpose.xlu0.c.b16.cont [6/8] 0, 128
        %3755 = vxpose.xlu0.c.b16.cont [7/8] 0, 128
        %3756 = vxpose.xlu0.c.b16.end [8/8] 0, 128
        %v3757 = vpop.trf.xlu0
        %v3758 = vpop.trf.xlu0
        %v3759 = vpop.trf.xlu0
        %v3760 = vpop.trf.xlu0
        %v3761 = vpop.trf.xlu0
        %v3762 = vpop.trf.xlu0
        %v3763 = vpop.trf.xlu0
        %v3764 = vpop.trf.xlu0
        %3765 = vxpose.xlu0.c.b16.start [1/8] %v3312, 128
        %3766 = vxpose.xlu0.c.b16.cont [2/8] 0, 128
        %3767 = vxpose.xlu0.c.b16.cont [3/8] 0, 128
        %3768 = vxpose.xlu0.c.b16.cont [4/8] 0, 128
        %3769 = vxpose.xlu0.c.b16.cont [5/8] 0, 128
        %3770 = vxpose.xlu0.c.b16.cont [6/8] 0, 128
        %3771 = vxpose.xlu0.c.b16.cont [7/8] 0, 128
        %3772 = vxpose.xlu0.c.b16.end [8/8] 0, 128
        %v3773 = vpop.trf.xlu0
        %v3774 = vpop.trf.xlu0
        %v3775 = vpop.trf.xlu0
        %v3776 = vpop.trf.xlu0
        %v3777 = vpop.trf.xlu0
        %v3778 = vpop.trf.xlu0
        %v3779 = vpop.trf.xlu0
        %v3780 = vpop.trf.xlu0
        %3781 = vxpose.xlu0.c.b16.start [1/8] %v3368, 128
        %3782 = vxpose.xlu0.c.b16.cont [2/8] 0, 128
        %3783 = vxpose.xlu0.c.b16.cont [3/8] 0, 128
        %3784 = vxpose.xlu0.c.b16.cont [4/8] 0, 128
        %3785 = vxpose.xlu0.c.b16.cont [5/8] 0, 128
        %3786 = vxpose.xlu0.c.b16.cont [6/8] 0, 128
        %3787 = vxpose.xlu0.c.b16.cont [7/8] 0, 128
        %3788 = vxpose.xlu0.c.b16.end [8/8] 0, 128
        %v3789 = vpop.trf.xlu0
        %v3790 = vpop.trf.xlu0
        %v3791 = vpop.trf.xlu0
        %v3792 = vpop.trf.xlu0
        %v3793 = vpop.trf.xlu0
        %v3794 = vpop.trf.xlu0
        %v3795 = vpop.trf.xlu0
        %v3796 = vpop.trf.xlu0
        %3797 = vxpose.xlu0.c.b16.start [1/8] %v3322, 128
        %3798 = vxpose.xlu0.c.b16.cont [2/8] 0, 128
        %3799 = vxpose.xlu0.c.b16.cont [3/8] 0, 128
        %3800 = vxpose.xlu0.c.b16.cont [4/8] 0, 128
        %3801 = vxpose.xlu0.c.b16.cont [5/8] 0, 128
        %3802 = vxpose.xlu0.c.b16.cont [6/8] 0, 128
        %3803 = vxpose.xlu0.c.b16.cont [7/8] 0, 128
        %3804 = vxpose.xlu0.c.b16.end [8/8] 0, 128
        %v3805 = vpop.trf.xlu0
        %v3806 = vpop.trf.xlu0
        %v3807 = vpop.trf.xlu0
        %v3808 = vpop.trf.xlu0
        %v3809 = vpop.trf.xlu0
        %v3810 = vpop.trf.xlu0
        %v3811 = vpop.trf.xlu0
        %v3812 = vpop.trf.xlu0
        %3813 = vxpose.xlu0.c.b16.start [1/8] %v3378, 128
        %3814 = vxpose.xlu0.c.b16.cont [2/8] 0, 128
        %3815 = vxpose.xlu0.c.b16.cont [3/8] 0, 128
        %3816 = vxpose.xlu0.c.b16.cont [4/8] 0, 128
        %3817 = vxpose.xlu0.c.b16.cont [5/8] 0, 128
        %3818 = vxpose.xlu0.c.b16.cont [6/8] 0, 128
        %3819 = vxpose.xlu0.c.b16.cont [7/8] 0, 128
        %3820 = vxpose.xlu0.c.b16.end [8/8] 0, 128
        %v3821 = vpop.trf.xlu0
        %v3822 = vpop.trf.xlu0
        %v3823 = vpop.trf.xlu0
        %v3824 = vpop.trf.xlu0
        %v3825 = vpop.trf.xlu0
        %v3826 = vpop.trf.xlu0
        %v3827 = vpop.trf.xlu0
        %v3828 = vpop.trf.xlu0
        %3829 = vxpose.xlu0.c.b16.start [1/8] %v3316, 128
        %3830 = vxpose.xlu0.c.b16.cont [2/8] 0, 128
        %3831 = vxpose.xlu0.c.b16.cont [3/8] 0, 128
        %3832 = vxpose.xlu0.c.b16.cont [4/8] 0, 128
        %3833 = vxpose.xlu0.c.b16.cont [5/8] 0, 128
        %3834 = vxpose.xlu0.c.b16.cont [6/8] 0, 128
        %3835 = vxpose.xlu0.c.b16.cont [7/8] 0, 128
        %3836 = vxpose.xlu0.c.b16.end [8/8] 0, 128
        %v3837 = vpop.trf.xlu0
        %v3838 = vpop.trf.xlu0
        %v3839 = vpop.trf.xlu0
        %v3840 = vpop.trf.xlu0
        %v3841 = vpop.trf.xlu0
        %v3842 = vpop.trf.xlu0
        %v3843 = vpop.trf.xlu0
        %v3844 = vpop.trf.xlu0
        %3845 = vxpose.xlu0.c.b16.start [1/8] %v3372, 128
        %3846 = vxpose.xlu0.c.b16.cont [2/8] 0, 128
        %3847 = vxpose.xlu0.c.b16.cont [3/8] 0, 128
        %3848 = vxpose.xlu0.c.b16.cont [4/8] 0, 128
        %3849 = vxpose.xlu0.c.b16.cont [5/8] 0, 128
        %3850 = vxpose.xlu0.c.b16.cont [6/8] 0, 128
        %3851 = vxpose.xlu0.c.b16.cont [7/8] 0, 128
        %3852 = vxpose.xlu0.c.b16.end [8/8] 0, 128
        %v3853 = vpop.trf.xlu0
        %v3854 = vpop.trf.xlu0
        %v3855 = vpop.trf.xlu0
        %v3856 = vpop.trf.xlu0
        %v3857 = vpop.trf.xlu0
        %v3858 = vpop.trf.xlu0
        %v3859 = vpop.trf.xlu0
        %v3860 = vpop.trf.xlu0
        %3861 = vxpose.xlu0.c.b16.start [1/8] %v3324, 128
        %3862 = vxpose.xlu0.c.b16.cont [2/8] 0, 128
        %3863 = vxpose.xlu0.c.b16.cont [3/8] 0, 128
        %3864 = vxpose.xlu0.c.b16.cont [4/8] 0, 128
        %3865 = vxpose.xlu0.c.b16.cont [5/8] 0, 128
        %3866 = vxpose.xlu0.c.b16.cont [6/8] 0, 128
        %3867 = vxpose.xlu0.c.b16.cont [7/8] 0, 128
        %3868 = vxpose.xlu0.c.b16.end [8/8] 0, 128
        %v3869 = vpop.trf.xlu0
        %v3870 = vpop.trf.xlu0
        %v3871 = vpop.trf.xlu0
        %v3872 = vpop.trf.xlu0
        %v3873 = vpop.trf.xlu0
        %v3874 = vpop.trf.xlu0
        %v3875 = vpop.trf.xlu0
        %v3876 = vpop.trf.xlu0
        %3877 = vxpose.xlu0.c.b16.start [1/8] %v3380, 128
        %3878 = vxpose.xlu0.c.b16.cont [2/8] 0, 128
        %3879 = vxpose.xlu0.c.b16.cont [3/8] 0, 128
        %3880 = vxpose.xlu0.c.b16.cont [4/8] 0, 128
        %3881 = vxpose.xlu0.c.b16.cont [5/8] 0, 128
        %3882 = vxpose.xlu0.c.b16.cont [6/8] 0, 128
        %3883 = vxpose.xlu0.c.b16.cont [7/8] 0, 128
        %3884 = vxpose.xlu0.c.b16.end [8/8] 0, 128
        %v3885 = vpop.trf.xlu0
        %v3886 = vpop.trf.xlu0
        %v3887 = vpop.trf.xlu0
        %v3888 = vpop.trf.xlu0
        %v3889 = vpop.trf.xlu0
        %v3890 = vpop.trf.xlu0
        %v3891 = vpop.trf.xlu0
        %v3892 = vpop.trf.xlu0
        %v3893 = vld [vmem:[#allocation2] sm:$0xff]
        %v3894 = vld [vmem:[#allocation2 + $0x8] sm:$0xff]
        %v3895 = vld [vmem:[#allocation2 + $0x10] sm:$0xff]
        %v3896 = vld [vmem:[#allocation2 + $0x18] sm:$0xff]
        %v3897 = vld [vmem:[#allocation2 + $0x20] sm:$0xff]
        %v3898 = vld [vmem:[#allocation2 + $0x28] sm:$0xff]
        %v3899 = vld [vmem:[#allocation2 + $0x30] sm:$0xff]
        %v3900 = vld [vmem:[#allocation2 + $0x38] sm:$0xff]
        %v3901 = vld [vmem:[#allocation2 + $0x40] sm:$0xff]
        %v3902 = vld [vmem:[#allocation2 + $0x48] sm:$0xff]
        %v3903 = vld [vmem:[#allocation2 + $0x50] sm:$0xff]
        %v3904 = vld [vmem:[#allocation2 + $0x58] sm:$0xff]
        %v3905 = vld [vmem:[#allocation2 + $0x60] sm:$0xff]
        %v3906 = vld [vmem:[#allocation2 + $0x68] sm:$0xff]
        %v3907 = vld [vmem:[#allocation2 + $0x70] sm:$0xff]
        %v3908 = vld [vmem:[#allocation2 + $0x78] sm:$0xff]
        %v3909 = vld [vmem:[#allocation2 + $0x80] sm:$0xff]
        %v3910 = vld [vmem:[#allocation2 + $0x88] sm:$0xff]
        %v3911 = vld [vmem:[#allocation2 + $0x90] sm:$0xff]
        %v3912 = vld [vmem:[#allocation2 + $0x98] sm:$0xff]
        %v3913 = vld [vmem:[#allocation2 + $0xa0] sm:$0xff]
        %v3914 = vld [vmem:[#allocation2 + $0xa8] sm:$0xff]
        %v3915 = vld [vmem:[#allocation2 + $0xb0] sm:$0xff]
        %v3916 = vld [vmem:[#allocation2 + $0xb8] sm:$0xff]
        %v3917 = vld [vmem:[#allocation2 + $0xc0] sm:$0xff]
        %v3918 = vld [vmem:[#allocation2 + $0xc8] sm:$0xff]
        %v3919 = vld [vmem:[#allocation2 + $0xd0] sm:$0xff]
        %v3920 = vld [vmem:[#allocation2 + $0xd8] sm:$0xff]
        %v3921 = vld [vmem:[#allocation2 + $0xe0] sm:$0xff]
        %v3922 = vld [vmem:[#allocation2 + $0xe8] sm:$0xff]
        %v3923 = vld [vmem:[#allocation2 + $0xf0] sm:$0xff]
        %v3924 = vld [vmem:[#allocation2 + $0xf8] sm:$0xff]
        %vm3925 = vcmask 64512
        %v3927 = vsel %vm3925, %v3389, 0
        %vm3929 = vcmask 1043456
        %v3931 = vsel %vm3929, %v2234, 0
        %3933 = vmatpush.bf16.msra.mxu0 0
        %3934 = vmatpush.bf16.msra.mxu0 0
        %3935 = vmatpush.bf16.msra.mxu0 0
        %3936 = vmatpush.bf16.msra.mxu0 0
        %3937 = vmatpush.bf16.msra.mxu0 0
        %3938 = vmatpush.bf16.msra.mxu0 0
        %3939 = vmatpush.bf16.msra.mxu0 0
        %3940 = vmatpush.bf16.msra.mxu0 %v3931
        %3941 = vmatmul.bf16.gmra.mxu0 %v3927
        %v3942 = vpop.f32.mrf.mxu0
        %v3943 = vadd.f32 0.0, %v3942
        %v3944 = vpop.f32.mrf.mxu0
        %3945 = vdwg.mxu0
        %v3947 = vsel %vm3925, %v3405, 0
        %v3950 = vsel %vm3929, %v2290, 0
        %3952 = vmatpush.bf16.msra.mxu0 0
        %3953 = vmatpush.bf16.msra.mxu0 0
        %3954 = vmatpush.bf16.msra.mxu0 0
        %3955 = vmatpush.bf16.msra.mxu0 0
        %3956 = vmatpush.bf16.msra.mxu0 0
        %3957 = vmatpush.bf16.msra.mxu0 0
        %3958 = vmatpush.bf16.msra.mxu0 0
        %3959 = vmatpush.bf16.msra.mxu0 %v3950
        %3960 = vmatmul.bf16.gmra.mxu0 %v3947
        %v3961 = vpop.f32.mrf.mxu0
        %v3962 = vadd.f32 0.0, %v3961
        %v3963 = vpop.f32.mrf.mxu0
        %3964 = vdwg.mxu0
        %v3966 = vsel %vm3925, %v3421, 0
        %v3969 = vsel %vm3929, %v2252, 0
        %3971 = vmatpush.bf16.msra.mxu0 0
        %3972 = vmatpush.bf16.msra.mxu0 0
        %3973 = vmatpush.bf16.msra.mxu0 0
        %3974 = vmatpush.bf16.msra.mxu0 0
        %3975 = vmatpush.bf16.msra.mxu0 0
        %3976 = vmatpush.bf16.msra.mxu0 0
        %3977 = vmatpush.bf16.msra.mxu0 0
        %3978 = vmatpush.bf16.msra.mxu0 %v3969
        %3979 = vmatmul.bf16.gmra.mxu0 %v3966
        %v3980 = vpop.f32.mrf.mxu0
        %v3981 = vadd.f32 0.0, %v3980
        %v3982 = vpop.f32.mrf.mxu0
        %3983 = vdwg.mxu0
        %v3985 = vsel %vm3925, %v3437, 0
        %v3988 = vsel %vm3929, %v2308, 0
        %3990 = vmatpush.bf16.msra.mxu0 0
        %3991 = vmatpush.bf16.msra.mxu0 0
        %3992 = vmatpush.bf16.msra.mxu0 0
        %3993 = vmatpush.bf16.msra.mxu0 0
        %3994 = vmatpush.bf16.msra.mxu0 0
        %3995 = vmatpush.bf16.msra.mxu0 0
        %3996 = vmatpush.bf16.msra.mxu0 0
        %3997 = vmatpush.bf16.msra.mxu0 %v3988
        %3998 = vmatmul.bf16.gmra.mxu0 %v3985
        %v3999 = vpop.f32.mrf.mxu0
        %v4000 = vadd.f32 0.0, %v3999
        %v4001 = vpop.f32.mrf.mxu0
        %4002 = vdwg.mxu0
        %v4004 = vsel %vm3925, %v3453, 0
        %v4007 = vsel %vm3929, %v2238, 0
        %4009 = vmatpush.bf16.msra.mxu0 0
        %4010 = vmatpush.bf16.msra.mxu0 0
        %4011 = vmatpush.bf16.msra.mxu0 0
        %4012 = vmatpush.bf16.msra.mxu0 0
        %4013 = vmatpush.bf16.msra.mxu0 0
        %4014 = vmatpush.bf16.msra.mxu0 0
        %4015 = vmatpush.bf16.msra.mxu0 0
        %4016 = vmatpush.bf16.msra.mxu0 %v4007
        %4017 = vmatmul.bf16.gmra.mxu0 %v4004
        %v4018 = vpop.f32.mrf.mxu0
        %v4019 = vadd.f32 0.0, %v4018
        %v4020 = vpop.f32.mrf.mxu0
        %4021 = vdwg.mxu0
        %v4023 = vsel %vm3925, %v3469, 0
        %v4026 = vsel %vm3929, %v2294, 0
        %4028 = vmatpush.bf16.msra.mxu0 0
        %4029 = vmatpush.bf16.msra.mxu0 0
        %4030 = vmatpush.bf16.msra.mxu0 0
        %4031 = vmatpush.bf16.msra.mxu0 0
        %4032 = vmatpush.bf16.msra.mxu0 0
        %4033 = vmatpush.bf16.msra.mxu0 0
        %4034 = vmatpush.bf16.msra.mxu0 0
        %4035 = vmatpush.bf16.msra.mxu0 %v4026
        %4036 = vmatmul.bf16.gmra.mxu0 %v4023
        %v4037 = vpop.f32.mrf.mxu0
        %v4038 = vadd.f32 0.0, %v4037
        %v4039 = vpop.f32.mrf.mxu0
        %4040 = vdwg.mxu0
        %v4042 = vsel %vm3925, %v3485, 0
        %v4045 = vsel %vm3929, %v2254, 0
        %4047 = vmatpush.bf16.msra.mxu0 0
        %4048 = vmatpush.bf16.msra.mxu0 0
        %4049 = vmatpush.bf16.msra.mxu0 0
        %4050 = vmatpush.bf16.msra.mxu0 0
        %4051 = vmatpush.bf16.msra.mxu0 0
        %4052 = vmatpush.bf16.msra.mxu0 0
        %4053 = vmatpush.bf16.msra.mxu0 0
        %4054 = vmatpush.bf16.msra.mxu0 %v4045
        %4055 = vmatmul.bf16.gmra.mxu0 %v4042
        %v4056 = vpop.f32.mrf.mxu0
        %v4057 = vadd.f32 0.0, %v4056
        %v4058 = vpop.f32.mrf.mxu0
        %4059 = vdwg.mxu0
        %v4061 = vsel %vm3925, %v3501, 0
        %v4064 = vsel %vm3929, %v2310, 0
        %4066 = vmatpush.bf16.msra.mxu0 0
        %4067 = vmatpush.bf16.msra.mxu0 0
        %4068 = vmatpush.bf16.msra.mxu0 0
        %4069 = vmatpush.bf16.msra.mxu0 0
        %4070 = vmatpush.bf16.msra.mxu0 0
        %4071 = vmatpush.bf16.msra.mxu0 0
        %4072 = vmatpush.bf16.msra.mxu0 0
        %4073 = vmatpush.bf16.msra.mxu0 %v4064
        %4074 = vmatmul.bf16.gmra.mxu0 %v4061
        %v4075 = vpop.f32.mrf.mxu0
        %v4076 = vadd.f32 0.0, %v4075
        %v4077 = vpop.f32.mrf.mxu0
        %4078 = vdwg.mxu0
        %v4080 = vsel %vm3925, %v3517, 0
        %v4083 = vsel %vm3929, %v2246, 0
        %4085 = vmatpush.bf16.msra.mxu0 0
        %4086 = vmatpush.bf16.msra.mxu0 0
        %4087 = vmatpush.bf16.msra.mxu0 0
        %4088 = vmatpush.bf16.msra.mxu0 0
        %4089 = vmatpush.bf16.msra.mxu0 0
        %4090 = vmatpush.bf16.msra.mxu0 0
        %4091 = vmatpush.bf16.msra.mxu0 0
        %4092 = vmatpush.bf16.msra.mxu0 %v4083
        %4093 = vmatmul.bf16.gmra.mxu0 %v4080
        %v4094 = vpop.f32.mrf.mxu0
        %v4095 = vadd.f32 0.0, %v4094
        %v4096 = vpop.f32.mrf.mxu0
        %4097 = vdwg.mxu0
        %v4099 = vsel %vm3925, %v3533, 0
        %v4102 = vsel %vm3929, %v2302, 0
        %4104 = vmatpush.bf16.msra.mxu0 0
        %4105 = vmatpush.bf16.msra.mxu0 0
        %4106 = vmatpush.bf16.msra.mxu0 0
        %4107 = vmatpush.bf16.msra.mxu0 0
        %4108 = vmatpush.bf16.msra.mxu0 0
        %4109 = vmatpush.bf16.msra.mxu0 0
        %4110 = vmatpush.bf16.msra.mxu0 0
        %4111 = vmatpush.bf16.msra.mxu0 %v4102
        %4112 = vmatmul.bf16.gmra.mxu0 %v4099
        %v4113 = vpop.f32.mrf.mxu0
        %v4114 = vadd.f32 0.0, %v4113
        %v4115 = vpop.f32.mrf.mxu0
        %4116 = vdwg.mxu0
        %v4118 = vsel %vm3925, %v3549, 0
        %v4121 = vsel %vm3929, %v2256, 0
        %4123 = vmatpush.bf16.msra.mxu0 0
        %4124 = vmatpush.bf16.msra.mxu0 0
        %4125 = vmatpush.bf16.msra.mxu0 0
        %4126 = vmatpush.bf16.msra.mxu0 0
        %4127 = vmatpush.bf16.msra.mxu0 0
        %4128 = vmatpush.bf16.msra.mxu0 0
        %4129 = vmatpush.bf16.msra.mxu0 0
        %4130 = vmatpush.bf16.msra.mxu0 %v4121
        %4131 = vmatmul.bf16.gmra.mxu0 %v4118
        %v4132 = vpop.f32.mrf.mxu0
        %v4133 = vadd.f32 0.0, %v4132
        %v4134 = vpop.f32.mrf.mxu0
        %4135 = vdwg.mxu0
        %v4137 = vsel %vm3925, %v3565, 0
        %v4140 = vsel %vm3929, %v2312, 0
        %4142 = vmatpush.bf16.msra.mxu0 0
        %4143 = vmatpush.bf16.msra.mxu0 0
        %4144 = vmatpush.bf16.msra.mxu0 0
        %4145 = vmatpush.bf16.msra.mxu0 0
        %4146 = vmatpush.bf16.msra.mxu0 0
        %4147 = vmatpush.bf16.msra.mxu0 0
        %4148 = vmatpush.bf16.msra.mxu0 0
        %4149 = vmatpush.bf16.msra.mxu0 %v4140
        %4150 = vmatmul.bf16.gmra.mxu0 %v4137
        %v4151 = vpop.f32.mrf.mxu0
        %v4152 = vadd.f32 0.0, %v4151
        %v4153 = vpop.f32.mrf.mxu0
        %4154 = vdwg.mxu0
        %v4156 = vsel %vm3925, %v3581, 0
        %v4159 = vsel %vm3929, %v2250, 0
        %4161 = vmatpush.bf16.msra.mxu0 0
        %4162 = vmatpush.bf16.msra.mxu0 0
        %4163 = vmatpush.bf16.msra.mxu0 0
        %4164 = vmatpush.bf16.msra.mxu0 0
        %4165 = vmatpush.bf16.msra.mxu0 0
        %4166 = vmatpush.bf16.msra.mxu0 0
        %4167 = vmatpush.bf16.msra.mxu0 0
        %4168 = vmatpush.bf16.msra.mxu0 %v4159
        %4169 = vmatmul.bf16.gmra.mxu0 %v4156
        %v4170 = vpop.f32.mrf.mxu0
        %v4171 = vadd.f32 0.0, %v4170
        %v4172 = vpop.f32.mrf.mxu0
        %4173 = vdwg.mxu0
        %v4175 = vsel %vm3925, %v3597, 0
        %v4178 = vsel %vm3929, %v2306, 0
        %4180 = vmatpush.bf16.msra.mxu0 0
        %4181 = vmatpush.bf16.msra.mxu0 0
        %4182 = vmatpush.bf16.msra.mxu0 0
        %4183 = vmatpush.bf16.msra.mxu0 0
        %4184 = vmatpush.bf16.msra.mxu0 0
        %4185 = vmatpush.bf16.msra.mxu0 0
        %4186 = vmatpush.bf16.msra.mxu0 0
        %4187 = vmatpush.bf16.msra.mxu0 %v4178
        %4188 = vmatmul.bf16.gmra.mxu0 %v4175
        %v4189 = vpop.f32.mrf.mxu0
        %v4190 = vadd.f32 0.0, %v4189
        %v4191 = vpop.f32.mrf.mxu0
        %4192 = vdwg.mxu0
        %v4194 = vsel %vm3925, %v3613, 0
        %v4197 = vsel %vm3929, %v2258, 0
        %4199 = vmatpush.bf16.msra.mxu0 0
        %4200 = vmatpush.bf16.msra.mxu0 0
        %4201 = vmatpush.bf16.msra.mxu0 0
        %4202 = vmatpush.bf16.msra.mxu0 0
        %4203 = vmatpush.bf16.msra.mxu0 0
        %4204 = vmatpush.bf16.msra.mxu0 0
        %4205 = vmatpush.bf16.msra.mxu0 0
        %4206 = vmatpush.bf16.msra.mxu0 %v4197
        %4207 = vmatmul.bf16.gmra.mxu0 %v4194
        %v4208 = vpop.f32.mrf.mxu0
        %v4209 = vadd.f32 0.0, %v4208
        %v4210 = vpop.f32.mrf.mxu0
        %4211 = vdwg.mxu0
        %v4213 = vsel %vm3925, %v3629, 0
        %v4216 = vsel %vm3929, %v2314, 0
        %4218 = vmatpush.bf16.msra.mxu0 0
        %4219 = vmatpush.bf16.msra.mxu0 0
        %4220 = vmatpush.bf16.msra.mxu0 0
        %4221 = vmatpush.bf16.msra.mxu0 0
        %4222 = vmatpush.bf16.msra.mxu0 0
        %4223 = vmatpush.bf16.msra.mxu0 0
        %4224 = vmatpush.bf16.msra.mxu0 0
        %4225 = vmatpush.bf16.msra.mxu0 %v4216
        %4226 = vmatmul.bf16.gmra.mxu0 %v4213
        %v4227 = vpop.f32.mrf.mxu0
        %v4228 = vadd.f32 0.0, %v4227
        %v4229 = vpop.f32.mrf.mxu0
        %4230 = vdwg.mxu0
        %v4232 = vsel %vm3925, %v3645, 0
        %v4235 = vsel %vm3929, %v2346, 0
        %4237 = vmatpush.bf16.msra.mxu0 0
        %4238 = vmatpush.bf16.msra.mxu0 0
        %4239 = vmatpush.bf16.msra.mxu0 0
        %4240 = vmatpush.bf16.msra.mxu0 0
        %4241 = vmatpush.bf16.msra.mxu0 0
        %4242 = vmatpush.bf16.msra.mxu0 0
        %4243 = vmatpush.bf16.msra.mxu0 0
        %4244 = vmatpush.bf16.msra.mxu0 %v4235
        %4245 = vmatmul.bf16.gmra.mxu0 %v4232
        %v4246 = vpop.f32.mrf.mxu0
        %v4247 = vadd.f32 0.0, %v4246
        %v4248 = vpop.f32.mrf.mxu0
        %4249 = vdwg.mxu0
        %v4251 = vsel %vm3925, %v3661, 0
        %v4254 = vsel %vm3929, %v2402, 0
        %4256 = vmatpush.bf16.msra.mxu0 0
        %4257 = vmatpush.bf16.msra.mxu0 0
        %4258 = vmatpush.bf16.msra.mxu0 0
        %4259 = vmatpush.bf16.msra.mxu0 0
        %4260 = vmatpush.bf16.msra.mxu0 0
        %4261 = vmatpush.bf16.msra.mxu0 0
        %4262 = vmatpush.bf16.msra.mxu0 0
        %4263 = vmatpush.bf16.msra.mxu0 %v4254
        %4264 = vmatmul.bf16.gmra.mxu0 %v4251
        %v4265 = vpop.f32.mrf.mxu0
        %v4266 = vadd.f32 0.0, %v4265
        %v4267 = vpop.f32.mrf.mxu0
        %4268 = vdwg.mxu0
        %v4270 = vsel %vm3925, %v3677, 0
        %v4273 = vsel %vm3929, %v2364, 0
        %4275 = vmatpush.bf16.msra.mxu0 0
        %4276 = vmatpush.bf16.msra.mxu0 0
        %4277 = vmatpush.bf16.msra.mxu0 0
        %4278 = vmatpush.bf16.msra.mxu0 0
        %4279 = vmatpush.bf16.msra.mxu0 0
        %4280 = vmatpush.bf16.msra.mxu0 0
        %4281 = vmatpush.bf16.msra.mxu0 0
        %4282 = vmatpush.bf16.msra.mxu0 %v4273
        %4283 = vmatmul.bf16.gmra.mxu0 %v4270
        %v4284 = vpop.f32.mrf.mxu0
        %v4285 = vadd.f32 0.0, %v4284
        %v4286 = vpop.f32.mrf.mxu0
        %4287 = vdwg.mxu0
        %v4289 = vsel %vm3925, %v3693, 0
        %v4292 = vsel %vm3929, %v2420, 0
        %4294 = vmatpush.bf16.msra.mxu0 0
        %4295 = vmatpush.bf16.msra.mxu0 0
        %4296 = vmatpush.bf16.msra.mxu0 0
        %4297 = vmatpush.bf16.msra.mxu0 0
        %4298 = vmatpush.bf16.msra.mxu0 0
        %4299 = vmatpush.bf16.msra.mxu0 0
        %4300 = vmatpush.bf16.msra.mxu0 0
        %4301 = vmatpush.bf16.msra.mxu0 %v4292
        %4302 = vmatmul.bf16.gmra.mxu0 %v4289
        %v4303 = vpop.f32.mrf.mxu0
        %v4304 = vadd.f32 0.0, %v4303
        %v4305 = vpop.f32.mrf.mxu0
        %4306 = vdwg.mxu0
        %v4308 = vsel %vm3925, %v3709, 0
        %v4311 = vsel %vm3929, %v2350, 0
        %4313 = vmatpush.bf16.msra.mxu0 0
        %4314 = vmatpush.bf16.msra.mxu0 0
        %4315 = vmatpush.bf16.msra.mxu0 0
        %4316 = vmatpush.bf16.msra.mxu0 0
        %4317 = vmatpush.bf16.msra.mxu0 0
        %4318 = vmatpush.bf16.msra.mxu0 0
        %4319 = vmatpush.bf16.msra.mxu0 0
        %4320 = vmatpush.bf16.msra.mxu0 %v4311
        %4321 = vmatmul.bf16.gmra.mxu0 %v4308
        %v4322 = vpop.f32.mrf.mxu0
        %v4323 = vadd.f32 0.0, %v4322
        %v4324 = vpop.f32.mrf.mxu0
        %4325 = vdwg.mxu0
        %v4327 = vsel %vm3925, %v3725, 0
        %v4330 = vsel %vm3929, %v2406, 0
        %4332 = vmatpush.bf16.msra.mxu0 0
        %4333 = vmatpush.bf16.msra.mxu0 0
        %4334 = vmatpush.bf16.msra.mxu0 0
        %4335 = vmatpush.bf16.msra.mxu0 0
        %4336 = vmatpush.bf16.msra.mxu0 0
        %4337 = vmatpush.bf16.msra.mxu0 0
        %4338 = vmatpush.bf16.msra.mxu0 0
        %4339 = vmatpush.bf16.msra.mxu0 %v4330
        %4340 = vmatmul.bf16.gmra.mxu0 %v4327
        %v4341 = vpop.f32.mrf.mxu0
        %v4342 = vadd.f32 0.0, %v4341
        %v4343 = vpop.f32.mrf.mxu0
        %4344 = vdwg.mxu0
        %v4346 = vsel %vm3925, %v3741, 0
        %v4349 = vsel %vm3929, %v2366, 0
        %4351 = vmatpush.bf16.msra.mxu0 0
        %4352 = vmatpush.bf16.msra.mxu0 0
        %4353 = vmatpush.bf16.msra.mxu0 0
        %4354 = vmatpush.bf16.msra.mxu0 0
        %4355 = vmatpush.bf16.msra.mxu0 0
        %4356 = vmatpush.bf16.msra.mxu0 0
        %4357 = vmatpush.bf16.msra.mxu0 0
        %4358 = vmatpush.bf16.msra.mxu0 %v4349
        %4359 = vmatmul.bf16.gmra.mxu0 %v4346
        %v4360 = vpop.f32.mrf.mxu0
        %v4361 = vadd.f32 0.0, %v4360
        %v4362 = vpop.f32.mrf.mxu0
        %4363 = vdwg.mxu0
        %v4365 = vsel %vm3925, %v3757, 0
        %v4368 = vsel %vm3929, %v2422, 0
        %4370 = vmatpush.bf16.msra.mxu0 0
        %4371 = vmatpush.bf16.msra.mxu0 0
        %4372 = vmatpush.bf16.msra.mxu0 0
        %4373 = vmatpush.bf16.msra.mxu0 0
        %4374 = vmatpush.bf16.msra.mxu0 0
        %4375 = vmatpush.bf16.msra.mxu0 0
        %4376 = vmatpush.bf16.msra.mxu0 0
        %4377 = vmatpush.bf16.msra.mxu0 %v4368
        %4378 = vmatmul.bf16.gmra.mxu0 %v4365
        %v4379 = vpop.f32.mrf.mxu0
        %v4380 = vadd.f32 0.0, %v4379
        %v4381 = vpop.f32.mrf.mxu0
        %4382 = vdwg.mxu0
        %v4384 = vsel %vm3925, %v3773, 0
        %v4387 = vsel %vm3929, %v2358, 0
        %4389 = vmatpush.bf16.msra.mxu0 0
        %4390 = vmatpush.bf16.msra.mxu0 0
        %4391 = vmatpush.bf16.msra.mxu0 0
        %4392 = vmatpush.bf16.msra.mxu0 0
        %4393 = vmatpush.bf16.msra.mxu0 0
        %4394 = vmatpush.bf16.msra.mxu0 0
        %4395 = vmatpush.bf16.msra.mxu0 0
        %4396 = vmatpush.bf16.msra.mxu0 %v4387
        %4397 = vmatmul.bf16.gmra.mxu0 %v4384
        %v4398 = vpop.f32.mrf.mxu0
        %v4399 = vadd.f32 0.0, %v4398
        %v4400 = vpop.f32.mrf.mxu0
        %4401 = vdwg.mxu0
        %v4403 = vsel %vm3925, %v3789, 0
        %v4406 = vsel %vm3929, %v2414, 0
        %4408 = vmatpush.bf16.msra.mxu0 0
        %4409 = vmatpush.bf16.msra.mxu0 0
        %4410 = vmatpush.bf16.msra.mxu0 0
        %4411 = vmatpush.bf16.msra.mxu0 0
        %4412 = vmatpush.bf16.msra.mxu0 0
        %4413 = vmatpush.bf16.msra.mxu0 0
        %4414 = vmatpush.bf16.msra.mxu0 0
        %4415 = vmatpush.bf16.msra.mxu0 %v4406
        %4416 = vmatmul.bf16.gmra.mxu0 %v4403
        %v4417 = vpop.f32.mrf.mxu0
        %v4418 = vadd.f32 0.0, %v4417
        %v4419 = vpop.f32.mrf.mxu0
        %4420 = vdwg.mxu0
        %v4422 = vsel %vm3925, %v3805, 0
        %v4425 = vsel %vm3929, %v2368, 0
        %4427 = vmatpush.bf16.msra.mxu0 0
        %4428 = vmatpush.bf16.msra.mxu0 0
        %4429 = vmatpush.bf16.msra.mxu0 0
        %4430 = vmatpush.bf16.msra.mxu0 0
        %4431 = vmatpush.bf16.msra.mxu0 0
        %4432 = vmatpush.bf16.msra.mxu0 0
        %4433 = vmatpush.bf16.msra.mxu0 0
        %4434 = vmatpush.bf16.msra.mxu0 %v4425
        %4435 = vmatmul.bf16.gmra.mxu0 %v4422
        %v4436 = vpop.f32.mrf.mxu0
        %v4437 = vadd.f32 0.0, %v4436
        %v4438 = vpop.f32.mrf.mxu0
        %4439 = vdwg.mxu0
        %v4441 = vsel %vm3925, %v3821, 0
        %v4444 = vsel %vm3929, %v2424, 0
        %4446 = vmatpush.bf16.msra.mxu0 0
        %4447 = vmatpush.bf16.msra.mxu0 0
        %4448 = vmatpush.bf16.msra.mxu0 0
        %4449 = vmatpush.bf16.msra.mxu0 0
        %4450 = vmatpush.bf16.msra.mxu0 0
        %4451 = vmatpush.bf16.msra.mxu0 0
        %4452 = vmatpush.bf16.msra.mxu0 0
        %4453 = vmatpush.bf16.msra.mxu0 %v4444
        %4454 = vmatmul.bf16.gmra.mxu0 %v4441
        %v4455 = vpop.f32.mrf.mxu0
        %v4456 = vadd.f32 0.0, %v4455
        %v4457 = vpop.f32.mrf.mxu0
        %4458 = vdwg.mxu0
        %v4460 = vsel %vm3925, %v3837, 0
        %v4463 = vsel %vm3929, %v2362, 0
        %4465 = vmatpush.bf16.msra.mxu0 0
        %4466 = vmatpush.bf16.msra.mxu0 0
        %4467 = vmatpush.bf16.msra.mxu0 0
        %4468 = vmatpush.bf16.msra.mxu0 0
        %4469 = vmatpush.bf16.msra.mxu0 0
        %4470 = vmatpush.bf16.msra.mxu0 0
        %4471 = vmatpush.bf16.msra.mxu0 0
        %4472 = vmatpush.bf16.msra.mxu0 %v4463
        %4473 = vmatmul.bf16.gmra.mxu0 %v4460
        %v4474 = vpop.f32.mrf.mxu0
        %v4475 = vadd.f32 0.0, %v4474
        %v4476 = vpop.f32.mrf.mxu0
        %4477 = vdwg.mxu0
        %v4479 = vsel %vm3925, %v3853, 0
        %v4482 = vsel %vm3929, %v2418, 0
        %4484 = vmatpush.bf16.msra.mxu0 0
        %4485 = vmatpush.bf16.msra.mxu0 0
        %4486 = vmatpush.bf16.msra.mxu0 0
        %4487 = vmatpush.bf16.msra.mxu0 0
        %4488 = vmatpush.bf16.msra.mxu0 0
        %4489 = vmatpush.bf16.msra.mxu0 0
        %4490 = vmatpush.bf16.msra.mxu0 0
        %4491 = vmatpush.bf16.msra.mxu0 %v4482
        %4492 = vmatmul.bf16.gmra.mxu0 %v4479
        %v4493 = vpop.f32.mrf.mxu0
        %v4494 = vadd.f32 0.0, %v4493
        %v4495 = vpop.f32.mrf.mxu0
        %4496 = vdwg.mxu0
        %v4498 = vsel %vm3925, %v3869, 0
        %v4501 = vsel %vm3929, %v2370, 0
        %4503 = vmatpush.bf16.msra.mxu0 0
        %4504 = vmatpush.bf16.msra.mxu0 0
        %4505 = vmatpush.bf16.msra.mxu0 0
        %4506 = vmatpush.bf16.msra.mxu0 0
        %4507 = vmatpush.bf16.msra.mxu0 0
        %4508 = vmatpush.bf16.msra.mxu0 0
        %4509 = vmatpush.bf16.msra.mxu0 0
        %4510 = vmatpush.bf16.msra.mxu0 %v4501
        %4511 = vmatmul.bf16.gmra.mxu0 %v4498
        %v4512 = vpop.f32.mrf.mxu0
        %v4513 = vadd.f32 0.0, %v4512
        %v4514 = vpop.f32.mrf.mxu0
        %4515 = vdwg.mxu0
        %v4517 = vsel %vm3925, %v3885, 0
        %v4520 = vsel %vm3929, %v2426, 0
        %4522 = vmatpush.bf16.msra.mxu0 0
        %4523 = vmatpush.bf16.msra.mxu0 0
        %4524 = vmatpush.bf16.msra.mxu0 0
        %4525 = vmatpush.bf16.msra.mxu0 0
        %4526 = vmatpush.bf16.msra.mxu0 0
        %4527 = vmatpush.bf16.msra.mxu0 0
        %4528 = vmatpush.bf16.msra.mxu0 0
        %4529 = vmatpush.bf16.msra.mxu0 %v4520
        %4530 = vmatmul.bf16.gmra.mxu0 %v4517
        %v4531 = vpop.f32.mrf.mxu0
        %v4532 = vadd.f32 0.0, %v4531
        %v4533 = vpop.f32.mrf.mxu0
        %4534 = vdwg.mxu0
        %v4535 = vadd.f32 %v3893, %v3943
        %v4536 = vadd.f32 %v3894, %v3962
        %v4537 = vadd.f32 %v3895, %v3981
        %v4538 = vadd.f32 %v3896, %v4000
        %v4539 = vadd.f32 %v3897, %v4019
        %v4540 = vadd.f32 %v3898, %v4038
        %v4541 = vadd.f32 %v3899, %v4057
        %v4542 = vadd.f32 %v3900, %v4076
        %v4543 = vadd.f32 %v3901, %v4095
        %v4544 = vadd.f32 %v3902, %v4114
        %v4545 = vadd.f32 %v3903, %v4133
        %v4546 = vadd.f32 %v3904, %v4152
        %v4547 = vadd.f32 %v3905, %v4171
        %v4548 = vadd.f32 %v3906, %v4190
        %v4549 = vadd.f32 %v3907, %v4209
        %v4550 = vadd.f32 %v3908, %v4228
        %v4551 = vadd.f32 %v3909, %v4247
        %v4552 = vadd.f32 %v3910, %v4266
        %v4553 = vadd.f32 %v3911, %v4285
        %v4554 = vadd.f32 %v3912, %v4304
        %v4555 = vadd.f32 %v3913, %v4323
        %v4556 = vadd.f32 %v3914, %v4342
        %v4557 = vadd.f32 %v3915, %v4361
        %v4558 = vadd.f32 %v3916, %v4380
        %v4559 = vadd.f32 %v3917, %v4399
        %v4560 = vadd.f32 %v3918, %v4418
        %v4561 = vadd.f32 %v3919, %v4437
        %v4562 = vadd.f32 %v3920, %v4456
        %v4563 = vadd.f32 %v3921, %v4475
        %v4564 = vadd.f32 %v3922, %v4494
        %v4565 = vadd.f32 %v3923, %v4513
        %v4566 = vadd.f32 %v3924, %v4532
        %vm4567 = vcmask 130048
        %4568 = vst.msk [vmem:[#allocation2] sm:$0xff] %vm4567, %v4535
        %4569 = vst.msk [vmem:[#allocation2 + $0x8] sm:$0xff] %vm4567, %v4536
        %4570 = vst.msk [vmem:[#allocation2 + $0x10] sm:$0xff] %vm4567, %v4537
        %4571 = vst.msk [vmem:[#allocation2 + $0x18] sm:$0xff] %vm4567, %v4538
        %4572 = vst.msk [vmem:[#allocation2 + $0x20] sm:$0xff] %vm4567, %v4539
        %4573 = vst.msk [vmem:[#allocation2 + $0x28] sm:$0xff] %vm4567, %v4540
        %4574 = vst.msk [vmem:[#allocation2 + $0x30] sm:$0xff] %vm4567, %v4541
        %4575 = vst.msk [vmem:[#allocation2 + $0x38] sm:$0xff] %vm4567, %v4542
        %4576 = vst.msk [vmem:[#allocation2 + $0x40] sm:$0xff] %vm4567, %v4543
        %4577 = vst.msk [vmem:[#allocation2 + $0x48] sm:$0xff] %vm4567, %v4544
        %4578 = vst.msk [vmem:[#allocation2 + $0x50] sm:$0xff] %vm4567, %v4545
        %4579 = vst.msk [vmem:[#allocation2 + $0x58] sm:$0xff] %vm4567, %v4546
        %4580 = vst.msk [vmem:[#allocation2 + $0x60] sm:$0xff] %vm4567, %v4547
        %4581 = vst.msk [vmem:[#allocation2 + $0x68] sm:$0xff] %vm4567, %v4548
        %4582 = vst.msk [vmem:[#allocation2 + $0x70] sm:$0xff] %vm4567, %v4549
        %4583 = vst.msk [vmem:[#allocation2 + $0x78] sm:$0xff] %vm4567, %v4550
        %4584 = vst.msk [vmem:[#allocation2 + $0x80] sm:$0xff] %vm4567, %v4551
        %4585 = vst.msk [vmem:[#allocation2 + $0x88] sm:$0xff] %vm4567, %v4552
        %4586 = vst.msk [vmem:[#allocation2 + $0x90] sm:$0xff] %vm4567, %v4553
        %4587 = vst.msk [vmem:[#allocation2 + $0x98] sm:$0xff] %vm4567, %v4554
        %4588 = vst.msk [vmem:[#allocation2 + $0xa0] sm:$0xff] %vm4567, %v4555
        %4589 = vst.msk [vmem:[#allocation2 + $0xa8] sm:$0xff] %vm4567, %v4556
        %4590 = vst.msk [vmem:[#allocation2 + $0xb0] sm:$0xff] %vm4567, %v4557
        %4591 = vst.msk [vmem:[#allocation2 + $0xb8] sm:$0xff] %vm4567, %v4558
        %4592 = vst.msk [vmem:[#allocation2 + $0xc0] sm:$0xff] %vm4567, %v4559
        %4593 = vst.msk [vmem:[#allocation2 + $0xc8] sm:$0xff] %vm4567, %v4560
        %4594 = vst.msk [vmem:[#allocation2 + $0xd0] sm:$0xff] %vm4567, %v4561
        %4595 = vst.msk [vmem:[#allocation2 + $0xd8] sm:$0xff] %vm4567, %v4562
        %4596 = vst.msk [vmem:[#allocation2 + $0xe0] sm:$0xff] %vm4567, %v4563
        %4597 = vst.msk [vmem:[#allocation2 + $0xe8] sm:$0xff] %vm4567, %v4564
        %4598 = vst.msk [vmem:[#allocation2 + $0xf0] sm:$0xff] %vm4567, %v4565
        %4599 = vst.msk [vmem:[#allocation2 + $0xf8] sm:$0xff] %vm4567, %v4566
        %p4600 = scmp.eq.s32.totalorder %s49, 1
        // Predicated region
        $region125: #{tpu_custom_call.1} parent=107 // pred_check
          %p4601 = pneg %p4600
        $region126: #{tpu_custom_call.1} parent=107 // pred_check_branch
          %4603 = sbr.rel (%p4601) target = $region128
        $region127: #{tpu_custom_call.1} parent=107 // pred_region
          %v4604 = vld [vmem:[#allocation2] sm:$0xff]
          %v4605 = vld [vmem:[#allocation2 + $0x8] sm:$0xff]
          %v4606 = vld [vmem:[#allocation2 + $0x10] sm:$0xff]
          %v4607 = vld [vmem:[#allocation2 + $0x18] sm:$0xff]
          %v4608 = vld [vmem:[#allocation2 + $0x20] sm:$0xff]
          %v4609 = vld [vmem:[#allocation2 + $0x28] sm:$0xff]
          %v4610 = vld [vmem:[#allocation2 + $0x30] sm:$0xff]
          %v4611 = vld [vmem:[#allocation2 + $0x38] sm:$0xff]
          %v4612 = vld [vmem:[#allocation2 + $0x40] sm:$0xff]
          %v4613 = vld [vmem:[#allocation2 + $0x48] sm:$0xff]
          %v4614 = vld [vmem:[#allocation2 + $0x50] sm:$0xff]
          %v4615 = vld [vmem:[#allocation2 + $0x58] sm:$0xff]
          %v4616 = vld [vmem:[#allocation2 + $0x60] sm:$0xff]
          %v4617 = vld [vmem:[#allocation2 + $0x68] sm:$0xff]
          %v4618 = vld [vmem:[#allocation2 + $0x70] sm:$0xff]
          %v4619 = vld [vmem:[#allocation2 + $0x78] sm:$0xff]
          %v4620 = vld [vmem:[#allocation2 + $0x80] sm:$0xff]
          %v4621 = vld [vmem:[#allocation2 + $0x88] sm:$0xff]
          %v4622 = vld [vmem:[#allocation2 + $0x90] sm:$0xff]
          %v4623 = vld [vmem:[#allocation2 + $0x98] sm:$0xff]
          %v4624 = vld [vmem:[#allocation2 + $0xa0] sm:$0xff]
          %v4625 = vld [vmem:[#allocation2 + $0xa8] sm:$0xff]
          %v4626 = vld [vmem:[#allocation2 + $0xb0] sm:$0xff]
          %v4627 = vld [vmem:[#allocation2 + $0xb8] sm:$0xff]
          %v4628 = vld [vmem:[#allocation2 + $0xc0] sm:$0xff]
          %v4629 = vld [vmem:[#allocation2 + $0xc8] sm:$0xff]
          %v4630 = vld [vmem:[#allocation2 + $0xd0] sm:$0xff]
          %v4631 = vld [vmem:[#allocation2 + $0xd8] sm:$0xff]
          %v4632 = vld [vmem:[#allocation2 + $0xe0] sm:$0xff]
          %v4633 = vld [vmem:[#allocation2 + $0xe8] sm:$0xff]
          %v4634 = vld [vmem:[#allocation2 + $0xf0] sm:$0xff]
          %v4635 = vld [vmem:[#allocation2 + $0xf8] sm:$0xff]
          %v4636 = vsel %vm4567, %v4604, 0.0
          %v4637 = vsel %vm4567, %v4605, 0.0
          %v4638 = vadd.f32 %v4636, %v4637
          %v4639 = vsel %vm4567, %v4606, 0.0
          %v4640 = vadd.f32 %v4638, %v4639
          %v4641 = vsel %vm4567, %v4607, 0.0
          %v4642 = vadd.f32 %v4640, %v4641
          %v4643 = vsel %vm4567, %v4608, 0.0
          %v4644 = vadd.f32 %v4642, %v4643
          %v4645 = vsel %vm4567, %v4609, 0.0
          %v4646 = vadd.f32 %v4644, %v4645
          %v4647 = vsel %vm4567, %v4610, 0.0
          %v4648 = vadd.f32 %v4646, %v4647
          %v4649 = vsel %vm4567, %v4611, 0.0
          %v4650 = vadd.f32 %v4648, %v4649
          %v4651 = vsel %vm4567, %v4612, 0.0
          %v4652 = vadd.f32 %v4650, %v4651
          %v4653 = vsel %vm4567, %v4613, 0.0
          %v4654 = vadd.f32 %v4652, %v4653
          %v4655 = vsel %vm4567, %v4614, 0.0
          %v4656 = vadd.f32 %v4654, %v4655
          %v4657 = vsel %vm4567, %v4615, 0.0
          %v4658 = vadd.f32 %v4656, %v4657
          %v4659 = vsel %vm4567, %v4616, 0.0
          %v4660 = vadd.f32 %v4658, %v4659
          %v4661 = vsel %vm4567, %v4617, 0.0
          %v4662 = vadd.f32 %v4660, %v4661
          %v4663 = vsel %vm4567, %v4618, 0.0
          %v4664 = vadd.f32 %v4662, %v4663
          %v4665 = vsel %vm4567, %v4619, 0.0
          %v4666 = vadd.f32 %v4664, %v4665
          %v4667 = vsel %vm4567, %v4620, 0.0
          %v4668 = vadd.f32 %v4666, %v4667
          %v4669 = vsel %vm4567, %v4621, 0.0
          %v4670 = vadd.f32 %v4668, %v4669
          %v4671 = vsel %vm4567, %v4622, 0.0
          %v4672 = vadd.f32 %v4670, %v4671
          %v4673 = vsel %vm4567, %v4623, 0.0
          %v4674 = vadd.f32 %v4672, %v4673
          %v4675 = vsel %vm4567, %v4624, 0.0
          %v4676 = vadd.f32 %v4674, %v4675
          %v4677 = vsel %vm4567, %v4625, 0.0
          %v4678 = vadd.f32 %v4676, %v4677
          %v4679 = vsel %vm4567, %v4626, 0.0
          %v4680 = vadd.f32 %v4678, %v4679
          %v4681 = vsel %vm4567, %v4627, 0.0
          %v4682 = vadd.f32 %v4680, %v4681
          %v4683 = vsel %vm4567, %v4628, 0.0
          %v4684 = vadd.f32 %v4682, %v4683
          %v4685 = vsel %vm4567, %v4629, 0.0
          %v4686 = vadd.f32 %v4684, %v4685
          %v4687 = vsel %vm4567, %v4630, 0.0
          %v4688 = vadd.f32 %v4686, %v4687
          %v4689 = vsel %vm4567, %v4631, 0.0
          %v4690 = vadd.f32 %v4688, %v4689
          %v4691 = vsel %vm4567, %v4632, 0.0
          %v4692 = vadd.f32 %v4690, %v4691
          %v4693 = vsel %vm4567, %v4633, 0.0
          %v4694 = vadd.f32 %v4692, %v4693
          %v4695 = vsel %vm4567, %v4634, 0.0
          %v4696 = vadd.f32 %v4694, %v4695
          %v4697 = vsel %vm4567, %v4635, 0.0
          %v4698 = vadd.f32 %v4696, %v4697
          %v4699 = vmul.f32 %v4698, %v1033
          %v4700 = vsub.f32 %v4604, %v4699
          %v4701 = vsub.f32 %v4605, %v4699
          %v4702 = vsub.f32 %v4606, %v4699
          %v4703 = vsub.f32 %v4607, %v4699
          %v4704 = vsub.f32 %v4608, %v4699
          %v4705 = vsub.f32 %v4609, %v4699
          %v4706 = vsub.f32 %v4610, %v4699
          %v4707 = vsub.f32 %v4611, %v4699
          %v4708 = vsub.f32 %v4612, %v4699
          %v4709 = vsub.f32 %v4613, %v4699
          %v4710 = vsub.f32 %v4614, %v4699
          %v4711 = vsub.f32 %v4615, %v4699
          %v4712 = vsub.f32 %v4616, %v4699
          %v4713 = vsub.f32 %v4617, %v4699
          %v4714 = vsub.f32 %v4618, %v4699
          %v4715 = vsub.f32 %v4619, %v4699
          %v4716 = vsub.f32 %v4620, %v4699
          %v4717 = vsub.f32 %v4621, %v4699
          %v4718 = vsub.f32 %v4622, %v4699
          %v4719 = vsub.f32 %v4623, %v4699
          %v4720 = vsub.f32 %v4624, %v4699
          %v4721 = vsub.f32 %v4625, %v4699
          %v4722 = vsub.f32 %v4626, %v4699
          %v4723 = vsub.f32 %v4627, %v4699
          %v4724 = vsub.f32 %v4628, %v4699
          %v4725 = vsub.f32 %v4629, %v4699
          %v4726 = vsub.f32 %v4630, %v4699
          %v4727 = vsub.f32 %v4631, %v4699
          %v4728 = vsub.f32 %v4632, %v4699
          %v4729 = vsub.f32 %v4633, %v4699
          %v4730 = vsub.f32 %v4634, %v4699
          %v4731 = vsub.f32 %v4635, %v4699
          %v4732 = vmul.f32 %v4700, %v4700
          %v4733 = vmul.f32 %v4701, %v4701
          %v4734 = vmul.f32 %v4702, %v4702
          %v4735 = vmul.f32 %v4703, %v4703
          %v4736 = vmul.f32 %v4704, %v4704
          %v4737 = vmul.f32 %v4705, %v4705
          %v4738 = vmul.f32 %v4706, %v4706
          %v4739 = vmul.f32 %v4707, %v4707
          %v4740 = vmul.f32 %v4708, %v4708
          %v4741 = vmul.f32 %v4709, %v4709
          %v4742 = vmul.f32 %v4710, %v4710
          %v4743 = vmul.f32 %v4711, %v4711
          %v4744 = vmul.f32 %v4712, %v4712
          %v4745 = vmul.f32 %v4713, %v4713
          %v4746 = vmul.f32 %v4714, %v4714
          %v4747 = vmul.f32 %v4715, %v4715
          %v4748 = vmul.f32 %v4716, %v4716
          %v4749 = vmul.f32 %v4717, %v4717
          %v4750 = vmul.f32 %v4718, %v4718
          %v4751 = vmul.f32 %v4719, %v4719
          %v4752 = vmul.f32 %v4720, %v4720
          %v4753 = vmul.f32 %v4721, %v4721
          %v4754 = vmul.f32 %v4722, %v4722
          %v4755 = vmul.f32 %v4723, %v4723
          %v4756 = vmul.f32 %v4724, %v4724
          %v4757 = vmul.f32 %v4725, %v4725
          %v4758 = vmul.f32 %v4726, %v4726
          %v4759 = vmul.f32 %v4727, %v4727
          %v4760 = vmul.f32 %v4728, %v4728
          %v4761 = vmul.f32 %v4729, %v4729
          %v4762 = vmul.f32 %v4730, %v4730
          %v4763 = vmul.f32 %v4731, %v4731
          %v4764 = vsel %vm4567, %v4732, 0.0
          %v4765 = vsel %vm4567, %v4733, 0.0
          %v4766 = vadd.f32 %v4764, %v4765
          %v4767 = vsel %vm4567, %v4734, 0.0
          %v4768 = vadd.f32 %v4766, %v4767
          %v4769 = vsel %vm4567, %v4735, 0.0
          %v4770 = vadd.f32 %v4768, %v4769
          %v4771 = vsel %vm4567, %v4736, 0.0
          %v4772 = vadd.f32 %v4770, %v4771
          %v4773 = vsel %vm4567, %v4737, 0.0
          %v4774 = vadd.f32 %v4772, %v4773
          %v4775 = vsel %vm4567, %v4738, 0.0
          %v4776 = vadd.f32 %v4774, %v4775
          %v4777 = vsel %vm4567, %v4739, 0.0
          %v4778 = vadd.f32 %v4776, %v4777
          %v4779 = vsel %vm4567, %v4740, 0.0
          %v4780 = vadd.f32 %v4778, %v4779
          %v4781 = vsel %vm4567, %v4741, 0.0
          %v4782 = vadd.f32 %v4780, %v4781
          %v4783 = vsel %vm4567, %v4742, 0.0
          %v4784 = vadd.f32 %v4782, %v4783
          %v4785 = vsel %vm4567, %v4743, 0.0
          %v4786 = vadd.f32 %v4784, %v4785
          %v4787 = vsel %vm4567, %v4744, 0.0
          %v4788 = vadd.f32 %v4786, %v4787
          %v4789 = vsel %vm4567, %v4745, 0.0
          %v4790 = vadd.f32 %v4788, %v4789
          %v4791 = vsel %vm4567, %v4746, 0.0
          %v4792 = vadd.f32 %v4790, %v4791
          %v4793 = vsel %vm4567, %v4747, 0.0
          %v4794 = vadd.f32 %v4792, %v4793
          %v4795 = vsel %vm4567, %v4748, 0.0
          %v4796 = vadd.f32 %v4794, %v4795
          %v4797 = vsel %vm4567, %v4749, 0.0
          %v4798 = vadd.f32 %v4796, %v4797
          %v4799 = vsel %vm4567, %v4750, 0.0
          %v4800 = vadd.f32 %v4798, %v4799
          %v4801 = vsel %vm4567, %v4751, 0.0
          %v4802 = vadd.f32 %v4800, %v4801
          %v4803 = vsel %vm4567, %v4752, 0.0
          %v4804 = vadd.f32 %v4802, %v4803
          %v4805 = vsel %vm4567, %v4753, 0.0
          %v4806 = vadd.f32 %v4804, %v4805
          %v4807 = vsel %vm4567, %v4754, 0.0
          %v4808 = vadd.f32 %v4806, %v4807
          %v4809 = vsel %vm4567, %v4755, 0.0
          %v4810 = vadd.f32 %v4808, %v4809
          %v4811 = vsel %vm4567, %v4756, 0.0
          %v4812 = vadd.f32 %v4810, %v4811
          %v4813 = vsel %vm4567, %v4757, 0.0
          %v4814 = vadd.f32 %v4812, %v4813
          %v4815 = vsel %vm4567, %v4758, 0.0
          %v4816 = vadd.f32 %v4814, %v4815
          %v4817 = vsel %vm4567, %v4759, 0.0
          %v4818 = vadd.f32 %v4816, %v4817
          %v4819 = vsel %vm4567, %v4760, 0.0
          %v4820 = vadd.f32 %v4818, %v4819
          %v4821 = vsel %vm4567, %v4761, 0.0
          %v4822 = vadd.f32 %v4820, %v4821
          %v4823 = vsel %vm4567, %v4762, 0.0
          %v4824 = vadd.f32 %v4822, %v4823
          %v4825 = vsel %vm4567, %v4763, 0.0
          %v4826 = vadd.f32 %v4824, %v4825
          %v4827 = vmul.f32 %v4826, %v1033
          %v4828 = vadd.f32 %v4827, 1e-05
          %v4829 = vrsqrt.pop %v4828
          %v4830 = vmul.f32 %v4829, %v4828
          %v4831 = vmul.f32 %v4830, %v4829
          %v4832 = vmul.f32 0.5, %v4831
          %v4833 = vsub.f32 1.5, %v4832
          %v4834 = vmul.f32 %v4829, %v4833
          %vm4835 = vweird.f32 %v4828
          %vm4836 = vweird.f32 %v4829
          %vm4837 = vmor %vm4835, %vm4836
          %v4838 = vsel %vm4837, %v4829, %v4834
          %v4839 = vmul.f32 %v4700, %v4838
          %v4840 = vmul.f32 %v4701, %v4838
          %v4841 = vmul.f32 %v4702, %v4838
          %v4842 = vmul.f32 %v4703, %v4838
          %v4843 = vmul.f32 %v4704, %v4838
          %v4844 = vmul.f32 %v4705, %v4838
          %v4845 = vmul.f32 %v4706, %v4838
          %v4846 = vmul.f32 %v4707, %v4838
          %v4847 = vmul.f32 %v4708, %v4838
          %v4848 = vmul.f32 %v4709, %v4838
          %v4849 = vmul.f32 %v4710, %v4838
          %v4850 = vmul.f32 %v4711, %v4838
          %v4851 = vmul.f32 %v4712, %v4838
          %v4852 = vmul.f32 %v4713, %v4838
          %v4853 = vmul.f32 %v4714, %v4838
          %v4854 = vmul.f32 %v4715, %v4838
          %v4855 = vmul.f32 %v4716, %v4838
          %v4856 = vmul.f32 %v4717, %v4838
          %v4857 = vmul.f32 %v4718, %v4838
          %v4858 = vmul.f32 %v4719, %v4838
          %v4859 = vmul.f32 %v4720, %v4838
          %v4860 = vmul.f32 %v4721, %v4838
          %v4861 = vmul.f32 %v4722, %v4838
          %v4862 = vmul.f32 %v4723, %v4838
          %v4863 = vmul.f32 %v4724, %v4838
          %v4864 = vmul.f32 %v4725, %v4838
          %v4865 = vmul.f32 %v4726, %v4838
          %v4866 = vmul.f32 %v4727, %v4838
          %v4867 = vmul.f32 %v4728, %v4838
          %v4868 = vmul.f32 %v4729, %v4838
          %v4869 = vmul.f32 %v4730, %v4838
          %v4870 = vmul.f32 %v4731, %v4838
          %v4871 = vld [vmem:[%s18] sm:$0xff]
          %v4872 = vld [vmem:[%s18 + $0x8] sm:$0xff]
          %v4873 = vld [vmem:[%s18 + $0x10] sm:$0xff]
          %v4874 = vld [vmem:[%s18 + $0x18] sm:$0xff]
          %v4879 = vrot.slane %v4871, 1
          %v4880 = vrot.slane %v4871, 2
          %v4881 = vrot.slane %v4871, 3
          %v4882 = vrot.slane %v4871, 4
          %v4883 = vrot.slane %v4871, 5
          %v4884 = vrot.slane %v4871, 6
          %v4885 = vrot.slane %v4871, 7
          %v4886 = vrot.slane %v4872, 1
          %v4887 = vrot.slane %v4872, 2
          %v4888 = vrot.slane %v4872, 3
          %v4889 = vrot.slane %v4872, 4
          %v4890 = vrot.slane %v4872, 5
          %v4891 = vrot.slane %v4872, 6
          %v4892 = vrot.slane %v4872, 7
          %v4893 = vrot.slane %v4873, 1
          %v4894 = vrot.slane %v4873, 2
          %v4895 = vrot.slane %v4873, 3
          %v4896 = vrot.slane %v4873, 4
          %v4897 = vrot.slane %v4873, 5
          %v4898 = vrot.slane %v4873, 6
          %v4899 = vrot.slane %v4873, 7
          %v4900 = vrot.slane %v4874, 1
          %v4901 = vrot.slane %v4874, 2
          %v4902 = vrot.slane %v4874, 3
          %v4903 = vrot.slane %v4874, 4
          %v4904 = vrot.slane %v4874, 5
          %v4905 = vrot.slane %v4874, 6
          %v4906 = vrot.slane %v4874, 7
          %v4907 = vperm.slane %v4871, 0
          %v4908 = vperm.slane %v4879, 0
          %v4909 = vperm.slane %v4880, 0
          %v4910 = vperm.slane %v4881, 0
          %v4911 = vperm.slane %v4882, 0
          %v4912 = vperm.slane %v4883, 0
          %v4913 = vperm.slane %v4884, 0
          %v4914 = vperm.slane %v4885, 0
          %v4915 = vperm.slane %v4872, 0
          %v4916 = vperm.slane %v4886, 0
          %v4917 = vperm.slane %v4887, 0
          %v4918 = vperm.slane %v4888, 0
          %v4919 = vperm.slane %v4889, 0
          %v4920 = vperm.slane %v4890, 0
          %v4921 = vperm.slane %v4891, 0
          %v4922 = vperm.slane %v4892, 0
          %v4923 = vperm.slane %v4873, 0
          %v4924 = vperm.slane %v4893, 0
          %v4925 = vperm.slane %v4894, 0
          %v4926 = vperm.slane %v4895, 0
          %v4927 = vperm.slane %v4896, 0
          %v4928 = vperm.slane %v4897, 0
          %v4929 = vperm.slane %v4898, 0
          %v4930 = vperm.slane %v4899, 0
          %v4931 = vperm.slane %v4874, 0
          %v4932 = vperm.slane %v4900, 0
          %v4933 = vperm.slane %v4901, 0
          %v4934 = vperm.slane %v4902, 0
          %v4935 = vperm.slane %v4903, 0
          %v4936 = vperm.slane %v4904, 0
          %v4937 = vperm.slane %v4905, 0
          %v4938 = vperm.slane %v4906, 0
          %4939 = vset.pattern.permute.xlu0 0
          %4940 = vperm.xlu0 %4939, %v4907
          %v4941 = vpop.permute.xlu0 %4940
          %4943 = vset.pattern.permute.xlu0 0
          %4944 = vperm.xlu0 %4943, %v4908
          %v4945 = vpop.permute.xlu0 %4944
          %4947 = vset.pattern.permute.xlu0 0
          %4948 = vperm.xlu0 %4947, %v4909
          %v4949 = vpop.permute.xlu0 %4948
          %4951 = vset.pattern.permute.xlu0 0
          %4952 = vperm.xlu0 %4951, %v4910
          %v4953 = vpop.permute.xlu0 %4952
          %4955 = vset.pattern.permute.xlu0 0
          %4956 = vperm.xlu0 %4955, %v4911
          %v4957 = vpop.permute.xlu0 %4956
          %4959 = vset.pattern.permute.xlu0 0
          %4960 = vperm.xlu0 %4959, %v4912
          %v4961 = vpop.permute.xlu0 %4960
          %4963 = vset.pattern.permute.xlu0 0
          %4964 = vperm.xlu0 %4963, %v4913
          %v4965 = vpop.permute.xlu0 %4964
          %4967 = vset.pattern.permute.xlu0 0
          %4968 = vperm.xlu0 %4967, %v4914
          %v4969 = vpop.permute.xlu0 %4968
          %4971 = vset.pattern.permute.xlu0 0
          %4972 = vperm.xlu0 %4971, %v4915
          %v4973 = vpop.permute.xlu0 %4972
          %4975 = vset.pattern.permute.xlu0 0
          %4976 = vperm.xlu0 %4975, %v4916
          %v4977 = vpop.permute.xlu0 %4976
          %4979 = vset.pattern.permute.xlu0 0
          %4980 = vperm.xlu0 %4979, %v4917
          %v4981 = vpop.permute.xlu0 %4980
          %4983 = vset.pattern.permute.xlu0 0
          %4984 = vperm.xlu0 %4983, %v4918
          %v4985 = vpop.permute.xlu0 %4984
          %4987 = vset.pattern.permute.xlu0 0
          %4988 = vperm.xlu0 %4987, %v4919
          %v4989 = vpop.permute.xlu0 %4988
          %4991 = vset.pattern.permute.xlu0 0
          %4992 = vperm.xlu0 %4991, %v4920
          %v4993 = vpop.permute.xlu0 %4992
          %4995 = vset.pattern.permute.xlu0 0
          %4996 = vperm.xlu0 %4995, %v4921
          %v4997 = vpop.permute.xlu0 %4996
          %4999 = vset.pattern.permute.xlu0 0
          %5000 = vperm.xlu0 %4999, %v4922
          %v5001 = vpop.permute.xlu0 %5000
          %5003 = vset.pattern.permute.xlu0 0
          %5004 = vperm.xlu0 %5003, %v4923
          %v5005 = vpop.permute.xlu0 %5004
          %5007 = vset.pattern.permute.xlu0 0
          %5008 = vperm.xlu0 %5007, %v4924
          %v5009 = vpop.permute.xlu0 %5008
          %5011 = vset.pattern.permute.xlu0 0
          %5012 = vperm.xlu0 %5011, %v4925
          %v5013 = vpop.permute.xlu0 %5012
          %5015 = vset.pattern.permute.xlu0 0
          %5016 = vperm.xlu0 %5015, %v4926
          %v5017 = vpop.permute.xlu0 %5016
          %5019 = vset.pattern.permute.xlu0 0
          %5020 = vperm.xlu0 %5019, %v4927
          %v5021 = vpop.permute.xlu0 %5020
          %5023 = vset.pattern.permute.xlu0 0
          %5024 = vperm.xlu0 %5023, %v4928
          %v5025 = vpop.permute.xlu0 %5024
          %5027 = vset.pattern.permute.xlu0 0
          %5028 = vperm.xlu0 %5027, %v4929
          %v5029 = vpop.permute.xlu0 %5028
          %5031 = vset.pattern.permute.xlu0 0
          %5032 = vperm.xlu0 %5031, %v4930
          %v5033 = vpop.permute.xlu0 %5032
          %5035 = vset.pattern.permute.xlu0 0
          %5036 = vperm.xlu0 %5035, %v4931
          %v5037 = vpop.permute.xlu0 %5036
          %5039 = vset.pattern.permute.xlu0 0
          %5040 = vperm.xlu0 %5039, %v4932
          %v5041 = vpop.permute.xlu0 %5040
          %5043 = vset.pattern.permute.xlu0 0
          %5044 = vperm.xlu0 %5043, %v4933
          %v5045 = vpop.permute.xlu0 %5044
          %5047 = vset.pattern.permute.xlu0 0
          %5048 = vperm.xlu0 %5047, %v4934
          %v5049 = vpop.permute.xlu0 %5048
          %5051 = vset.pattern.permute.xlu0 0
          %5052 = vperm.xlu0 %5051, %v4935
          %v5053 = vpop.permute.xlu0 %5052
          %5055 = vset.pattern.permute.xlu0 0
          %5056 = vperm.xlu0 %5055, %v4936
          %v5057 = vpop.permute.xlu0 %5056
          %5059 = vset.pattern.permute.xlu0 0
          %5060 = vperm.xlu0 %5059, %v4937
          %v5061 = vpop.permute.xlu0 %5060
          %5063 = vset.pattern.permute.xlu0 0
          %5064 = vperm.xlu0 %5063, %v4938
          %v5065 = vpop.permute.xlu0 %5064
          %v5067 = vmul.f32 %v4839, %v4941
          %v5068 = vmul.f32 %v4840, %v4945
          %v5069 = vmul.f32 %v4841, %v4949
          %v5070 = vmul.f32 %v4842, %v4953
          %v5071 = vmul.f32 %v4843, %v4957
          %v5072 = vmul.f32 %v4844, %v4961
          %v5073 = vmul.f32 %v4845, %v4965
          %v5074 = vmul.f32 %v4846, %v4969
          %v5075 = vmul.f32 %v4847, %v4973
          %v5076 = vmul.f32 %v4848, %v4977
          %v5077 = vmul.f32 %v4849, %v4981
          %v5078 = vmul.f32 %v4850, %v4985
          %v5079 = vmul.f32 %v4851, %v4989
          %v5080 = vmul.f32 %v4852, %v4993
          %v5081 = vmul.f32 %v4853, %v4997
          %v5082 = vmul.f32 %v4854, %v5001
          %v5083 = vmul.f32 %v4855, %v5005
          %v5084 = vmul.f32 %v4856, %v5009
          %v5085 = vmul.f32 %v4857, %v5013
          %v5086 = vmul.f32 %v4858, %v5017
          %v5087 = vmul.f32 %v4859, %v5021
          %v5088 = vmul.f32 %v4860, %v5025
          %v5089 = vmul.f32 %v4861, %v5029
          %v5090 = vmul.f32 %v4862, %v5033
          %v5091 = vmul.f32 %v4863, %v5037
          %v5092 = vmul.f32 %v4864, %v5041
          %v5093 = vmul.f32 %v4865, %v5045
          %v5094 = vmul.f32 %v4866, %v5049
          %v5095 = vmul.f32 %v4867, %v5053
          %v5096 = vmul.f32 %v4868, %v5057
          %v5097 = vmul.f32 %v4869, %v5061
          %v5098 = vmul.f32 %v4870, %v5065
          %v5099 = vld [vmem:[%s19] sm:$0xff]
          %v5100 = vld [vmem:[%s19 + $0x8] sm:$0xff]
          %v5101 = vld [vmem:[%s19 + $0x10] sm:$0xff]
          %v5102 = vld [vmem:[%s19 + $0x18] sm:$0xff]
          %v5107 = vrot.slane %v5099, 1
          %v5108 = vrot.slane %v5099, 2
          %v5109 = vrot.slane %v5099, 3
          %v5110 = vrot.slane %v5099, 4
          %v5111 = vrot.slane %v5099, 5
          %v5112 = vrot.slane %v5099, 6
          %v5113 = vrot.slane %v5099, 7
          %v5114 = vrot.slane %v5100, 1
          %v5115 = vrot.slane %v5100, 2
          %v5116 = vrot.slane %v5100, 3
          %v5117 = vrot.slane %v5100, 4
          %v5118 = vrot.slane %v5100, 5
          %v5119 = vrot.slane %v5100, 6
          %v5120 = vrot.slane %v5100, 7
          %v5121 = vrot.slane %v5101, 1
          %v5122 = vrot.slane %v5101, 2
          %v5123 = vrot.slane %v5101, 3
          %v5124 = vrot.slane %v5101, 4
          %v5125 = vrot.slane %v5101, 5
          %v5126 = vrot.slane %v5101, 6
          %v5127 = vrot.slane %v5101, 7
          %v5128 = vrot.slane %v5102, 1
          %v5129 = vrot.slane %v5102, 2
          %v5130 = vrot.slane %v5102, 3
          %v5131 = vrot.slane %v5102, 4
          %v5132 = vrot.slane %v5102, 5
          %v5133 = vrot.slane %v5102, 6
          %v5134 = vrot.slane %v5102, 7
          %v5135 = vperm.slane %v5099, 0
          %v5136 = vperm.slane %v5107, 0
          %v5137 = vperm.slane %v5108, 0
          %v5138 = vperm.slane %v5109, 0
          %v5139 = vperm.slane %v5110, 0
          %v5140 = vperm.slane %v5111, 0
          %v5141 = vperm.slane %v5112, 0
          %v5142 = vperm.slane %v5113, 0
          %v5143 = vperm.slane %v5100, 0
          %v5144 = vperm.slane %v5114, 0
          %v5145 = vperm.slane %v5115, 0
          %v5146 = vperm.slane %v5116, 0
          %v5147 = vperm.slane %v5117, 0
          %v5148 = vperm.slane %v5118, 0
          %v5149 = vperm.slane %v5119, 0
          %v5150 = vperm.slane %v5120, 0
          %v5151 = vperm.slane %v5101, 0
          %v5152 = vperm.slane %v5121, 0
          %v5153 = vperm.slane %v5122, 0
          %v5154 = vperm.slane %v5123, 0
          %v5155 = vperm.slane %v5124, 0
          %v5156 = vperm.slane %v5125, 0
          %v5157 = vperm.slane %v5126, 0
          %v5158 = vperm.slane %v5127, 0
          %v5159 = vperm.slane %v5102, 0
          %v5160 = vperm.slane %v5128, 0
          %v5161 = vperm.slane %v5129, 0
          %v5162 = vperm.slane %v5130, 0
          %v5163 = vperm.slane %v5131, 0
          %v5164 = vperm.slane %v5132, 0
          %v5165 = vperm.slane %v5133, 0
          %v5166 = vperm.slane %v5134, 0
          %5167 = vset.pattern.permute.xlu0 0
          %5168 = vperm.xlu0 %5167, %v5135
          %v5169 = vpop.permute.xlu0 %5168
          %5171 = vset.pattern.permute.xlu0 0
          %5172 = vperm.xlu0 %5171, %v5136
          %v5173 = vpop.permute.xlu0 %5172
          %5175 = vset.pattern.permute.xlu0 0
          %5176 = vperm.xlu0 %5175, %v5137
          %v5177 = vpop.permute.xlu0 %5176
          %5179 = vset.pattern.permute.xlu0 0
          %5180 = vperm.xlu0 %5179, %v5138
          %v5181 = vpop.permute.xlu0 %5180
          %5183 = vset.pattern.permute.xlu0 0
          %5184 = vperm.xlu0 %5183, %v5139
          %v5185 = vpop.permute.xlu0 %5184
          %5187 = vset.pattern.permute.xlu0 0
          %5188 = vperm.xlu0 %5187, %v5140
          %v5189 = vpop.permute.xlu0 %5188
          %5191 = vset.pattern.permute.xlu0 0
          %5192 = vperm.xlu0 %5191, %v5141
          %v5193 = vpop.permute.xlu0 %5192
          %5195 = vset.pattern.permute.xlu0 0
          %5196 = vperm.xlu0 %5195, %v5142
          %v5197 = vpop.permute.xlu0 %5196
          %5199 = vset.pattern.permute.xlu0 0
          %5200 = vperm.xlu0 %5199, %v5143
          %v5201 = vpop.permute.xlu0 %5200
          %5203 = vset.pattern.permute.xlu0 0
          %5204 = vperm.xlu0 %5203, %v5144
          %v5205 = vpop.permute.xlu0 %5204
          %5207 = vset.pattern.permute.xlu0 0
          %5208 = vperm.xlu0 %5207, %v5145
          %v5209 = vpop.permute.xlu0 %5208
          %5211 = vset.pattern.permute.xlu0 0
          %5212 = vperm.xlu0 %5211, %v5146
          %v5213 = vpop.permute.xlu0 %5212
          %5215 = vset.pattern.permute.xlu0 0
          %5216 = vperm.xlu0 %5215, %v5147
          %v5217 = vpop.permute.xlu0 %5216
          %5219 = vset.pattern.permute.xlu0 0
          %5220 = vperm.xlu0 %5219, %v5148
          %v5221 = vpop.permute.xlu0 %5220
          %5223 = vset.pattern.permute.xlu0 0
          %5224 = vperm.xlu0 %5223, %v5149
          %v5225 = vpop.permute.xlu0 %5224
          %5227 = vset.pattern.permute.xlu0 0
          %5228 = vperm.xlu0 %5227, %v5150
          %v5229 = vpop.permute.xlu0 %5228
          %5231 = vset.pattern.permute.xlu0 0
          %5232 = vperm.xlu0 %5231, %v5151
          %v5233 = vpop.permute.xlu0 %5232
          %5235 = vset.pattern.permute.xlu0 0
          %5236 = vperm.xlu0 %5235, %v5152
          %v5237 = vpop.permute.xlu0 %5236
          %5239 = vset.pattern.permute.xlu0 0
          %5240 = vperm.xlu0 %5239, %v5153
          %v5241 = vpop.permute.xlu0 %5240
          %5243 = vset.pattern.permute.xlu0 0
          %5244 = vperm.xlu0 %5243, %v5154
          %v5245 = vpop.permute.xlu0 %5244
          %5247 = vset.pattern.permute.xlu0 0
          %5248 = vperm.xlu0 %5247, %v5155
          %v5249 = vpop.permute.xlu0 %5248
          %5251 = vset.pattern.permute.xlu0 0
          %5252 = vperm.xlu0 %5251, %v5156
          %v5253 = vpop.permute.xlu0 %5252
          %5255 = vset.pattern.permute.xlu0 0
          %5256 = vperm.xlu0 %5255, %v5157
          %v5257 = vpop.permute.xlu0 %5256
          %5259 = vset.pattern.permute.xlu0 0
          %5260 = vperm.xlu0 %5259, %v5158
          %v5261 = vpop.permute.xlu0 %5260
          %5263 = vset.pattern.permute.xlu0 0
          %5264 = vperm.xlu0 %5263, %v5159
          %v5265 = vpop.permute.xlu0 %5264
          %5267 = vset.pattern.permute.xlu0 0
          %5268 = vperm.xlu0 %5267, %v5160
          %v5269 = vpop.permute.xlu0 %5268
          %5271 = vset.pattern.permute.xlu0 0
          %5272 = vperm.xlu0 %5271, %v5161
          %v5273 = vpop.permute.xlu0 %5272
          %5275 = vset.pattern.permute.xlu0 0
          %5276 = vperm.xlu0 %5275, %v5162
          %v5277 = vpop.permute.xlu0 %5276
          %5279 = vset.pattern.permute.xlu0 0
          %5280 = vperm.xlu0 %5279, %v5163
          %v5281 = vpop.permute.xlu0 %5280
          %5283 = vset.pattern.permute.xlu0 0
          %5284 = vperm.xlu0 %5283, %v5164
          %v5285 = vpop.permute.xlu0 %5284
          %5287 = vset.pattern.permute.xlu0 0
          %5288 = vperm.xlu0 %5287, %v5165
          %v5289 = vpop.permute.xlu0 %5288
          %5291 = vset.pattern.permute.xlu0 0
          %5292 = vperm.xlu0 %5291, %v5166
          %v5293 = vpop.permute.xlu0 %5292
          %v5295 = vadd.f32 %v5067, %v5169
          %v5296 = vadd.f32 %v5068, %v5173
          %v5297 = vadd.f32 %v5069, %v5177
          %v5298 = vadd.f32 %v5070, %v5181
          %v5299 = vadd.f32 %v5071, %v5185
          %v5300 = vadd.f32 %v5072, %v5189
          %v5301 = vadd.f32 %v5073, %v5193
          %v5302 = vadd.f32 %v5074, %v5197
          %v5303 = vadd.f32 %v5075, %v5201
          %v5304 = vadd.f32 %v5076, %v5205
          %v5305 = vadd.f32 %v5077, %v5209
          %v5306 = vadd.f32 %v5078, %v5213
          %v5307 = vadd.f32 %v5079, %v5217
          %v5308 = vadd.f32 %v5080, %v5221
          %v5309 = vadd.f32 %v5081, %v5225
          %v5310 = vadd.f32 %v5082, %v5229
          %v5311 = vadd.f32 %v5083, %v5233
          %v5312 = vadd.f32 %v5084, %v5237
          %v5313 = vadd.f32 %v5085, %v5241
          %v5314 = vadd.f32 %v5086, %v5245
          %v5315 = vadd.f32 %v5087, %v5249
          %v5316 = vadd.f32 %v5088, %v5253
          %v5317 = vadd.f32 %v5089, %v5257
          %v5318 = vadd.f32 %v5090, %v5261
          %v5319 = vadd.f32 %v5091, %v5265
          %v5320 = vadd.f32 %v5092, %v5269
          %v5321 = vadd.f32 %v5093, %v5273
          %v5322 = vadd.f32 %v5094, %v5277
          %v5323 = vadd.f32 %v5095, %v5281
          %v5324 = vadd.f32 %v5096, %v5285
          %v5325 = vadd.f32 %v5097, %v5289
          %v5326 = vadd.f32 %v5098, %v5293
          %v5327 = vld [vmem:[%s793] sm:$0xff]
          %v5328 = vld [vmem:[%s793 + $0x8] sm:$0xff]
          %v5329 = vld [vmem:[%s793 + $0x10] sm:$0xff]
          %v5330 = vld [vmem:[%s793 + $0x18] sm:$0xff]
          %v5331 = vld [vmem:[%s793 + $0x20] sm:$0xff]
          %v5332 = vld [vmem:[%s793 + $0x28] sm:$0xff]
          %v5333 = vld [vmem:[%s793 + $0x30] sm:$0xff]
          %v5334 = vld [vmem:[%s793 + $0x38] sm:$0xff]
          %v5335 = vld [vmem:[%s793 + $0x40] sm:$0xff]
          %v5336 = vld [vmem:[%s793 + $0x48] sm:$0xff]
          %v5337 = vld [vmem:[%s793 + $0x50] sm:$0xff]
          %v5338 = vld [vmem:[%s793 + $0x58] sm:$0xff]
          %v5339 = vld [vmem:[%s793 + $0x60] sm:$0xff]
          %v5340 = vld [vmem:[%s793 + $0x68] sm:$0xff]
          %v5341 = vld [vmem:[%s793 + $0x70] sm:$0xff]
          %v5342 = vld [vmem:[%s793 + $0x78] sm:$0xff]
          %v5343 = vsel %vm978, %v5327, 0.0
          %5344 = vadd.xlane.f32.xlu0 %v5343
          %v5345 = vpop.xlane.xlu0 %5344
          %v5346 = vsel %vm978, %v5328, 0.0
          %5347 = vadd.xlane.f32.xlu0 %v5346
          %v5348 = vpop.xlane.xlu0 %5347
          %v5349 = vsel %vm978, %v5329, 0.0
          %5350 = vadd.xlane.f32.xlu0 %v5349
          %v5351 = vpop.xlane.xlu0 %5350
          %v5352 = vsel %vm978, %v5330, 0.0
          %5353 = vadd.xlane.f32.xlu0 %v5352
          %v5354 = vpop.xlane.xlu0 %5353
          %v5355 = vsel %vm978, %v5331, 0.0
          %5356 = vadd.xlane.f32.xlu0 %v5355
          %v5357 = vpop.xlane.xlu0 %5356
          %v5358 = vsel %vm978, %v5332, 0.0
          %5359 = vadd.xlane.f32.xlu0 %v5358
          %v5360 = vpop.xlane.xlu0 %5359
          %v5361 = vsel %vm978, %v5333, 0.0
          %5362 = vadd.xlane.f32.xlu0 %v5361
          %v5363 = vpop.xlane.xlu0 %5362
          %v5364 = vsel %vm978, %v5334, 0.0
          %5365 = vadd.xlane.f32.xlu0 %v5364
          %v5366 = vpop.xlane.xlu0 %5365
          %v5367 = vsel %vm978, %v5335, 0.0
          %5368 = vadd.xlane.f32.xlu0 %v5367
          %v5369 = vpop.xlane.xlu0 %5368
          %v5370 = vsel %vm978, %v5336, 0.0
          %5371 = vadd.xlane.f32.xlu0 %v5370
          %v5372 = vpop.xlane.xlu0 %5371
          %v5373 = vsel %vm978, %v5337, 0.0
          %5374 = vadd.xlane.f32.xlu0 %v5373
          %v5375 = vpop.xlane.xlu0 %5374
          %v5376 = vsel %vm978, %v5338, 0.0
          %5377 = vadd.xlane.f32.xlu0 %v5376
          %v5378 = vpop.xlane.xlu0 %5377
          %v5379 = vsel %vm978, %v5339, 0.0
          %5380 = vadd.xlane.f32.xlu0 %v5379
          %v5381 = vpop.xlane.xlu0 %5380
          %v5382 = vsel %vm978, %v5340, 0.0
          %5383 = vadd.xlane.f32.xlu0 %v5382
          %v5384 = vpop.xlane.xlu0 %5383
          %v5385 = vsel %vm978, %v5341, 0.0
          %5386 = vadd.xlane.f32.xlu0 %v5385
          %v5387 = vpop.xlane.xlu0 %5386
          %v5388 = vsel %vm978, %v5342, 0.0
          %5389 = vadd.xlane.f32.xlu0 %v5388
          %v5390 = vpop.xlane.xlu0 %5389
          %v5391 = vmul.f32 %v5345, %v1033
          %v5392 = vmul.f32 %v5348, %v1033
          %v5393 = vmul.f32 %v5351, %v1033
          %v5394 = vmul.f32 %v5354, %v1033
          %v5395 = vmul.f32 %v5357, %v1033
          %v5396 = vmul.f32 %v5360, %v1033
          %v5397 = vmul.f32 %v5363, %v1033
          %v5398 = vmul.f32 %v5366, %v1033
          %v5399 = vmul.f32 %v5369, %v1033
          %v5400 = vmul.f32 %v5372, %v1033
          %v5401 = vmul.f32 %v5375, %v1033
          %v5402 = vmul.f32 %v5378, %v1033
          %v5403 = vmul.f32 %v5381, %v1033
          %v5404 = vmul.f32 %v5384, %v1033
          %v5405 = vmul.f32 %v5387, %v1033
          %v5406 = vmul.f32 %v5390, %v1033
          %v5407 = vsub.f32 %v5327, %v5391
          %v5408 = vsub.f32 %v5328, %v5392
          %v5409 = vsub.f32 %v5329, %v5393
          %v5410 = vsub.f32 %v5330, %v5394
          %v5411 = vsub.f32 %v5331, %v5395
          %v5412 = vsub.f32 %v5332, %v5396
          %v5413 = vsub.f32 %v5333, %v5397
          %v5414 = vsub.f32 %v5334, %v5398
          %v5415 = vsub.f32 %v5335, %v5399
          %v5416 = vsub.f32 %v5336, %v5400
          %v5417 = vsub.f32 %v5337, %v5401
          %v5418 = vsub.f32 %v5338, %v5402
          %v5419 = vsub.f32 %v5339, %v5403
          %v5420 = vsub.f32 %v5340, %v5404
          %v5421 = vsub.f32 %v5341, %v5405
          %v5422 = vsub.f32 %v5342, %v5406
          %v5423 = vmul.f32 %v5407, %v5407
          %v5424 = vmul.f32 %v5408, %v5408
          %v5425 = vmul.f32 %v5409, %v5409
          %v5426 = vmul.f32 %v5410, %v5410
          %v5427 = vmul.f32 %v5411, %v5411
          %v5428 = vmul.f32 %v5412, %v5412
          %v5429 = vmul.f32 %v5413, %v5413
          %v5430 = vmul.f32 %v5414, %v5414
          %v5431 = vmul.f32 %v5415, %v5415
          %v5432 = vmul.f32 %v5416, %v5416
          %v5433 = vmul.f32 %v5417, %v5417
          %v5434 = vmul.f32 %v5418, %v5418
          %v5435 = vmul.f32 %v5419, %v5419
          %v5436 = vmul.f32 %v5420, %v5420
          %v5437 = vmul.f32 %v5421, %v5421
          %v5438 = vmul.f32 %v5422, %v5422
          %v5439 = vsel %vm978, %v5423, 0.0
          %5440 = vadd.xlane.f32.xlu0 %v5439
          %v5441 = vpop.xlane.xlu0 %5440
          %v5442 = vsel %vm978, %v5424, 0.0
          %5443 = vadd.xlane.f32.xlu0 %v5442
          %v5444 = vpop.xlane.xlu0 %5443
          %v5445 = vsel %vm978, %v5425, 0.0
          %5446 = vadd.xlane.f32.xlu0 %v5445
          %v5447 = vpop.xlane.xlu0 %5446
          %v5448 = vsel %vm978, %v5426, 0.0
          %5449 = vadd.xlane.f32.xlu0 %v5448
          %v5450 = vpop.xlane.xlu0 %5449
          %v5451 = vsel %vm978, %v5427, 0.0
          %5452 = vadd.xlane.f32.xlu0 %v5451
          %v5453 = vpop.xlane.xlu0 %5452
          %v5454 = vsel %vm978, %v5428, 0.0
          %5455 = vadd.xlane.f32.xlu0 %v5454
          %v5456 = vpop.xlane.xlu0 %5455
          %v5457 = vsel %vm978, %v5429, 0.0
          %5458 = vadd.xlane.f32.xlu0 %v5457
          %v5459 = vpop.xlane.xlu0 %5458
          %v5460 = vsel %vm978, %v5430, 0.0
          %5461 = vadd.xlane.f32.xlu0 %v5460
          %v5462 = vpop.xlane.xlu0 %5461
          %v5463 = vsel %vm978, %v5431, 0.0
          %5464 = vadd.xlane.f32.xlu0 %v5463
          %v5465 = vpop.xlane.xlu0 %5464
          %v5466 = vsel %vm978, %v5432, 0.0
          %5467 = vadd.xlane.f32.xlu0 %v5466
          %v5468 = vpop.xlane.xlu0 %5467
          %v5469 = vsel %vm978, %v5433, 0.0
          %5470 = vadd.xlane.f32.xlu0 %v5469
          %v5471 = vpop.xlane.xlu0 %5470
          %v5472 = vsel %vm978, %v5434, 0.0
          %5473 = vadd.xlane.f32.xlu0 %v5472
          %v5474 = vpop.xlane.xlu0 %5473
          %v5475 = vsel %vm978, %v5435, 0.0
          %5476 = vadd.xlane.f32.xlu0 %v5475
          %v5477 = vpop.xlane.xlu0 %5476
          %v5478 = vsel %vm978, %v5436, 0.0
          %5479 = vadd.xlane.f32.xlu0 %v5478
          %v5480 = vpop.xlane.xlu0 %5479
          %v5481 = vsel %vm978, %v5437, 0.0
          %5482 = vadd.xlane.f32.xlu0 %v5481
          %v5483 = vpop.xlane.xlu0 %5482
          %v5484 = vsel %vm978, %v5438, 0.0
          %5485 = vadd.xlane.f32.xlu0 %v5484
          %v5486 = vpop.xlane.xlu0 %5485
          %v5487 = vmul.f32 %v5441, %v1033
          %v5488 = vmul.f32 %v5444, %v1033
          %v5489 = vmul.f32 %v5447, %v1033
          %v5490 = vmul.f32 %v5450, %v1033
          %v5491 = vmul.f32 %v5453, %v1033
          %v5492 = vmul.f32 %v5456, %v1033
          %v5493 = vmul.f32 %v5459, %v1033
          %v5494 = vmul.f32 %v5462, %v1033
          %v5495 = vmul.f32 %v5465, %v1033
          %v5496 = vmul.f32 %v5468, %v1033
          %v5497 = vmul.f32 %v5471, %v1033
          %v5498 = vmul.f32 %v5474, %v1033
          %v5499 = vmul.f32 %v5477, %v1033
          %v5500 = vmul.f32 %v5480, %v1033
          %v5501 = vmul.f32 %v5483, %v1033
          %v5502 = vmul.f32 %v5486, %v1033
          %v5503 = vadd.f32 %v5487, 1e-05
          %v5504 = vadd.f32 %v5488, 1e-05
          %v5505 = vadd.f32 %v5489, 1e-05
          %v5506 = vadd.f32 %v5490, 1e-05
          %v5507 = vadd.f32 %v5491, 1e-05
          %v5508 = vadd.f32 %v5492, 1e-05
          %v5509 = vadd.f32 %v5493, 1e-05
          %v5510 = vadd.f32 %v5494, 1e-05
          %v5511 = vadd.f32 %v5495, 1e-05
          %v5512 = vadd.f32 %v5496, 1e-05
          %v5513 = vadd.f32 %v5497, 1e-05
          %v5514 = vadd.f32 %v5498, 1e-05
          %v5515 = vadd.f32 %v5499, 1e-05
          %v5516 = vadd.f32 %v5500, 1e-05
          %v5517 = vadd.f32 %v5501, 1e-05
          %v5518 = vadd.f32 %v5502, 1e-05
          %v5519 = vrsqrt.pop %v5503
          %v5520 = vmul.f32 %v5519, %v5503
          %v5521 = vmul.f32 %v5520, %v5519
          %v5522 = vmul.f32 0.5, %v5521
          %v5523 = vsub.f32 1.5, %v5522
          %v5524 = vmul.f32 %v5519, %v5523
          %vm5525 = vweird.f32 %v5503
          %vm5526 = vweird.f32 %v5519
          %vm5527 = vmor %vm5525, %vm5526
          %v5528 = vsel %vm5527, %v5519, %v5524
          %v5529 = vrsqrt.pop %v5504
          %v5530 = vmul.f32 %v5529, %v5504
          %v5531 = vmul.f32 %v5530, %v5529
          %v5532 = vmul.f32 0.5, %v5531
          %v5533 = vsub.f32 1.5, %v5532
          %v5534 = vmul.f32 %v5529, %v5533
          %vm5535 = vweird.f32 %v5504
          %vm5536 = vweird.f32 %v5529
          %vm5537 = vmor %vm5535, %vm5536
          %v5538 = vsel %vm5537, %v5529, %v5534
          %v5539 = vrsqrt.pop %v5505
          %v5540 = vmul.f32 %v5539, %v5505
          %v5541 = vmul.f32 %v5540, %v5539
          %v5542 = vmul.f32 0.5, %v5541
          %v5543 = vsub.f32 1.5, %v5542
          %v5544 = vmul.f32 %v5539, %v5543
          %vm5545 = vweird.f32 %v5505
          %vm5546 = vweird.f32 %v5539
          %vm5547 = vmor %vm5545, %vm5546
          %v5548 = vsel %vm5547, %v5539, %v5544
          %v5549 = vrsqrt.pop %v5506
          %v5550 = vmul.f32 %v5549, %v5506
          %v5551 = vmul.f32 %v5550, %v5549
          %v5552 = vmul.f32 0.5, %v5551
          %v5553 = vsub.f32 1.5, %v5552
          %v5554 = vmul.f32 %v5549, %v5553
          %vm5555 = vweird.f32 %v5506
          %vm5556 = vweird.f32 %v5549
          %vm5557 = vmor %vm5555, %vm5556
          %v5558 = vsel %vm5557, %v5549, %v5554
          %v5559 = vrsqrt.pop %v5507
          %v5560 = vmul.f32 %v5559, %v5507
          %v5561 = vmul.f32 %v5560, %v5559
          %v5562 = vmul.f32 0.5, %v5561
          %v5563 = vsub.f32 1.5, %v5562
          %v5564 = vmul.f32 %v5559, %v5563
          %vm5565 = vweird.f32 %v5507
          %vm5566 = vweird.f32 %v5559
          %vm5567 = vmor %vm5565, %vm5566
          %v5568 = vsel %vm5567, %v5559, %v5564
          %v5569 = vrsqrt.pop %v5508
          %v5570 = vmul.f32 %v5569, %v5508
          %v5571 = vmul.f32 %v5570, %v5569
          %v5572 = vmul.f32 0.5, %v5571
          %v5573 = vsub.f32 1.5, %v5572
          %v5574 = vmul.f32 %v5569, %v5573
          %vm5575 = vweird.f32 %v5508
          %vm5576 = vweird.f32 %v5569
          %vm5577 = vmor %vm5575, %vm5576
          %v5578 = vsel %vm5577, %v5569, %v5574
          %v5579 = vrsqrt.pop %v5509
          %v5580 = vmul.f32 %v5579, %v5509
          %v5581 = vmul.f32 %v5580, %v5579
          %v5582 = vmul.f32 0.5, %v5581
          %v5583 = vsub.f32 1.5, %v5582
          %v5584 = vmul.f32 %v5579, %v5583
          %vm5585 = vweird.f32 %v5509
          %vm5586 = vweird.f32 %v5579
          %vm5587 = vmor %vm5585, %vm5586
          %v5588 = vsel %vm5587, %v5579, %v5584
          %v5589 = vrsqrt.pop %v5510
          %v5590 = vmul.f32 %v5589, %v5510
          %v5591 = vmul.f32 %v5590, %v5589
          %v5592 = vmul.f32 0.5, %v5591
          %v5593 = vsub.f32 1.5, %v5592
          %v5594 = vmul.f32 %v5589, %v5593
          %vm5595 = vweird.f32 %v5510
          %vm5596 = vweird.f32 %v5589
          %vm5597 = vmor %vm5595, %vm5596
          %v5598 = vsel %vm5597, %v5589, %v5594
          %v5599 = vrsqrt.pop %v5511
          %v5600 = vmul.f32 %v5599, %v5511
          %v5601 = vmul.f32 %v5600, %v5599
          %v5602 = vmul.f32 0.5, %v5601
          %v5603 = vsub.f32 1.5, %v5602
          %v5604 = vmul.f32 %v5599, %v5603
          %vm5605 = vweird.f32 %v5511
          %vm5606 = vweird.f32 %v5599
          %vm5607 = vmor %vm5605, %vm5606
          %v5608 = vsel %vm5607, %v5599, %v5604
          %v5609 = vrsqrt.pop %v5512
          %v5610 = vmul.f32 %v5609, %v5512
          %v5611 = vmul.f32 %v5610, %v5609
          %v5612 = vmul.f32 0.5, %v5611
          %v5613 = vsub.f32 1.5, %v5612
          %v5614 = vmul.f32 %v5609, %v5613
          %vm5615 = vweird.f32 %v5512
          %vm5616 = vweird.f32 %v5609
          %vm5617 = vmor %vm5615, %vm5616
          %v5618 = vsel %vm5617, %v5609, %v5614
          %v5619 = vrsqrt.pop %v5513
          %v5620 = vmul.f32 %v5619, %v5513
          %v5621 = vmul.f32 %v5620, %v5619
          %v5622 = vmul.f32 0.5, %v5621
          %v5623 = vsub.f32 1.5, %v5622
          %v5624 = vmul.f32 %v5619, %v5623
          %vm5625 = vweird.f32 %v5513
          %vm5626 = vweird.f32 %v5619
          %vm5627 = vmor %vm5625, %vm5626
          %v5628 = vsel %vm5627, %v5619, %v5624
          %v5629 = vrsqrt.pop %v5514
          %v5630 = vmul.f32 %v5629, %v5514
          %v5631 = vmul.f32 %v5630, %v5629
          %v5632 = vmul.f32 0.5, %v5631
          %v5633 = vsub.f32 1.5, %v5632
          %v5634 = vmul.f32 %v5629, %v5633
          %vm5635 = vweird.f32 %v5514
          %vm5636 = vweird.f32 %v5629
          %vm5637 = vmor %vm5635, %vm5636
          %v5638 = vsel %vm5637, %v5629, %v5634
          %v5639 = vrsqrt.pop %v5515
          %v5640 = vmul.f32 %v5639, %v5515
          %v5641 = vmul.f32 %v5640, %v5639
          %v5642 = vmul.f32 0.5, %v5641
          %v5643 = vsub.f32 1.5, %v5642
          %v5644 = vmul.f32 %v5639, %v5643
          %vm5645 = vweird.f32 %v5515
          %vm5646 = vweird.f32 %v5639
          %vm5647 = vmor %vm5645, %vm5646
          %v5648 = vsel %vm5647, %v5639, %v5644
          %v5649 = vrsqrt.pop %v5516
          %v5650 = vmul.f32 %v5649, %v5516
          %v5651 = vmul.f32 %v5650, %v5649
          %v5652 = vmul.f32 0.5, %v5651
          %v5653 = vsub.f32 1.5, %v5652
          %v5654 = vmul.f32 %v5649, %v5653
          %vm5655 = vweird.f32 %v5516
          %vm5656 = vweird.f32 %v5649
          %vm5657 = vmor %vm5655, %vm5656
          %v5658 = vsel %vm5657, %v5649, %v5654
          %v5659 = vrsqrt.pop %v5517
          %v5660 = vmul.f32 %v5659, %v5517
          %v5661 = vmul.f32 %v5660, %v5659
          %v5662 = vmul.f32 0.5, %v5661
          %v5663 = vsub.f32 1.5, %v5662
          %v5664 = vmul.f32 %v5659, %v5663
          %vm5665 = vweird.f32 %v5517
          %vm5666 = vweird.f32 %v5659
          %vm5667 = vmor %vm5665, %vm5666
          %v5668 = vsel %vm5667, %v5659, %v5664
          %v5669 = vrsqrt.pop %v5518
          %v5670 = vmul.f32 %v5669, %v5518
          %v5671 = vmul.f32 %v5670, %v5669
          %v5672 = vmul.f32 0.5, %v5671
          %v5673 = vsub.f32 1.5, %v5672
          %v5674 = vmul.f32 %v5669, %v5673
          %vm5675 = vweird.f32 %v5518
          %vm5676 = vweird.f32 %v5669
          %vm5677 = vmor %vm5675, %vm5676
          %v5678 = vsel %vm5677, %v5669, %v5674
          %v5679 = vmul.f32 %v5407, %v5528
          %v5680 = vmul.f32 %v5408, %v5538
          %v5681 = vmul.f32 %v5409, %v5548
          %v5682 = vmul.f32 %v5410, %v5558
          %v5683 = vmul.f32 %v5411, %v5568
          %v5684 = vmul.f32 %v5412, %v5578
          %v5685 = vmul.f32 %v5413, %v5588
          %v5686 = vmul.f32 %v5414, %v5598
          %v5687 = vmul.f32 %v5415, %v5608
          %v5688 = vmul.f32 %v5416, %v5618
          %v5689 = vmul.f32 %v5417, %v5628
          %v5690 = vmul.f32 %v5418, %v5638
          %v5691 = vmul.f32 %v5419, %v5648
          %v5692 = vmul.f32 %v5420, %v5658
          %v5693 = vmul.f32 %v5421, %v5668
          %v5694 = vmul.f32 %v5422, %v5678
          %v5695 = vmul.f32 %v5679, %v1339
          %v5696 = vmul.f32 %v5680, %v1339
          %v5697 = vmul.f32 %v5681, %v1339
          %v5698 = vmul.f32 %v5682, %v1339
          %v5699 = vmul.f32 %v5683, %v1339
          %v5700 = vmul.f32 %v5684, %v1339
          %v5701 = vmul.f32 %v5685, %v1339
          %v5702 = vmul.f32 %v5686, %v1339
          %v5703 = vmul.f32 %v5687, %v1339
          %v5704 = vmul.f32 %v5688, %v1339
          %v5705 = vmul.f32 %v5689, %v1339
          %v5706 = vmul.f32 %v5690, %v1339
          %v5707 = vmul.f32 %v5691, %v1339
          %v5708 = vmul.f32 %v5692, %v1339
          %v5709 = vmul.f32 %v5693, %v1339
          %v5710 = vmul.f32 %v5694, %v1339
          %v5711 = vadd.f32 %v5695, %v1358
          %v5712 = vadd.f32 %v5696, %v1358
          %v5713 = vadd.f32 %v5697, %v1358
          %v5714 = vadd.f32 %v5698, %v1358
          %v5715 = vadd.f32 %v5699, %v1358
          %v5716 = vadd.f32 %v5700, %v1358
          %v5717 = vadd.f32 %v5701, %v1358
          %v5718 = vadd.f32 %v5702, %v1358
          %v5719 = vadd.f32 %v5703, %v1358
          %v5720 = vadd.f32 %v5704, %v1358
          %v5721 = vadd.f32 %v5705, %v1358
          %v5722 = vadd.f32 %v5706, %v1358
          %v5723 = vadd.f32 %v5707, %v1358
          %v5724 = vadd.f32 %v5708, %v1358
          %v5725 = vadd.f32 %v5709, %v1358
          %v5726 = vadd.f32 %v5710, %v1358
          %v5727 = vpack.c.bf16 %v5712, %v5711
          %v5728 = vpack.c.bf16 %v5714, %v5713
          %v5729 = vpack.c.bf16 %v5716, %v5715
          %v5730 = vpack.c.bf16 %v5718, %v5717
          %v5731 = vpack.c.bf16 %v5720, %v5719
          %v5732 = vpack.c.bf16 %v5722, %v5721
          %v5733 = vpack.c.bf16 %v5724, %v5723
          %v5734 = vpack.c.bf16 %v5726, %v5725
          %v5735 = vld [vmem:[%s16] sm:$0xf]
          %v5736 = vld [vmem:[%s16 + $0x4] sm:$0xf]
          %v5737 = vld [vmem:[%s16 + $0x8] sm:$0xf]
          %v5738 = vld [vmem:[%s16 + $0xc] sm:$0xf]
          %v5739 = vld [vmem:[%s17] sm:$0x1]
          %v5741 = vperm.slane %v5739, 0
          %v5747 = vunpack.c.l.b16 %v5735
          %v5748 = vunpack.c.l.b16 %v5736
          %v5749 = vunpack.c.l.b16 %v5737
          %v5750 = vunpack.c.l.b16 %v5738
          %v5751 = vpack.c.b16 %v5748, %v5747
          %v5752 = vpack.c.b16 %v5750, %v5749
          %v5756 = vsel %vm978, %v5727, 0
          %v5759 = vsel %vm978, %v5728, 0
          %v5762 = vsel %vm978, %v5729, 0
          %v5765 = vsel %vm978, %v5730, 0
          %v5768 = vsel %vm978, %v5731, 0
          %v5771 = vsel %vm978, %v5732, 0
          %v5774 = vsel %vm978, %v5733, 0
          %v5777 = vsel %vm978, %v5734, 0
          %5779 = vmatpush.bf16.msra.mxu0 0
          %5780 = vmatpush.bf16.msra.mxu0 0
          %5781 = vmatpush.bf16.msra.mxu0 0
          %5782 = vmatpush.bf16.msra.mxu0 0
          %5783 = vmatpush.bf16.msra.mxu0 0
          %5784 = vmatpush.bf16.msra.mxu0 0
          %5785 = vmatpush.bf16.msra.mxu0 %v5752
          %5786 = vmatpush.bf16.msra.mxu0 %v5751
          %5787 = vmatmul.bf16.gmra.mxu0 %v5756
          %v5788 = vpop.f32.mrf.mxu0
          %v5789 = vadd.f32 %v5741, %v5788
          %v5790 = vpop.f32.mrf.mxu0
          %v5791 = vadd.f32 %v5741, %v5790
          %5792 = vmatmul.bf16.gmra.mxu0 %v5759
          %v5793 = vpop.f32.mrf.mxu0
          %v5794 = vadd.f32 %v5741, %v5793
          %v5795 = vpop.f32.mrf.mxu0
          %v5796 = vadd.f32 %v5741, %v5795
          %5797 = vmatmul.bf16.gmra.mxu0 %v5762
          %v5798 = vpop.f32.mrf.mxu0
          %v5799 = vadd.f32 %v5741, %v5798
          %v5800 = vpop.f32.mrf.mxu0
          %v5801 = vadd.f32 %v5741, %v5800
          %5802 = vmatmul.bf16.gmra.mxu0 %v5765
          %v5803 = vpop.f32.mrf.mxu0
          %v5804 = vadd.f32 %v5741, %v5803
          %v5805 = vpop.f32.mrf.mxu0
          %v5806 = vadd.f32 %v5741, %v5805
          %5807 = vmatmul.bf16.gmra.mxu0 %v5768
          %v5808 = vpop.f32.mrf.mxu0
          %v5809 = vadd.f32 %v5741, %v5808
          %v5810 = vpop.f32.mrf.mxu0
          %v5811 = vadd.f32 %v5741, %v5810
          %5812 = vmatmul.bf16.gmra.mxu0 %v5771
          %v5813 = vpop.f32.mrf.mxu0
          %v5814 = vadd.f32 %v5741, %v5813
          %v5815 = vpop.f32.mrf.mxu0
          %v5816 = vadd.f32 %v5741, %v5815
          %5817 = vmatmul.bf16.gmra.mxu0 %v5774
          %v5818 = vpop.f32.mrf.mxu0
          %v5819 = vadd.f32 %v5741, %v5818
          %v5820 = vpop.f32.mrf.mxu0
          %v5821 = vadd.f32 %v5741, %v5820
          %5822 = vmatmul.bf16.gmra.mxu0 %v5777
          %v5823 = vpop.f32.mrf.mxu0
          %v5824 = vadd.f32 %v5741, %v5823
          %v5825 = vpop.f32.mrf.mxu0
          %v5826 = vadd.f32 %v5741, %v5825
          %5827 = vdwg.mxu0
          %v5828 = vxor.u32 %v5789, 2147483648
          %v5829 = vxor.u32 %v5791, 2147483648
          %v5830 = vxor.u32 %v5794, 2147483648
          %v5831 = vxor.u32 %v5796, 2147483648
          %v5832 = vxor.u32 %v5799, 2147483648
          %v5833 = vxor.u32 %v5801, 2147483648
          %v5834 = vxor.u32 %v5804, 2147483648
          %v5835 = vxor.u32 %v5806, 2147483648
          %v5836 = vxor.u32 %v5809, 2147483648
          %v5837 = vxor.u32 %v5811, 2147483648
          %v5838 = vxor.u32 %v5814, 2147483648
          %v5839 = vxor.u32 %v5816, 2147483648
          %v5840 = vxor.u32 %v5819, 2147483648
          %v5841 = vxor.u32 %v5821, 2147483648
          %v5842 = vxor.u32 %v5824, 2147483648
          %v5843 = vxor.u32 %v5826, 2147483648
          %v5844 = vmul.f32 %v5828, 1.442695
          %v5845 = vpow.pop %v5844
          %v5846 = vmul.f32 %v5829, 1.442695
          %v5847 = vpow.pop %v5846
          %v5848 = vmul.f32 %v5830, 1.442695
          %v5849 = vpow.pop %v5848
          %v5850 = vmul.f32 %v5831, 1.442695
          %v5851 = vpow.pop %v5850
          %v5852 = vmul.f32 %v5832, 1.442695
          %v5853 = vpow.pop %v5852
          %v5854 = vmul.f32 %v5833, 1.442695
          %v5855 = vpow.pop %v5854
          %v5856 = vmul.f32 %v5834, 1.442695
          %v5857 = vpow.pop %v5856
          %v5858 = vmul.f32 %v5835, 1.442695
          %v5859 = vpow.pop %v5858
          %v5860 = vmul.f32 %v5836, 1.442695
          %v5861 = vpow.pop %v5860
          %v5862 = vmul.f32 %v5837, 1.442695
          %v5863 = vpow.pop %v5862
          %v5864 = vmul.f32 %v5838, 1.442695
          %v5865 = vpow.pop %v5864
          %v5866 = vmul.f32 %v5839, 1.442695
          %v5867 = vpow.pop %v5866
          %v5868 = vmul.f32 %v5840, 1.442695
          %v5869 = vpow.pop %v5868
          %v5870 = vmul.f32 %v5841, 1.442695
          %v5871 = vpow.pop %v5870
          %v5872 = vmul.f32 %v5842, 1.442695
          %v5873 = vpow.pop %v5872
          %v5874 = vmul.f32 %v5843, 1.442695
          %v5875 = vpow.pop %v5874
          %v5876 = vadd.f32 %v5845, 1.0
          %v5877 = vadd.f32 %v5847, 1.0
          %v5878 = vadd.f32 %v5849, 1.0
          %v5879 = vadd.f32 %v5851, 1.0
          %v5880 = vadd.f32 %v5853, 1.0
          %v5881 = vadd.f32 %v5855, 1.0
          %v5882 = vadd.f32 %v5857, 1.0
          %v5883 = vadd.f32 %v5859, 1.0
          %v5884 = vadd.f32 %v5861, 1.0
          %v5885 = vadd.f32 %v5863, 1.0
          %v5886 = vadd.f32 %v5865, 1.0
          %v5887 = vadd.f32 %v5867, 1.0
          %v5888 = vadd.f32 %v5869, 1.0
          %v5889 = vadd.f32 %v5871, 1.0
          %v5890 = vadd.f32 %v5873, 1.0
          %v5891 = vadd.f32 %v5875, 1.0
          %v5892 = vrcp.pop %v5876
          %v5893 = vmul.f32 %v5876, %v5892
          %v5894 = vsub.f32 1.0, %v5893
          %v5895 = vmul.f32 %v5892, %v5894
          %v5896 = vadd.f32 %v5892, %v5895
          %vm5897 = vweird.f32 %v5876
          %vm5898 = vweird.f32 %v5892
          %vm5899 = vmor %vm5897, %vm5898
          %v5900 = vsel %vm5899, %v5892, %v5896
          %v5901 = vand.u32 2147483647, %v5876
          %vm5902 = vcmp.eq.f32.partialorder %v5901, 8.507059e+37
          %v5903 = vand.u32 %v5876, 2147483648
          %v5904 = vor.u32 1.1754944e-38, %v5903
          %v5905 = vsel %vm5902, %v5904, %v5900
          %v5906 = vmul.f32 1.0, %v5905
          %v5907 = vrcp.pop %v5877
          %v5908 = vmul.f32 %v5877, %v5907
          %v5909 = vsub.f32 1.0, %v5908
          %v5910 = vmul.f32 %v5907, %v5909
          %v5911 = vadd.f32 %v5907, %v5910
          %vm5912 = vweird.f32 %v5877
          %vm5913 = vweird.f32 %v5907
          %vm5914 = vmor %vm5912, %vm5913
          %v5915 = vsel %vm5914, %v5907, %v5911
          %v5916 = vand.u32 2147483647, %v5877
          %vm5917 = vcmp.eq.f32.partialorder %v5916, 8.507059e+37
          %v5918 = vand.u32 %v5877, 2147483648
          %v5919 = vor.u32 1.1754944e-38, %v5918
          %v5920 = vsel %vm5917, %v5919, %v5915
          %v5921 = vmul.f32 1.0, %v5920
          %v5922 = vrcp.pop %v5878
          %v5923 = vmul.f32 %v5878, %v5922
          %v5924 = vsub.f32 1.0, %v5923
          %v5925 = vmul.f32 %v5922, %v5924
          %v5926 = vadd.f32 %v5922, %v5925
          %vm5927 = vweird.f32 %v5878
          %vm5928 = vweird.f32 %v5922
          %vm5929 = vmor %vm5927, %vm5928
          %v5930 = vsel %vm5929, %v5922, %v5926
          %v5931 = vand.u32 2147483647, %v5878
          %vm5932 = vcmp.eq.f32.partialorder %v5931, 8.507059e+37
          %v5933 = vand.u32 %v5878, 2147483648
          %v5934 = vor.u32 1.1754944e-38, %v5933
          %v5935 = vsel %vm5932, %v5934, %v5930
          %v5936 = vmul.f32 1.0, %v5935
          %v5937 = vrcp.pop %v5879
          %v5938 = vmul.f32 %v5879, %v5937
          %v5939 = vsub.f32 1.0, %v5938
          %v5940 = vmul.f32 %v5937, %v5939
          %v5941 = vadd.f32 %v5937, %v5940
          %vm5942 = vweird.f32 %v5879
          %vm5943 = vweird.f32 %v5937
          %vm5944 = vmor %vm5942, %vm5943
          %v5945 = vsel %vm5944, %v5937, %v5941
          %v5946 = vand.u32 2147483647, %v5879
          %vm5947 = vcmp.eq.f32.partialorder %v5946, 8.507059e+37
          %v5948 = vand.u32 %v5879, 2147483648
          %v5949 = vor.u32 1.1754944e-38, %v5948
          %v5950 = vsel %vm5947, %v5949, %v5945
          %v5951 = vmul.f32 1.0, %v5950
          %v5952 = vrcp.pop %v5880
          %v5953 = vmul.f32 %v5880, %v5952
          %v5954 = vsub.f32 1.0, %v5953
          %v5955 = vmul.f32 %v5952, %v5954
          %v5956 = vadd.f32 %v5952, %v5955
          %vm5957 = vweird.f32 %v5880
          %vm5958 = vweird.f32 %v5952
          %vm5959 = vmor %vm5957, %vm5958
          %v5960 = vsel %vm5959, %v5952, %v5956
          %v5961 = vand.u32 2147483647, %v5880
          %vm5962 = vcmp.eq.f32.partialorder %v5961, 8.507059e+37
          %v5963 = vand.u32 %v5880, 2147483648
          %v5964 = vor.u32 1.1754944e-38, %v5963
          %v5965 = vsel %vm5962, %v5964, %v5960
          %v5966 = vmul.f32 1.0, %v5965
          %v5967 = vrcp.pop %v5881
          %v5968 = vmul.f32 %v5881, %v5967
          %v5969 = vsub.f32 1.0, %v5968
          %v5970 = vmul.f32 %v5967, %v5969
          %v5971 = vadd.f32 %v5967, %v5970
          %vm5972 = vweird.f32 %v5881
          %vm5973 = vweird.f32 %v5967
          %vm5974 = vmor %vm5972, %vm5973
          %v5975 = vsel %vm5974, %v5967, %v5971
          %v5976 = vand.u32 2147483647, %v5881
          %vm5977 = vcmp.eq.f32.partialorder %v5976, 8.507059e+37
          %v5978 = vand.u32 %v5881, 2147483648
          %v5979 = vor.u32 1.1754944e-38, %v5978
          %v5980 = vsel %vm5977, %v5979, %v5975
          %v5981 = vmul.f32 1.0, %v5980
          %v5982 = vrcp.pop %v5882
          %v5983 = vmul.f32 %v5882, %v5982
          %v5984 = vsub.f32 1.0, %v5983
          %v5985 = vmul.f32 %v5982, %v5984
          %v5986 = vadd.f32 %v5982, %v5985
          %vm5987 = vweird.f32 %v5882
          %vm5988 = vweird.f32 %v5982
          %vm5989 = vmor %vm5987, %vm5988
          %v5990 = vsel %vm5989, %v5982, %v5986
          %v5991 = vand.u32 2147483647, %v5882
          %vm5992 = vcmp.eq.f32.partialorder %v5991, 8.507059e+37
          %v5993 = vand.u32 %v5882, 2147483648
          %v5994 = vor.u32 1.1754944e-38, %v5993
          %v5995 = vsel %vm5992, %v5994, %v5990
          %v5996 = vmul.f32 1.0, %v5995
          %v5997 = vrcp.pop %v5883
          %v5998 = vmul.f32 %v5883, %v5997
          %v5999 = vsub.f32 1.0, %v5998
          %v6000 = vmul.f32 %v5997, %v5999
          %v6001 = vadd.f32 %v5997, %v6000
          %vm6002 = vweird.f32 %v5883
          %vm6003 = vweird.f32 %v5997
          %vm6004 = vmor %vm6002, %vm6003
          %v6005 = vsel %vm6004, %v5997, %v6001
          %v6006 = vand.u32 2147483647, %v5883
          %vm6007 = vcmp.eq.f32.partialorder %v6006, 8.507059e+37
          %v6008 = vand.u32 %v5883, 2147483648
          %v6009 = vor.u32 1.1754944e-38, %v6008
          %v6010 = vsel %vm6007, %v6009, %v6005
          %v6011 = vmul.f32 1.0, %v6010
          %v6012 = vrcp.pop %v5884
          %v6013 = vmul.f32 %v5884, %v6012
          %v6014 = vsub.f32 1.0, %v6013
          %v6015 = vmul.f32 %v6012, %v6014
          %v6016 = vadd.f32 %v6012, %v6015
          %vm6017 = vweird.f32 %v5884
          %vm6018 = vweird.f32 %v6012
          %vm6019 = vmor %vm6017, %vm6018
          %v6020 = vsel %vm6019, %v6012, %v6016
          %v6021 = vand.u32 2147483647, %v5884
          %vm6022 = vcmp.eq.f32.partialorder %v6021, 8.507059e+37
          %v6023 = vand.u32 %v5884, 2147483648
          %v6024 = vor.u32 1.1754944e-38, %v6023
          %v6025 = vsel %vm6022, %v6024, %v6020
          %v6026 = vmul.f32 1.0, %v6025
          %v6027 = vrcp.pop %v5885
          %v6028 = vmul.f32 %v5885, %v6027
          %v6029 = vsub.f32 1.0, %v6028
          %v6030 = vmul.f32 %v6027, %v6029
          %v6031 = vadd.f32 %v6027, %v6030
          %vm6032 = vweird.f32 %v5885
          %vm6033 = vweird.f32 %v6027
          %vm6034 = vmor %vm6032, %vm6033
          %v6035 = vsel %vm6034, %v6027, %v6031
          %v6036 = vand.u32 2147483647, %v5885
          %vm6037 = vcmp.eq.f32.partialorder %v6036, 8.507059e+37
          %v6038 = vand.u32 %v5885, 2147483648
          %v6039 = vor.u32 1.1754944e-38, %v6038
          %v6040 = vsel %vm6037, %v6039, %v6035
          %v6041 = vmul.f32 1.0, %v6040
          %v6042 = vrcp.pop %v5886
          %v6043 = vmul.f32 %v5886, %v6042
          %v6044 = vsub.f32 1.0, %v6043
          %v6045 = vmul.f32 %v6042, %v6044
          %v6046 = vadd.f32 %v6042, %v6045
          %vm6047 = vweird.f32 %v5886
          %vm6048 = vweird.f32 %v6042
          %vm6049 = vmor %vm6047, %vm6048
          %v6050 = vsel %vm6049, %v6042, %v6046
          %v6051 = vand.u32 2147483647, %v5886
          %vm6052 = vcmp.eq.f32.partialorder %v6051, 8.507059e+37
          %v6053 = vand.u32 %v5886, 2147483648
          %v6054 = vor.u32 1.1754944e-38, %v6053
          %v6055 = vsel %vm6052, %v6054, %v6050
          %v6056 = vmul.f32 1.0, %v6055
          %v6057 = vrcp.pop %v5887
          %v6058 = vmul.f32 %v5887, %v6057
          %v6059 = vsub.f32 1.0, %v6058
          %v6060 = vmul.f32 %v6057, %v6059
          %v6061 = vadd.f32 %v6057, %v6060
          %vm6062 = vweird.f32 %v5887
          %vm6063 = vweird.f32 %v6057
          %vm6064 = vmor %vm6062, %vm6063
          %v6065 = vsel %vm6064, %v6057, %v6061
          %v6066 = vand.u32 2147483647, %v5887
          %vm6067 = vcmp.eq.f32.partialorder %v6066, 8.507059e+37
          %v6068 = vand.u32 %v5887, 2147483648
          %v6069 = vor.u32 1.1754944e-38, %v6068
          %v6070 = vsel %vm6067, %v6069, %v6065
          %v6071 = vmul.f32 1.0, %v6070
          %v6072 = vrcp.pop %v5888
          %v6073 = vmul.f32 %v5888, %v6072
          %v6074 = vsub.f32 1.0, %v6073
          %v6075 = vmul.f32 %v6072, %v6074
          %v6076 = vadd.f32 %v6072, %v6075
          %vm6077 = vweird.f32 %v5888
          %vm6078 = vweird.f32 %v6072
          %vm6079 = vmor %vm6077, %vm6078
          %v6080 = vsel %vm6079, %v6072, %v6076
          %v6081 = vand.u32 2147483647, %v5888
          %vm6082 = vcmp.eq.f32.partialorder %v6081, 8.507059e+37
          %v6083 = vand.u32 %v5888, 2147483648
          %v6084 = vor.u32 1.1754944e-38, %v6083
          %v6085 = vsel %vm6082, %v6084, %v6080
          %v6086 = vmul.f32 1.0, %v6085
          %v6087 = vrcp.pop %v5889
          %v6088 = vmul.f32 %v5889, %v6087
          %v6089 = vsub.f32 1.0, %v6088
          %v6090 = vmul.f32 %v6087, %v6089
          %v6091 = vadd.f32 %v6087, %v6090
          %vm6092 = vweird.f32 %v5889
          %vm6093 = vweird.f32 %v6087
          %vm6094 = vmor %vm6092, %vm6093
          %v6095 = vsel %vm6094, %v6087, %v6091
          %v6096 = vand.u32 2147483647, %v5889
          %vm6097 = vcmp.eq.f32.partialorder %v6096, 8.507059e+37
          %v6098 = vand.u32 %v5889, 2147483648
          %v6099 = vor.u32 1.1754944e-38, %v6098
          %v6100 = vsel %vm6097, %v6099, %v6095
          %v6101 = vmul.f32 1.0, %v6100
          %v6102 = vrcp.pop %v5890
          %v6103 = vmul.f32 %v5890, %v6102
          %v6104 = vsub.f32 1.0, %v6103
          %v6105 = vmul.f32 %v6102, %v6104
          %v6106 = vadd.f32 %v6102, %v6105
          %vm6107 = vweird.f32 %v5890
          %vm6108 = vweird.f32 %v6102
          %vm6109 = vmor %vm6107, %vm6108
          %v6110 = vsel %vm6109, %v6102, %v6106
          %v6111 = vand.u32 2147483647, %v5890
          %vm6112 = vcmp.eq.f32.partialorder %v6111, 8.507059e+37
          %v6113 = vand.u32 %v5890, 2147483648
          %v6114 = vor.u32 1.1754944e-38, %v6113
          %v6115 = vsel %vm6112, %v6114, %v6110
          %v6116 = vmul.f32 1.0, %v6115
          %v6117 = vrcp.pop %v5891
          %v6118 = vmul.f32 %v5891, %v6117
          %v6119 = vsub.f32 1.0, %v6118
          %v6120 = vmul.f32 %v6117, %v6119
          %v6121 = vadd.f32 %v6117, %v6120
          %vm6122 = vweird.f32 %v5891
          %vm6123 = vweird.f32 %v6117
          %vm6124 = vmor %vm6122, %vm6123
          %v6125 = vsel %vm6124, %v6117, %v6121
          %v6126 = vand.u32 2147483647, %v5891
          %vm6127 = vcmp.eq.f32.partialorder %v6126, 8.507059e+37
          %v6128 = vand.u32 %v5891, 2147483648
          %v6129 = vor.u32 1.1754944e-38, %v6128
          %v6130 = vsel %vm6127, %v6129, %v6125
          %v6131 = vmul.f32 1.0, %v6130
          %v6132 = vpack.c.bf16 %v5906, %v5906
          %v6133 = vpack.c.bf16 %v5921, %v5921
          %v6134 = vpack.c.bf16 %v5936, %v5936
          %v6135 = vpack.c.bf16 %v5951, %v5951
          %v6136 = vpack.c.bf16 %v5966, %v5966
          %v6137 = vpack.c.bf16 %v5981, %v5981
          %v6138 = vpack.c.bf16 %v5996, %v5996
          %v6139 = vpack.c.bf16 %v6011, %v6011
          %v6140 = vpack.c.bf16 %v6026, %v6026
          %v6141 = vpack.c.bf16 %v6041, %v6041
          %v6142 = vpack.c.bf16 %v6056, %v6056
          %v6143 = vpack.c.bf16 %v6071, %v6071
          %v6144 = vpack.c.bf16 %v6086, %v6086
          %v6145 = vpack.c.bf16 %v6101, %v6101
          %v6146 = vpack.c.bf16 %v6116, %v6116
          %v6147 = vpack.c.bf16 %v6131, %v6131
          %v6164 = vunpack.c.l.b16 %v6132
          %v6165 = vunpack.c.l.b16 %v6133
          %v6166 = vunpack.c.l.b16 %v6134
          %v6167 = vunpack.c.l.b16 %v6135
          %v6168 = vunpack.c.l.b16 %v6136
          %v6169 = vunpack.c.l.b16 %v6137
          %v6170 = vunpack.c.l.b16 %v6138
          %v6171 = vunpack.c.l.b16 %v6139
          %v6172 = vunpack.c.l.b16 %v6140
          %v6173 = vunpack.c.l.b16 %v6141
          %v6174 = vunpack.c.l.b16 %v6142
          %v6175 = vunpack.c.l.b16 %v6143
          %v6176 = vunpack.c.l.b16 %v6144
          %v6177 = vunpack.c.l.b16 %v6145
          %v6178 = vunpack.c.l.b16 %v6146
          %v6179 = vunpack.c.l.b16 %v6147
          %v6180 = vpack.c.b16 %v6165, %v6164
          %v6181 = vpack.c.b16 %v6167, %v6166
          %v6182 = vpack.c.b16 %v6169, %v6168
          %v6183 = vpack.c.b16 %v6171, %v6170
          %v6184 = vpack.c.b16 %v6173, %v6172
          %v6185 = vpack.c.b16 %v6175, %v6174
          %v6186 = vpack.c.b16 %v6177, %v6176
          %v6187 = vpack.c.b16 %v6179, %v6178
          %6196 = vxpose.xlu0.c.b16.start [1/8] %v6180, 128
          %6197 = vxpose.xlu0.c.b16.cont [2/8] 0, 128
          %6198 = vxpose.xlu0.c.b16.cont [3/8] 0, 128
          %6199 = vxpose.xlu0.c.b16.cont [4/8] 0, 128
          %6200 = vxpose.xlu0.c.b16.cont [5/8] 0, 128
          %6201 = vxpose.xlu0.c.b16.cont [6/8] 0, 128
          %6202 = vxpose.xlu0.c.b16.cont [7/8] 0, 128
          %6203 = vxpose.xlu0.c.b16.end [8/8] 0, 128
          %v6204 = vpop.trf.xlu0
          %v6205 = vpop.trf.xlu0
          %v6206 = vpop.trf.xlu0
          %v6207 = vpop.trf.xlu0
          %v6208 = vpop.trf.xlu0
          %v6209 = vpop.trf.xlu0
          %v6210 = vpop.trf.xlu0
          %v6211 = vpop.trf.xlu0
          %6212 = vxpose.xlu0.c.b16.start [1/8] %v6181, 128
          %6213 = vxpose.xlu0.c.b16.cont [2/8] 0, 128
          %6214 = vxpose.xlu0.c.b16.cont [3/8] 0, 128
          %6215 = vxpose.xlu0.c.b16.cont [4/8] 0, 128
          %6216 = vxpose.xlu0.c.b16.cont [5/8] 0, 128
          %6217 = vxpose.xlu0.c.b16.cont [6/8] 0, 128
          %6218 = vxpose.xlu0.c.b16.cont [7/8] 0, 128
          %6219 = vxpose.xlu0.c.b16.end [8/8] 0, 128
          %v6220 = vpop.trf.xlu0
          %v6221 = vpop.trf.xlu0
          %v6222 = vpop.trf.xlu0
          %v6223 = vpop.trf.xlu0
          %v6224 = vpop.trf.xlu0
          %v6225 = vpop.trf.xlu0
          %v6226 = vpop.trf.xlu0
          %v6227 = vpop.trf.xlu0
          %6228 = vxpose.xlu0.c.b16.start [1/8] %v6182, 128
          %6229 = vxpose.xlu0.c.b16.cont [2/8] 0, 128
          %6230 = vxpose.xlu0.c.b16.cont [3/8] 0, 128
          %6231 = vxpose.xlu0.c.b16.cont [4/8] 0, 128
          %6232 = vxpose.xlu0.c.b16.cont [5/8] 0, 128
          %6233 = vxpose.xlu0.c.b16.cont [6/8] 0, 128
          %6234 = vxpose.xlu0.c.b16.cont [7/8] 0, 128
          %6235 = vxpose.xlu0.c.b16.end [8/8] 0, 128
          %v6236 = vpop.trf.xlu0
          %v6237 = vpop.trf.xlu0
          %v6238 = vpop.trf.xlu0
          %v6239 = vpop.trf.xlu0
          %v6240 = vpop.trf.xlu0
          %v6241 = vpop.trf.xlu0
          %v6242 = vpop.trf.xlu0
          %v6243 = vpop.trf.xlu0
          %6244 = vxpose.xlu0.c.b16.start [1/8] %v6183, 128
          %6245 = vxpose.xlu0.c.b16.cont [2/8] 0, 128
          %6246 = vxpose.xlu0.c.b16.cont [3/8] 0, 128
          %6247 = vxpose.xlu0.c.b16.cont [4/8] 0, 128
          %6248 = vxpose.xlu0.c.b16.cont [5/8] 0, 128
          %6249 = vxpose.xlu0.c.b16.cont [6/8] 0, 128
          %6250 = vxpose.xlu0.c.b16.cont [7/8] 0, 128
          %6251 = vxpose.xlu0.c.b16.end [8/8] 0, 128
          %v6252 = vpop.trf.xlu0
          %v6253 = vpop.trf.xlu0
          %v6254 = vpop.trf.xlu0
          %v6255 = vpop.trf.xlu0
          %v6256 = vpop.trf.xlu0
          %v6257 = vpop.trf.xlu0
          %v6258 = vpop.trf.xlu0
          %v6259 = vpop.trf.xlu0
          %6260 = vxpose.xlu0.c.b16.start [1/8] %v6184, 128
          %6261 = vxpose.xlu0.c.b16.cont [2/8] 0, 128
          %6262 = vxpose.xlu0.c.b16.cont [3/8] 0, 128
          %6263 = vxpose.xlu0.c.b16.cont [4/8] 0, 128
          %6264 = vxpose.xlu0.c.b16.cont [5/8] 0, 128
          %6265 = vxpose.xlu0.c.b16.cont [6/8] 0, 128
          %6266 = vxpose.xlu0.c.b16.cont [7/8] 0, 128
          %6267 = vxpose.xlu0.c.b16.end [8/8] 0, 128
          %v6268 = vpop.trf.xlu0
          %v6269 = vpop.trf.xlu0
          %v6270 = vpop.trf.xlu0
          %v6271 = vpop.trf.xlu0
          %v6272 = vpop.trf.xlu0
          %v6273 = vpop.trf.xlu0
          %v6274 = vpop.trf.xlu0
          %v6275 = vpop.trf.xlu0
          %6276 = vxpose.xlu0.c.b16.start [1/8] %v6185, 128
          %6277 = vxpose.xlu0.c.b16.cont [2/8] 0, 128
          %6278 = vxpose.xlu0.c.b16.cont [3/8] 0, 128
          %6279 = vxpose.xlu0.c.b16.cont [4/8] 0, 128
          %6280 = vxpose.xlu0.c.b16.cont [5/8] 0, 128
          %6281 = vxpose.xlu0.c.b16.cont [6/8] 0, 128
          %6282 = vxpose.xlu0.c.b16.cont [7/8] 0, 128
          %6283 = vxpose.xlu0.c.b16.end [8/8] 0, 128
          %v6284 = vpop.trf.xlu0
          %v6285 = vpop.trf.xlu0
          %v6286 = vpop.trf.xlu0
          %v6287 = vpop.trf.xlu0
          %v6288 = vpop.trf.xlu0
          %v6289 = vpop.trf.xlu0
          %v6290 = vpop.trf.xlu0
          %v6291 = vpop.trf.xlu0
          %6292 = vxpose.xlu0.c.b16.start [1/8] %v6186, 128
          %6293 = vxpose.xlu0.c.b16.cont [2/8] 0, 128
          %6294 = vxpose.xlu0.c.b16.cont [3/8] 0, 128
          %6295 = vxpose.xlu0.c.b16.cont [4/8] 0, 128
          %6296 = vxpose.xlu0.c.b16.cont [5/8] 0, 128
          %6297 = vxpose.xlu0.c.b16.cont [6/8] 0, 128
          %6298 = vxpose.xlu0.c.b16.cont [7/8] 0, 128
          %6299 = vxpose.xlu0.c.b16.end [8/8] 0, 128
          %v6300 = vpop.trf.xlu0
          %v6301 = vpop.trf.xlu0
          %v6302 = vpop.trf.xlu0
          %v6303 = vpop.trf.xlu0
          %v6304 = vpop.trf.xlu0
          %v6305 = vpop.trf.xlu0
          %v6306 = vpop.trf.xlu0
          %v6307 = vpop.trf.xlu0
          %6308 = vxpose.xlu0.c.b16.start [1/8] %v6187, 128
          %6309 = vxpose.xlu0.c.b16.cont [2/8] 0, 128
          %6310 = vxpose.xlu0.c.b16.cont [3/8] 0, 128
          %6311 = vxpose.xlu0.c.b16.cont [4/8] 0, 128
          %6312 = vxpose.xlu0.c.b16.cont [5/8] 0, 128
          %6313 = vxpose.xlu0.c.b16.cont [6/8] 0, 128
          %6314 = vxpose.xlu0.c.b16.cont [7/8] 0, 128
          %6315 = vxpose.xlu0.c.b16.end [8/8] 0, 128
          %v6316 = vpop.trf.xlu0
          %v6317 = vpop.trf.xlu0
          %v6318 = vpop.trf.xlu0
          %v6319 = vpop.trf.xlu0
          %v6320 = vpop.trf.xlu0
          %v6321 = vpop.trf.xlu0
          %v6322 = vpop.trf.xlu0
          %v6323 = vpop.trf.xlu0
          %v6326 = vpack.i.b16 %v6220, %v6204
          %v6328 = vshrl.u32 %v6204, 16
          %v6329 = vshrl.u32 %v6220, 16
          %v6330 = vpack.i.b16 %v6329, %v6328
          %v6334 = vpack.i.b16 %v6252, %v6236
          %v6336 = vshrl.u32 %v6236, 16
          %v6337 = vshrl.u32 %v6252, 16
          %v6338 = vpack.i.b16 %v6337, %v6336
          %v6342 = vpack.i.b16 %v6284, %v6268
          %v6344 = vshrl.u32 %v6268, 16
          %v6345 = vshrl.u32 %v6284, 16
          %v6346 = vpack.i.b16 %v6345, %v6344
          %v6350 = vpack.i.b16 %v6316, %v6300
          %v6352 = vshrl.u32 %v6300, 16
          %v6353 = vshrl.u32 %v6316, 16
          %v6354 = vpack.i.b16 %v6353, %v6352
          %v6358 = vpack.i.b16 %v6221, %v6205
          %v6360 = vshrl.u32 %v6205, 16
          %v6361 = vshrl.u32 %v6221, 16
          %v6362 = vpack.i.b16 %v6361, %v6360
          %v6366 = vpack.i.b16 %v6253, %v6237
          %v6368 = vshrl.u32 %v6237, 16
          %v6369 = vshrl.u32 %v6253, 16
          %v6370 = vpack.i.b16 %v6369, %v6368
          %v6374 = vpack.i.b16 %v6285, %v6269
          %v6376 = vshrl.u32 %v6269, 16
          %v6377 = vshrl.u32 %v6285, 16
          %v6378 = vpack.i.b16 %v6377, %v6376
          %v6382 = vpack.i.b16 %v6317, %v6301
          %v6384 = vshrl.u32 %v6301, 16
          %v6385 = vshrl.u32 %v6317, 16
          %v6386 = vpack.i.b16 %v6385, %v6384
          %v6388 = vrot.slane %v6342, 4
          %v6389 = vsel %vm2203, %v6388, %v6326
          %v6390 = vrot.slane %v6326, 4
          %v6391 = vsel %vm2203, %v6342, %v6390
          %v6393 = vunpack.c.l.s4 1983009808
          %v6394 = vunpack.c.0.s8 %v6393
          %v6395 = vperm.slane %v6389, %v6394
          %v6397 = vunpack.c.l.s4 1983009808
          %v6398 = vunpack.c.0.s8 %v6397
          %v6399 = vperm.slane %v6391, %v6398
          %v6400 = vrot.slane %v6350, 4
          %v6401 = vsel %vm2203, %v6400, %v6334
          %v6402 = vrot.slane %v6334, 4
          %v6403 = vsel %vm2203, %v6350, %v6402
          %v6405 = vunpack.c.l.s4 1983009808
          %v6406 = vunpack.c.0.s8 %v6405
          %v6407 = vperm.slane %v6401, %v6406
          %v6409 = vunpack.c.l.s4 1983009808
          %v6410 = vunpack.c.0.s8 %v6409
          %v6411 = vperm.slane %v6403, %v6410
          %v6412 = vrot.slane %v6407, 4
          %v6413 = vsel %vm2203, %v6412, %v6395
          %v6414 = vrot.slane %v6395, 4
          %v6415 = vsel %vm2203, %v6407, %v6414
          %v6417 = vunpack.c.l.s4 1934713408
          %v6418 = vunpack.c.0.s8 %v6417
          %v6419 = vperm.slane %v6413, %v6418
          %v6421 = vunpack.c.l.s4 1934713408
          %v6422 = vunpack.c.0.s8 %v6421
          %v6423 = vperm.slane %v6415, %v6422
          %v6424 = vrot.slane %v6411, 4
          %v6425 = vsel %vm2203, %v6424, %v6399
          %v6426 = vrot.slane %v6399, 4
          %v6427 = vsel %vm2203, %v6411, %v6426
          %v6429 = vunpack.c.l.s4 1934713408
          %v6430 = vunpack.c.0.s8 %v6429
          %v6431 = vperm.slane %v6425, %v6430
          %v6433 = vunpack.c.l.s4 1934713408
          %v6434 = vunpack.c.0.s8 %v6433
          %v6435 = vperm.slane %v6427, %v6434
          %v6436 = vrot.slane %v6419, 4
          %v6437 = vsel %vm2203, 0, %v6436
          %v6438 = vrot.slane %v6423, 4
          %v6439 = vsel %vm2203, 0, %v6438
          %v6440 = vrot.slane %v6431, 4
          %v6441 = vsel %vm2203, 0, %v6440
          %v6442 = vrot.slane %v6435, 4
          %v6443 = vsel %vm2203, 0, %v6442
          %v6444 = vrot.slane %v6346, 4
          %v6445 = vsel %vm2203, %v6444, %v6330
          %v6446 = vrot.slane %v6330, 4
          %v6447 = vsel %vm2203, %v6346, %v6446
          %v6449 = vunpack.c.l.s4 1983009808
          %v6450 = vunpack.c.0.s8 %v6449
          %v6451 = vperm.slane %v6445, %v6450
          %v6453 = vunpack.c.l.s4 1983009808
          %v6454 = vunpack.c.0.s8 %v6453
          %v6455 = vperm.slane %v6447, %v6454
          %v6456 = vrot.slane %v6354, 4
          %v6457 = vsel %vm2203, %v6456, %v6338
          %v6458 = vrot.slane %v6338, 4
          %v6459 = vsel %vm2203, %v6354, %v6458
          %v6461 = vunpack.c.l.s4 1983009808
          %v6462 = vunpack.c.0.s8 %v6461
          %v6463 = vperm.slane %v6457, %v6462
          %v6465 = vunpack.c.l.s4 1983009808
          %v6466 = vunpack.c.0.s8 %v6465
          %v6467 = vperm.slane %v6459, %v6466
          %v6468 = vrot.slane %v6463, 4
          %v6469 = vsel %vm2203, %v6468, %v6451
          %v6470 = vrot.slane %v6451, 4
          %v6471 = vsel %vm2203, %v6463, %v6470
          %v6473 = vunpack.c.l.s4 1934713408
          %v6474 = vunpack.c.0.s8 %v6473
          %v6475 = vperm.slane %v6469, %v6474
          %v6477 = vunpack.c.l.s4 1934713408
          %v6478 = vunpack.c.0.s8 %v6477
          %v6479 = vperm.slane %v6471, %v6478
          %v6480 = vrot.slane %v6467, 4
          %v6481 = vsel %vm2203, %v6480, %v6455
          %v6482 = vrot.slane %v6455, 4
          %v6483 = vsel %vm2203, %v6467, %v6482
          %v6485 = vunpack.c.l.s4 1934713408
          %v6486 = vunpack.c.0.s8 %v6485
          %v6487 = vperm.slane %v6481, %v6486
          %v6489 = vunpack.c.l.s4 1934713408
          %v6490 = vunpack.c.0.s8 %v6489
          %v6491 = vperm.slane %v6483, %v6490
          %v6492 = vrot.slane %v6475, 4
          %v6493 = vsel %vm2203, 0, %v6492
          %v6494 = vrot.slane %v6479, 4
          %v6495 = vsel %vm2203, 0, %v6494
          %v6496 = vrot.slane %v6487, 4
          %v6497 = vsel %vm2203, 0, %v6496
          %v6498 = vrot.slane %v6491, 4
          %v6499 = vsel %vm2203, 0, %v6498
          %v6500 = vrot.slane %v6374, 4
          %v6501 = vsel %vm2203, %v6500, %v6358
          %v6502 = vrot.slane %v6358, 4
          %v6503 = vsel %vm2203, %v6374, %v6502
          %v6505 = vunpack.c.l.s4 1983009808
          %v6506 = vunpack.c.0.s8 %v6505
          %v6507 = vperm.slane %v6501, %v6506
          %v6509 = vunpack.c.l.s4 1983009808
          %v6510 = vunpack.c.0.s8 %v6509
          %v6511 = vperm.slane %v6503, %v6510
          %v6512 = vrot.slane %v6382, 4
          %v6513 = vsel %vm2203, %v6512, %v6366
          %v6514 = vrot.slane %v6366, 4
          %v6515 = vsel %vm2203, %v6382, %v6514
          %v6517 = vunpack.c.l.s4 1983009808
          %v6518 = vunpack.c.0.s8 %v6517
          %v6519 = vperm.slane %v6513, %v6518
          %v6521 = vunpack.c.l.s4 1983009808
          %v6522 = vunpack.c.0.s8 %v6521
          %v6523 = vperm.slane %v6515, %v6522
          %v6524 = vrot.slane %v6519, 4
          %v6525 = vsel %vm2203, %v6524, %v6507
          %v6526 = vrot.slane %v6507, 4
          %v6527 = vsel %vm2203, %v6519, %v6526
          %v6529 = vunpack.c.l.s4 1934713408
          %v6530 = vunpack.c.0.s8 %v6529
          %v6531 = vperm.slane %v6525, %v6530
          %v6533 = vunpack.c.l.s4 1934713408
          %v6534 = vunpack.c.0.s8 %v6533
          %v6535 = vperm.slane %v6527, %v6534
          %v6536 = vrot.slane %v6523, 4
          %v6537 = vsel %vm2203, %v6536, %v6511
          %v6538 = vrot.slane %v6511, 4
          %v6539 = vsel %vm2203, %v6523, %v6538
          %v6541 = vunpack.c.l.s4 1934713408
          %v6542 = vunpack.c.0.s8 %v6541
          %v6543 = vperm.slane %v6537, %v6542
          %v6545 = vunpack.c.l.s4 1934713408
          %v6546 = vunpack.c.0.s8 %v6545
          %v6547 = vperm.slane %v6539, %v6546
          %v6548 = vrot.slane %v6531, 4
          %v6549 = vsel %vm2203, 0, %v6548
          %v6550 = vrot.slane %v6535, 4
          %v6551 = vsel %vm2203, 0, %v6550
          %v6552 = vrot.slane %v6543, 4
          %v6553 = vsel %vm2203, 0, %v6552
          %v6554 = vrot.slane %v6547, 4
          %v6555 = vsel %vm2203, 0, %v6554
          %v6556 = vrot.slane %v6378, 4
          %v6557 = vsel %vm2203, %v6556, %v6362
          %v6558 = vrot.slane %v6362, 4
          %v6559 = vsel %vm2203, %v6378, %v6558
          %v6561 = vunpack.c.l.s4 1983009808
          %v6562 = vunpack.c.0.s8 %v6561
          %v6563 = vperm.slane %v6557, %v6562
          %v6565 = vunpack.c.l.s4 1983009808
          %v6566 = vunpack.c.0.s8 %v6565
          %v6567 = vperm.slane %v6559, %v6566
          %v6568 = vrot.slane %v6386, 4
          %v6569 = vsel %vm2203, %v6568, %v6370
          %v6570 = vrot.slane %v6370, 4
          %v6571 = vsel %vm2203, %v6386, %v6570
          %v6573 = vunpack.c.l.s4 1983009808
          %v6574 = vunpack.c.0.s8 %v6573
          %v6575 = vperm.slane %v6569, %v6574
          %v6577 = vunpack.c.l.s4 1983009808
          %v6578 = vunpack.c.0.s8 %v6577
          %v6579 = vperm.slane %v6571, %v6578
          %v6580 = vrot.slane %v6575, 4
          %v6581 = vsel %vm2203, %v6580, %v6563
          %v6582 = vrot.slane %v6563, 4
          %v6583 = vsel %vm2203, %v6575, %v6582
          %v6585 = vunpack.c.l.s4 1934713408
          %v6586 = vunpack.c.0.s8 %v6585
          %v6587 = vperm.slane %v6581, %v6586
          %v6589 = vunpack.c.l.s4 1934713408
          %v6590 = vunpack.c.0.s8 %v6589
          %v6591 = vperm.slane %v6583, %v6590
          %v6592 = vrot.slane %v6579, 4
          %v6593 = vsel %vm2203, %v6592, %v6567
          %v6594 = vrot.slane %v6567, 4
          %v6595 = vsel %vm2203, %v6579, %v6594
          %v6597 = vunpack.c.l.s4 1934713408
          %v6598 = vunpack.c.0.s8 %v6597
          %v6599 = vperm.slane %v6593, %v6598
          %v6601 = vunpack.c.l.s4 1934713408
          %v6602 = vunpack.c.0.s8 %v6601
          %v6603 = vperm.slane %v6595, %v6602
          %v6604 = vrot.slane %v6587, 4
          %v6605 = vsel %vm2203, 0, %v6604
          %v6606 = vrot.slane %v6591, 4
          %v6607 = vsel %vm2203, 0, %v6606
          %v6608 = vrot.slane %v6599, 4
          %v6609 = vsel %vm2203, 0, %v6608
          %v6610 = vrot.slane %v6603, 4
          %v6611 = vsel %vm2203, 0, %v6610
          %v6612 = vunpack.c.l.bf16 %v6419
          %v6613 = vunpack.c.l.bf16 %v6475
          %v6614 = vunpack.c.l.bf16 %v6437
          %v6615 = vunpack.c.l.bf16 %v6493
          %v6616 = vunpack.c.l.bf16 %v6423
          %v6617 = vunpack.c.l.bf16 %v6479
          %v6618 = vunpack.c.l.bf16 %v6439
          %v6619 = vunpack.c.l.bf16 %v6495
          %v6620 = vunpack.c.l.bf16 %v6431
          %v6621 = vunpack.c.l.bf16 %v6487
          %v6622 = vunpack.c.l.bf16 %v6441
          %v6623 = vunpack.c.l.bf16 %v6497
          %v6624 = vunpack.c.l.bf16 %v6435
          %v6625 = vunpack.c.l.bf16 %v6491
          %v6626 = vunpack.c.l.bf16 %v6443
          %v6627 = vunpack.c.l.bf16 %v6499
          %v6628 = vunpack.c.l.bf16 %v6531
          %v6629 = vunpack.c.l.bf16 %v6587
          %v6630 = vunpack.c.l.bf16 %v6549
          %v6631 = vunpack.c.l.bf16 %v6605
          %v6632 = vunpack.c.l.bf16 %v6535
          %v6633 = vunpack.c.l.bf16 %v6591
          %v6634 = vunpack.c.l.bf16 %v6551
          %v6635 = vunpack.c.l.bf16 %v6607
          %v6636 = vunpack.c.l.bf16 %v6543
          %v6637 = vunpack.c.l.bf16 %v6599
          %v6638 = vunpack.c.l.bf16 %v6553
          %v6639 = vunpack.c.l.bf16 %v6609
          %v6640 = vunpack.c.l.bf16 %v6547
          %v6641 = vunpack.c.l.bf16 %v6603
          %v6642 = vunpack.c.l.bf16 %v6555
          %v6643 = vunpack.c.l.bf16 %v6611
          %v6644 = vmul.f32 %v5295, %v6612
          %v6645 = vmul.f32 %v5296, %v6613
          %v6646 = vmul.f32 %v5297, %v6614
          %v6647 = vmul.f32 %v5298, %v6615
          %v6648 = vmul.f32 %v5299, %v6616
          %v6649 = vmul.f32 %v5300, %v6617
          %v6650 = vmul.f32 %v5301, %v6618
          %v6651 = vmul.f32 %v5302, %v6619
          %v6652 = vmul.f32 %v5303, %v6620
          %v6653 = vmul.f32 %v5304, %v6621
          %v6654 = vmul.f32 %v5305, %v6622
          %v6655 = vmul.f32 %v5306, %v6623
          %v6656 = vmul.f32 %v5307, %v6624
          %v6657 = vmul.f32 %v5308, %v6625
          %v6658 = vmul.f32 %v5309, %v6626
          %v6659 = vmul.f32 %v5310, %v6627
          %v6660 = vmul.f32 %v5311, %v6628
          %v6661 = vmul.f32 %v5312, %v6629
          %v6662 = vmul.f32 %v5313, %v6630
          %v6663 = vmul.f32 %v5314, %v6631
          %v6664 = vmul.f32 %v5315, %v6632
          %v6665 = vmul.f32 %v5316, %v6633
          %v6666 = vmul.f32 %v5317, %v6634
          %v6667 = vmul.f32 %v5318, %v6635
          %v6668 = vmul.f32 %v5319, %v6636
          %v6669 = vmul.f32 %v5320, %v6637
          %v6670 = vmul.f32 %v5321, %v6638
          %v6671 = vmul.f32 %v5322, %v6639
          %v6672 = vmul.f32 %v5323, %v6640
          %v6673 = vmul.f32 %v5324, %v6641
          %v6674 = vmul.f32 %v5325, %v6642
          %v6675 = vmul.f32 %v5326, %v6643
          %v6676 = vpack.c.bf16 %v6644, %v6644
          %v6677 = vpack.c.bf16 %v6645, %v6645
          %v6678 = vpack.c.bf16 %v6646, %v6646
          %v6679 = vpack.c.bf16 %v6647, %v6647
          %v6680 = vpack.c.bf16 %v6648, %v6648
          %v6681 = vpack.c.bf16 %v6649, %v6649
          %v6682 = vpack.c.bf16 %v6650, %v6650
          %v6683 = vpack.c.bf16 %v6651, %v6651
          %v6684 = vpack.c.bf16 %v6652, %v6652
          %v6685 = vpack.c.bf16 %v6653, %v6653
          %v6686 = vpack.c.bf16 %v6654, %v6654
          %v6687 = vpack.c.bf16 %v6655, %v6655
          %v6688 = vpack.c.bf16 %v6656, %v6656
          %v6689 = vpack.c.bf16 %v6657, %v6657
          %v6690 = vpack.c.bf16 %v6658, %v6658
          %v6691 = vpack.c.bf16 %v6659, %v6659
          %v6692 = vpack.c.bf16 %v6660, %v6660
          %v6693 = vpack.c.bf16 %v6661, %v6661
          %v6694 = vpack.c.bf16 %v6662, %v6662
          %v6695 = vpack.c.bf16 %v6663, %v6663
          %v6696 = vpack.c.bf16 %v6664, %v6664
          %v6697 = vpack.c.bf16 %v6665, %v6665
          %v6698 = vpack.c.bf16 %v6666, %v6666
          %v6699 = vpack.c.bf16 %v6667, %v6667
          %v6700 = vpack.c.bf16 %v6668, %v6668
          %v6701 = vpack.c.bf16 %v6669, %v6669
          %v6702 = vpack.c.bf16 %v6670, %v6670
          %v6703 = vpack.c.bf16 %v6671, %v6671
          %v6704 = vpack.c.bf16 %v6672, %v6672
          %v6705 = vpack.c.bf16 %v6673, %v6673
          %v6706 = vpack.c.bf16 %v6674, %v6674
          %v6707 = vpack.c.bf16 %v6675, %v6675
          %v6708 = vrot.slane %v6680, 4
          %v6709 = vsel %vm2203, %v6708, %v6676
          %v6711 = vunpack.c.l.s4 1983009808
          %v6712 = vunpack.c.0.s8 %v6711
          %v6713 = vperm.slane %v6709, %v6712
          %v6714 = vrot.slane %v6682, 4
          %v6715 = vsel %vm2203, %v6714, %v6678
          %v6717 = vunpack.c.l.s4 1983009808
          %v6718 = vunpack.c.0.s8 %v6717
          %v6719 = vperm.slane %v6715, %v6718
          %v6720 = vrot.slane %v6719, 4
          %v6721 = vsel %vm2203, %v6720, %v6713
          %v6722 = vrot.slane %v6713, 4
          %v6723 = vsel %vm2203, %v6719, %v6722
          %v6725 = vunpack.c.l.s4 1934713408
          %v6726 = vunpack.c.0.s8 %v6725
          %v6727 = vperm.slane %v6721, %v6726
          %v6729 = vunpack.c.l.s4 1934713408
          %v6730 = vunpack.c.0.s8 %v6729
          %v6731 = vperm.slane %v6723, %v6730
          %v6732 = vrot.slane %v6727, 4
          %v6733 = vsel %vm2203, 0, %v6732
          %v6734 = vrot.slane %v6731, 4
          %v6735 = vsel %vm2203, 0, %v6734
          %v6736 = vrot.slane %v6681, 4
          %v6737 = vsel %vm2203, %v6736, %v6677
          %v6739 = vunpack.c.l.s4 1983009808
          %v6740 = vunpack.c.0.s8 %v6739
          %v6741 = vperm.slane %v6737, %v6740
          %v6742 = vrot.slane %v6683, 4
          %v6743 = vsel %vm2203, %v6742, %v6679
          %v6745 = vunpack.c.l.s4 1983009808
          %v6746 = vunpack.c.0.s8 %v6745
          %v6747 = vperm.slane %v6743, %v6746
          %v6748 = vrot.slane %v6747, 4
          %v6749 = vsel %vm2203, %v6748, %v6741
          %v6750 = vrot.slane %v6741, 4
          %v6751 = vsel %vm2203, %v6747, %v6750
          %v6753 = vunpack.c.l.s4 1934713408
          %v6754 = vunpack.c.0.s8 %v6753
          %v6755 = vperm.slane %v6749, %v6754
          %v6757 = vunpack.c.l.s4 1934713408
          %v6758 = vunpack.c.0.s8 %v6757
          %v6759 = vperm.slane %v6751, %v6758
          %v6760 = vrot.slane %v6755, 4
          %v6761 = vsel %vm2203, 0, %v6760
          %v6762 = vrot.slane %v6759, 4
          %v6763 = vsel %vm2203, 0, %v6762
          %v6764 = vrot.slane %v6688, 4
          %v6765 = vsel %vm2203, %v6764, %v6684
          %v6767 = vunpack.c.l.s4 1983009808
          %v6768 = vunpack.c.0.s8 %v6767
          %v6769 = vperm.slane %v6765, %v6768
          %v6770 = vrot.slane %v6690, 4
          %v6771 = vsel %vm2203, %v6770, %v6686
          %v6773 = vunpack.c.l.s4 1983009808
          %v6774 = vunpack.c.0.s8 %v6773
          %v6775 = vperm.slane %v6771, %v6774
          %v6776 = vrot.slane %v6775, 4
          %v6777 = vsel %vm2203, %v6776, %v6769
          %v6778 = vrot.slane %v6769, 4
          %v6779 = vsel %vm2203, %v6775, %v6778
          %v6781 = vunpack.c.l.s4 1934713408
          %v6782 = vunpack.c.0.s8 %v6781
          %v6783 = vperm.slane %v6777, %v6782
          %v6785 = vunpack.c.l.s4 1934713408
          %v6786 = vunpack.c.0.s8 %v6785
          %v6787 = vperm.slane %v6779, %v6786
          %v6788 = vrot.slane %v6783, 4
          %v6789 = vsel %vm2203, 0, %v6788
          %v6790 = vrot.slane %v6787, 4
          %v6791 = vsel %vm2203, 0, %v6790
          %v6792 = vrot.slane %v6689, 4
          %v6793 = vsel %vm2203, %v6792, %v6685
          %v6795 = vunpack.c.l.s4 1983009808
          %v6796 = vunpack.c.0.s8 %v6795
          %v6797 = vperm.slane %v6793, %v6796
          %v6798 = vrot.slane %v6691, 4
          %v6799 = vsel %vm2203, %v6798, %v6687
          %v6801 = vunpack.c.l.s4 1983009808
          %v6802 = vunpack.c.0.s8 %v6801
          %v6803 = vperm.slane %v6799, %v6802
          %v6804 = vrot.slane %v6803, 4
          %v6805 = vsel %vm2203, %v6804, %v6797
          %v6806 = vrot.slane %v6797, 4
          %v6807 = vsel %vm2203, %v6803, %v6806
          %v6809 = vunpack.c.l.s4 1934713408
          %v6810 = vunpack.c.0.s8 %v6809
          %v6811 = vperm.slane %v6805, %v6810
          %v6813 = vunpack.c.l.s4 1934713408
          %v6814 = vunpack.c.0.s8 %v6813
          %v6815 = vperm.slane %v6807, %v6814
          %v6816 = vrot.slane %v6811, 4
          %v6817 = vsel %vm2203, 0, %v6816
          %v6818 = vrot.slane %v6815, 4
          %v6819 = vsel %vm2203, 0, %v6818
          %v6820 = vrot.slane %v6696, 4
          %v6821 = vsel %vm2203, %v6820, %v6692
          %v6823 = vunpack.c.l.s4 1983009808
          %v6824 = vunpack.c.0.s8 %v6823
          %v6825 = vperm.slane %v6821, %v6824
          %v6826 = vrot.slane %v6698, 4
          %v6827 = vsel %vm2203, %v6826, %v6694
          %v6829 = vunpack.c.l.s4 1983009808
          %v6830 = vunpack.c.0.s8 %v6829
          %v6831 = vperm.slane %v6827, %v6830
          %v6832 = vrot.slane %v6831, 4
          %v6833 = vsel %vm2203, %v6832, %v6825
          %v6834 = vrot.slane %v6825, 4
          %v6835 = vsel %vm2203, %v6831, %v6834
          %v6837 = vunpack.c.l.s4 1934713408
          %v6838 = vunpack.c.0.s8 %v6837
          %v6839 = vperm.slane %v6833, %v6838
          %v6841 = vunpack.c.l.s4 1934713408
          %v6842 = vunpack.c.0.s8 %v6841
          %v6843 = vperm.slane %v6835, %v6842
          %v6844 = vrot.slane %v6839, 4
          %v6845 = vsel %vm2203, 0, %v6844
          %v6846 = vrot.slane %v6843, 4
          %v6847 = vsel %vm2203, 0, %v6846
          %v6848 = vrot.slane %v6697, 4
          %v6849 = vsel %vm2203, %v6848, %v6693
          %v6851 = vunpack.c.l.s4 1983009808
          %v6852 = vunpack.c.0.s8 %v6851
          %v6853 = vperm.slane %v6849, %v6852
          %v6854 = vrot.slane %v6699, 4
          %v6855 = vsel %vm2203, %v6854, %v6695
          %v6857 = vunpack.c.l.s4 1983009808
          %v6858 = vunpack.c.0.s8 %v6857
          %v6859 = vperm.slane %v6855, %v6858
          %v6860 = vrot.slane %v6859, 4
          %v6861 = vsel %vm2203, %v6860, %v6853
          %v6862 = vrot.slane %v6853, 4
          %v6863 = vsel %vm2203, %v6859, %v6862
          %v6865 = vunpack.c.l.s4 1934713408
          %v6866 = vunpack.c.0.s8 %v6865
          %v6867 = vperm.slane %v6861, %v6866
          %v6869 = vunpack.c.l.s4 1934713408
          %v6870 = vunpack.c.0.s8 %v6869
          %v6871 = vperm.slane %v6863, %v6870
          %v6872 = vrot.slane %v6867, 4
          %v6873 = vsel %vm2203, 0, %v6872
          %v6874 = vrot.slane %v6871, 4
          %v6875 = vsel %vm2203, 0, %v6874
          %v6876 = vrot.slane %v6704, 4
          %v6877 = vsel %vm2203, %v6876, %v6700
          %v6879 = vunpack.c.l.s4 1983009808
          %v6880 = vunpack.c.0.s8 %v6879
          %v6881 = vperm.slane %v6877, %v6880
          %v6882 = vrot.slane %v6706, 4
          %v6883 = vsel %vm2203, %v6882, %v6702
          %v6885 = vunpack.c.l.s4 1983009808
          %v6886 = vunpack.c.0.s8 %v6885
          %v6887 = vperm.slane %v6883, %v6886
          %v6888 = vrot.slane %v6887, 4
          %v6889 = vsel %vm2203, %v6888, %v6881
          %v6890 = vrot.slane %v6881, 4
          %v6891 = vsel %vm2203, %v6887, %v6890
          %v6893 = vunpack.c.l.s4 1934713408
          %v6894 = vunpack.c.0.s8 %v6893
          %v6895 = vperm.slane %v6889, %v6894
          %v6897 = vunpack.c.l.s4 1934713408
          %v6898 = vunpack.c.0.s8 %v6897
          %v6899 = vperm.slane %v6891, %v6898
          %v6900 = vrot.slane %v6895, 4
          %v6901 = vsel %vm2203, 0, %v6900
          %v6902 = vrot.slane %v6899, 4
          %v6903 = vsel %vm2203, 0, %v6902
          %v6904 = vrot.slane %v6705, 4
          %v6905 = vsel %vm2203, %v6904, %v6701
          %v6907 = vunpack.c.l.s4 1983009808
          %v6908 = vunpack.c.0.s8 %v6907
          %v6909 = vperm.slane %v6905, %v6908
          %v6910 = vrot.slane %v6707, 4
          %v6911 = vsel %vm2203, %v6910, %v6703
          %v6913 = vunpack.c.l.s4 1983009808
          %v6914 = vunpack.c.0.s8 %v6913
          %v6915 = vperm.slane %v6911, %v6914
          %v6916 = vrot.slane %v6915, 4
          %v6917 = vsel %vm2203, %v6916, %v6909
          %v6918 = vrot.slane %v6909, 4
          %v6919 = vsel %vm2203, %v6915, %v6918
          %v6921 = vunpack.c.l.s4 1934713408
          %v6922 = vunpack.c.0.s8 %v6921
          %v6923 = vperm.slane %v6917, %v6922
          %v6925 = vunpack.c.l.s4 1934713408
          %v6926 = vunpack.c.0.s8 %v6925
          %v6927 = vperm.slane %v6919, %v6926
          %v6928 = vrot.slane %v6923, 4
          %v6929 = vsel %vm2203, 0, %v6928
          %v6930 = vrot.slane %v6927, 4
          %v6931 = vsel %vm2203, 0, %v6930
          %v6934 = vpack.i.b16 %v6755, %v6727
          %v6935 = vshrl.u32 %v6727, 16
          %v6936 = vshrl.u32 %v6755, 16
          %v6937 = vpack.i.b16 %v6936, %v6935
          %v6940 = vpack.i.b16 %v6761, %v6733
          %v6941 = vshrl.u32 %v6733, 16
          %v6942 = vshrl.u32 %v6761, 16
          %v6943 = vpack.i.b16 %v6942, %v6941
          %v6946 = vpack.i.b16 %v6759, %v6731
          %v6947 = vshrl.u32 %v6731, 16
          %v6948 = vshrl.u32 %v6759, 16
          %v6949 = vpack.i.b16 %v6948, %v6947
          %v6952 = vpack.i.b16 %v6763, %v6735
          %v6953 = vshrl.u32 %v6735, 16
          %v6954 = vshrl.u32 %v6763, 16
          %v6955 = vpack.i.b16 %v6954, %v6953
          %v6958 = vpack.i.b16 %v6811, %v6783
          %v6959 = vshrl.u32 %v6783, 16
          %v6960 = vshrl.u32 %v6811, 16
          %v6961 = vpack.i.b16 %v6960, %v6959
          %v6964 = vpack.i.b16 %v6817, %v6789
          %v6965 = vshrl.u32 %v6789, 16
          %v6966 = vshrl.u32 %v6817, 16
          %v6967 = vpack.i.b16 %v6966, %v6965
          %v6970 = vpack.i.b16 %v6815, %v6787
          %v6971 = vshrl.u32 %v6787, 16
          %v6972 = vshrl.u32 %v6815, 16
          %v6973 = vpack.i.b16 %v6972, %v6971
          %v6976 = vpack.i.b16 %v6819, %v6791
          %v6977 = vshrl.u32 %v6791, 16
          %v6978 = vshrl.u32 %v6819, 16
          %v6979 = vpack.i.b16 %v6978, %v6977
          %v6982 = vpack.i.b16 %v6867, %v6839
          %v6983 = vshrl.u32 %v6839, 16
          %v6984 = vshrl.u32 %v6867, 16
          %v6985 = vpack.i.b16 %v6984, %v6983
          %v6988 = vpack.i.b16 %v6873, %v6845
          %v6989 = vshrl.u32 %v6845, 16
          %v6990 = vshrl.u32 %v6873, 16
          %v6991 = vpack.i.b16 %v6990, %v6989
          %v6994 = vpack.i.b16 %v6871, %v6843
          %v6995 = vshrl.u32 %v6843, 16
          %v6996 = vshrl.u32 %v6871, 16
          %v6997 = vpack.i.b16 %v6996, %v6995
          %v7000 = vpack.i.b16 %v6875, %v6847
          %v7001 = vshrl.u32 %v6847, 16
          %v7002 = vshrl.u32 %v6875, 16
          %v7003 = vpack.i.b16 %v7002, %v7001
          %v7006 = vpack.i.b16 %v6923, %v6895
          %v7007 = vshrl.u32 %v6895, 16
          %v7008 = vshrl.u32 %v6923, 16
          %v7009 = vpack.i.b16 %v7008, %v7007
          %v7012 = vpack.i.b16 %v6929, %v6901
          %v7013 = vshrl.u32 %v6901, 16
          %v7014 = vshrl.u32 %v6929, 16
          %v7015 = vpack.i.b16 %v7014, %v7013
          %v7018 = vpack.i.b16 %v6927, %v6899
          %v7019 = vshrl.u32 %v6899, 16
          %v7020 = vshrl.u32 %v6927, 16
          %v7021 = vpack.i.b16 %v7020, %v7019
          %v7024 = vpack.i.b16 %v6931, %v6903
          %v7025 = vshrl.u32 %v6903, 16
          %v7026 = vshrl.u32 %v6931, 16
          %v7027 = vpack.i.b16 %v7026, %v7025
          %v7028 = vunpack.c.l.b16 %v6934
          %v7029 = vunpack.c.l.b16 %v6958
          %v7030 = vunpack.c.l.b16 %v6982
          %v7031 = vunpack.c.l.b16 %v7006
          %v7032 = vpack.c.b16 %v7029, %v7028
          %v7033 = vpack.c.b16 %v7031, %v7030
          %v7034 = vunpack.c.l.b16 %v6937
          %v7035 = vunpack.c.l.b16 %v6961
          %v7036 = vunpack.c.l.b16 %v6985
          %v7037 = vunpack.c.l.b16 %v7009
          %v7038 = vpack.c.b16 %v7035, %v7034
          %v7039 = vpack.c.b16 %v7037, %v7036
          %7040 = vrot.lane.b32.xlu0 %v7038, 16
          %v7041 = vpop.permute.xlu0 %7040
          %7042 = vrot.lane.b32.xlu0 %v7039, 16
          %v7043 = vpop.permute.xlu0 %7042
          %v7044 = vunpack.c.l.b16 %v6940
          %v7045 = vunpack.c.l.b16 %v6964
          %v7046 = vunpack.c.l.b16 %v6988
          %v7047 = vunpack.c.l.b16 %v7012
          %v7048 = vpack.c.b16 %v7045, %v7044
          %v7049 = vpack.c.b16 %v7047, %v7046
          %7050 = vrot.lane.b32.xlu0 %v7048, 32
          %v7051 = vpop.permute.xlu0 %7050
          %7052 = vrot.lane.b32.xlu0 %v7049, 32
          %v7053 = vpop.permute.xlu0 %7052
          %v7054 = vunpack.c.l.b16 %v6943
          %v7055 = vunpack.c.l.b16 %v6967
          %v7056 = vunpack.c.l.b16 %v6991
          %v7057 = vunpack.c.l.b16 %v7015
          %v7058 = vpack.c.b16 %v7055, %v7054
          %v7059 = vpack.c.b16 %v7057, %v7056
          %7060 = vrot.lane.b32.xlu0 %v7058, 48
          %v7061 = vpop.permute.xlu0 %7060
          %7062 = vrot.lane.b32.xlu0 %v7059, 48
          %v7063 = vpop.permute.xlu0 %7062
          %v7064 = vunpack.c.l.b16 %v6946
          %v7065 = vunpack.c.l.b16 %v6970
          %v7066 = vunpack.c.l.b16 %v6994
          %v7067 = vunpack.c.l.b16 %v7018
          %v7068 = vpack.c.b16 %v7065, %v7064
          %v7069 = vpack.c.b16 %v7067, %v7066
          %7070 = vrot.lane.b32.xlu0 %v7068, 64
          %v7071 = vpop.permute.xlu0 %7070
          %7072 = vrot.lane.b32.xlu0 %v7069, 64
          %v7073 = vpop.permute.xlu0 %7072
          %v7074 = vunpack.c.l.b16 %v6949
          %v7075 = vunpack.c.l.b16 %v6973
          %v7076 = vunpack.c.l.b16 %v6997
          %v7077 = vunpack.c.l.b16 %v7021
          %v7078 = vpack.c.b16 %v7075, %v7074
          %v7079 = vpack.c.b16 %v7077, %v7076
          %7080 = vrot.lane.b32.xlu0 %v7078, 80
          %v7081 = vpop.permute.xlu0 %7080
          %7082 = vrot.lane.b32.xlu0 %v7079, 80
          %v7083 = vpop.permute.xlu0 %7082
          %v7084 = vunpack.c.l.b16 %v6952
          %v7085 = vunpack.c.l.b16 %v6976
          %v7086 = vunpack.c.l.b16 %v7000
          %v7087 = vunpack.c.l.b16 %v7024
          %v7088 = vpack.c.b16 %v7085, %v7084
          %v7089 = vpack.c.b16 %v7087, %v7086
          %7090 = vrot.lane.b32.xlu0 %v7088, 96
          %v7091 = vpop.permute.xlu0 %7090
          %7092 = vrot.lane.b32.xlu0 %v7089, 96
          %v7093 = vpop.permute.xlu0 %7092
          %v7094 = vunpack.c.l.b16 %v6955
          %v7095 = vunpack.c.l.b16 %v6979
          %v7096 = vunpack.c.l.b16 %v7003
          %v7097 = vunpack.c.l.b16 %v7027
          %v7098 = vpack.c.b16 %v7095, %v7094
          %v7099 = vpack.c.b16 %v7097, %v7096
          %7100 = vrot.lane.b32.xlu0 %v7098, 112
          %v7101 = vpop.permute.xlu0 %7100
          %7102 = vrot.lane.b32.xlu0 %v7099, 112
          %v7103 = vpop.permute.xlu0 %7102
          %v7106 = vsel %vm4567, %v7032, %v7041
          %v7109 = vsel %vm4567, %v7033, %v7043
          %v7111 = vsel %vm978, %v7106, %v7051
          %v7113 = vsel %vm978, %v7109, %v7053
          %vm7114 = vcmask 392192
          %v7116 = vsel %vm7114, %v7111, %v7061
          %v7118 = vsel %vm7114, %v7113, %v7063
          %vm7119 = vcmask 523264
          %v7121 = vsel %vm7119, %v7116, %v7071
          %v7123 = vsel %vm7119, %v7118, %v7073
          %vm7124 = vcmask 654336
          %v7126 = vsel %vm7124, %v7121, %v7081
          %v7128 = vsel %vm7124, %v7123, %v7083
          %vm7129 = vcmask 785408
          %v7131 = vsel %vm7129, %v7126, %v7091
          %v7133 = vsel %vm7129, %v7128, %v7093
          %vm7134 = vcmask 916480
          %v7136 = vsel %vm7134, %v7131, %v7101
          %v7139 = vsel %vm7134, %v7133, %v7103
          %v7141 = vld [vmem:[%s20] sm:$0xf]
          %v7142 = vld [vmem:[%s20 + $0x4] sm:$0xf]
          %v7143 = vld [vmem:[%s20 + $0x8] sm:$0xf]
          %v7144 = vld [vmem:[%s20 + $0xc] sm:$0xf]
          %v7145 = vld [vmem:[%s21] sm:$0xff]
          %v7146 = vld [vmem:[%s21 + $0x8] sm:$0xff]
          %v7147 = vld [vmem:[%s21 + $0x10] sm:$0xff]
          %v7148 = vld [vmem:[%s21 + $0x18] sm:$0xff]
          %7150 = vset.pattern.permute.xlu0 0
          %7151 = vperm.xlu0 %7150, %v7145
          %v7152 = vpop.permute.xlu0 %7151
          %7155 = vset.pattern.permute.xlu0 0
          %7156 = vperm.xlu0 %7155, %v7146
          %v7157 = vpop.permute.xlu0 %7156
          %7160 = vset.pattern.permute.xlu0 0
          %7161 = vperm.xlu0 %7160, %v7147
          %v7162 = vpop.permute.xlu0 %7161
          %7165 = vset.pattern.permute.xlu0 0
          %7166 = vperm.xlu0 %7165, %v7148
          %v7167 = vpop.permute.xlu0 %7166
          %v7173 = vunpack.c.l.b16 %v7141
          %v7174 = vunpack.c.l.b16 %v7142
          %v7175 = vunpack.c.l.b16 %v7143
          %v7176 = vunpack.c.l.b16 %v7144
          %v7177 = vpack.c.b16 %v7174, %v7173
          %v7178 = vpack.c.b16 %v7176, %v7175
          %v7180 = vsel %vm978, %v7177, 0
          %v7183 = vsel %vm978, %v7178, 0
          %7185 = vmatpush.bf16.msra.mxu0 0
          %7186 = vmatpush.bf16.msra.mxu0 0
          %7187 = vmatpush.bf16.msra.mxu0 0
          %7188 = vmatpush.bf16.msra.mxu0 0
          %7189 = vmatpush.bf16.msra.mxu0 0
          %7190 = vmatpush.bf16.msra.mxu0 0
          %7191 = vmatpush.bf16.msra.mxu0 %v7139
          %7192 = vmatpush.bf16.msra.mxu0 %v7136
          %7193 = vmatmul.bf16.gmra.mxu0 %v7180
          %v7194 = vpop.f32.mrf.mxu0
          %v7195 = vadd.f32 %v7152, %v7194
          %v7196 = vpop.f32.mrf.mxu0
          %v7197 = vadd.f32 %v7157, %v7196
          %7198 = vmatmul.bf16.gmra.mxu0 %v7183
          %v7199 = vpop.f32.mrf.mxu0
          %v7200 = vadd.f32 %v7162, %v7199
          %v7201 = vpop.f32.mrf.mxu0
          %v7202 = vadd.f32 %v7167, %v7201
          %7203 = vdwg.mxu0
          %7204 = vst [vmem:[%s885] sm:$0xff] %v7195
          %7205 = vst [vmem:[%s885 + $0x8] sm:$0xff] %v7197
          %7206 = vst [vmem:[%s885 + $0x10] sm:$0xff] %v7200
          %7207 = vst [vmem:[%s885 + $0x18] sm:$0xff] %v7202
        $region128: #{tpu_custom_call.1} parent=107 // pred_fallthru
          _
        %s7208 = sand.u32 %s575, 1
        %s7209 = scalar_lea.sflag [#allocation5], %s7208
        %s7210 = sand.u32 %s575, 1
        %s7211 = smul.addr %s7210, 32
        %s7212 = scalar_lea.vmem [#allocation9], %s7211
        // Predicated region
        $region129: #{tpu_custom_call.1} parent=107 // pred_check
          %p7213 = pneg %p585
        $region130: #{tpu_custom_call.1} parent=107 // pred_check_branch
          %7215 = sbr.rel (%p7213) target = $region132
        $region131: #{tpu_custom_call.1} parent=107 // pred_region
          %7217 = vsyncadd %s7209, 0
          %s7218 = smul.addr %s47, 8
          %s7219 = sadd.s32 %s48, %s7218
          %s7220 = smul.addr %s7219, 8
          %s7221 = scalar_lea.hbm %s22, %s7220
          %s7222 = sshll.u32 %s7212, 4
          %s7223 = int_to_ptr.vmem [resolvable:$true] %s7222
          %s7224 = sshll.u32 %s7221, 4
          %s7225 = int_to_ptr.hbm [resolvable:$true] %s7224
          %7230 = dma.vmem_to_hbm [thread:$0]  %s7223, 512, %s7225, %s7209, 128, 256, 8
        $region132: #{tpu_custom_call.1} parent=107 // pred_fallthru
          _
      $region108: #{tpu_custom_call.1} parent=5 // pred_fallthru
        _
      %p7231 = scmp.le.s32.totalorder 2, %s37
      // Predicated region
      $region133: #{tpu_custom_call.1} parent=5 // pred_check
        %p7232 = pneg %p7231
      $region134: #{tpu_custom_call.1} parent=5 // pred_check_branch
        %7234 = sbr.rel (%p7232) target = $region136
      $region135: #{tpu_custom_call.1} parent=5 // pred_region
        %s7235 = ssub.s32 %s37, 2
        // Predicated region
        $region137: #{tpu_custom_call.1} parent=135 // pred_check
          %p7236 = pneg %p591
        $region138: #{tpu_custom_call.1} parent=135 // pred_check_branch
          %7238 = sbr.rel (%p7236) target = $region140
        $region139: #{tpu_custom_call.1} parent=135 // pred_region
          %s7239 = sand.u32 %s576, 1
          %s7240 = scalar_lea.sflag [#allocation5], %s7239
          %s7241 = sand.u32 %s576, 1
          %s7242 = smul.addr %s7241, 32
          %s7243 = scalar_lea.vmem [#allocation9], %s7242
          %7245 = dma.done %s7240, 512
        $region140: #{tpu_custom_call.1} parent=135 // pred_fallthru
          _
      $region136: #{tpu_custom_call.1} parent=5 // pred_fallthru
        _
    $region6: #{tpu_custom_call.1} parent=1 // loop_footer
      %s41 = sadd.s32 1, %s37
    $region7: #{tpu_custom_call.1} parent=1 // loop_footer_branch
      %36 = sbr.rel target = $region3
    $region8: #{tpu_custom_call.1} parent=1 // loop_exit
      _
    %7246 = vsyncpa [#allocation4], 1
    %s7247 = scalar_lea.sflag [#allocation4], 1
    %7248 = vsyncpa %s7247, 1
    %7249 = vsyncpa [#allocation7], 1
    %s7250 = scalar_lea.sflag [#allocation7], 1
    %7251 = vsyncpa %s7250, 1
    %7252 = vsyncpa [#allocation5], 1
    %s7253 = scalar_lea.sflag [#allocation5], 1
    %7254 = vsyncpa %s7253, 1

</llo_original>
